<compile_context>
chip_gen: v7x
topology: tpu7x:2x2x1
jax: 0.10.0
libtpu: 0.0.40
codegen_flags: <defaults>
</compile_context>

<pallas_src>
import jax
import jax.numpy as jnp
from jax import lax
from jax.experimental import pallas as pl
from jax.experimental.pallas import tpu as pltpu

EPS = 1e-5                    # BatchNorm eps (PyTorch default)
LANES = 128                   # lane width
PB = 256                      # 128-aligned width of one (even/odd w_out) column group
VMEM_LIMIT = 32 * 1024 * 1024

# (name, input spatial, Cin, Cout) for the three conv blocks (input is 31x31x3).
_CONV_SPECS = (("conv1", 31, 3, 16), ("conv2", 15, 16, 32), ("conv3", 7, 32, 64))
_HEAD_IN = 3 * PB             # conv3 features: each of the 3 rows in its own 256-lane slot


# ------------------------------ Pallas kernel -------------------------------

def _elu(v):
    return jnp.where(v > 0, v, jnp.exp(jnp.minimum(v, 0.0)) - 1.0)


def _make_fused_kernel(bt):
    """Whole-network forward for a batch tile of `bt` images."""
    hp1, hp2, hp3 = 15, 7, 3          # pooled spatial sizes per conv block
    r1, r2, r3 = 240, 224, 192        # real lane widths (Wp * Cout) per conv block

    def conv_block(src_ref, b, w_ref, t_ref, hp, real):
        """3x3 conv (pad=1) + folded BN + MaxPool(2,2) + ELU for image b.

        src_ref[b] is the h-zero-padded input with (w, c) merged into lanes.
        w_ref[dy] is a banded matrix whose rows enumerate (w_in, ci) and whose
        columns enumerate (parity of w_out, w_out//2, co), each parity group
        padded to a 256-lane block (the pool-dropped last column is omitted).
        """
        nrow = 2 * hp                                   # conv rows that survive pooling
        acc = jnp.zeros((nrow, 2 * PB), jnp.float32)
        for dy in range(3):                             # ky taps -> whole-image matmuls
            acc = acc + jnp.dot(src_ref[b, dy:dy + nrow, :], w_ref[dy],
                                preferred_element_type=jnp.float32)
        # w-pool: even/odd w_out groups -> one shifted, 128-aligned max.
        yw = jnp.maximum(acc[:, :real], acc[:, PB:PB + real])
        # h-pool: adjacent conv-row pairs.
        yh = jnp.concatenate(
            [jnp.maximum(yw[2 * r:2 * r + 1, :], yw[2 * r + 1:2 * r + 2, :])
             for r in range(hp)], axis=0)
        # BN shift + ELU after pooling (exact: shift is per-channel, ELU monotone).
        return _elu(yh + t_ref[...])

    def kernel(x_ref, w1_ref, t1_ref, w2_ref, t2_ref, w3_ref, t3_ref,
               hw1_ref, ht1_ref, hw2_ref, hb2_ref, out_ref,
               a2_ref, a3_ref, c3_ref):
        # Zero the scratch activations (spatial zero-pad rows / unused lanes).
        a2_ref[...] = jnp.zeros((bt, hp1 + 2, r1), jnp.bfloat16)
        a3_ref[...] = jnp.zeros((bt, hp2 + 2, r2), jnp.bfloat16)
        c3_ref[...] = jnp.zeros((bt, _HEAD_IN), jnp.bfloat16)

        for b in range(bt):
            z1 = conv_block(x_ref, b, w1_ref, t1_ref, hp1, r1)       # (15, 240)
            a2_ref[b, 1:1 + hp1, :] = z1.astype(jnp.bfloat16)
            z2 = conv_block(a2_ref, b, w2_ref, t2_ref, hp2, r2)      # (7, 224)
            a3_ref[b, 1:1 + hp2, :] = z2.astype(jnp.bfloat16)
            z3 = conv_block(a3_ref, b, w3_ref, t3_ref, hp3, r3)      # (3, 192)
            # Flatten (h, w, c): each of the 3 rows goes to its own 256-lane
            # slot (aligned stores; the gap lanes hit zero rows of hw1).
            for r in range(hp3):
                c3_ref[b:b + 1, r * PB:r * PB + r3] = z3[r:r + 1, :].astype(jnp.bfloat16)

        # MLP head for the whole batch tile: Linear(576,100) + folded BN1d +
        # ReLU + Linear(100,out), all dims padded to 128 lanes.
        hid = jnp.dot(c3_ref[...], hw1_ref[...], preferred_element_type=jnp.float32)
        hid = jnp.maximum(hid + ht1_ref[...], 0.0)
        logits = jnp.dot(hid.astype(jnp.bfloat16), hw2_ref[...],
                         preferred_element_type=jnp.float32) + hb2_ref[...]
        out_ref[...] = logits

    return kernel


# --------------------------------- wrapper -----------------------------------

def _fused_forward(imgs, kp, bt):
    """imgs: (N_pad, 33, 93) bf16 (h-zero-padded, (w,c) merged) -> (N_pad, 128) f32."""
    n_pad = imgs.shape[0]
    c1, c2, c3, hd = kp["conv1"], kp["conv2"], kp["conv3"], kp["head"]
    return pl.pallas_call(
        _make_fused_kernel(bt),
        grid=(n_pad // bt,),
        in_specs=[
            pl.BlockSpec((bt, 33, 93), lambda i: (i, 0, 0)),
            pl.BlockSpec(c1["w"].shape, lambda i: (0, 0, 0)),   # VMEM-resident weights
            pl.BlockSpec(c1["t"].shape, lambda i: (0, 0)),
            pl.BlockSpec(c2["w"].shape, lambda i: (0, 0, 0)),
            pl.BlockSpec(c2["t"].shape, lambda i: (0, 0)),
            pl.BlockSpec(c3["w"].shape, lambda i: (0, 0, 0)),
            pl.BlockSpec(c3["t"].shape, lambda i: (0, 0)),
            pl.BlockSpec(hd["w1"].shape, lambda i: (0, 0)),
            pl.BlockSpec(hd["t1"].shape, lambda i: (0, 0)),
            pl.BlockSpec(hd["w2"].shape, lambda i: (0, 0)),
            pl.BlockSpec(hd["b2"].shape, lambda i: (0, 0)),
        ],
        out_specs=pl.BlockSpec((bt, LANES), lambda i: (i, 0)),
        out_shape=jax.ShapeDtypeStruct((n_pad, LANES), jnp.float32),
        scratch_shapes=[
            pltpu.VMEM((bt, 17, 240), jnp.bfloat16),   # conv2 input (h-padded, compact lanes)
            pltpu.VMEM((bt, 9, 224), jnp.bfloat16),    # conv3 input
            pltpu.VMEM((bt, _HEAD_IN), jnp.bfloat16),  # flattened conv3 features
        ],
        compiler_params=pltpu.CompilerParams(
            dimension_semantics=("parallel",),
            vmem_limit_bytes=VMEM_LIMIT),
    )(imgs, c1["w"], c1["t"], c2["w"], c2["t"], c3["w"], c3["t"],
      hd["w1"], hd["t1"], hd["w2"], hd["b2"])


def neuralnet_forward(x, kparams, *, out_size):
    """x: (N, in_size) with in_size = 3*31*31, as in NeuralNet.forward."""
    n = x.shape[0]
    # x.view(n, 3, 31, 31) -> NHWC -> merge (w, c) into lanes -> zero-pad h by 1.
    imgs = x.reshape(n, 3, 31, 31).transpose(0, 2, 3, 1).reshape(n, 31, 93)
    imgs = jnp.pad(imgs, ((0, 0), (1, 1), (0, 0))).astype(jnp.bfloat16)
    bt = n if n <= 8 else 8
    n_pad = -(-n // bt) * bt
    if n_pad != n:
        imgs = jnp.pad(imgs, ((0, n_pad - n), (0, 0), (0, 0)))
    logits = _fused_forward(imgs, kparams, bt)
    return logits[:n, :out_size]


# --------------------------- parameter creation ------------------------------

def _fold_bn(bias, gamma, beta, mean, var):
    scale = gamma / jnp.sqrt(var + EPS)
    shift = (bias - mean) * scale + beta
    return scale, shift


def init_params(key, out_size):
    """Random parameters in their 'PyTorch-shaped' form (eval-mode BN stats)."""
    def conv_params(k, cin, cout):
        kw, kb, kg, kbt = jax.random.split(k, 4)
        w = jax.random.normal(kw, (3, 3, cin, cout), jnp.float32) * (2.0 / (9 * cin)) ** 0.5
        b = 0.01 * jax.random.normal(kb, (cout,), jnp.float32)
        gamma = 1.0 + 0.1 * jax.random.normal(kg, (cout,), jnp.float32)
        beta = 0.1 * jax.random.normal(kbt, (cout,), jnp.float32)
        scale, shift = _fold_bn(b, gamma, beta, jnp.zeros((cout,)), jnp.ones((cout,)))
        return {"w": w, "scale": scale, "shift": shift}

    k1, k2, k3, k4, k5 = jax.random.split(key, 5)
    params = {"conv1": conv_params(k1, 3, 16),
              "conv2": conv_params(k2, 16, 32),
              "conv3": conv_params(k3, 32, 64)}

    kw1, kb1, kg1, kbt1 = jax.random.split(k4, 4)
    w1 = jax.random.normal(kw1, (576, 100), jnp.float32) * (2.0 / 576) ** 0.5
    b1 = 0.01 * jax.random.normal(kb1, (100,), jnp.float32)
    gamma1 = 1.0 + 0.1 * jax.random.normal(kg1, (100,), jnp.float32)
    beta1 = 0.1 * jax.random.normal(kbt1, (100,), jnp.float32)
    s1, t1 = _fold_bn(b1, gamma1, beta1, jnp.zeros((100,)), jnp.ones((100,)))

    kw2, kb2 = jax.random.split(k5, 2)
    w2 = 0.1 * jax.random.normal(kw2, (100, out_size), jnp.float32)
    b2 = 0.01 * jax.random.normal(kb2, (out_size,), jnp.float32)
    params["head"] = {"w1": w1, "s1": s1, "t1": t1, "w2": w2, "b2": b2}
    return params


def _banded_conv_weight(w, scale, W):
    """(3,3,Cin,Cout) HWIO weights (BN scale folded) -> (3, W*Cin, 2*PB) bf16.

    Rows enumerate the un-padded merged input lanes (w_in*Cin + ci); columns
    pack (parity of w_out, w_out//2, co) with each parity group zero-padded to
    PB lanes; the pool-dropped last output column (w_out = W-1) is not emitted.
    """
    cin, cout = w.shape[2], w.shape[3]
    wp = W // 2
    wf = w * scale[None, None, None, :]
    wi = jnp.arange(W)                                          # w_in
    wo = 2 * jnp.arange(wp)[None, :] + jnp.arange(2)[:, None]   # (parity, j) -> w_out
    dx = jnp.arange(3)
    band = (wi[None, None, None, :] ==
            (wo[None, :, :, None] + dx[:, None, None, None] - 1)).astype(jnp.float32)
    bm = jnp.einsum("xpjw,yxio->ywipjo", band, wf)              # (3, W, Cin, 2, wp, Cout)
    bm = bm.reshape(3, W * cin, 2, wp * cout)
    bm = jnp.pad(bm, ((0, 0), (0, 0), (0, 0), (0, PB - wp * cout)))
    return bm.reshape(3, W * cin, 2 * PB).astype(jnp.bfloat16)


def prepare_kernel_params(params):
    """One-time conversion to kernel layout: banded bf16 conv weights (BN scale
    folded, pool-aware column order), tiled BN shifts, and a head with the
    NCHW-flatten permutation / BN1d scale / lane padding folded into w1."""
    kp = {}
    for name, W, _cin, cout in _CONV_SPECS:
        p = params[name]
        shift_tiled = jnp.tile(p["shift"], W // 2).reshape(1, (W // 2) * cout)
        kp[name] = {
            "w": _banded_conv_weight(p["w"], p["scale"], W),
            "t": shift_tiled.astype(jnp.float32),
        }

    h = params["head"]
    out_size = h["w2"].shape[1]
    # torch Flatten(1,3) order is (c, h, w); kernel features are (h, w, c) with
    # each h-row in its own 256-lane slot.
    w1 = h["w1"].reshape(64, 3, 3, 100)                       # (c, h, w, out)
    w1 = jnp.transpose(w1, (1, 2, 0, 3)).reshape(3, 192, 100) * h["s1"][None, None, :]
    w1 = jnp.pad(w1, ((0, 0), (0, PB - 192), (0, LANES - 100)))
    kp["head"] = {
        "w1": w1.reshape(_HEAD_IN, LANES).astype(jnp.bfloat16),
        "t1": jnp.pad(h["t1"], (0, LANES - 100)).reshape(1, LANES).astype(jnp.float32),
        "w2": jnp.pad(h["w2"], ((0, LANES - 100), (0, LANES - out_size))
                      ).astype(jnp.bfloat16),
        "b2": jnp.pad(h["b2"], (0, LANES - out_size)).reshape(1, LANES).astype(jnp.float32),
    }
    return kp


# ------------------------------ pure-JAX reference ---------------------------

def reference_forward(x, params):
    """Pure-JAX f32 reference with the same eval-mode semantics."""
    n = x.shape[0]
    a = x.reshape(n, 3, 31, 31)
    for name, _, _, _ in _CONV_SPECS:
        p = params[name]
        a = lax.conv_general_dilated(a, p["w"], (1, 1), ((1, 1), (1, 1)),
                                     dimension_numbers=("NCHW", "HWIO", "NCHW"))
        a = a * p["scale"][None, :, None, None] + p["shift"][None, :, None, None]
        a = jnp.where(a > 0, a, jnp.exp(jnp.minimum(a, 0.0)) - 1.0)
        c, hgt = a.shape[1], a.shape[2]
        hp = hgt // 2
        a = a[:, :, :2 * hp, :2 * hp].reshape(n, c, hp, 2, hp, 2).max(axis=(3, 5))
    feat = a.reshape(n, -1)                       # NCHW flatten == torch Flatten(1, 3)
    h = params["head"]
    hid = jnp.maximum((feat @ h["w1"]) * h["s1"] + h["t1"], 0.0)
    return hid @ h["w2"] + h["b2"]


# ----------------------------------- main ------------------------------------

if __name__ == "__main__":
    N = 2
    in_size = 3 * 31 * 31   # 2883, implied by x.view(n, 3, 31, 31)
    out_size = 4

    key = jax.random.PRNGKey(0)
    kx, kparam = jax.random.split(key)
    x = jax.random.normal(kx, (N, in_size), jnp.float32)

    params = init_params(kparam, out_size)
    kparams = prepare_kernel_params(params)

    fwd = jax.jit(neuralnet_forward, static_argnames=("out_size",))
    y = jax.block_until_ready(fwd(x, kparams, out_size=out_size))

    assert y.shape == (N, out_size), y.shape
    assert bool(jnp.all(jnp.isfinite(y)))

    y_ref = reference_forward(x, params)
    err = float(jnp.max(jnp.abs(y - y_ref)))
    ref_mag = float(jnp.max(jnp.abs(y_ref)))
    assert err <= 0.1 * (1.0 + ref_mag), (err, ref_mag)

    print("KERNEL_OK")
</pallas_src>

<mosaic_0001>
module attributes {stable_mosaic.version = 11 : i64} {
  func.func @kernel(%arg0: i32, %arg1: memref<2x33x93xbf16, #tpu.memory_space<vmem>>, %arg2: memref<3x93x512xbf16, #tpu.memory_space<vmem>>, %arg3: memref<1x240xf32, #tpu.memory_space<vmem>>, %arg4: memref<3x240x512xbf16, #tpu.memory_space<vmem>>, %arg5: memref<1x224xf32, #tpu.memory_space<vmem>>, %arg6: memref<3x224x512xbf16, #tpu.memory_space<vmem>>, %arg7: memref<1x192xf32, #tpu.memory_space<vmem>>, %arg8: memref<768x128xbf16, #tpu.memory_space<vmem>>, %arg9: memref<1x128xf32, #tpu.memory_space<vmem>>, %arg10: memref<128x128xbf16, #tpu.memory_space<vmem>>, %arg11: memref<1x128xf32, #tpu.memory_space<vmem>>, %arg12: memref<2x128xf32, #tpu.memory_space<vmem>>, %arg13: memref<2x17x240xbf16, #tpu.memory_space<vmem>>, %arg14: memref<2x9x224xbf16, #tpu.memory_space<vmem>>, %arg15: memref<2x768xbf16, #tpu.memory_space<vmem>>) attributes {dimension_semantics = [#tpu.dimension_semantics<parallel>], iteration_bounds = array<i64: 1>, scalar_prefetch = 0 : i64, scratch_operands = 3 : i64, tpu.core_type = #tpu.core_type<tc>, window_params = [{transform_indices = @transform_0, window_bounds = array<i64: 2, 33, 93>}, {pipeline_mode = #tpu.pipeline_mode<synchronous>, transform_indices = @transform_1, window_bounds = array<i64: 3, 93, 512>}, {pipeline_mode = #tpu.pipeline_mode<synchronous>, transform_indices = @transform_2, window_bounds = array<i64: 1, 240>}, {pipeline_mode = #tpu.pipeline_mode<synchronous>, transform_indices = @transform_3, window_bounds = array<i64: 3, 240, 512>}, {pipeline_mode = #tpu.pipeline_mode<synchronous>, transform_indices = @transform_4, window_bounds = array<i64: 1, 224>}, {pipeline_mode = #tpu.pipeline_mode<synchronous>, transform_indices = @transform_5, window_bounds = array<i64: 3, 224, 512>}, {pipeline_mode = #tpu.pipeline_mode<synchronous>, transform_indices = @transform_6, window_bounds = array<i64: 1, 192>}, {pipeline_mode = #tpu.pipeline_mode<synchronous>, transform_indices = @transform_7, window_bounds = array<i64: 768, 128>}, {pipeline_mode = #tpu.pipeline_mode<synchronous>, transform_indices = @transform_8, window_bounds = array<i64: 1, 128>}, {pipeline_mode = #tpu.pipeline_mode<synchronous>, transform_indices = @transform_9, window_bounds = array<i64: 128, 128>}, {pipeline_mode = #tpu.pipeline_mode<synchronous>, transform_indices = @transform_10, window_bounds = array<i64: 1, 128>}, {transform_indices = @transform_11, window_bounds = array<i64: 2, 128>}]} {
    %cst = arith.constant 0.000000e+00 : bf16
    %0 = vector.broadcast %cst : bf16 to vector<2x17x240xbf16>
    %c0 = arith.constant 0 : index
    %c0_0 = arith.constant 0 : index
    %c0_1 = arith.constant 0 : index
    %1 = vector.load %arg13[%c0, %c0_0, %c0_1] : memref<2x17x240xbf16, #tpu.memory_space<vmem>>, vector<2x17x240xbf16>
    tpu.vector_store %arg13[%c0, %c0_0, %c0_1], %0 {strides = array<i32>} : memref<2x17x240xbf16, #tpu.memory_space<vmem>>, vector<2x17x240xbf16>,
    %cst_2 = arith.constant 0.000000e+00 : bf16
    %2 = vector.broadcast %cst_2 : bf16 to vector<2x9x224xbf16>
    %c0_3 = arith.constant 0 : index
    %c0_4 = arith.constant 0 : index
    %c0_5 = arith.constant 0 : index
    %3 = vector.load %arg14[%c0_3, %c0_4, %c0_5] : memref<2x9x224xbf16, #tpu.memory_space<vmem>>, vector<2x9x224xbf16>
    tpu.vector_store %arg14[%c0_3, %c0_4, %c0_5], %2 {strides = array<i32>} : memref<2x9x224xbf16, #tpu.memory_space<vmem>>, vector<2x9x224xbf16>,
    %cst_6 = arith.constant 0.000000e+00 : bf16
    %4 = vector.broadcast %cst_6 : bf16 to vector<2x768xbf16>
    %c0_7 = arith.constant 0 : index
    %c0_8 = arith.constant 0 : index
    %5 = vector.load %arg15[%c0_7, %c0_8] : memref<2x768xbf16, #tpu.memory_space<vmem>>, vector<2x768xbf16>
    tpu.vector_store %arg15[%c0_7, %c0_8], %4 {strides = array<i32>} : memref<2x768xbf16, #tpu.memory_space<vmem>>, vector<2x768xbf16>,
    %cst_9 = arith.constant 0.000000e+00 : f32
    %6 = vector.broadcast %cst_9 : f32 to vector<30x512xf32>
    %c0_10 = arith.constant 0 : index
    %c0_11 = arith.constant 0 : index
    %c0_12 = arith.constant 0 : index
    %7 = vector.load %arg1[%c0_10, %c0_11, %c0_12] : memref<2x33x93xbf16, #tpu.memory_space<vmem>>, vector<1x30x93xbf16>
    %8 = vector.shape_cast %7 : vector<1x30x93xbf16> to vector<30x93xbf16>
    %c0_13 = arith.constant 0 : index
    %c0_14 = arith.constant 0 : index
    %c0_15 = arith.constant 0 : index
    %9 = vector.load %arg2[%c0_13, %c0_14, %c0_15] : memref<3x93x512xbf16, #tpu.memory_space<vmem>>, vector<1x93x512xbf16>
    %10 = vector.shape_cast %9 : vector<1x93x512xbf16> to vector<93x512xbf16>
    %cst_16 = arith.constant dense<0.000000e+00> : vector<30x512xf32>
    %11 = tpu.matmul %8, %10, %cst_16 {dimension_numbers = #tpu.dot_dimension_numbers<[1], [0], [0], [1], [0, 0, 1, 1], [], []>} : vector<30x93xbf16>, vector<93x512xbf16>, vector<30x512xf32> -> vector<30x512xf32>
    %12 = arith.addf %6, %11 : vector<30x512xf32>
    %c0_17 = arith.constant 0 : index
    %c1 = arith.constant 1 : index
    %c0_18 = arith.constant 0 : index
    %13 = vector.load %arg1[%c0_17, %c1, %c0_18] : memref<2x33x93xbf16, #tpu.memory_space<vmem>>, vector<1x30x93xbf16>
    %14 = vector.shape_cast %13 : vector<1x30x93xbf16> to vector<30x93xbf16>
    %c1_19 = arith.constant 1 : index
    %c0_20 = arith.constant 0 : index
    %c0_21 = arith.constant 0 : index
    %15 = vector.load %arg2[%c1_19, %c0_20, %c0_21] : memref<3x93x512xbf16, #tpu.memory_space<vmem>>, vector<1x93x512xbf16>
    %16 = vector.shape_cast %15 : vector<1x93x512xbf16> to vector<93x512xbf16>
    %cst_22 = arith.constant dense<0.000000e+00> : vector<30x512xf32>
    %17 = tpu.matmul %14, %16, %cst_22 {dimension_numbers = #tpu.dot_dimension_numbers<[1], [0], [0], [1], [0, 0, 1, 1], [], []>} : vector<30x93xbf16>, vector<93x512xbf16>, vector<30x512xf32> -> vector<30x512xf32>
    %18 = arith.addf %12, %17 : vector<30x512xf32>
    %c0_23 = arith.constant 0 : index
    %c2 = arith.constant 2 : index
    %c0_24 = arith.constant 0 : index
    %19 = vector.load %arg1[%c0_23, %c2, %c0_24] : memref<2x33x93xbf16, #tpu.memory_space<vmem>>, vector<1x30x93xbf16>
    %20 = vector.shape_cast %19 : vector<1x30x93xbf16> to vector<30x93xbf16>
    %c2_25 = arith.constant 2 : index
    %c0_26 = arith.constant 0 : index
    %c0_27 = arith.constant 0 : index
    %21 = vector.load %arg2[%c2_25, %c0_26, %c0_27] : memref<3x93x512xbf16, #tpu.memory_space<vmem>>, vector<1x93x512xbf16>
    %22 = vector.shape_cast %21 : vector<1x93x512xbf16> to vector<93x512xbf16>
    %cst_28 = arith.constant dense<0.000000e+00> : vector<30x512xf32>
    %23 = tpu.matmul %20, %22, %cst_28 {dimension_numbers = #tpu.dot_dimension_numbers<[1], [0], [0], [1], [0, 0, 1, 1], [], []>} : vector<30x93xbf16>, vector<93x512xbf16>, vector<30x512xf32> -> vector<30x512xf32>
    %24 = arith.addf %18, %23 : vector<30x512xf32>
    %25 = vector.extract_strided_slice %24 {offsets = [0, 0], sizes = [30, 240], strides = [1, 1]} : vector<30x512xf32> to vector<30x240xf32>
    %26 = vector.extract_strided_slice %24 {offsets = [0, 256], sizes = [30, 240], strides = [1, 1]} : vector<30x512xf32> to vector<30x240xf32>
    %27 = arith.maximumf %25, %26 : vector<30x240xf32>
    %28 = vector.extract_strided_slice %27 {offsets = [0, 0], sizes = [1, 240], strides = [1, 1]} : vector<30x240xf32> to vector<1x240xf32>
    %29 = vector.extract_strided_slice %27 {offsets = [1, 0], sizes = [1, 240], strides = [1, 1]} : vector<30x240xf32> to vector<1x240xf32>
    %30 = arith.maximumf %28, %29 : vector<1x240xf32>
    %31 = vector.extract_strided_slice %27 {offsets = [2, 0], sizes = [1, 240], strides = [1, 1]} : vector<30x240xf32> to vector<1x240xf32>
    %32 = vector.extract_strided_slice %27 {offsets = [3, 0], sizes = [1, 240], strides = [1, 1]} : vector<30x240xf32> to vector<1x240xf32>
    %33 = arith.maximumf %31, %32 : vector<1x240xf32>
    %34 = vector.extract_strided_slice %27 {offsets = [4, 0], sizes = [1, 240], strides = [1, 1]} : vector<30x240xf32> to vector<1x240xf32>
    %35 = vector.extract_strided_slice %27 {offsets = [5, 0], sizes = [1, 240], strides = [1, 1]} : vector<30x240xf32> to vector<1x240xf32>
    %36 = arith.maximumf %34, %35 : vector<1x240xf32>
    %37 = vector.extract_strided_slice %27 {offsets = [6, 0], sizes = [1, 240], strides = [1, 1]} : vector<30x240xf32> to vector<1x240xf32>
    %38 = vector.extract_strided_slice %27 {offsets = [7, 0], sizes = [1, 240], strides = [1, 1]} : vector<30x240xf32> to vector<1x240xf32>
    %39 = arith.maximumf %37, %38 : vector<1x240xf32>
    %40 = vector.extract_strided_slice %27 {offsets = [8, 0], sizes = [1, 240], strides = [1, 1]} : vector<30x240xf32> to vector<1x240xf32>
    %41 = vector.extract_strided_slice %27 {offsets = [9, 0], sizes = [1, 240], strides = [1, 1]} : vector<30x240xf32> to vector<1x240xf32>
    %42 = arith.maximumf %40, %41 : vector<1x240xf32>
    %43 = vector.extract_strided_slice %27 {offsets = [10, 0], sizes = [1, 240], strides = [1, 1]} : vector<30x240xf32> to vector<1x240xf32>
    %44 = vector.extract_strided_slice %27 {offsets = [11, 0], sizes = [1, 240], strides = [1, 1]} : vector<30x240xf32> to vector<1x240xf32>
    %45 = arith.maximumf %43, %44 : vector<1x240xf32>
    %46 = vector.extract_strided_slice %27 {offsets = [12, 0], sizes = [1, 240], strides = [1, 1]} : vector<30x240xf32> to vector<1x240xf32>
    %47 = vector.extract_strided_slice %27 {offsets = [13, 0], sizes = [1, 240], strides = [1, 1]} : vector<30x240xf32> to vector<1x240xf32>
    %48 = arith.maximumf %46, %47 : vector<1x240xf32>
    %49 = vector.extract_strided_slice %27 {offsets = [14, 0], sizes = [1, 240], strides = [1, 1]} : vector<30x240xf32> to vector<1x240xf32>
    %50 = vector.extract_strided_slice %27 {offsets = [15, 0], sizes = [1, 240], strides = [1, 1]} : vector<30x240xf32> to vector<1x240xf32>
    %51 = arith.maximumf %49, %50 : vector<1x240xf32>
    %52 = vector.extract_strided_slice %27 {offsets = [16, 0], sizes = [1, 240], strides = [1, 1]} : vector<30x240xf32> to vector<1x240xf32>
    %53 = vector.extract_strided_slice %27 {offsets = [17, 0], sizes = [1, 240], strides = [1, 1]} : vector<30x240xf32> to vector<1x240xf32>
    %54 = arith.maximumf %52, %53 : vector<1x240xf32>
    %55 = vector.extract_strided_slice %27 {offsets = [18, 0], sizes = [1, 240], strides = [1, 1]} : vector<30x240xf32> to vector<1x240xf32>
    %56 = vector.extract_strided_slice %27 {offsets = [19, 0], sizes = [1, 240], strides = [1, 1]} : vector<30x240xf32> to vector<1x240xf32>
    %57 = arith.maximumf %55, %56 : vector<1x240xf32>
    %58 = vector.extract_strided_slice %27 {offsets = [20, 0], sizes = [1, 240], strides = [1, 1]} : vector<30x240xf32> to vector<1x240xf32>
    %59 = vector.extract_strided_slice %27 {offsets = [21, 0], sizes = [1, 240], strides = [1, 1]} : vector<30x240xf32> to vector<1x240xf32>
    %60 = arith.maximumf %58, %59 : vector<1x240xf32>
    %61 = vector.extract_strided_slice %27 {offsets = [22, 0], sizes = [1, 240], strides = [1, 1]} : vector<30x240xf32> to vector<1x240xf32>
    %62 = vector.extract_strided_slice %27 {offsets = [23, 0], sizes = [1, 240], strides = [1, 1]} : vector<30x240xf32> to vector<1x240xf32>
    %63 = arith.maximumf %61, %62 : vector<1x240xf32>
    %64 = vector.extract_strided_slice %27 {offsets = [24, 0], sizes = [1, 240], strides = [1, 1]} : vector<30x240xf32> to vector<1x240xf32>
    %65 = vector.extract_strided_slice %27 {offsets = [25, 0], sizes = [1, 240], strides = [1, 1]} : vector<30x240xf32> to vector<1x240xf32>
    %66 = arith.maximumf %64, %65 : vector<1x240xf32>
    %67 = vector.extract_strided_slice %27 {offsets = [26, 0], sizes = [1, 240], strides = [1, 1]} : vector<30x240xf32> to vector<1x240xf32>
    %68 = vector.extract_strided_slice %27 {offsets = [27, 0], sizes = [1, 240], strides = [1, 1]} : vector<30x240xf32> to vector<1x240xf32>
    %69 = arith.maximumf %67, %68 : vector<1x240xf32>
    %70 = vector.extract_strided_slice %27 {offsets = [28, 0], sizes = [1, 240], strides = [1, 1]} : vector<30x240xf32> to vector<1x240xf32>
    %71 = vector.extract_strided_slice %27 {offsets = [29, 0], sizes = [1, 240], strides = [1, 1]} : vector<30x240xf32> to vector<1x240xf32>
    %72 = arith.maximumf %70, %71 : vector<1x240xf32>
    %73 = tpu.concatenate %30, %33, %36, %39, %42, %45, %48, %51, %54, %57, %60, %63, %66, %69, %72 in 0 : vector<1x240xf32>, vector<1x240xf32>, vector<1x240xf32>, vector<1x240xf32>, vector<1x240xf32>, vector<1x240xf32>, vector<1x240xf32>, vector<1x240xf32>, vector<1x240xf32>, vector<1x240xf32>, vector<1x240xf32>, vector<1x240xf32>, vector<1x240xf32>, vector<1x240xf32>, vector<1x240xf32> -> vector<15x240xf32>
    %c0_29 = arith.constant 0 : index
    %c0_30 = arith.constant 0 : index
    %74 = vector.load %arg3[%c0_29, %c0_30] : memref<1x240xf32, #tpu.memory_space<vmem>>, vector<1x240xf32>
    %75 = vector.broadcast %74 : vector<1x240xf32> to vector<15x240xf32>
    %76 = arith.addf %73, %75 : vector<15x240xf32>
    %cst_31 = arith.constant 0.000000e+00 : f32
    %77 = vector.broadcast %cst_31 : f32 to vector<15x240xf32>
    %78 = arith.cmpf ogt, %76, %77 : vector<15x240xf32>
    %cst_32 = arith.constant 0.000000e+00 : f32
    %79 = vector.broadcast %cst_32 : f32 to vector<15x240xf32>
    %80 = arith.minimumf %76, %79 : vector<15x240xf32>
    %81 = math.exp %80 : vector<15x240xf32>
    %cst_33 = arith.constant 1.000000e+00 : f32
    %82 = vector.broadcast %cst_33 : f32 to vector<15x240xf32>
    %83 = arith.subf %81, %82 : vector<15x240xf32>
    %84 = arith.select %78, %76, %83 : vector<15x240xi1>, vector<15x240xf32>
    %85 = arith.truncf %84 : vector<15x240xf32> to vector<15x240xbf16>
    %c0_34 = arith.constant 0 : index
    %c1_35 = arith.constant 1 : index
    %c0_36 = arith.constant 0 : index
    %86 = vector.load %arg13[%c0_34, %c1_35, %c0_36] : memref<2x17x240xbf16, #tpu.memory_space<vmem>>, vector<1x15x240xbf16>
    %87 = vector.shape_cast %86 : vector<1x15x240xbf16> to vector<15x240xbf16>
    %88 = vector.shape_cast %85 : vector<15x240xbf16> to vector<1x15x240xbf16>
    tpu.vector_store %arg13[%c0_34, %c1_35, %c0_36], %88 {strides = array<i32>} : memref<2x17x240xbf16, #tpu.memory_space<vmem>>, vector<1x15x240xbf16>,
    %cst_37 = arith.constant 0.000000e+00 : f32
    %89 = vector.broadcast %cst_37 : f32 to vector<14x512xf32>
    %c0_38 = arith.constant 0 : index
    %c0_39 = arith.constant 0 : index
    %c0_40 = arith.constant 0 : index
    %90 = vector.load %arg13[%c0_38, %c0_39, %c0_40] : memref<2x17x240xbf16, #tpu.memory_space<vmem>>, vector<1x14x240xbf16>
    %91 = vector.shape_cast %90 : vector<1x14x240xbf16> to vector<14x240xbf16>
    %c0_41 = arith.constant 0 : index
    %c0_42 = arith.constant 0 : index
    %c0_43 = arith.constant 0 : index
    %92 = vector.load %arg4[%c0_41, %c0_42, %c0_43] : memref<3x240x512xbf16, #tpu.memory_space<vmem>>, vector<1x240x512xbf16>
    %93 = vector.shape_cast %92 : vector<1x240x512xbf16> to vector<240x512xbf16>
    %cst_44 = arith.constant dense<0.000000e+00> : vector<14x512xf32>
    %94 = tpu.matmul %91, %93, %cst_44 {dimension_numbers = #tpu.dot_dimension_numbers<[1], [0], [0], [1], [0, 0, 1, 1], [], []>} : vector<14x240xbf16>, vector<240x512xbf16>, vector<14x512xf32> -> vector<14x512xf32>
    %95 = arith.addf %89, %94 : vector<14x512xf32>
    %c0_45 = arith.constant 0 : index
    %c1_46 = arith.constant 1 : index
    %c0_47 = arith.constant 0 : index
    %96 = vector.load %arg13[%c0_45, %c1_46, %c0_47] : memref<2x17x240xbf16, #tpu.memory_space<vmem>>, vector<1x14x240xbf16>
    %97 = vector.shape_cast %96 : vector<1x14x240xbf16> to vector<14x240xbf16>
    %c1_48 = arith.constant 1 : index
    %c0_49 = arith.constant 0 : index
    %c0_50 = arith.constant 0 : index
    %98 = vector.load %arg4[%c1_48, %c0_49, %c0_50] : memref<3x240x512xbf16, #tpu.memory_space<vmem>>, vector<1x240x512xbf16>
    %99 = vector.shape_cast %98 : vector<1x240x512xbf16> to vector<240x512xbf16>
    %cst_51 = arith.constant dense<0.000000e+00> : vector<14x512xf32>
    %100 = tpu.matmul %97, %99, %cst_51 {dimension_numbers = #tpu.dot_dimension_numbers<[1], [0], [0], [1], [0, 0, 1, 1], [], []>} : vector<14x240xbf16>, vector<240x512xbf16>, vector<14x512xf32> -> vector<14x512xf32>
    %101 = arith.addf %95, %100 : vector<14x512xf32>
    %c0_52 = arith.constant 0 : index
    %c2_53 = arith.constant 2 : index
    %c0_54 = arith.constant 0 : index
    %102 = vector.load %arg13[%c0_52, %c2_53, %c0_54] : memref<2x17x240xbf16, #tpu.memory_space<vmem>>, vector<1x14x240xbf16>
    %103 = vector.shape_cast %102 : vector<1x14x240xbf16> to vector<14x240xbf16>
    %c2_55 = arith.constant 2 : index
    %c0_56 = arith.constant 0 : index
    %c0_57 = arith.constant 0 : index
    %104 = vector.load %arg4[%c2_55, %c0_56, %c0_57] : memref<3x240x512xbf16, #tpu.memory_space<vmem>>, vector<1x240x512xbf16>
    %105 = vector.shape_cast %104 : vector<1x240x512xbf16> to vector<240x512xbf16>
    %cst_58 = arith.constant dense<0.000000e+00> : vector<14x512xf32>
    %106 = tpu.matmul %103, %105, %cst_58 {dimension_numbers = #tpu.dot_dimension_numbers<[1], [0], [0], [1], [0, 0, 1, 1], [], []>} : vector<14x240xbf16>, vector<240x512xbf16>, vector<14x512xf32> -> vector<14x512xf32>
    %107 = arith.addf %101, %106 : vector<14x512xf32>
    %108 = vector.extract_strided_slice %107 {offsets = [0, 0], sizes = [14, 224], strides = [1, 1]} : vector<14x512xf32> to vector<14x224xf32>
    %109 = vector.extract_strided_slice %107 {offsets = [0, 256], sizes = [14, 224], strides = [1, 1]} : vector<14x512xf32> to vector<14x224xf32>
    %110 = arith.maximumf %108, %109 : vector<14x224xf32>
    %111 = vector.extract_strided_slice %110 {offsets = [0, 0], sizes = [1, 224], strides = [1, 1]} : vector<14x224xf32> to vector<1x224xf32>
    %112 = vector.extract_strided_slice %110 {offsets = [1, 0], sizes = [1, 224], strides = [1, 1]} : vector<14x224xf32> to vector<1x224xf32>
    %113 = arith.maximumf %111, %112 : vector<1x224xf32>
    %114 = vector.extract_strided_slice %110 {offsets = [2, 0], sizes = [1, 224], strides = [1, 1]} : vector<14x224xf32> to vector<1x224xf32>
    %115 = vector.extract_strided_slice %110 {offsets = [3, 0], sizes = [1, 224], strides = [1, 1]} : vector<14x224xf32> to vector<1x224xf32>
    %116 = arith.maximumf %114, %115 : vector<1x224xf32>
    %117 = vector.extract_strided_slice %110 {offsets = [4, 0], sizes = [1, 224], strides = [1, 1]} : vector<14x224xf32> to vector<1x224xf32>
    %118 = vector.extract_strided_slice %110 {offsets = [5, 0], sizes = [1, 224], strides = [1, 1]} : vector<14x224xf32> to vector<1x224xf32>
    %119 = arith.maximumf %117, %118 : vector<1x224xf32>
    %120 = vector.extract_strided_slice %110 {offsets = [6, 0], sizes = [1, 224], strides = [1, 1]} : vector<14x224xf32> to vector<1x224xf32>
    %121 = vector.extract_strided_slice %110 {offsets = [7, 0], sizes = [1, 224], strides = [1, 1]} : vector<14x224xf32> to vector<1x224xf32>
    %122 = arith.maximumf %120, %121 : vector<1x224xf32>
    %123 = vector.extract_strided_slice %110 {offsets = [8, 0], sizes = [1, 224], strides = [1, 1]} : vector<14x224xf32> to vector<1x224xf32>
    %124 = vector.extract_strided_slice %110 {offsets = [9, 0], sizes = [1, 224], strides = [1, 1]} : vector<14x224xf32> to vector<1x224xf32>
    %125 = arith.maximumf %123, %124 : vector<1x224xf32>
    %126 = vector.extract_strided_slice %110 {offsets = [10, 0], sizes = [1, 224], strides = [1, 1]} : vector<14x224xf32> to vector<1x224xf32>
    %127 = vector.extract_strided_slice %110 {offsets = [11, 0], sizes = [1, 224], strides = [1, 1]} : vector<14x224xf32> to vector<1x224xf32>
    %128 = arith.maximumf %126, %127 : vector<1x224xf32>
    %129 = vector.extract_strided_slice %110 {offsets = [12, 0], sizes = [1, 224], strides = [1, 1]} : vector<14x224xf32> to vector<1x224xf32>
    %130 = vector.extract_strided_slice %110 {offsets = [13, 0], sizes = [1, 224], strides = [1, 1]} : vector<14x224xf32> to vector<1x224xf32>
    %131 = arith.maximumf %129, %130 : vector<1x224xf32>
    %132 = tpu.concatenate %113, %116, %119, %122, %125, %128, %131 in 0 : vector<1x224xf32>, vector<1x224xf32>, vector<1x224xf32>, vector<1x224xf32>, vector<1x224xf32>, vector<1x224xf32>, vector<1x224xf32> -> vector<7x224xf32>
    %c0_59 = arith.constant 0 : index
    %c0_60 = arith.constant 0 : index
    %133 = vector.load %arg5[%c0_59, %c0_60] : memref<1x224xf32, #tpu.memory_space<vmem>>, vector<1x224xf32>
    %134 = vector.broadcast %133 : vector<1x224xf32> to vector<7x224xf32>
    %135 = arith.addf %132, %134 : vector<7x224xf32>
    %cst_61 = arith.constant 0.000000e+00 : f32
    %136 = vector.broadcast %cst_61 : f32 to vector<7x224xf32>
    %137 = arith.cmpf ogt, %135, %136 : vector<7x224xf32>
    %cst_62 = arith.constant 0.000000e+00 : f32
    %138 = vector.broadcast %cst_62 : f32 to vector<7x224xf32>
    %139 = arith.minimumf %135, %138 : vector<7x224xf32>
    %140 = math.exp %139 : vector<7x224xf32>
    %cst_63 = arith.constant 1.000000e+00 : f32
    %141 = vector.broadcast %cst_63 : f32 to vector<7x224xf32>
    %142 = arith.subf %140, %141 : vector<7x224xf32>
    %143 = arith.select %137, %135, %142 : vector<7x224xi1>, vector<7x224xf32>
    %144 = arith.truncf %143 : vector<7x224xf32> to vector<7x224xbf16>
    %c0_64 = arith.constant 0 : index
    %c1_65 = arith.constant 1 : index
    %c0_66 = arith.constant 0 : index
    %145 = vector.load %arg14[%c0_64, %c1_65, %c0_66] : memref<2x9x224xbf16, #tpu.memory_space<vmem>>, vector<1x7x224xbf16>
    %146 = vector.shape_cast %145 : vector<1x7x224xbf16> to vector<7x224xbf16>
    %147 = vector.shape_cast %144 : vector<7x224xbf16> to vector<1x7x224xbf16>
    tpu.vector_store %arg14[%c0_64, %c1_65, %c0_66], %147 {strides = array<i32>} : memref<2x9x224xbf16, #tpu.memory_space<vmem>>, vector<1x7x224xbf16>,
    %cst_67 = arith.constant 0.000000e+00 : f32
    %148 = vector.broadcast %cst_67 : f32 to vector<6x512xf32>
    %c0_68 = arith.constant 0 : index
    %c0_69 = arith.constant 0 : index
    %c0_70 = arith.constant 0 : index
    %149 = vector.load %arg14[%c0_68, %c0_69, %c0_70] : memref<2x9x224xbf16, #tpu.memory_space<vmem>>, vector<1x6x224xbf16>
    %150 = vector.shape_cast %149 : vector<1x6x224xbf16> to vector<6x224xbf16>
    %c0_71 = arith.constant 0 : index
    %c0_72 = arith.constant 0 : index
    %c0_73 = arith.constant 0 : index
    %151 = vector.load %arg6[%c0_71, %c0_72, %c0_73] : memref<3x224x512xbf16, #tpu.memory_space<vmem>>, vector<1x224x512xbf16>
    %152 = vector.shape_cast %151 : vector<1x224x512xbf16> to vector<224x512xbf16>
    %cst_74 = arith.constant dense<0.000000e+00> : vector<6x512xf32>
    %153 = tpu.matmul %150, %152, %cst_74 {dimension_numbers = #tpu.dot_dimension_numbers<[1], [0], [0], [1], [0, 0, 1, 1], [], []>} : vector<6x224xbf16>, vector<224x512xbf16>, vector<6x512xf32> -> vector<6x512xf32>
    %154 = arith.addf %148, %153 : vector<6x512xf32>
    %c0_75 = arith.constant 0 : index
    %c1_76 = arith.constant 1 : index
    %c0_77 = arith.constant 0 : index
    %155 = vector.load %arg14[%c0_75, %c1_76, %c0_77] : memref<2x9x224xbf16, #tpu.memory_space<vmem>>, vector<1x6x224xbf16>
    %156 = vector.shape_cast %155 : vector<1x6x224xbf16> to vector<6x224xbf16>
    %c1_78 = arith.constant 1 : index
    %c0_79 = arith.constant 0 : index
    %c0_80 = arith.constant 0 : index
    %157 = vector.load %arg6[%c1_78, %c0_79, %c0_80] : memref<3x224x512xbf16, #tpu.memory_space<vmem>>, vector<1x224x512xbf16>
    %158 = vector.shape_cast %157 : vector<1x224x512xbf16> to vector<224x512xbf16>
    %cst_81 = arith.constant dense<0.000000e+00> : vector<6x512xf32>
    %159 = tpu.matmul %156, %158, %cst_81 {dimension_numbers = #tpu.dot_dimension_numbers<[1], [0], [0], [1], [0, 0, 1, 1], [], []>} : vector<6x224xbf16>, vector<224x512xbf16>, vector<6x512xf32> -> vector<6x512xf32>
    %160 = arith.addf %154, %159 : vector<6x512xf32>
    %c0_82 = arith.constant 0 : index
    %c2_83 = arith.constant 2 : index
    %c0_84 = arith.constant 0 : index
    %161 = vector.load %arg14[%c0_82, %c2_83, %c0_84] : memref<2x9x224xbf16, #tpu.memory_space<vmem>>, vector<1x6x224xbf16>
    %162 = vector.shape_cast %161 : vector<1x6x224xbf16> to vector<6x224xbf16>
    %c2_85 = arith.constant 2 : index
    %c0_86 = arith.constant 0 : index
    %c0_87 = arith.constant 0 : index
    %163 = vector.load %arg6[%c2_85, %c0_86, %c0_87] : memref<3x224x512xbf16, #tpu.memory_space<vmem>>, vector<1x224x512xbf16>
    %164 = vector.shape_cast %163 : vector<1x224x512xbf16> to vector<224x512xbf16>
    %cst_88 = arith.constant dense<0.000000e+00> : vector<6x512xf32>
    %165 = tpu.matmul %162, %164, %cst_88 {dimension_numbers = #tpu.dot_dimension_numbers<[1], [0], [0], [1], [0, 0, 1, 1], [], []>} : vector<6x224xbf16>, vector<224x512xbf16>, vector<6x512xf32> -> vector<6x512xf32>
    %166 = arith.addf %160, %165 : vector<6x512xf32>
    %167 = vector.extract_strided_slice %166 {offsets = [0, 0], sizes = [6, 192], strides = [1, 1]} : vector<6x512xf32> to vector<6x192xf32>
    %168 = vector.extract_strided_slice %166 {offsets = [0, 256], sizes = [6, 192], strides = [1, 1]} : vector<6x512xf32> to vector<6x192xf32>
    %169 = arith.maximumf %167, %168 : vector<6x192xf32>
    %170 = vector.extract_strided_slice %169 {offsets = [0, 0], sizes = [1, 192], strides = [1, 1]} : vector<6x192xf32> to vector<1x192xf32>
    %171 = vector.extract_strided_slice %169 {offsets = [1, 0], sizes = [1, 192], strides = [1, 1]} : vector<6x192xf32> to vector<1x192xf32>
    %172 = arith.maximumf %170, %171 : vector<1x192xf32>
    %173 = vector.extract_strided_slice %169 {offsets = [2, 0], sizes = [1, 192], strides = [1, 1]} : vector<6x192xf32> to vector<1x192xf32>
    %174 = vector.extract_strided_slice %169 {offsets = [3, 0], sizes = [1, 192], strides = [1, 1]} : vector<6x192xf32> to vector<1x192xf32>
    %175 = arith.maximumf %173, %174 : vector<1x192xf32>
    %176 = vector.extract_strided_slice %169 {offsets = [4, 0], sizes = [1, 192], strides = [1, 1]} : vector<6x192xf32> to vector<1x192xf32>
    %177 = vector.extract_strided_slice %169 {offsets = [5, 0], sizes = [1, 192], strides = [1, 1]} : vector<6x192xf32> to vector<1x192xf32>
    %178 = arith.maximumf %176, %177 : vector<1x192xf32>
    %179 = tpu.concatenate %172, %175, %178 in 0 : vector<1x192xf32>, vector<1x192xf32>, vector<1x192xf32> -> vector<3x192xf32>
    %c0_89 = arith.constant 0 : index
    %c0_90 = arith.constant 0 : index
    %180 = vector.load %arg7[%c0_89, %c0_90] : memref<1x192xf32, #tpu.memory_space<vmem>>, vector<1x192xf32>
    %181 = vector.broadcast %180 : vector<1x192xf32> to vector<3x192xf32>
    %182 = arith.addf %179, %181 : vector<3x192xf32>
    %cst_91 = arith.constant 0.000000e+00 : f32
    %183 = vector.broadcast %cst_91 : f32 to vector<3x192xf32>
    %184 = arith.cmpf ogt, %182, %183 : vector<3x192xf32>
    %cst_92 = arith.constant 0.000000e+00 : f32
    %185 = vector.broadcast %cst_92 : f32 to vector<3x192xf32>
    %186 = arith.minimumf %182, %185 : vector<3x192xf32>
    %187 = math.exp %186 : vector<3x192xf32>
    %cst_93 = arith.constant 1.000000e+00 : f32
    %188 = vector.broadcast %cst_93 : f32 to vector<3x192xf32>
    %189 = arith.subf %187, %188 : vector<3x192xf32>
    %190 = arith.select %184, %182, %189 : vector<3x192xi1>, vector<3x192xf32>
    %191 = vector.extract_strided_slice %190 {offsets = [0, 0], sizes = [1, 192], strides = [1, 1]} : vector<3x192xf32> to vector<1x192xf32>
    %192 = arith.truncf %191 : vector<1x192xf32> to vector<1x192xbf16>
    %c0_94 = arith.constant 0 : index
    %c0_95 = arith.constant 0 : index
    %193 = vector.load %arg15[%c0_94, %c0_95] : memref<2x768xbf16, #tpu.memory_space<vmem>>, vector<1x192xbf16>
    tpu.vector_store %arg15[%c0_94, %c0_95], %192 {strides = array<i32>} : memref<2x768xbf16, #tpu.memory_space<vmem>>, vector<1x192xbf16>,
    %194 = vector.extract_strided_slice %190 {offsets = [1, 0], sizes = [1, 192], strides = [1, 1]} : vector<3x192xf32> to vector<1x192xf32>
    %195 = arith.truncf %194 : vector<1x192xf32> to vector<1x192xbf16>
    %c0_96 = arith.constant 0 : index
    %c256 = arith.constant 256 : index
    %196 = vector.load %arg15[%c0_96, %c256] : memref<2x768xbf16, #tpu.memory_space<vmem>>, vector<1x192xbf16>
    tpu.vector_store %arg15[%c0_96, %c256], %195 {strides = array<i32>} : memref<2x768xbf16, #tpu.memory_space<vmem>>, vector<1x192xbf16>,
    %197 = vector.extract_strided_slice %190 {offsets = [2, 0], sizes = [1, 192], strides = [1, 1]} : vector<3x192xf32> to vector<1x192xf32>
    %198 = arith.truncf %197 : vector<1x192xf32> to vector<1x192xbf16>
    %c0_97 = arith.constant 0 : index
    %c512 = arith.constant 512 : index
    %199 = vector.load %arg15[%c0_97, %c512] : memref<2x768xbf16, #tpu.memory_space<vmem>>, vector<1x192xbf16>
    tpu.vector_store %arg15[%c0_97, %c512], %198 {strides = array<i32>} : memref<2x768xbf16, #tpu.memory_space<vmem>>, vector<1x192xbf16>,
    %cst_98 = arith.constant 0.000000e+00 : f32
    %200 = vector.broadcast %cst_98 : f32 to vector<30x512xf32>
    %c1_99 = arith.constant 1 : index
    %c0_100 = arith.constant 0 : index
    %c0_101 = arith.constant 0 : index
    %201 = vector.load %arg1[%c1_99, %c0_100, %c0_101] : memref<2x33x93xbf16, #tpu.memory_space<vmem>>, vector<1x30x93xbf16>
    %202 = vector.shape_cast %201 : vector<1x30x93xbf16> to vector<30x93xbf16>
    %c0_102 = arith.constant 0 : index
    %c0_103 = arith.constant 0 : index
    %c0_104 = arith.constant 0 : index
    %203 = vector.load %arg2[%c0_102, %c0_103, %c0_104] : memref<3x93x512xbf16, #tpu.memory_space<vmem>>, vector<1x93x512xbf16>
    %204 = vector.shape_cast %203 : vector<1x93x512xbf16> to vector<93x512xbf16>
    %cst_105 = arith.constant dense<0.000000e+00> : vector<30x512xf32>
    %205 = tpu.matmul %202, %204, %cst_105 {dimension_numbers = #tpu.dot_dimension_numbers<[1], [0], [0], [1], [0, 0, 1, 1], [], []>} : vector<30x93xbf16>, vector<93x512xbf16>, vector<30x512xf32> -> vector<30x512xf32>
    %206 = arith.addf %200, %205 : vector<30x512xf32>
    %c1_106 = arith.constant 1 : index
    %c1_107 = arith.constant 1 : index
    %c0_108 = arith.constant 0 : index
    %207 = vector.load %arg1[%c1_106, %c1_107, %c0_108] : memref<2x33x93xbf16, #tpu.memory_space<vmem>>, vector<1x30x93xbf16>
    %208 = vector.shape_cast %207 : vector<1x30x93xbf16> to vector<30x93xbf16>
    %c1_109 = arith.constant 1 : index
    %c0_110 = arith.constant 0 : index
    %c0_111 = arith.constant 0 : index
    %209 = vector.load %arg2[%c1_109, %c0_110, %c0_111] : memref<3x93x512xbf16, #tpu.memory_space<vmem>>, vector<1x93x512xbf16>
    %210 = vector.shape_cast %209 : vector<1x93x512xbf16> to vector<93x512xbf16>
    %cst_112 = arith.constant dense<0.000000e+00> : vector<30x512xf32>
    %211 = tpu.matmul %208, %210, %cst_112 {dimension_numbers = #tpu.dot_dimension_numbers<[1], [0], [0], [1], [0, 0, 1, 1], [], []>} : vector<30x93xbf16>, vector<93x512xbf16>, vector<30x512xf32> -> vector<30x512xf32>
    %212 = arith.addf %206, %211 : vector<30x512xf32>
    %c1_113 = arith.constant 1 : index
    %c2_114 = arith.constant 2 : index
    %c0_115 = arith.constant 0 : index
    %213 = vector.load %arg1[%c1_113, %c2_114, %c0_115] : memref<2x33x93xbf16, #tpu.memory_space<vmem>>, vector<1x30x93xbf16>
    %214 = vector.shape_cast %213 : vector<1x30x93xbf16> to vector<30x93xbf16>
    %c2_116 = arith.constant 2 : index
    %c0_117 = arith.constant 0 : index
    %c0_118 = arith.constant 0 : index
    %215 = vector.load %arg2[%c2_116, %c0_117, %c0_118] : memref<3x93x512xbf16, #tpu.memory_space<vmem>>, vector<1x93x512xbf16>
    %216 = vector.shape_cast %215 : vector<1x93x512xbf16> to vector<93x512xbf16>
    %cst_119 = arith.constant dense<0.000000e+00> : vector<30x512xf32>
    %217 = tpu.matmul %214, %216, %cst_119 {dimension_numbers = #tpu.dot_dimension_numbers<[1], [0], [0], [1], [0, 0, 1, 1], [], []>} : vector<30x93xbf16>, vector<93x512xbf16>, vector<30x512xf32> -> vector<30x512xf32>
    %218 = arith.addf %212, %217 : vector<30x512xf32>
    %219 = vector.extract_strided_slice %218 {offsets = [0, 0], sizes = [30, 240], strides = [1, 1]} : vector<30x512xf32> to vector<30x240xf32>
    %220 = vector.extract_strided_slice %218 {offsets = [0, 256], sizes = [30, 240], strides = [1, 1]} : vector<30x512xf32> to vector<30x240xf32>
    %221 = arith.maximumf %219, %220 : vector<30x240xf32>
    %222 = vector.extract_strided_slice %221 {offsets = [0, 0], sizes = [1, 240], strides = [1, 1]} : vector<30x240xf32> to vector<1x240xf32>
    %223 = vector.extract_strided_slice %221 {offsets = [1, 0], sizes = [1, 240], strides = [1, 1]} : vector<30x240xf32> to vector<1x240xf32>
    %224 = arith.maximumf %222, %223 : vector<1x240xf32>
    %225 = vector.extract_strided_slice %221 {offsets = [2, 0], sizes = [1, 240], strides = [1, 1]} : vector<30x240xf32> to vector<1x240xf32>
    %226 = vector.extract_strided_slice %221 {offsets = [3, 0], sizes = [1, 240], strides = [1, 1]} : vector<30x240xf32> to vector<1x240xf32>
    %227 = arith.maximumf %225, %226 : vector<1x240xf32>
    %228 = vector.extract_strided_slice %221 {offsets = [4, 0], sizes = [1, 240], strides = [1, 1]} : vector<30x240xf32> to vector<1x240xf32>
    %229 = vector.extract_strided_slice %221 {offsets = [5, 0], sizes = [1, 240], strides = [1, 1]} : vector<30x240xf32> to vector<1x240xf32>
    %230 = arith.maximumf %228, %229 : vector<1x240xf32>
    %231 = vector.extract_strided_slice %221 {offsets = [6, 0], sizes = [1, 240], strides = [1, 1]} : vector<30x240xf32> to vector<1x240xf32>
    %232 = vector.extract_strided_slice %221 {offsets = [7, 0], sizes = [1, 240], strides = [1, 1]} : vector<30x240xf32> to vector<1x240xf32>
    %233 = arith.maximumf %231, %232 : vector<1x240xf32>
    %234 = vector.extract_strided_slice %221 {offsets = [8, 0], sizes = [1, 240], strides = [1, 1]} : vector<30x240xf32> to vector<1x240xf32>
    %235 = vector.extract_strided_slice %221 {offsets = [9, 0], sizes = [1, 240], strides = [1, 1]} : vector<30x240xf32> to vector<1x240xf32>
    %236 = arith.maximumf %234, %235 : vector<1x240xf32>
    %237 = vector.extract_strided_slice %221 {offsets = [10, 0], sizes = [1, 240], strides = [1, 1]} : vector<30x240xf32> to vector<1x240xf32>
    %238 = vector.extract_strided_slice %221 {offsets = [11, 0], sizes = [1, 240], strides = [1, 1]} : vector<30x240xf32> to vector<1x240xf32>
    %239 = arith.maximumf %237, %238 : vector<1x240xf32>
    %240 = vector.extract_strided_slice %221 {offsets = [12, 0], sizes = [1, 240], strides = [1, 1]} : vector<30x240xf32> to vector<1x240xf32>
    %241 = vector.extract_strided_slice %221 {offsets = [13, 0], sizes = [1, 240], strides = [1, 1]} : vector<30x240xf32> to vector<1x240xf32>
    %242 = arith.maximumf %240, %241 : vector<1x240xf32>
    %243 = vector.extract_strided_slice %221 {offsets = [14, 0], sizes = [1, 240], strides = [1, 1]} : vector<30x240xf32> to vector<1x240xf32>
    %244 = vector.extract_strided_slice %221 {offsets = [15, 0], sizes = [1, 240], strides = [1, 1]} : vector<30x240xf32> to vector<1x240xf32>
    %245 = arith.maximumf %243, %244 : vector<1x240xf32>
    %246 = vector.extract_strided_slice %221 {offsets = [16, 0], sizes = [1, 240], strides = [1, 1]} : vector<30x240xf32> to vector<1x240xf32>
    %247 = vector.extract_strided_slice %221 {offsets = [17, 0], sizes = [1, 240], strides = [1, 1]} : vector<30x240xf32> to vector<1x240xf32>
    %248 = arith.maximumf %246, %247 : vector<1x240xf32>
    %249 = vector.extract_strided_slice %221 {offsets = [18, 0], sizes = [1, 240], strides = [1, 1]} : vector<30x240xf32> to vector<1x240xf32>
    %250 = vector.extract_strided_slice %221 {offsets = [19, 0], sizes = [1, 240], strides = [1, 1]} : vector<30x240xf32> to vector<1x240xf32>
    %251 = arith.maximumf %249, %250 : vector<1x240xf32>
    %252 = vector.extract_strided_slice %221 {offsets = [20, 0], sizes = [1, 240], strides = [1, 1]} : vector<30x240xf32> to vector<1x240xf32>
    %253 = vector.extract_strided_slice %221 {offsets = [21, 0], sizes = [1, 240], strides = [1, 1]} : vector<30x240xf32> to vector<1x240xf32>
    %254 = arith.maximumf %252, %253 : vector<1x240xf32>
    %255 = vector.extract_strided_slice %221 {offsets = [22, 0], sizes = [1, 240], strides = [1, 1]} : vector<30x240xf32> to vector<1x240xf32>
    %256 = vector.extract_strided_slice %221 {offsets = [23, 0], sizes = [1, 240], strides = [1, 1]} : vector<30x240xf32> to vector<1x240xf32>
    %257 = arith.maximumf %255, %256 : vector<1x240xf32>
    %258 = vector.extract_strided_slice %221 {offsets = [24, 0], sizes = [1, 240], strides = [1, 1]} : vector<30x240xf32> to vector<1x240xf32>
    %259 = vector.extract_strided_slice %221 {offsets = [25, 0], sizes = [1, 240], strides = [1, 1]} : vector<30x240xf32> to vector<1x240xf32>
    %260 = arith.maximumf %258, %259 : vector<1x240xf32>
    %261 = vector.extract_strided_slice %221 {offsets = [26, 0], sizes = [1, 240], strides = [1, 1]} : vector<30x240xf32> to vector<1x240xf32>
    %262 = vector.extract_strided_slice %221 {offsets = [27, 0], sizes = [1, 240], strides = [1, 1]} : vector<30x240xf32> to vector<1x240xf32>
    %263 = arith.maximumf %261, %262 : vector<1x240xf32>
    %264 = vector.extract_strided_slice %221 {offsets = [28, 0], sizes = [1, 240], strides = [1, 1]} : vector<30x240xf32> to vector<1x240xf32>
    %265 = vector.extract_strided_slice %221 {offsets = [29, 0], sizes = [1, 240], strides = [1, 1]} : vector<30x240xf32> to vector<1x240xf32>
    %266 = arith.maximumf %264, %265 : vector<1x240xf32>
    %267 = tpu.concatenate %224, %227, %230, %233, %236, %239, %242, %245, %248, %251, %254, %257, %260, %263, %266 in 0 : vector<1x240xf32>, vector<1x240xf32>, vector<1x240xf32>, vector<1x240xf32>, vector<1x240xf32>, vector<1x240xf32>, vector<1x240xf32>, vector<1x240xf32>, vector<1x240xf32>, vector<1x240xf32>, vector<1x240xf32>, vector<1x240xf32>, vector<1x240xf32>, vector<1x240xf32>, vector<1x240xf32> -> vector<15x240xf32>
    %c0_120 = arith.constant 0 : index
    %c0_121 = arith.constant 0 : index
    %268 = vector.load %arg3[%c0_120, %c0_121] : memref<1x240xf32, #tpu.memory_space<vmem>>, vector<1x240xf32>
    %269 = vector.broadcast %268 : vector<1x240xf32> to vector<15x240xf32>
    %270 = arith.addf %267, %269 : vector<15x240xf32>
    %cst_122 = arith.constant 0.000000e+00 : f32
    %271 = vector.broadcast %cst_122 : f32 to vector<15x240xf32>
    %272 = arith.cmpf ogt, %270, %271 : vector<15x240xf32>
    %cst_123 = arith.constant 0.000000e+00 : f32
    %273 = vector.broadcast %cst_123 : f32 to vector<15x240xf32>
    %274 = arith.minimumf %270, %273 : vector<15x240xf32>
    %275 = math.exp %274 : vector<15x240xf32>
    %cst_124 = arith.constant 1.000000e+00 : f32
    %276 = vector.broadcast %cst_124 : f32 to vector<15x240xf32>
    %277 = arith.subf %275, %276 : vector<15x240xf32>
    %278 = arith.select %272, %270, %277 : vector<15x240xi1>, vector<15x240xf32>
    %279 = arith.truncf %278 : vector<15x240xf32> to vector<15x240xbf16>
    %c1_125 = arith.constant 1 : index
    %c1_126 = arith.constant 1 : index
    %c0_127 = arith.constant 0 : index
    %280 = vector.load %arg13[%c1_125, %c1_126, %c0_127] : memref<2x17x240xbf16, #tpu.memory_space<vmem>>, vector<1x15x240xbf16>
    %281 = vector.shape_cast %280 : vector<1x15x240xbf16> to vector<15x240xbf16>
    %282 = vector.shape_cast %279 : vector<15x240xbf16> to vector<1x15x240xbf16>
    tpu.vector_store %arg13[%c1_125, %c1_126, %c0_127], %282 {strides = array<i32>} : memref<2x17x240xbf16, #tpu.memory_space<vmem>>, vector<1x15x240xbf16>,
    %cst_128 = arith.constant 0.000000e+00 : f32
    %283 = vector.broadcast %cst_128 : f32 to vector<14x512xf32>
    %c1_129 = arith.constant 1 : index
    %c0_130 = arith.constant 0 : index
    %c0_131 = arith.constant 0 : index
    %284 = vector.load %arg13[%c1_129, %c0_130, %c0_131] : memref<2x17x240xbf16, #tpu.memory_space<vmem>>, vector<1x14x240xbf16>
    %285 = vector.shape_cast %284 : vector<1x14x240xbf16> to vector<14x240xbf16>
    %c0_132 = arith.constant 0 : index
    %c0_133 = arith.constant 0 : index
    %c0_134 = arith.constant 0 : index
    %286 = vector.load %arg4[%c0_132, %c0_133, %c0_134] : memref<3x240x512xbf16, #tpu.memory_space<vmem>>, vector<1x240x512xbf16>
    %287 = vector.shape_cast %286 : vector<1x240x512xbf16> to vector<240x512xbf16>
    %cst_135 = arith.constant dense<0.000000e+00> : vector<14x512xf32>
    %288 = tpu.matmul %285, %287, %cst_135 {dimension_numbers = #tpu.dot_dimension_numbers<[1], [0], [0], [1], [0, 0, 1, 1], [], []>} : vector<14x240xbf16>, vector<240x512xbf16>, vector<14x512xf32> -> vector<14x512xf32>
    %289 = arith.addf %283, %288 : vector<14x512xf32>
    %c1_136 = arith.constant 1 : index
    %c1_137 = arith.constant 1 : index
    %c0_138 = arith.constant 0 : index
    %290 = vector.load %arg13[%c1_136, %c1_137, %c0_138] : memref<2x17x240xbf16, #tpu.memory_space<vmem>>, vector<1x14x240xbf16>
    %291 = vector.shape_cast %290 : vector<1x14x240xbf16> to vector<14x240xbf16>
    %c1_139 = arith.constant 1 : index
    %c0_140 = arith.constant 0 : index
    %c0_141 = arith.constant 0 : index
    %292 = vector.load %arg4[%c1_139, %c0_140, %c0_141] : memref<3x240x512xbf16, #tpu.memory_space<vmem>>, vector<1x240x512xbf16>
    %293 = vector.shape_cast %292 : vector<1x240x512xbf16> to vector<240x512xbf16>
    %cst_142 = arith.constant dense<0.000000e+00> : vector<14x512xf32>
    %294 = tpu.matmul %291, %293, %cst_142 {dimension_numbers = #tpu.dot_dimension_numbers<[1], [0], [0], [1], [0, 0, 1, 1], [], []>} : vector<14x240xbf16>, vector<240x512xbf16>, vector<14x512xf32> -> vector<14x512xf32>
    %295 = arith.addf %289, %294 : vector<14x512xf32>
    %c1_143 = arith.constant 1 : index
    %c2_144 = arith.constant 2 : index
    %c0_145 = arith.constant 0 : index
    %296 = vector.load %arg13[%c1_143, %c2_144, %c0_145] : memref<2x17x240xbf16, #tpu.memory_space<vmem>>, vector<1x14x240xbf16>
    %297 = vector.shape_cast %296 : vector<1x14x240xbf16> to vector<14x240xbf16>
    %c2_146 = arith.constant 2 : index
    %c0_147 = arith.constant 0 : index
    %c0_148 = arith.constant 0 : index
    %298 = vector.load %arg4[%c2_146, %c0_147, %c0_148] : memref<3x240x512xbf16, #tpu.memory_space<vmem>>, vector<1x240x512xbf16>
    %299 = vector.shape_cast %298 : vector<1x240x512xbf16> to vector<240x512xbf16>
    %cst_149 = arith.constant dense<0.000000e+00> : vector<14x512xf32>
    %300 = tpu.matmul %297, %299, %cst_149 {dimension_numbers = #tpu.dot_dimension_numbers<[1], [0], [0], [1], [0, 0, 1, 1], [], []>} : vector<14x240xbf16>, vector<240x512xbf16>, vector<14x512xf32> -> vector<14x512xf32>
    %301 = arith.addf %295, %300 : vector<14x512xf32>
    %302 = vector.extract_strided_slice %301 {offsets = [0, 0], sizes = [14, 224], strides = [1, 1]} : vector<14x512xf32> to vector<14x224xf32>
    %303 = vector.extract_strided_slice %301 {offsets = [0, 256], sizes = [14, 224], strides = [1, 1]} : vector<14x512xf32> to vector<14x224xf32>
    %304 = arith.maximumf %302, %303 : vector<14x224xf32>
    %305 = vector.extract_strided_slice %304 {offsets = [0, 0], sizes = [1, 224], strides = [1, 1]} : vector<14x224xf32> to vector<1x224xf32>
    %306 = vector.extract_strided_slice %304 {offsets = [1, 0], sizes = [1, 224], strides = [1, 1]} : vector<14x224xf32> to vector<1x224xf32>
    %307 = arith.maximumf %305, %306 : vector<1x224xf32>
    %308 = vector.extract_strided_slice %304 {offsets = [2, 0], sizes = [1, 224], strides = [1, 1]} : vector<14x224xf32> to vector<1x224xf32>
    %309 = vector.extract_strided_slice %304 {offsets = [3, 0], sizes = [1, 224], strides = [1, 1]} : vector<14x224xf32> to vector<1x224xf32>
    %310 = arith.maximumf %308, %309 : vector<1x224xf32>
    %311 = vector.extract_strided_slice %304 {offsets = [4, 0], sizes = [1, 224], strides = [1, 1]} : vector<14x224xf32> to vector<1x224xf32>
    %312 = vector.extract_strided_slice %304 {offsets = [5, 0], sizes = [1, 224], strides = [1, 1]} : vector<14x224xf32> to vector<1x224xf32>
    %313 = arith.maximumf %311, %312 : vector<1x224xf32>
    %314 = vector.extract_strided_slice %304 {offsets = [6, 0], sizes = [1, 224], strides = [1, 1]} : vector<14x224xf32> to vector<1x224xf32>
    %315 = vector.extract_strided_slice %304 {offsets = [7, 0], sizes = [1, 224], strides = [1, 1]} : vector<14x224xf32> to vector<1x224xf32>
    %316 = arith.maximumf %314, %315 : vector<1x224xf32>
    %317 = vector.extract_strided_slice %304 {offsets = [8, 0], sizes = [1, 224], strides = [1, 1]} : vector<14x224xf32> to vector<1x224xf32>
    %318 = vector.extract_strided_slice %304 {offsets = [9, 0], sizes = [1, 224], strides = [1, 1]} : vector<14x224xf32> to vector<1x224xf32>
    %319 = arith.maximumf %317, %318 : vector<1x224xf32>
    %320 = vector.extract_strided_slice %304 {offsets = [10, 0], sizes = [1, 224], strides = [1, 1]} : vector<14x224xf32> to vector<1x224xf32>
    %321 = vector.extract_strided_slice %304 {offsets = [11, 0], sizes = [1, 224], strides = [1, 1]} : vector<14x224xf32> to vector<1x224xf32>
    %322 = arith.maximumf %320, %321 : vector<1x224xf32>
    %323 = vector.extract_strided_slice %304 {offsets = [12, 0], sizes = [1, 224], strides = [1, 1]} : vector<14x224xf32> to vector<1x224xf32>
    %324 = vector.extract_strided_slice %304 {offsets = [13, 0], sizes = [1, 224], strides = [1, 1]} : vector<14x224xf32> to vector<1x224xf32>
    %325 = arith.maximumf %323, %324 : vector<1x224xf32>
    %326 = tpu.concatenate %307, %310, %313, %316, %319, %322, %325 in 0 : vector<1x224xf32>, vector<1x224xf32>, vector<1x224xf32>, vector<1x224xf32>, vector<1x224xf32>, vector<1x224xf32>, vector<1x224xf32> -> vector<7x224xf32>
    %c0_150 = arith.constant 0 : index
    %c0_151 = arith.constant 0 : index
    %327 = vector.load %arg5[%c0_150, %c0_151] : memref<1x224xf32, #tpu.memory_space<vmem>>, vector<1x224xf32>
    %328 = vector.broadcast %327 : vector<1x224xf32> to vector<7x224xf32>
    %329 = arith.addf %326, %328 : vector<7x224xf32>
    %cst_152 = arith.constant 0.000000e+00 : f32
    %330 = vector.broadcast %cst_152 : f32 to vector<7x224xf32>
    %331 = arith.cmpf ogt, %329, %330 : vector<7x224xf32>
    %cst_153 = arith.constant 0.000000e+00 : f32
    %332 = vector.broadcast %cst_153 : f32 to vector<7x224xf32>
    %333 = arith.minimumf %329, %332 : vector<7x224xf32>
    %334 = math.exp %333 : vector<7x224xf32>
    %cst_154 = arith.constant 1.000000e+00 : f32
    %335 = vector.broadcast %cst_154 : f32 to vector<7x224xf32>
    %336 = arith.subf %334, %335 : vector<7x224xf32>
    %337 = arith.select %331, %329, %336 : vector<7x224xi1>, vector<7x224xf32>
    %338 = arith.truncf %337 : vector<7x224xf32> to vector<7x224xbf16>
    %c1_155 = arith.constant 1 : index
    %c1_156 = arith.constant 1 : index
    %c0_157 = arith.constant 0 : index
    %339 = vector.load %arg14[%c1_155, %c1_156, %c0_157] : memref<2x9x224xbf16, #tpu.memory_space<vmem>>, vector<1x7x224xbf16>
    %340 = vector.shape_cast %339 : vector<1x7x224xbf16> to vector<7x224xbf16>
    %341 = vector.shape_cast %338 : vector<7x224xbf16> to vector<1x7x224xbf16>
    tpu.vector_store %arg14[%c1_155, %c1_156, %c0_157], %341 {strides = array<i32>} : memref<2x9x224xbf16, #tpu.memory_space<vmem>>, vector<1x7x224xbf16>,
    %cst_158 = arith.constant 0.000000e+00 : f32
    %342 = vector.broadcast %cst_158 : f32 to vector<6x512xf32>
    %c1_159 = arith.constant 1 : index
    %c0_160 = arith.constant 0 : index
    %c0_161 = arith.constant 0 : index
    %343 = vector.load %arg14[%c1_159, %c0_160, %c0_161] : memref<2x9x224xbf16, #tpu.memory_space<vmem>>, vector<1x6x224xbf16>
    %344 = vector.shape_cast %343 : vector<1x6x224xbf16> to vector<6x224xbf16>
    %c0_162 = arith.constant 0 : index
    %c0_163 = arith.constant 0 : index
    %c0_164 = arith.constant 0 : index
    %345 = vector.load %arg6[%c0_162, %c0_163, %c0_164] : memref<3x224x512xbf16, #tpu.memory_space<vmem>>, vector<1x224x512xbf16>
    %346 = vector.shape_cast %345 : vector<1x224x512xbf16> to vector<224x512xbf16>
    %cst_165 = arith.constant dense<0.000000e+00> : vector<6x512xf32>
    %347 = tpu.matmul %344, %346, %cst_165 {dimension_numbers = #tpu.dot_dimension_numbers<[1], [0], [0], [1], [0, 0, 1, 1], [], []>} : vector<6x224xbf16>, vector<224x512xbf16>, vector<6x512xf32> -> vector<6x512xf32>
    %348 = arith.addf %342, %347 : vector<6x512xf32>
    %c1_166 = arith.constant 1 : index
    %c1_167 = arith.constant 1 : index
    %c0_168 = arith.constant 0 : index
    %349 = vector.load %arg14[%c1_166, %c1_167, %c0_168] : memref<2x9x224xbf16, #tpu.memory_space<vmem>>, vector<1x6x224xbf16>
    %350 = vector.shape_cast %349 : vector<1x6x224xbf16> to vector<6x224xbf16>
    %c1_169 = arith.constant 1 : index
    %c0_170 = arith.constant 0 : index
    %c0_171 = arith.constant 0 : index
    %351 = vector.load %arg6[%c1_169, %c0_170, %c0_171] : memref<3x224x512xbf16, #tpu.memory_space<vmem>>, vector<1x224x512xbf16>
    %352 = vector.shape_cast %351 : vector<1x224x512xbf16> to vector<224x512xbf16>
    %cst_172 = arith.constant dense<0.000000e+00> : vector<6x512xf32>
    %353 = tpu.matmul %350, %352, %cst_172 {dimension_numbers = #tpu.dot_dimension_numbers<[1], [0], [0], [1], [0, 0, 1, 1], [], []>} : vector<6x224xbf16>, vector<224x512xbf16>, vector<6x512xf32> -> vector<6x512xf32>
    %354 = arith.addf %348, %353 : vector<6x512xf32>
    %c1_173 = arith.constant 1 : index
    %c2_174 = arith.constant 2 : index
    %c0_175 = arith.constant 0 : index
    %355 = vector.load %arg14[%c1_173, %c2_174, %c0_175] : memref<2x9x224xbf16, #tpu.memory_space<vmem>>, vector<1x6x224xbf16>
    %356 = vector.shape_cast %355 : vector<1x6x224xbf16> to vector<6x224xbf16>
    %c2_176 = arith.constant 2 : index
    %c0_177 = arith.constant 0 : index
    %c0_178 = arith.constant 0 : index
    %357 = vector.load %arg6[%c2_176, %c0_177, %c0_178] : memref<3x224x512xbf16, #tpu.memory_space<vmem>>, vector<1x224x512xbf16>
    %358 = vector.shape_cast %357 : vector<1x224x512xbf16> to vector<224x512xbf16>
    %cst_179 = arith.constant dense<0.000000e+00> : vector<6x512xf32>
    %359 = tpu.matmul %356, %358, %cst_179 {dimension_numbers = #tpu.dot_dimension_numbers<[1], [0], [0], [1], [0, 0, 1, 1], [], []>} : vector<6x224xbf16>, vector<224x512xbf16>, vector<6x512xf32> -> vector<6x512xf32>
    %360 = arith.addf %354, %359 : vector<6x512xf32>
    %361 = vector.extract_strided_slice %360 {offsets = [0, 0], sizes = [6, 192], strides = [1, 1]} : vector<6x512xf32> to vector<6x192xf32>
    %362 = vector.extract_strided_slice %360 {offsets = [0, 256], sizes = [6, 192], strides = [1, 1]} : vector<6x512xf32> to vector<6x192xf32>
    %363 = arith.maximumf %361, %362 : vector<6x192xf32>
    %364 = vector.extract_strided_slice %363 {offsets = [0, 0], sizes = [1, 192], strides = [1, 1]} : vector<6x192xf32> to vector<1x192xf32>
    %365 = vector.extract_strided_slice %363 {offsets = [1, 0], sizes = [1, 192], strides = [1, 1]} : vector<6x192xf32> to vector<1x192xf32>
    %366 = arith.maximumf %364, %365 : vector<1x192xf32>
    %367 = vector.extract_strided_slice %363 {offsets = [2, 0], sizes = [1, 192], strides = [1, 1]} : vector<6x192xf32> to vector<1x192xf32>
    %368 = vector.extract_strided_slice %363 {offsets = [3, 0], sizes = [1, 192], strides = [1, 1]} : vector<6x192xf32> to vector<1x192xf32>
    %369 = arith.maximumf %367, %368 : vector<1x192xf32>
    %370 = vector.extract_strided_slice %363 {offsets = [4, 0], sizes = [1, 192], strides = [1, 1]} : vector<6x192xf32> to vector<1x192xf32>
    %371 = vector.extract_strided_slice %363 {offsets = [5, 0], sizes = [1, 192], strides = [1, 1]} : vector<6x192xf32> to vector<1x192xf32>
    %372 = arith.maximumf %370, %371 : vector<1x192xf32>
    %373 = tpu.concatenate %366, %369, %372 in 0 : vector<1x192xf32>, vector<1x192xf32>, vector<1x192xf32> -> vector<3x192xf32>
    %c0_180 = arith.constant 0 : index
    %c0_181 = arith.constant 0 : index
    %374 = vector.load %arg7[%c0_180, %c0_181] : memref<1x192xf32, #tpu.memory_space<vmem>>, vector<1x192xf32>
    %375 = vector.broadcast %374 : vector<1x192xf32> to vector<3x192xf32>
    %376 = arith.addf %373, %375 : vector<3x192xf32>
    %cst_182 = arith.constant 0.000000e+00 : f32
    %377 = vector.broadcast %cst_182 : f32 to vector<3x192xf32>
    %378 = arith.cmpf ogt, %376, %377 : vector<3x192xf32>
    %cst_183 = arith.constant 0.000000e+00 : f32
    %379 = vector.broadcast %cst_183 : f32 to vector<3x192xf32>
    %380 = arith.minimumf %376, %379 : vector<3x192xf32>
    %381 = math.exp %380 : vector<3x192xf32>
    %cst_184 = arith.constant 1.000000e+00 : f32
    %382 = vector.broadcast %cst_184 : f32 to vector<3x192xf32>
    %383 = arith.subf %381, %382 : vector<3x192xf32>
    %384 = arith.select %378, %376, %383 : vector<3x192xi1>, vector<3x192xf32>
    %385 = vector.extract_strided_slice %384 {offsets = [0, 0], sizes = [1, 192], strides = [1, 1]} : vector<3x192xf32> to vector<1x192xf32>
    %386 = arith.truncf %385 : vector<1x192xf32> to vector<1x192xbf16>
    %c1_185 = arith.constant 1 : index
    %c0_186 = arith.constant 0 : index
    %387 = vector.load %arg15[%c1_185, %c0_186] : memref<2x768xbf16, #tpu.memory_space<vmem>>, vector<1x192xbf16>
    tpu.vector_store %arg15[%c1_185, %c0_186], %386 {strides = array<i32>} : memref<2x768xbf16, #tpu.memory_space<vmem>>, vector<1x192xbf16>,
    %388 = vector.extract_strided_slice %384 {offsets = [1, 0], sizes = [1, 192], strides = [1, 1]} : vector<3x192xf32> to vector<1x192xf32>
    %389 = arith.truncf %388 : vector<1x192xf32> to vector<1x192xbf16>
    %c1_187 = arith.constant 1 : index
    %c256_188 = arith.constant 256 : index
    %390 = vector.load %arg15[%c1_187, %c256_188] : memref<2x768xbf16, #tpu.memory_space<vmem>>, vector<1x192xbf16>
    tpu.vector_store %arg15[%c1_187, %c256_188], %389 {strides = array<i32>} : memref<2x768xbf16, #tpu.memory_space<vmem>>, vector<1x192xbf16>,
    %391 = vector.extract_strided_slice %384 {offsets = [2, 0], sizes = [1, 192], strides = [1, 1]} : vector<3x192xf32> to vector<1x192xf32>
    %392 = arith.truncf %391 : vector<1x192xf32> to vector<1x192xbf16>
    %c1_189 = arith.constant 1 : index
    %c512_190 = arith.constant 512 : index
    %393 = vector.load %arg15[%c1_189, %c512_190] : memref<2x768xbf16, #tpu.memory_space<vmem>>, vector<1x192xbf16>
    tpu.vector_store %arg15[%c1_189, %c512_190], %392 {strides = array<i32>} : memref<2x768xbf16, #tpu.memory_space<vmem>>, vector<1x192xbf16>,
    %c0_191 = arith.constant 0 : index
    %c0_192 = arith.constant 0 : index
    %394 = vector.load %arg15[%c0_191, %c0_192] : memref<2x768xbf16, #tpu.memory_space<vmem>>, vector<2x768xbf16>
    %c0_193 = arith.constant 0 : index
    %c0_194 = arith.constant 0 : index
    %395 = vector.load %arg8[%c0_193, %c0_194] : memref<768x128xbf16, #tpu.memory_space<vmem>>, vector<768x128xbf16>
    %cst_195 = arith.constant dense<0.000000e+00> : vector<2x128xf32>
    %396 = tpu.matmul %394, %395, %cst_195 {dimension_numbers = #tpu.dot_dimension_numbers<[1], [0], [0], [1], [0, 0, 1, 1], [], []>} : vector<2x768xbf16>, vector<768x128xbf16>, vector<2x128xf32> -> vector<2x128xf32>
    %c0_196 = arith.constant 0 : index
    %c0_197 = arith.constant 0 : index
    %397 = vector.load %arg9[%c0_196, %c0_197] : memref<1x128xf32, #tpu.memory_space<vmem>>, vector<1x128xf32>
    %398 = vector.broadcast %397 : vector<1x128xf32> to vector<2x128xf32>
    %399 = arith.addf %396, %398 : vector<2x128xf32>
    %cst_198 = arith.constant 0.000000e+00 : f32
    %400 = vector.broadcast %cst_198 : f32 to vector<2x128xf32>
    %401 = arith.maximumf %399, %400 : vector<2x128xf32>
    %402 = arith.truncf %401 : vector<2x128xf32> to vector<2x128xbf16>
    %c0_199 = arith.constant 0 : index
    %c0_200 = arith.constant 0 : index
    %403 = vector.load %arg10[%c0_199, %c0_200] : memref<128x128xbf16, #tpu.memory_space<vmem>>, vector<128x128xbf16>
    %cst_201 = arith.constant dense<0.000000e+00> : vector<2x128xf32>
    %404 = tpu.matmul %402, %403, %cst_201 {dimension_numbers = #tpu.dot_dimension_numbers<[1], [0], [0], [1], [0, 0, 1, 1], [], []>} : vector<2x128xbf16>, vector<128x128xbf16>, vector<2x128xf32> -> vector<2x128xf32>
    %c0_202 = arith.constant 0 : index
    %c0_203 = arith.constant 0 : index
    %405 = vector.load %arg11[%c0_202, %c0_203] : memref<1x128xf32, #tpu.memory_space<vmem>>, vector<1x128xf32>
    %406 = vector.broadcast %405 : vector<1x128xf32> to vector<2x128xf32>
    %407 = arith.addf %404, %406 : vector<2x128xf32>
    %c0_204 = arith.constant 0 : index
    %c0_205 = arith.constant 0 : index
    %408 = vector.load %arg12[%c0_204, %c0_205] : memref<2x128xf32, #tpu.memory_space<vmem>>, vector<2x128xf32>
    tpu.vector_store %arg12[%c0_204, %c0_205], %407 {strides = array<i32>} : memref<2x128xf32, #tpu.memory_space<vmem>>, vector<2x128xf32>,
    return
  }
  func.func @transform_0(%arg0: i32) -> (i32, i32, i32) {
    %c0_i32 = arith.constant 0 : i32
    %c0_i32_0 = arith.constant 0 : i32
    %c0_i32_1 = arith.constant 0 : i32
    return %arg0, %c0_i32, %c0_i32_0 : i32, i32, i32
  }
  func.func @transform_1(%arg0: i32) -> (i32, i32, i32) {
    %c0_i32 = arith.constant 0 : i32
    %c0_i32_0 = arith.constant 0 : i32
    %c0_i32_1 = arith.constant 0 : i32
    %c0_i32_2 = arith.constant 0 : i32
    return %c0_i32, %c0_i32_0, %c0_i32_1 : i32, i32, i32
  }
  func.func @transform_2(%arg0: i32) -> (i32, i32) {
    %c0_i32 = arith.constant 0 : i32
    %c0_i32_0 = arith.constant 0 : i32
    %c0_i32_1 = arith.constant 0 : i32
    return %c0_i32, %c0_i32_0 : i32, i32
  }
  func.func @transform_3(%arg0: i32) -> (i32, i32, i32) {
    %c0_i32 = arith.constant 0 : i32
    %c0_i32_0 = arith.constant 0 : i32
    %c0_i32_1 = arith.constant 0 : i32
    %c0_i32_2 = arith.constant 0 : i32
    return %c0_i32, %c0_i32_0, %c0_i32_1 : i32, i32, i32
  }
  func.func @transform_4(%arg0: i32) -> (i32, i32) {
    %c0_i32 = arith.constant 0 : i32
    %c0_i32_0 = arith.constant 0 : i32
    %c0_i32_1 = arith.constant 0 : i32
    return %c0_i32, %c0_i32_0 : i32, i32
  }
  func.func @transform_5(%arg0: i32) -> (i32, i32, i32) {
    %c0_i32 = arith.constant 0 : i32
    %c0_i32_0 = arith.constant 0 : i32
    %c0_i32_1 = arith.constant 0 : i32
    %c0_i32_2 = arith.constant 0 : i32
    return %c0_i32, %c0_i32_0, %c0_i32_1 : i32, i32, i32
  }
  func.func @transform_6(%arg0: i32) -> (i32, i32) {
    %c0_i32 = arith.constant 0 : i32
    %c0_i32_0 = arith.constant 0 : i32
    %c0_i32_1 = arith.constant 0 : i32
    return %c0_i32, %c0_i32_0 : i32, i32
  }
  func.func @transform_7(%arg0: i32) -> (i32, i32) {
    %c0_i32 = arith.constant 0 : i32
    %c0_i32_0 = arith.constant 0 : i32
    %c0_i32_1 = arith.constant 0 : i32
    return %c0_i32, %c0_i32_0 : i32, i32
  }
  func.func @transform_8(%arg0: i32) -> (i32, i32) {
    %c0_i32 = arith.constant 0 : i32
    %c0_i32_0 = arith.constant 0 : i32
    %c0_i32_1 = arith.constant 0 : i32
    return %c0_i32, %c0_i32_0 : i32, i32
  }
  func.func @transform_9(%arg0: i32) -> (i32, i32) {
    %c0_i32 = arith.constant 0 : i32
    %c0_i32_0 = arith.constant 0 : i32
    %c0_i32_1 = arith.constant 0 : i32
    return %c0_i32, %c0_i32_0 : i32, i32
  }
  func.func @transform_10(%arg0: i32) -> (i32, i32) {
    %c0_i32 = arith.constant 0 : i32
    %c0_i32_0 = arith.constant 0 : i32
    %c0_i32_1 = arith.constant 0 : i32
    return %c0_i32, %c0_i32_0 : i32, i32
  }
  func.func @transform_11(%arg0: i32) -> (i32, i32) {
    %c0_i32 = arith.constant 0 : i32
    %c0_i32_0 = arith.constant 0 : i32
    return %arg0, %c0_i32 : i32, i32
  }
}

</mosaic_0001>

<llo_original>
// kernel: neuralnet_forward.1
$region0: #{neuralnet_forward.1}
  #allocation0 [shape = 'u32[]', space=smem, size = 0x4, offset = 0x4, fixed_abs, tag = 'smem constant byte address 0x4 - core index']
  #allocation1 [shape = 'u32[144,128]{1,0:T(1,128)}', space=vmem, size = 0x12000, scoped, tag = 'internal scratch']
  #allocation2 [shape = 'bf16[2,17,240]{2,1,0:T(8,128)(2,1)}', space=vmem, size = 0x6000, scoped, tag = 'scratch operand']
  #allocation3 [shape = 'bf16[2,9,224]{2,1,0:T(8,128)(2,1)}', space=vmem, size = 0x4000, scoped, tag = 'scratch operand']
  #allocation4 [shape = 'bf16[2,768]{1,0:T(2,128)(2,1)}', space=vmem, size = 0xc00, scoped, tag = 'scratch operand']
  %s0 = inlined_call_operand.vmem [shape: bf16[2,33,93], index: 0, kind: input, shape index: {}]
  %s1 = inlined_call_operand.vmem [shape: bf16[3,93,512], index: 1, kind: input, shape index: {}]
  %s2 = inlined_call_operand.vmem [shape: f32[1,240], index: 2, kind: input, shape index: {}]
  %s3 = inlined_call_operand.hbm [shape: bf16[3,240,512], index: 3, kind: input, shape index: {}]
  %s4 = inlined_call_operand.vmem [shape: f32[1,224], index: 4, kind: input, shape index: {}]
  %s5 = inlined_call_operand.hbm [shape: bf16[3,224,512], index: 5, kind: input, shape index: {}]
  %s6 = inlined_call_operand.vmem [shape: f32[1,192], index: 6, kind: input, shape index: {}]
  %s7 = inlined_call_operand.hbm [shape: bf16[768,128], index: 7, kind: input, shape index: {}]
  %s8 = inlined_call_operand.vmem [shape: f32[1,128], index: 8, kind: input, shape index: {}]
  %s9 = inlined_call_operand.hbm [shape: bf16[128,128], index: 9, kind: input, shape index: {}]
  %s10 = inlined_call_operand.vmem [shape: f32[1,128], index: 10, kind: input, shape index: {}]
  %s11 = inlined_call_operand.hbm [shape: f32[2,128], index: 11, kind: output, shape index: {}]
  %s12 = sld [smem:[#allocation0]]
  $region70: #{neuralnet_forward.1} parent=0
    _
  %s14 = ssub.s32 1, %s12
  %s15 = scalar_select 0, %s14, %s12
  $region1: #{neuralnet_forward.1} parent=0
    #allocation5 [shape = 'u8[737280]{0}', space=vmem, size = 0xb4000, scoped, tag = 'input window, operand 3, single buffered']
    #allocation6 [shape = 's32[1]{0}', space=sflag, size = 0x4, scoped, tag = 'scoped memory for neuralnet_forward.1']
    #allocation7 [shape = 's32[1]{0}', space=sflag, size = 0x4, scoped, tag = 'scoped memory for neuralnet_forward.1']
    #allocation8 [shape = 'u8[688128]{0}', space=vmem, size = 0xa8000, scoped, tag = 'input window, operand 5, single buffered']
    #allocation9 [shape = 's32[1]{0}', space=sflag, size = 0x4, scoped, tag = 'scoped memory for neuralnet_forward.1']
    #allocation10 [shape = 'u8[196608]{0}', space=vmem, size = 0x30000, scoped, tag = 'input window, operand 7, single buffered']
    #allocation11 [shape = 'u8[32768]{0}', space=vmem, size = 0x8000, scoped, tag = 'input window, operand 9, single buffered']
    #allocation12 [shape = 's32[1]{0}', space=sflag, size = 0x4, scoped, tag = 'scoped memory for neuralnet_forward.1']
    #allocation13 [shape = 'u8[1024]{0}', space=vmem, size = 0x400, scoped, tag = 'output window, operand 0, single buffered']
    %16 = vsyncpa [#allocation6], 0
    %17 = vsyncpa [#allocation9], 0
    %18 = vsyncpa [#allocation12], 0
    %19 = vsyncpa [#allocation7], 0
    // Predicated region
    $region2: #{neuralnet_forward.1} parent=1 // pred_check
      _
    $region3: #{neuralnet_forward.1} parent=1 // pred_check_branch
      %21 = sbr.rel (0) target = $region5
    $region4: #{neuralnet_forward.1} parent=1 // pred_region
      _
    $region5: #{neuralnet_forward.1} parent=1 // pred_fallthru
      _
    // Predicated region
    $region6: #{neuralnet_forward.1} parent=1 // pred_check
      _
    $region7: #{neuralnet_forward.1} parent=1 // pred_check_branch
      %23 = sbr.rel (0) target = $region9
    $region8: #{neuralnet_forward.1} parent=1 // pred_region
      _
    $region9: #{neuralnet_forward.1} parent=1 // pred_fallthru
      _
    // Predicated region
    $region10: #{neuralnet_forward.1} parent=1 // pred_check
      _
    $region11: #{neuralnet_forward.1} parent=1 // pred_check_branch
      %25 = sbr.rel (0) target = $region13
    $region12: #{neuralnet_forward.1} parent=1 // pred_region
      _
    $region13: #{neuralnet_forward.1} parent=1 // pred_fallthru
      _
    // Predicated region
    $region14: #{neuralnet_forward.1} parent=1 // pred_check
      _
    $region15: #{neuralnet_forward.1} parent=1 // pred_check_branch
      %27 = sbr.rel (0) target = $region17
    $region16: #{neuralnet_forward.1} parent=1 // pred_region
      %s29 = ssub.s32 23040, 23040
      %30 = vsyncadd [#allocation6], %s29
      %s31 = sshll.u32 [#allocation5], 4
      %s32 = int_to_ptr.vmem [resolvable:$true] %s31
      %37 = dma.hbm_to_vmem [thread:$0]  %s3, 23040, %s32, [#allocation6], 256, 256, 16
    $region17: #{neuralnet_forward.1} parent=1 // pred_fallthru
      _
    // Predicated region
    $region18: #{neuralnet_forward.1} parent=1 // pred_check
      _
    $region19: #{neuralnet_forward.1} parent=1 // pred_check_branch
      %39 = sbr.rel (0) target = $region21
    $region20: #{neuralnet_forward.1} parent=1 // pred_region
      _
    $region21: #{neuralnet_forward.1} parent=1 // pred_fallthru
      _
    // Predicated region
    $region22: #{neuralnet_forward.1} parent=1 // pred_check
      _
    $region23: #{neuralnet_forward.1} parent=1 // pred_check_branch
      %41 = sbr.rel (0) target = $region25
    $region24: #{neuralnet_forward.1} parent=1 // pred_region
      %s43 = ssub.s32 21504, 21504
      %44 = vsyncadd [#allocation9], %s43
      %s45 = sshll.u32 [#allocation8], 4
      %s46 = int_to_ptr.vmem [resolvable:$true] %s45
      %51 = dma.hbm_to_vmem [thread:$0]  %s5, 21504, %s46, [#allocation9], 256, 256, 16
    $region25: #{neuralnet_forward.1} parent=1 // pred_fallthru
      _
    // Predicated region
    $region26: #{neuralnet_forward.1} parent=1 // pred_check
      _
    $region27: #{neuralnet_forward.1} parent=1 // pred_check_branch
      %53 = sbr.rel (0) target = $region29
    $region28: #{neuralnet_forward.1} parent=1 // pred_region
      _
    $region29: #{neuralnet_forward.1} parent=1 // pred_fallthru
      _
    // Predicated region
    $region30: #{neuralnet_forward.1} parent=1 // pred_check
      _
    $region31: #{neuralnet_forward.1} parent=1 // pred_check_branch
      %55 = sbr.rel (0) target = $region33
    $region32: #{neuralnet_forward.1} parent=1 // pred_region
      %s57 = ssub.s32 6144, 6144
      %58 = vsyncadd [#allocation9], %s57
      %s59 = sshll.u32 [#allocation10], 4
      %s60 = int_to_ptr.vmem [resolvable:$true] %s59
      %65 = dma.hbm_to_vmem [thread:$0]  %s7, 6144, %s60, [#allocation9], 64, 64, 4
    $region33: #{neuralnet_forward.1} parent=1 // pred_fallthru
      _
    // Predicated region
    $region34: #{neuralnet_forward.1} parent=1 // pred_check
      _
    $region35: #{neuralnet_forward.1} parent=1 // pred_check_branch
      %67 = sbr.rel (0) target = $region37
    $region36: #{neuralnet_forward.1} parent=1 // pred_region
      _
    $region37: #{neuralnet_forward.1} parent=1 // pred_fallthru
      _
    // Predicated region
    $region38: #{neuralnet_forward.1} parent=1 // pred_check
      _
    $region39: #{neuralnet_forward.1} parent=1 // pred_check_branch
      %69 = sbr.rel (0) target = $region41
    $region40: #{neuralnet_forward.1} parent=1 // pred_region
      %s71 = ssub.s32 1024, 1024
      %72 = vsyncadd [#allocation12], %s71
      %s73 = sshll.u32 [#allocation11], 4
      %s74 = int_to_ptr.vmem [resolvable:$true] %s73
      %79 = dma.hbm_to_vmem [thread:$0]  %s9, 1024, %s74, [#allocation12], 64, 64, 4
    $region41: #{neuralnet_forward.1} parent=1 // pred_fallthru
      _
    // Predicated region
    $region42: #{neuralnet_forward.1} parent=1 // pred_check
      _
    $region43: #{neuralnet_forward.1} parent=1 // pred_check_branch
      %81 = sbr.rel (0) target = $region45
    $region44: #{neuralnet_forward.1} parent=1 // pred_region
      _
    $region45: #{neuralnet_forward.1} parent=1 // pred_fallthru
      _
    // Predicated region
    $region46: #{neuralnet_forward.1} parent=1 // pred_check
      _
    $region47: #{neuralnet_forward.1} parent=1 // pred_check_branch
      %83 = sbr.rel (0) target = $region49
    $region48: #{neuralnet_forward.1} parent=1 // pred_region
      %84 = dma.done [#allocation6], 23040
    $region49: #{neuralnet_forward.1} parent=1 // pred_fallthru
      _
    // Predicated region
    $region50: #{neuralnet_forward.1} parent=1 // pred_check
      _
    $region51: #{neuralnet_forward.1} parent=1 // pred_check_branch
      %86 = sbr.rel (0) target = $region53
    $region52: #{neuralnet_forward.1} parent=1 // pred_region
      %87 = dma.done [#allocation9], 21504
    $region53: #{neuralnet_forward.1} parent=1 // pred_fallthru
      _
    // Predicated region
    $region54: #{neuralnet_forward.1} parent=1 // pred_check
      _
    $region55: #{neuralnet_forward.1} parent=1 // pred_check_branch
      %89 = sbr.rel (0) target = $region57
    $region56: #{neuralnet_forward.1} parent=1 // pred_region
      %90 = dma.done [#allocation9], 6144
    $region57: #{neuralnet_forward.1} parent=1 // pred_fallthru
      _
    // Predicated region
    $region58: #{neuralnet_forward.1} parent=1 // pred_check
      _
    $region59: #{neuralnet_forward.1} parent=1 // pred_check_branch
      %92 = sbr.rel (0) target = $region61
    $region60: #{neuralnet_forward.1} parent=1 // pred_region
      %93 = dma.done [#allocation12], 1024
    $region61: #{neuralnet_forward.1} parent=1 // pred_fallthru
      _
    %vm95 = vcmask 1043456
    %vm96 = vcmask 916484
    %vm97 = vmor %vm96, %vm95
    %98 = vst.msk [vmem:[#allocation2] sm:$0xff] %vm97, 0
    %99 = vst.msk [vmem:[#allocation2 + $0x8] sm:$0xff] %vm97, 0
    %vm100 = vcmask 1040384
    %vm101 = vsmask.f32 256
    %vm102 = vmand %vm100, %vm101
    %vm103 = vcmask 913412
    %vm104 = vsmask.f32 4352
    %vm105 = vmand %vm103, %vm104
    %vm106 = vmor %vm105, %vm102
    %v107 = vld [vmem:[#allocation2 + $0x10] sm:$0x11]
    %v108 = vsel %vm106, 0, %v107
    %109 = vst [vmem:[#allocation2 + $0x10] sm:$0x11] %v108
    %110 = vst.msk [vmem:[#allocation2 + $0x18] sm:$0xff] %vm97, 0
    %111 = vst.msk [vmem:[#allocation2 + $0x20] sm:$0xff] %vm97, 0
    %v112 = vld [vmem:[#allocation2 + $0x28] sm:$0x11]
    %v113 = vsel %vm106, 0, %v112
    %114 = vst [vmem:[#allocation2 + $0x28] sm:$0x11] %v113
    %vm115 = vcmask 785412
    %vm116 = vmor %vm115, %vm95
    %117 = vst.msk [vmem:[#allocation3] sm:$0xff] %vm116, 0
    %vm118 = vcmask 782340
    %vm119 = vmand %vm118, %vm104
    %vm120 = vmor %vm119, %vm102
    %v121 = vld [vmem:[#allocation3 + $0x8] sm:$0x11]
    %v122 = vsel %vm120, 0, %v121
    %123 = vst [vmem:[#allocation3 + $0x8] sm:$0x11] %v122
    %124 = vst.msk [vmem:[#allocation3 + $0x10] sm:$0xff] %vm116, 0
    %v125 = vld [vmem:[#allocation3 + $0x18] sm:$0x11]
    %v126 = vsel %vm120, 0, %v125
    %127 = vst [vmem:[#allocation3 + $0x18] sm:$0x11] %v126
    %128 = vst [vmem:[#allocation4] sm:$0x3f] 0
    %v129 = vld [vmem:[%s0] sm:$0xf]
    %v130 = vld [vmem:[%s0 + $0x4] sm:$0xf]
    %v131 = vld [vmem:[%s0 + $0x8] sm:$0xf]
    %v132 = vld [vmem:[%s0 + $0xc] sm:$0x7]
    %v133 = vld [vmem:[%s1] sm:$0xff]
    %v134 = vld [vmem:[%s1 + $0x8] sm:$0xff]
    %v135 = vld [vmem:[%s1 + $0x10] sm:$0xff]
    %v136 = vld [vmem:[%s1 + $0x18] sm:$0xff]
    %v137 = vld [vmem:[%s1 + $0x20] sm:$0xff]
    %v138 = vld [vmem:[%s1 + $0x28] sm:$0xff]
    %v139 = vld [vmem:[%s1 + $0x30] sm:$0xff]
    %v140 = vld [vmem:[%s1 + $0x38] sm:$0xff]
    %v141 = vld [vmem:[%s1 + $0x40] sm:$0xff]
    %v142 = vld [vmem:[%s1 + $0x48] sm:$0xff]
    %v143 = vld [vmem:[%s1 + $0x50] sm:$0xff]
    %v144 = vld [vmem:[%s1 + $0x58] sm:$0xff]
    %v145 = vld [vmem:[%s1 + $0x60] sm:$0xff]
    %v146 = vld [vmem:[%s1 + $0x68] sm:$0xff]
    %v147 = vld [vmem:[%s1 + $0x70] sm:$0xff]
    %v148 = vld [vmem:[%s1 + $0x78] sm:$0xff]
    %v149 = vld [vmem:[%s1 + $0x80] sm:$0xff]
    %v150 = vld [vmem:[%s1 + $0x88] sm:$0xff]
    %v151 = vld [vmem:[%s1 + $0x90] sm:$0xff]
    %v152 = vld [vmem:[%s1 + $0x98] sm:$0xff]
    %v153 = vld [vmem:[%s1 + $0xa0] sm:$0xff]
    %v154 = vld [vmem:[%s1 + $0xa8] sm:$0xff]
    %v155 = vld [vmem:[%s1 + $0xb0] sm:$0x77]
    %v156 = vld [vmem:[%s1 + $0xb8] sm:$0x77]
    %v157 = vld [vmem:[%s0 + $0xc] sm:$0xf]
    %s158 = scalar_lea.vmem %s1, 192
    %v159 = vld [vmem:[%s158] sm:$0xff]
    %v160 = vld [vmem:[%s158 + $0x8] sm:$0xff]
    %v161 = vld [vmem:[%s158 + $0x10] sm:$0xff]
    %v162 = vld [vmem:[%s158 + $0x18] sm:$0xff]
    %v163 = vld [vmem:[%s158 + $0x20] sm:$0xff]
    %v164 = vld [vmem:[%s158 + $0x28] sm:$0xff]
    %v165 = vld [vmem:[%s158 + $0x30] sm:$0xff]
    %v166 = vld [vmem:[%s158 + $0x38] sm:$0xff]
    %v167 = vld [vmem:[%s158 + $0x40] sm:$0xff]
    %v168 = vld [vmem:[%s158 + $0x48] sm:$0xff]
    %v169 = vld [vmem:[%s158 + $0x50] sm:$0xff]
    %v170 = vld [vmem:[%s158 + $0x58] sm:$0xff]
    %v171 = vld [vmem:[%s158 + $0x60] sm:$0xff]
    %v172 = vld [vmem:[%s158 + $0x68] sm:$0xff]
    %v173 = vld [vmem:[%s158 + $0x70] sm:$0xff]
    %v174 = vld [vmem:[%s158 + $0x78] sm:$0xff]
    %v175 = vld [vmem:[%s158 + $0x80] sm:$0xff]
    %v176 = vld [vmem:[%s158 + $0x88] sm:$0xff]
    %v177 = vld [vmem:[%s158 + $0x90] sm:$0xff]
    %v178 = vld [vmem:[%s158 + $0x98] sm:$0xff]
    %v179 = vld [vmem:[%s158 + $0xa0] sm:$0xff]
    %v180 = vld [vmem:[%s158 + $0xa8] sm:$0xff]
    %v181 = vld [vmem:[%s158 + $0xb0] sm:$0x77]
    %v182 = vld [vmem:[%s158 + $0xb8] sm:$0x77]
    %v187 = vunpack.c.l.b16 %v129
    %v188 = vunpack.c.l.b16 %v130
    %v189 = vunpack.c.l.b16 %v131
    %v190 = vunpack.c.l.b16 %v157
    %v191 = vpack.c.b16 %v188, %v187
    %v192 = vpack.c.b16 %v190, %v189
    %vm193 = vsmask.f32 7424
    %v195 = vshrl.u32 %v191, 16
    %v197 = vshll.u32 %v191, 16
    %v199 = vrot.slane %v197, 1
    %v200 = vor.u32 %v195, %v199
    %v202 = vshll.u32 %v192, 16
    %v204 = vrot.slane %v202, 1
    %v205 = vsel %vm193, %v200, %v204
    %v206 = vshrl.u32 %v192, 16
    %v208 = vor.u32 %v206, %v204
    %v233 = vunpack.c.l.b16 %v159
    %v234 = vunpack.c.h.b16 %v159
    %v235 = vunpack.c.l.b16 %v160
    %v236 = vunpack.c.h.b16 %v160
    %v237 = vunpack.c.l.b16 %v161
    %v238 = vunpack.c.h.b16 %v161
    %v239 = vunpack.c.l.b16 %v162
    %v240 = vunpack.c.h.b16 %v162
    %v241 = vunpack.c.l.b16 %v163
    %v242 = vunpack.c.h.b16 %v163
    %v243 = vunpack.c.l.b16 %v164
    %v244 = vunpack.c.h.b16 %v164
    %v245 = vunpack.c.l.b16 %v165
    %v246 = vunpack.c.h.b16 %v165
    %v247 = vunpack.c.l.b16 %v166
    %v248 = vunpack.c.h.b16 %v166
    %v249 = vunpack.c.l.b16 %v167
    %v250 = vunpack.c.h.b16 %v167
    %v251 = vunpack.c.l.b16 %v168
    %v252 = vunpack.c.h.b16 %v168
    %v253 = vunpack.c.l.b16 %v169
    %v254 = vunpack.c.h.b16 %v169
    %v255 = vunpack.c.l.b16 %v170
    %v256 = vunpack.c.h.b16 %v170
    %v257 = vunpack.c.l.b16 %v171
    %v258 = vunpack.c.h.b16 %v171
    %v259 = vunpack.c.l.b16 %v172
    %v260 = vunpack.c.h.b16 %v172
    %v261 = vunpack.c.l.b16 %v173
    %v262 = vunpack.c.h.b16 %v173
    %v263 = vunpack.c.l.b16 %v174
    %v264 = vunpack.c.h.b16 %v174
    %v265 = vunpack.c.l.b16 %v175
    %v266 = vunpack.c.h.b16 %v175
    %v267 = vunpack.c.l.b16 %v176
    %v268 = vunpack.c.h.b16 %v176
    %v269 = vunpack.c.l.b16 %v177
    %v270 = vunpack.c.h.b16 %v177
    %v271 = vunpack.c.l.b16 %v178
    %v272 = vunpack.c.h.b16 %v178
    %v273 = vunpack.c.l.b16 %v179
    %v274 = vunpack.c.h.b16 %v179
    %v275 = vunpack.c.l.b16 %v180
    %v276 = vunpack.c.h.b16 %v180
    %v277 = vunpack.c.l.b16 %v181
    %v278 = vunpack.c.h.b16 %v181
    %v279 = vunpack.c.l.b16 %v182
    %v280 = vunpack.c.h.b16 %v182
    %v281 = vpack.c.b16 %v237, %v233
    %v282 = vpack.c.b16 %v238, %v234
    %v283 = vpack.c.b16 %v239, %v235
    %v284 = vpack.c.b16 %v240, %v236
    %v285 = vpack.c.b16 %v245, %v241
    %v286 = vpack.c.b16 %v246, %v242
    %v287 = vpack.c.b16 %v247, %v243
    %v288 = vpack.c.b16 %v248, %v244
    %v289 = vpack.c.b16 %v253, %v249
    %v290 = vpack.c.b16 %v254, %v250
    %v291 = vpack.c.b16 %v255, %v251
    %v292 = vpack.c.b16 %v256, %v252
    %v293 = vpack.c.b16 %v261, %v257
    %v294 = vpack.c.b16 %v262, %v258
    %v295 = vpack.c.b16 %v263, %v259
    %v296 = vpack.c.b16 %v264, %v260
    %v297 = vpack.c.b16 %v269, %v265
    %v298 = vpack.c.b16 %v270, %v266
    %v299 = vpack.c.b16 %v271, %v267
    %v300 = vpack.c.b16 %v272, %v268
    %v301 = vpack.c.b16 %v277, %v273
    %v302 = vpack.c.b16 %v278, %v274
    %v303 = vpack.c.b16 %v279, %v275
    %v304 = vpack.c.b16 %v280, %v276
    %vm325 = vcmask 760832
    %v327 = vsel %vm325, %v205, 0
    %v330 = vsel %vm325, %v208, 0
    %vm332 = vcmask 1045504
    %vm333 = vcmask 1046528
    %v334 = vsel %vm332, 4294967295, 65535
    %v335 = vsel %vm333, %v334, 0
    %v337 = vand.u32 %v301, %v335
    %v340 = vand.u32 %v302, %v335
    %v343 = vand.u32 %v303, %v335
    %v346 = vand.u32 %v304, %v335
    %348 = vmatprep.subr.bf16.mxu0 %v282
    %349 = vmatpush1.bf16.msra.mxu0 %v281
    %350 = vmatprep.subr.bf16.mxu0 %v286
    %351 = vmatpush1.bf16.msra.mxu0 %v285
    %352 = vmatprep.subr.bf16.mxu0 %v290
    %353 = vmatpush1.bf16.msra.mxu0 %v289
    %354 = vmatprep.subr.bf16.mxu0 %v294
    %355 = vmatpush1.bf16.msra.mxu0 %v293
    %356 = vmatprep.subr.bf16.mxu0 %v298
    %357 = vmatpush1.bf16.msra.mxu0 %v297
    %358 = vmatprep.subr.bf16.mxu0 %v340
    %359 = vmatpush1.bf16.msra.mxu0 %v337
    %360 = vmatprep.subr.bf16.mxu0 0
    %361 = vmatpush1.bf16.msra.mxu0 0
    %362 = vmatprep.subr.bf16.mxu0 0
    %363 = vmatpush1.bf16.msra.mxu0 0
    %364 = vmatprep.subr.bf16.mxu0 0
    %365 = vmatpush1.bf16.msra.mxu0 0
    %366 = vmatprep.subr.bf16.mxu0 0
    %367 = vmatpush1.bf16.msra.mxu0 0
    %368 = vmatprep.subr.bf16.mxu0 0
    %369 = vmatpush1.bf16.msra.mxu0 0
    %370 = vmatprep.subr.bf16.mxu0 0
    %371 = vmatpush1.bf16.msra.mxu0 0
    %372 = vmatprep.subr.bf16.mxu0 0
    %373 = vmatpush1.bf16.msra.mxu0 0
    %374 = vmatprep.subr.bf16.mxu0 0
    %375 = vmatpush1.bf16.msra.mxu0 0
    %376 = vmatprep.subr.bf16.mxu0 0
    %377 = vmatpush1.bf16.msra.mxu0 0
    %378 = vmatprep.subr.bf16.mxu0 0
    %379 = vmatpush1.bf16.msra.mxu0 0
    %380 = vmatprep.mubr.bf16.mxu0 0
    %381 = vmatmul.mubr.bf16.gmra.mrb[0].mxu0 %v327
    %v382 = vpop.f32.mrb[0].mxu0
    %v383 = vadd.f32 0.0, %v382
    %v384 = vpop.f32.mrb[0].mxu0
    %v385 = vadd.f32 0.0, %v384
    %v386 = vpop.f32.mrb[0].mxu0
    %v387 = vadd.f32 0.0, %v386
    %v388 = vpop.f32.mrb[0].mxu0
    %v389 = vadd.f32 0.0, %v388
    %390 = vmatprep.mubr.bf16.mxu0 0
    %391 = vmatmul.mubr.bf16.gmra.mrb[0].mxu0 %v330
    %v392 = vpop.f32.mrb[0].mxu0
    %v393 = vadd.f32 0.0, %v392
    %v394 = vpop.f32.mrb[0].mxu0
    %v395 = vadd.f32 0.0, %v394
    %v396 = vpop.f32.mrb[0].mxu0
    %v397 = vadd.f32 0.0, %v396
    %v398 = vpop.f32.mrb[0].mxu0
    %v399 = vadd.f32 0.0, %v398
    %400 = vdwg.mxu0
    %401 = vmatprep.subr.bf16.mxu0 %v284
    %402 = vmatpush1.bf16.msra.mxu0 %v283
    %403 = vmatprep.subr.bf16.mxu0 %v288
    %404 = vmatpush1.bf16.msra.mxu0 %v287
    %405 = vmatprep.subr.bf16.mxu0 %v292
    %406 = vmatpush1.bf16.msra.mxu0 %v291
    %407 = vmatprep.subr.bf16.mxu0 %v296
    %408 = vmatpush1.bf16.msra.mxu0 %v295
    %409 = vmatprep.subr.bf16.mxu0 %v300
    %410 = vmatpush1.bf16.msra.mxu0 %v299
    %411 = vmatprep.subr.bf16.mxu0 %v346
    %412 = vmatpush1.bf16.msra.mxu0 %v343
    %413 = vmatprep.subr.bf16.mxu0 0
    %414 = vmatpush1.bf16.msra.mxu0 0
    %415 = vmatprep.subr.bf16.mxu0 0
    %416 = vmatpush1.bf16.msra.mxu0 0
    %417 = vmatprep.subr.bf16.mxu0 0
    %418 = vmatpush1.bf16.msra.mxu0 0
    %419 = vmatprep.subr.bf16.mxu0 0
    %420 = vmatpush1.bf16.msra.mxu0 0
    %421 = vmatprep.subr.bf16.mxu0 0
    %422 = vmatpush1.bf16.msra.mxu0 0
    %423 = vmatprep.subr.bf16.mxu0 0
    %424 = vmatpush1.bf16.msra.mxu0 0
    %425 = vmatprep.subr.bf16.mxu0 0
    %426 = vmatpush1.bf16.msra.mxu0 0
    %427 = vmatprep.subr.bf16.mxu0 0
    %428 = vmatpush1.bf16.msra.mxu0 0
    %429 = vmatprep.subr.bf16.mxu0 0
    %430 = vmatpush1.bf16.msra.mxu0 0
    %431 = vmatprep.subr.bf16.mxu0 0
    %432 = vmatpush1.bf16.msra.mxu0 0
    %433 = vmatprep.mubr.bf16.mxu0 0
    %434 = vmatmul.mubr.bf16.gmra.mrb[0].mxu0 %v327
    %v435 = vpop.f32.mrb[0].mxu0
    %v436 = vadd.f32 0.0, %v435
    %v437 = vpop.f32.mrb[0].mxu0
    %v438 = vadd.f32 0.0, %v437
    %v439 = vpop.f32.mrb[0].mxu0
    %v440 = vadd.f32 0.0, %v439
    %v441 = vpop.f32.mrb[0].mxu0
    %v442 = vadd.f32 0.0, %v441
    %443 = vmatprep.mubr.bf16.mxu0 0
    %444 = vmatmul.mubr.bf16.gmra.mrb[0].mxu0 %v330
    %v445 = vpop.f32.mrb[0].mxu0
    %v446 = vadd.f32 0.0, %v445
    %v447 = vpop.f32.mrb[0].mxu0
    %v448 = vadd.f32 0.0, %v447
    %v449 = vpop.f32.mrb[0].mxu0
    %v450 = vadd.f32 0.0, %v449
    %v451 = vpop.f32.mrb[0].mxu0
    %v452 = vadd.f32 0.0, %v451
    %453 = vdwg.mxu0
    %v455 = vunpack.c.l.b16 %v132
    %v456 = vpack.c.b16 %v455, %v189
    %v481 = vunpack.c.l.b16 %v133
    %v482 = vunpack.c.h.b16 %v133
    %v483 = vunpack.c.l.b16 %v134
    %v484 = vunpack.c.h.b16 %v134
    %v485 = vunpack.c.l.b16 %v135
    %v486 = vunpack.c.h.b16 %v135
    %v487 = vunpack.c.l.b16 %v136
    %v488 = vunpack.c.h.b16 %v136
    %v489 = vunpack.c.l.b16 %v137
    %v490 = vunpack.c.h.b16 %v137
    %v491 = vunpack.c.l.b16 %v138
    %v492 = vunpack.c.h.b16 %v138
    %v493 = vunpack.c.l.b16 %v139
    %v494 = vunpack.c.h.b16 %v139
    %v495 = vunpack.c.l.b16 %v140
    %v496 = vunpack.c.h.b16 %v140
    %v497 = vunpack.c.l.b16 %v141
    %v498 = vunpack.c.h.b16 %v141
    %v499 = vunpack.c.l.b16 %v142
    %v500 = vunpack.c.h.b16 %v142
    %v501 = vunpack.c.l.b16 %v143
    %v502 = vunpack.c.h.b16 %v143
    %v503 = vunpack.c.l.b16 %v144
    %v504 = vunpack.c.h.b16 %v144
    %v505 = vunpack.c.l.b16 %v145
    %v506 = vunpack.c.h.b16 %v145
    %v507 = vunpack.c.l.b16 %v146
    %v508 = vunpack.c.h.b16 %v146
    %v509 = vunpack.c.l.b16 %v147
    %v510 = vunpack.c.h.b16 %v147
    %v511 = vunpack.c.l.b16 %v148
    %v512 = vunpack.c.h.b16 %v148
    %v513 = vunpack.c.l.b16 %v149
    %v514 = vunpack.c.h.b16 %v149
    %v515 = vunpack.c.l.b16 %v150
    %v516 = vunpack.c.h.b16 %v150
    %v517 = vunpack.c.l.b16 %v151
    %v518 = vunpack.c.h.b16 %v151
    %v519 = vunpack.c.l.b16 %v152
    %v520 = vunpack.c.h.b16 %v152
    %v521 = vunpack.c.l.b16 %v153
    %v522 = vunpack.c.h.b16 %v153
    %v523 = vunpack.c.l.b16 %v154
    %v524 = vunpack.c.h.b16 %v154
    %v525 = vunpack.c.l.b16 %v155
    %v526 = vunpack.c.h.b16 %v155
    %v527 = vunpack.c.l.b16 %v156
    %v528 = vunpack.c.h.b16 %v156
    %v529 = vpack.c.b16 %v485, %v481
    %v530 = vpack.c.b16 %v486, %v482
    %v531 = vpack.c.b16 %v487, %v483
    %v532 = vpack.c.b16 %v488, %v484
    %v533 = vpack.c.b16 %v493, %v489
    %v534 = vpack.c.b16 %v494, %v490
    %v535 = vpack.c.b16 %v495, %v491
    %v536 = vpack.c.b16 %v496, %v492
    %v537 = vpack.c.b16 %v501, %v497
    %v538 = vpack.c.b16 %v502, %v498
    %v539 = vpack.c.b16 %v503, %v499
    %v540 = vpack.c.b16 %v504, %v500
    %v541 = vpack.c.b16 %v509, %v505
    %v542 = vpack.c.b16 %v510, %v506
    %v543 = vpack.c.b16 %v511, %v507
    %v544 = vpack.c.b16 %v512, %v508
    %v545 = vpack.c.b16 %v517, %v513
    %v546 = vpack.c.b16 %v518, %v514
    %v547 = vpack.c.b16 %v519, %v515
    %v548 = vpack.c.b16 %v520, %v516
    %v549 = vpack.c.b16 %v525, %v521
    %v550 = vpack.c.b16 %v526, %v522
    %v551 = vpack.c.b16 %v527, %v523
    %v552 = vpack.c.b16 %v528, %v524
    %v573 = vsel %vm325, %v191, 0
    %v576 = vsel %vm325, %v456, 0
    %v579 = vand.u32 %v549, %v335
    %v582 = vand.u32 %v550, %v335
    %v585 = vand.u32 %v551, %v335
    %v588 = vand.u32 %v552, %v335
    %590 = vmatprep.subr.bf16.mxu0 %v530
    %591 = vmatpush1.bf16.msra.mxu0 %v529
    %592 = vmatprep.subr.bf16.mxu0 %v534
    %593 = vmatpush1.bf16.msra.mxu0 %v533
    %594 = vmatprep.subr.bf16.mxu0 %v538
    %595 = vmatpush1.bf16.msra.mxu0 %v537
    %596 = vmatprep.subr.bf16.mxu0 %v542
    %597 = vmatpush1.bf16.msra.mxu0 %v541
    %598 = vmatprep.subr.bf16.mxu0 %v546
    %599 = vmatpush1.bf16.msra.mxu0 %v545
    %600 = vmatprep.subr.bf16.mxu0 %v582
    %601 = vmatpush1.bf16.msra.mxu0 %v579
    %602 = vmatprep.subr.bf16.mxu0 0
    %603 = vmatpush1.bf16.msra.mxu0 0
    %604 = vmatprep.subr.bf16.mxu0 0
    %605 = vmatpush1.bf16.msra.mxu0 0
    %606 = vmatprep.subr.bf16.mxu0 0
    %607 = vmatpush1.bf16.msra.mxu0 0
    %608 = vmatprep.subr.bf16.mxu0 0
    %609 = vmatpush1.bf16.msra.mxu0 0
    %610 = vmatprep.subr.bf16.mxu0 0
    %611 = vmatpush1.bf16.msra.mxu0 0
    %612 = vmatprep.subr.bf16.mxu0 0
    %613 = vmatpush1.bf16.msra.mxu0 0
    %614 = vmatprep.subr.bf16.mxu0 0
    %615 = vmatpush1.bf16.msra.mxu0 0
    %616 = vmatprep.subr.bf16.mxu0 0
    %617 = vmatpush1.bf16.msra.mxu0 0
    %618 = vmatprep.subr.bf16.mxu0 0
    %619 = vmatpush1.bf16.msra.mxu0 0
    %620 = vmatprep.subr.bf16.mxu0 0
    %621 = vmatpush1.bf16.msra.mxu0 0
    %622 = vmatprep.mubr.bf16.mxu0 0
    %623 = vmatmul.mubr.bf16.gmra.mrb[0].mxu0 %v573
    %v624 = vpop.f32.mrb[0].mxu0
    %v625 = vadd.f32 %v383, %v624
    %v626 = vpop.f32.mrb[0].mxu0
    %v627 = vadd.f32 %v385, %v626
    %v628 = vpop.f32.mrb[0].mxu0
    %v629 = vadd.f32 %v387, %v628
    %v630 = vpop.f32.mrb[0].mxu0
    %v631 = vadd.f32 %v389, %v630
    %632 = vmatprep.mubr.bf16.mxu0 0
    %633 = vmatmul.mubr.bf16.gmra.mrb[0].mxu0 %v576
    %v634 = vpop.f32.mrb[0].mxu0
    %v635 = vadd.f32 %v393, %v634
    %v636 = vpop.f32.mrb[0].mxu0
    %v637 = vadd.f32 %v395, %v636
    %v638 = vpop.f32.mrb[0].mxu0
    %v639 = vadd.f32 %v397, %v638
    %v640 = vpop.f32.mrb[0].mxu0
    %v641 = vadd.f32 %v399, %v640
    %642 = vdwg.mxu0
    %643 = vmatprep.subr.bf16.mxu0 %v532
    %644 = vmatpush1.bf16.msra.mxu0 %v531
    %645 = vmatprep.subr.bf16.mxu0 %v536
    %646 = vmatpush1.bf16.msra.mxu0 %v535
    %647 = vmatprep.subr.bf16.mxu0 %v540
    %648 = vmatpush1.bf16.msra.mxu0 %v539
    %649 = vmatprep.subr.bf16.mxu0 %v544
    %650 = vmatpush1.bf16.msra.mxu0 %v543
    %651 = vmatprep.subr.bf16.mxu0 %v548
    %652 = vmatpush1.bf16.msra.mxu0 %v547
    %653 = vmatprep.subr.bf16.mxu0 %v588
    %654 = vmatpush1.bf16.msra.mxu0 %v585
    %655 = vmatprep.subr.bf16.mxu0 0
    %656 = vmatpush1.bf16.msra.mxu0 0
    %657 = vmatprep.subr.bf16.mxu0 0
    %658 = vmatpush1.bf16.msra.mxu0 0
    %659 = vmatprep.subr.bf16.mxu0 0
    %660 = vmatpush1.bf16.msra.mxu0 0
    %661 = vmatprep.subr.bf16.mxu0 0
    %662 = vmatpush1.bf16.msra.mxu0 0
    %663 = vmatprep.subr.bf16.mxu0 0
    %664 = vmatpush1.bf16.msra.mxu0 0
    %665 = vmatprep.subr.bf16.mxu0 0
    %666 = vmatpush1.bf16.msra.mxu0 0
    %667 = vmatprep.subr.bf16.mxu0 0
    %668 = vmatpush1.bf16.msra.mxu0 0
    %669 = vmatprep.subr.bf16.mxu0 0
    %670 = vmatpush1.bf16.msra.mxu0 0
    %671 = vmatprep.subr.bf16.mxu0 0
    %672 = vmatpush1.bf16.msra.mxu0 0
    %673 = vmatprep.subr.bf16.mxu0 0
    %674 = vmatpush1.bf16.msra.mxu0 0
    %675 = vmatprep.mubr.bf16.mxu0 0
    %676 = vmatmul.mubr.bf16.gmra.mrb[0].mxu0 %v573
    %v677 = vpop.f32.mrb[0].mxu0
    %v678 = vadd.f32 %v436, %v677
    %v679 = vpop.f32.mrb[0].mxu0
    %v680 = vadd.f32 %v438, %v679
    %v681 = vpop.f32.mrb[0].mxu0
    %v682 = vadd.f32 %v440, %v681
    %v683 = vpop.f32.mrb[0].mxu0
    %v684 = vadd.f32 %v442, %v683
    %685 = vmatprep.mubr.bf16.mxu0 0
    %686 = vmatmul.mubr.bf16.gmra.mrb[0].mxu0 %v576
    %v687 = vpop.f32.mrb[0].mxu0
    %v688 = vadd.f32 %v446, %v687
    %v689 = vpop.f32.mrb[0].mxu0
    %v690 = vadd.f32 %v448, %v689
    %v691 = vpop.f32.mrb[0].mxu0
    %v692 = vadd.f32 %v450, %v691
    %v693 = vpop.f32.mrb[0].mxu0
    %v694 = vadd.f32 %v452, %v693
    %695 = vdwg.mxu0
    %v696 = vld [vmem:[%s0] sm:$0xe]
    %s697 = scalar_lea.vmem %s1, 384
    %v698 = vld [vmem:[%s697] sm:$0xff]
    %v699 = vld [vmem:[%s697 + $0x8] sm:$0xff]
    %v700 = vld [vmem:[%s697 + $0x10] sm:$0xff]
    %v701 = vld [vmem:[%s697 + $0x18] sm:$0xff]
    %v702 = vld [vmem:[%s697 + $0x20] sm:$0xff]
    %v703 = vld [vmem:[%s697 + $0x28] sm:$0xff]
    %v704 = vld [vmem:[%s697 + $0x30] sm:$0xff]
    %v705 = vld [vmem:[%s697 + $0x38] sm:$0xff]
    %v706 = vld [vmem:[%s697 + $0x40] sm:$0xff]
    %v707 = vld [vmem:[%s697 + $0x48] sm:$0xff]
    %v708 = vld [vmem:[%s697 + $0x50] sm:$0xff]
    %v709 = vld [vmem:[%s697 + $0x58] sm:$0xff]
    %v710 = vld [vmem:[%s697 + $0x60] sm:$0xff]
    %v711 = vld [vmem:[%s697 + $0x68] sm:$0xff]
    %v712 = vld [vmem:[%s697 + $0x70] sm:$0xff]
    %v713 = vld [vmem:[%s697 + $0x78] sm:$0xff]
    %v714 = vld [vmem:[%s697 + $0x80] sm:$0xff]
    %v715 = vld [vmem:[%s697 + $0x88] sm:$0xff]
    %v716 = vld [vmem:[%s697 + $0x90] sm:$0xff]
    %v717 = vld [vmem:[%s697 + $0x98] sm:$0xff]
    %v718 = vld [vmem:[%s697 + $0xa0] sm:$0xff]
    %v719 = vld [vmem:[%s697 + $0xa8] sm:$0xff]
    %v720 = vld [vmem:[%s697 + $0xb0] sm:$0x77]
    %v721 = vld [vmem:[%s697 + $0xb8] sm:$0x77]
    %v723 = vunpack.c.l.b16 %v696
    %v724 = vpack.c.b16 %v188, %v723
    %vm725 = vcmask 1046528
    %v726 = vrot.slane %v724, 1
    %v727 = vrot.slane %v192, 1
    %v728 = vsel %vm725, %v726, %v727
    %v753 = vunpack.c.l.b16 %v698
    %v754 = vunpack.c.h.b16 %v698
    %v755 = vunpack.c.l.b16 %v699
    %v756 = vunpack.c.h.b16 %v699
    %v757 = vunpack.c.l.b16 %v700
    %v758 = vunpack.c.h.b16 %v700
    %v759 = vunpack.c.l.b16 %v701
    %v760 = vunpack.c.h.b16 %v701
    %v761 = vunpack.c.l.b16 %v702
    %v762 = vunpack.c.h.b16 %v702
    %v763 = vunpack.c.l.b16 %v703
    %v764 = vunpack.c.h.b16 %v703
    %v765 = vunpack.c.l.b16 %v704
    %v766 = vunpack.c.h.b16 %v704
    %v767 = vunpack.c.l.b16 %v705
    %v768 = vunpack.c.h.b16 %v705
    %v769 = vunpack.c.l.b16 %v706
    %v770 = vunpack.c.h.b16 %v706
    %v771 = vunpack.c.l.b16 %v707
    %v772 = vunpack.c.h.b16 %v707
    %v773 = vunpack.c.l.b16 %v708
    %v774 = vunpack.c.h.b16 %v708
    %v775 = vunpack.c.l.b16 %v709
    %v776 = vunpack.c.h.b16 %v709
    %v777 = vunpack.c.l.b16 %v710
    %v778 = vunpack.c.h.b16 %v710
    %v779 = vunpack.c.l.b16 %v711
    %v780 = vunpack.c.h.b16 %v711
    %v781 = vunpack.c.l.b16 %v712
    %v782 = vunpack.c.h.b16 %v712
    %v783 = vunpack.c.l.b16 %v713
    %v784 = vunpack.c.h.b16 %v713
    %v785 = vunpack.c.l.b16 %v714
    %v786 = vunpack.c.h.b16 %v714
    %v787 = vunpack.c.l.b16 %v715
    %v788 = vunpack.c.h.b16 %v715
    %v789 = vunpack.c.l.b16 %v716
    %v790 = vunpack.c.h.b16 %v716
    %v791 = vunpack.c.l.b16 %v717
    %v792 = vunpack.c.h.b16 %v717
    %v793 = vunpack.c.l.b16 %v718
    %v794 = vunpack.c.h.b16 %v718
    %v795 = vunpack.c.l.b16 %v719
    %v796 = vunpack.c.h.b16 %v719
    %v797 = vunpack.c.l.b16 %v720
    %v798 = vunpack.c.h.b16 %v720
    %v799 = vunpack.c.l.b16 %v721
    %v800 = vunpack.c.h.b16 %v721
    %v801 = vpack.c.b16 %v757, %v753
    %v802 = vpack.c.b16 %v758, %v754
    %v803 = vpack.c.b16 %v759, %v755
    %v804 = vpack.c.b16 %v760, %v756
    %v805 = vpack.c.b16 %v765, %v761
    %v806 = vpack.c.b16 %v766, %v762
    %v807 = vpack.c.b16 %v767, %v763
    %v808 = vpack.c.b16 %v768, %v764
    %v809 = vpack.c.b16 %v773, %v769
    %v810 = vpack.c.b16 %v774, %v770
    %v811 = vpack.c.b16 %v775, %v771
    %v812 = vpack.c.b16 %v776, %v772
    %v813 = vpack.c.b16 %v781, %v777
    %v814 = vpack.c.b16 %v782, %v778
    %v815 = vpack.c.b16 %v783, %v779
    %v816 = vpack.c.b16 %v784, %v780
    %v817 = vpack.c.b16 %v789, %v785
    %v818 = vpack.c.b16 %v790, %v786
    %v819 = vpack.c.b16 %v791, %v787
    %v820 = vpack.c.b16 %v792, %v788
    %v821 = vpack.c.b16 %v797, %v793
    %v822 = vpack.c.b16 %v798, %v794
    %v823 = vpack.c.b16 %v799, %v795
    %v824 = vpack.c.b16 %v800, %v796
    %v846 = vsel %vm325, %v728, 0
    %v849 = vsel %vm325, %v727, 0
    %v852 = vand.u32 %v821, %v335
    %v855 = vand.u32 %v822, %v335
    %v858 = vand.u32 %v823, %v335
    %v861 = vand.u32 %v824, %v335
    %863 = vmatprep.subr.bf16.mxu0 %v802
    %864 = vmatpush1.bf16.msra.mxu0 %v801
    %865 = vmatprep.subr.bf16.mxu0 %v806
    %866 = vmatpush1.bf16.msra.mxu0 %v805
    %867 = vmatprep.subr.bf16.mxu0 %v810
    %868 = vmatpush1.bf16.msra.mxu0 %v809
    %869 = vmatprep.subr.bf16.mxu0 %v814
    %870 = vmatpush1.bf16.msra.mxu0 %v813
    %871 = vmatprep.subr.bf16.mxu0 %v818
    %872 = vmatpush1.bf16.msra.mxu0 %v817
    %873 = vmatprep.subr.bf16.mxu0 %v855
    %874 = vmatpush1.bf16.msra.mxu0 %v852
    %875 = vmatprep.subr.bf16.mxu0 0
    %876 = vmatpush1.bf16.msra.mxu0 0
    %877 = vmatprep.subr.bf16.mxu0 0
    %878 = vmatpush1.bf16.msra.mxu0 0
    %879 = vmatprep.subr.bf16.mxu0 0
    %880 = vmatpush1.bf16.msra.mxu0 0
    %881 = vmatprep.subr.bf16.mxu0 0
    %882 = vmatpush1.bf16.msra.mxu0 0
    %883 = vmatprep.subr.bf16.mxu0 0
    %884 = vmatpush1.bf16.msra.mxu0 0
    %885 = vmatprep.subr.bf16.mxu0 0
    %886 = vmatpush1.bf16.msra.mxu0 0
    %887 = vmatprep.subr.bf16.mxu0 0
    %888 = vmatpush1.bf16.msra.mxu0 0
    %889 = vmatprep.subr.bf16.mxu0 0
    %890 = vmatpush1.bf16.msra.mxu0 0
    %891 = vmatprep.subr.bf16.mxu0 0
    %892 = vmatpush1.bf16.msra.mxu0 0
    %893 = vmatprep.subr.bf16.mxu0 0
    %894 = vmatpush1.bf16.msra.mxu0 0
    %895 = vmatprep.mubr.bf16.mxu0 0
    %896 = vmatmul.mubr.bf16.gmra.mrb[0].mxu0 %v846
    %v897 = vpop.f32.mrb[0].mxu0
    %v898 = vadd.f32 0.0, %v897
    %v899 = vpop.f32.mrb[0].mxu0
    %v900 = vadd.f32 0.0, %v899
    %v901 = vpop.f32.mrb[0].mxu0
    %v902 = vadd.f32 0.0, %v901
    %v903 = vpop.f32.mrb[0].mxu0
    %v904 = vadd.f32 0.0, %v903
    %905 = vmatprep.mubr.bf16.mxu0 0
    %906 = vmatmul.mubr.bf16.gmra.mrb[0].mxu0 %v849
    %v907 = vpop.f32.mrb[0].mxu0
    %v908 = vadd.f32 0.0, %v907
    %v909 = vpop.f32.mrb[0].mxu0
    %v910 = vadd.f32 0.0, %v909
    %v911 = vpop.f32.mrb[0].mxu0
    %v912 = vadd.f32 0.0, %v911
    %v913 = vpop.f32.mrb[0].mxu0
    %v914 = vadd.f32 0.0, %v913
    %915 = vdwg.mxu0
    %916 = vmatprep.subr.bf16.mxu0 %v804
    %917 = vmatpush1.bf16.msra.mxu0 %v803
    %918 = vmatprep.subr.bf16.mxu0 %v808
    %919 = vmatpush1.bf16.msra.mxu0 %v807
    %920 = vmatprep.subr.bf16.mxu0 %v812
    %921 = vmatpush1.bf16.msra.mxu0 %v811
    %922 = vmatprep.subr.bf16.mxu0 %v816
    %923 = vmatpush1.bf16.msra.mxu0 %v815
    %924 = vmatprep.subr.bf16.mxu0 %v820
    %925 = vmatpush1.bf16.msra.mxu0 %v819
    %926 = vmatprep.subr.bf16.mxu0 %v861
    %927 = vmatpush1.bf16.msra.mxu0 %v858
    %928 = vmatprep.subr.bf16.mxu0 0
    %929 = vmatpush1.bf16.msra.mxu0 0
    %930 = vmatprep.subr.bf16.mxu0 0
    %931 = vmatpush1.bf16.msra.mxu0 0
    %932 = vmatprep.subr.bf16.mxu0 0
    %933 = vmatpush1.bf16.msra.mxu0 0
    %934 = vmatprep.subr.bf16.mxu0 0
    %935 = vmatpush1.bf16.msra.mxu0 0
    %936 = vmatprep.subr.bf16.mxu0 0
    %937 = vmatpush1.bf16.msra.mxu0 0
    %938 = vmatprep.subr.bf16.mxu0 0
    %939 = vmatpush1.bf16.msra.mxu0 0
    %940 = vmatprep.subr.bf16.mxu0 0
    %941 = vmatpush1.bf16.msra.mxu0 0
    %942 = vmatprep.subr.bf16.mxu0 0
    %943 = vmatpush1.bf16.msra.mxu0 0
    %944 = vmatprep.subr.bf16.mxu0 0
    %945 = vmatpush1.bf16.msra.mxu0 0
    %946 = vmatprep.subr.bf16.mxu0 0
    %947 = vmatpush1.bf16.msra.mxu0 0
    %948 = vmatprep.mubr.bf16.mxu0 0
    %949 = vmatmul.mubr.bf16.gmra.mrb[0].mxu0 %v846
    %v950 = vpop.f32.mrb[0].mxu0
    %v951 = vadd.f32 0.0, %v950
    %v952 = vpop.f32.mrb[0].mxu0
    %v953 = vadd.f32 0.0, %v952
    %v954 = vpop.f32.mrb[0].mxu0
    %v955 = vadd.f32 0.0, %v954
    %v956 = vpop.f32.mrb[0].mxu0
    %v957 = vadd.f32 0.0, %v956
    %958 = vmatprep.mubr.bf16.mxu0 0
    %959 = vmatmul.mubr.bf16.gmra.mrb[0].mxu0 %v849
    %v960 = vpop.f32.mrb[0].mxu0
    %v961 = vadd.f32 0.0, %v960
    %v962 = vpop.f32.mrb[0].mxu0
    %v963 = vadd.f32 0.0, %v962
    %v964 = vpop.f32.mrb[0].mxu0
    %v965 = vadd.f32 0.0, %v964
    %v966 = vpop.f32.mrb[0].mxu0
    %v967 = vadd.f32 0.0, %v966
    %968 = vdwg.mxu0
    %v969 = vadd.f32 %v625, %v898
    %v970 = vadd.f32 %v627, %v900
    %v971 = vadd.f32 %v678, %v951
    %v972 = vadd.f32 %v680, %v953
    %v973 = vadd.f32 %v629, %v902
    %v974 = vadd.f32 %v631, %v904
    %v975 = vadd.f32 %v682, %v955
    %v976 = vadd.f32 %v684, %v957
    %v977 = vadd.f32 %v635, %v908
    %v978 = vadd.f32 %v637, %v910
    %v979 = vadd.f32 %v688, %v961
    %v980 = vadd.f32 %v690, %v963
    %v981 = vadd.f32 %v639, %v912
    %v982 = vadd.f32 %v641, %v914
    %v983 = vadd.f32 %v692, %v965
    %v984 = vadd.f32 %v694, %v967
    %v985 = vmax.f32 %v969, %v971
    %v986 = vmax.f32 %v970, %v972
    %v987 = vmax.f32 %v973, %v975
    %v988 = vmax.f32 %v974, %v976
    %v989 = vmax.f32 %v977, %v979
    %v990 = vmax.f32 %v978, %v980
    %v991 = vmax.f32 %v981, %v983
    %v992 = vmax.f32 %v982, %v984
    %v995 = vrot.slane %v985, 1
    %v996 = vrot.slane %v986, 1
    %v999 = vmax.f32 %v985, %v995
    %v1000 = vmax.f32 %v986, %v996
    %v1003 = vrot.slane %v987, 1
    %v1004 = vrot.slane %v988, 1
    %v1007 = vmax.f32 %v987, %v1003
    %v1008 = vmax.f32 %v988, %v1004
    %v1011 = vrot.slane %v989, 1
    %v1012 = vrot.slane %v990, 1
    %v1015 = vmax.f32 %v989, %v1011
    %v1016 = vmax.f32 %v990, %v1012
    %v1019 = vrot.slane %v991, 1
    %v1020 = vrot.slane %v992, 1
    %v1023 = vmax.f32 %v991, %v1019
    %v1024 = vmax.f32 %v992, %v1020
    %v1027 = vrot.slane %v999, 1
    %v1028 = vrot.slane %v1000, 1
    %v1031 = vrot.slane %v999, 2
    %v1032 = vrot.slane %v1000, 2
    %v1035 = vrot.slane %v999, 3
    %v1036 = vrot.slane %v1000, 3
    %v1041 = vrot.slane %v1007, 4
    %v1042 = vrot.slane %v1008, 4
    %v1045 = vrot.slane %v1007, 5
    %v1046 = vrot.slane %v1008, 5
    %v1049 = vrot.slane %v1007, 6
    %v1050 = vrot.slane %v1008, 6
    %v1053 = vrot.slane %v1007, 7
    %v1054 = vrot.slane %v1008, 7
    %v1059 = vrot.slane %v1015, 1
    %v1060 = vrot.slane %v1016, 1
    %v1063 = vrot.slane %v1015, 2
    %v1064 = vrot.slane %v1016, 2
    %v1067 = vrot.slane %v1015, 3
    %v1068 = vrot.slane %v1016, 3
    %v1073 = vrot.slane %v1023, 4
    %v1074 = vrot.slane %v1024, 4
    %v1077 = vrot.slane %v1023, 5
    %v1078 = vrot.slane %v1024, 5
    %v1081 = vrot.slane %v1023, 6
    %v1082 = vrot.slane %v1024, 6
    %vm1085 = vcmask 1040384
    %v1086 = vsel %vm1085, %v999, %v1027
    %v1087 = vsel %vm1085, %v1000, %v1028
    %vm1088 = vcmask 1041408
    %v1089 = vsel %vm1088, %v1086, %v1031
    %v1090 = vsel %vm1088, %v1087, %v1032
    %vm1091 = vcmask 1042432
    %v1092 = vsel %vm1091, %v1089, %v1035
    %v1093 = vsel %vm1091, %v1090, %v1036
    %v1094 = vsel %vm95, %v1092, %v1041
    %v1095 = vsel %vm95, %v1093, %v1042
    %vm1096 = vcmask 1044480
    %v1097 = vsel %vm1096, %v1094, %v1045
    %v1098 = vsel %vm1096, %v1095, %v1046
    %v1099 = vsel %vm332, %v1097, %v1049
    %v1100 = vsel %vm332, %v1098, %v1050
    %v1101 = vsel %vm333, %v1099, %v1053
    %v1102 = vsel %vm333, %v1100, %v1054
    %v1103 = vsel %vm1085, %v1015, %v1059
    %v1104 = vsel %vm1085, %v1016, %v1060
    %v1105 = vsel %vm1088, %v1103, %v1063
    %v1106 = vsel %vm1088, %v1104, %v1064
    %v1107 = vsel %vm1091, %v1105, %v1067
    %v1108 = vsel %vm1091, %v1106, %v1068
    %v1109 = vsel %vm95, %v1107, %v1073
    %v1110 = vsel %vm95, %v1108, %v1074
    %v1111 = vsel %vm1096, %v1109, %v1077
    %v1112 = vsel %vm1096, %v1110, %v1078
    %v1113 = vsel %vm332, %v1111, %v1081
    %v1114 = vsel %vm332, %v1112, %v1082
    %v1115 = vld [vmem:[%s2] sm:$0x3]
    %v1117 = vlaneseq
    %v1118 = vshrl.u32 %v1117, 7
    %v1119 = vsub.s32 0, %v1118
    %v1120 = vrot.slane %v1115, %v1119
    %v1121 = vlaneseq
    %v1122 = vshrl.u32 %v1121, 7
    %v1123 = vsub.s32 1, %v1122
    %v1124 = vrot.slane %v1115, %v1123
    %v1127 = vadd.f32 %v1101, %v1120
    %v1128 = vadd.f32 %v1102, %v1124
    %v1129 = vadd.f32 %v1113, %v1120
    %v1130 = vadd.f32 %v1114, %v1124
    %vm1131 = vcmp.gt.f32.partialorder %v1127, 0.0
    %vm1132 = vcmp.gt.f32.partialorder %v1128, 0.0
    %vm1133 = vcmp.gt.f32.partialorder %v1129, 0.0
    %vm1134 = vcmp.gt.f32.partialorder %v1130, 0.0
    %v1135 = vmin.f32 %v1127, 0.0
    %v1136 = vmin.f32 %v1128, 0.0
    %v1137 = vmin.f32 %v1129, 0.0
    %v1138 = vmin.f32 %v1130, 0.0
    %v1139 = vmul.f32 %v1135, 1.442695
    %v1140 = vpow.pop %v1139
    %v1141 = vmul.f32 %v1136, 1.442695
    %v1142 = vpow.pop %v1141
    %v1143 = vmul.f32 %v1137, 1.442695
    %v1144 = vpow.pop %v1143
    %v1145 = vmul.f32 %v1138, 1.442695
    %v1146 = vpow.pop %v1145
    %v1147 = vsub.f32 %v1140, 1.0
    %v1148 = vsub.f32 %v1142, 1.0
    %v1149 = vsub.f32 %v1144, 1.0
    %v1150 = vsub.f32 %v1146, 1.0
    %v1151 = vsel %vm1131, %v1127, %v1147
    %v1152 = vsel %vm1132, %v1128, %v1148
    %v1153 = vsel %vm1133, %v1129, %v1149
    %v1154 = vsel %vm1134, %v1130, %v1150
    %v1155 = vpack.c.bf16 %v1153, %v1151
    %v1156 = vpack.c.bf16 %v1154, %v1152
    %v1159 = vunpack.c.l.b16 %v1155
    %v1160 = vunpack.c.l.b16 %v1156
    %v1161 = vunpack.c.h.b16 %v1155
    %v1162 = vunpack.c.h.b16 %v1156
    %v1163 = vpack.c.b16 %v1160, %v1159
    %v1164 = vpack.c.b16 %v1162, %v1161
    %vm1165 = vsmask.f32 4368
    %vm1166 = vmor %vm101, %vm1165
    %v1168 = vshrl.u32 %v1163, 16
    %v1170 = vrot.slane %v1168, 7
    %v1171 = vshll.u32 %v1163, 16
    %v1173 = vor.u32 %v1170, %v1171
    %v1174 = vrot.slane %v1170, 4
    %v1176 = vshrl.u32 %v1164, 16
    %v1178 = vrot.slane %v1176, 7
    %v1179 = vshll.u32 %v1164, 16
    %v1181 = vor.u32 %v1178, %v1179
    %v1182 = vsel %vm1166, %v1174, %v1181
    %vm1185 = vcmask 1043456
    %vm1186 = vsmask.f32 7938
    %vm1187 = vmand %vm1185, %vm1186
    %vm1188 = vcmask 916484
    %vm1189 = vsmask.f32 7954
    %vm1190 = vmand %vm1188, %vm1189
    %vm1191 = vmor %vm1190, %vm1187
    %v1192 = vld [vmem:[#allocation2] sm:$0xff]
    %v1193 = vsel %vm1191, %v1173, %v1192
    %1194 = vst [vmem:[#allocation2] sm:$0xff] %v1193
    %1195 = vst.msk [vmem:[#allocation2 + $0x8] sm:$0xff] %vm97, %v1182
    %v1196 = vld [vmem:[#allocation2] sm:$0xff]
    %v1197 = vld [vmem:[#allocation2 + $0x8] sm:$0x77]
    %v1198 = vld [vmem:[#allocation5] sm:$0xff]
    %v1199 = vld [vmem:[#allocation5 + $0x8] sm:$0xff]
    %v1200 = vld [vmem:[#allocation5 + $0x10] sm:$0xff]
    %v1201 = vld [vmem:[#allocation5 + $0x18] sm:$0xff]
    %v1202 = vld [vmem:[#allocation5 + $0x20] sm:$0xff]
    %v1203 = vld [vmem:[#allocation5 + $0x28] sm:$0xff]
    %v1204 = vld [vmem:[#allocation5 + $0x30] sm:$0xff]
    %v1205 = vld [vmem:[#allocation5 + $0x38] sm:$0xff]
    %v1206 = vld [vmem:[#allocation5 + $0x40] sm:$0xff]
    %v1207 = vld [vmem:[#allocation5 + $0x48] sm:$0xff]
    %v1208 = vld [vmem:[#allocation5 + $0x50] sm:$0xff]
    %v1209 = vld [vmem:[#allocation5 + $0x58] sm:$0xff]
    %v1210 = vld [vmem:[#allocation5 + $0x60] sm:$0xff]
    %v1211 = vld [vmem:[#allocation5 + $0x68] sm:$0xff]
    %v1212 = vld [vmem:[#allocation5 + $0x70] sm:$0xff]
    %v1213 = vld [vmem:[#allocation5 + $0x78] sm:$0xff]
    %v1214 = vld [vmem:[#allocation5 + $0x80] sm:$0xff]
    %v1215 = vld [vmem:[#allocation5 + $0x88] sm:$0xff]
    %v1216 = vld [vmem:[#allocation5 + $0x90] sm:$0xff]
    %v1217 = vld [vmem:[#allocation5 + $0x98] sm:$0xff]
    %v1218 = vld [vmem:[#allocation5 + $0xa0] sm:$0xff]
    %v1219 = vld [vmem:[#allocation5 + $0xa8] sm:$0xff]
    %v1220 = vld [vmem:[#allocation5 + $0xb0] sm:$0xff]
    %v1221 = vld [vmem:[#allocation5 + $0xb8] sm:$0xff]
    %v1222 = vld [vmem:[#allocation5 + $0xc0] sm:$0xff]
    %v1223 = vld [vmem:[#allocation5 + $0xc8] sm:$0xff]
    %v1224 = vld [vmem:[#allocation5 + $0xd0] sm:$0xff]
    %v1225 = vld [vmem:[#allocation5 + $0xd8] sm:$0xff]
    %v1226 = vld [vmem:[#allocation5 + $0xe0] sm:$0xff]
    %v1227 = vld [vmem:[#allocation5 + $0xe8] sm:$0xff]
    %v1228 = vld [vmem:[#allocation5 + $0xf0] sm:$0xff]
    %v1229 = vld [vmem:[#allocation5 + $0xf8] sm:$0xff]
    %v1230 = vld [vmem:[#allocation5 + $0x100] sm:$0xff]
    %v1231 = vld [vmem:[#allocation5 + $0x108] sm:$0xff]
    %v1232 = vld [vmem:[#allocation5 + $0x110] sm:$0xff]
    %v1233 = vld [vmem:[#allocation5 + $0x118] sm:$0xff]
    %v1234 = vld [vmem:[#allocation5 + $0x120] sm:$0xff]
    %v1235 = vld [vmem:[#allocation5 + $0x128] sm:$0xff]
    %v1236 = vld [vmem:[#allocation5 + $0x130] sm:$0xff]
    %v1237 = vld [vmem:[#allocation5 + $0x138] sm:$0xff]
    %v1238 = vld [vmem:[#allocation5 + $0x140] sm:$0xff]
    %v1239 = vld [vmem:[#allocation5 + $0x148] sm:$0xff]
    %v1240 = vld [vmem:[#allocation5 + $0x150] sm:$0xff]
    %v1241 = vld [vmem:[#allocation5 + $0x158] sm:$0xff]
    %v1242 = vld [vmem:[#allocation5 + $0x160] sm:$0xff]
    %v1243 = vld [vmem:[#allocation5 + $0x168] sm:$0xff]
    %v1244 = vld [vmem:[#allocation5 + $0x170] sm:$0xff]
    %v1245 = vld [vmem:[#allocation5 + $0x178] sm:$0xff]
    %v1246 = vld [vmem:[#allocation5 + $0x180] sm:$0xff]
    %v1247 = vld [vmem:[#allocation5 + $0x188] sm:$0xff]
    %v1248 = vld [vmem:[#allocation5 + $0x190] sm:$0xff]
    %v1249 = vld [vmem:[#allocation5 + $0x198] sm:$0xff]
    %v1250 = vld [vmem:[#allocation5 + $0x1a0] sm:$0xff]
    %v1251 = vld [vmem:[#allocation5 + $0x1a8] sm:$0xff]
    %v1252 = vld [vmem:[#allocation5 + $0x1b0] sm:$0xff]
    %v1253 = vld [vmem:[#allocation5 + $0x1b8] sm:$0xff]
    %v1254 = vld [vmem:[#allocation5 + $0x1c0] sm:$0xff]
    %v1255 = vld [vmem:[#allocation5 + $0x1c8] sm:$0xff]
    %v1256 = vld [vmem:[#allocation5 + $0x1d0] sm:$0xff]
    %v1257 = vld [vmem:[#allocation5 + $0x1d8] sm:$0xff]
    %v1258 = vld [vmem:[#allocation2 + $0x8] sm:$0xff]
    %s1259 = scalar_lea.vmem [#allocation5], 480
    %v1260 = vld [vmem:[%s1259] sm:$0xff]
    %v1261 = vld [vmem:[%s1259 + $0x8] sm:$0xff]
    %v1262 = vld [vmem:[%s1259 + $0x10] sm:$0xff]
    %v1263 = vld [vmem:[%s1259 + $0x18] sm:$0xff]
    %v1264 = vld [vmem:[%s1259 + $0x20] sm:$0xff]
    %v1265 = vld [vmem:[%s1259 + $0x28] sm:$0xff]
    %v1266 = vld [vmem:[%s1259 + $0x30] sm:$0xff]
    %v1267 = vld [vmem:[%s1259 + $0x38] sm:$0xff]
    %v1268 = vld [vmem:[%s1259 + $0x40] sm:$0xff]
    %v1269 = vld [vmem:[%s1259 + $0x48] sm:$0xff]
    %v1270 = vld [vmem:[%s1259 + $0x50] sm:$0xff]
    %v1271 = vld [vmem:[%s1259 + $0x58] sm:$0xff]
    %v1272 = vld [vmem:[%s1259 + $0x60] sm:$0xff]
    %v1273 = vld [vmem:[%s1259 + $0x68] sm:$0xff]
    %v1274 = vld [vmem:[%s1259 + $0x70] sm:$0xff]
    %v1275 = vld [vmem:[%s1259 + $0x78] sm:$0xff]
    %v1276 = vld [vmem:[%s1259 + $0x80] sm:$0xff]
    %v1277 = vld [vmem:[%s1259 + $0x88] sm:$0xff]
    %v1278 = vld [vmem:[%s1259 + $0x90] sm:$0xff]
    %v1279 = vld [vmem:[%s1259 + $0x98] sm:$0xff]
    %v1280 = vld [vmem:[%s1259 + $0xa0] sm:$0xff]
    %v1281 = vld [vmem:[%s1259 + $0xa8] sm:$0xff]
    %v1282 = vld [vmem:[%s1259 + $0xb0] sm:$0xff]
    %v1283 = vld [vmem:[%s1259 + $0xb8] sm:$0xff]
    %v1284 = vld [vmem:[%s1259 + $0xc0] sm:$0xff]
    %v1285 = vld [vmem:[%s1259 + $0xc8] sm:$0xff]
    %v1286 = vld [vmem:[%s1259 + $0xd0] sm:$0xff]
    %v1287 = vld [vmem:[%s1259 + $0xd8] sm:$0xff]
    %v1288 = vld [vmem:[%s1259 + $0xe0] sm:$0xff]
    %v1289 = vld [vmem:[%s1259 + $0xe8] sm:$0xff]
    %v1290 = vld [vmem:[%s1259 + $0xf0] sm:$0xff]
    %v1291 = vld [vmem:[%s1259 + $0xf8] sm:$0xff]
    %v1292 = vld [vmem:[%s1259 + $0x100] sm:$0xff]
    %v1293 = vld [vmem:[%s1259 + $0x108] sm:$0xff]
    %v1294 = vld [vmem:[%s1259 + $0x110] sm:$0xff]
    %v1295 = vld [vmem:[%s1259 + $0x118] sm:$0xff]
    %v1296 = vld [vmem:[%s1259 + $0x120] sm:$0xff]
    %v1297 = vld [vmem:[%s1259 + $0x128] sm:$0xff]
    %v1298 = vld [vmem:[%s1259 + $0x130] sm:$0xff]
    %v1299 = vld [vmem:[%s1259 + $0x138] sm:$0xff]
    %v1300 = vld [vmem:[%s1259 + $0x140] sm:$0xff]
    %v1301 = vld [vmem:[%s1259 + $0x148] sm:$0xff]
    %v1302 = vld [vmem:[%s1259 + $0x150] sm:$0xff]
    %v1303 = vld [vmem:[%s1259 + $0x158] sm:$0xff]
    %v1304 = vld [vmem:[%s1259 + $0x160] sm:$0xff]
    %v1305 = vld [vmem:[%s1259 + $0x168] sm:$0xff]
    %v1306 = vld [vmem:[%s1259 + $0x170] sm:$0xff]
    %v1307 = vld [vmem:[%s1259 + $0x178] sm:$0xff]
    %v1308 = vld [vmem:[%s1259 + $0x180] sm:$0xff]
    %v1309 = vld [vmem:[%s1259 + $0x188] sm:$0xff]
    %v1310 = vld [vmem:[%s1259 + $0x190] sm:$0xff]
    %v1311 = vld [vmem:[%s1259 + $0x198] sm:$0xff]
    %v1312 = vld [vmem:[%s1259 + $0x1a0] sm:$0xff]
    %v1313 = vld [vmem:[%s1259 + $0x1a8] sm:$0xff]
    %v1314 = vld [vmem:[%s1259 + $0x1b0] sm:$0xff]
    %v1315 = vld [vmem:[%s1259 + $0x1b8] sm:$0xff]
    %v1316 = vld [vmem:[%s1259 + $0x1c0] sm:$0xff]
    %v1317 = vld [vmem:[%s1259 + $0x1c8] sm:$0xff]
    %v1318 = vld [vmem:[%s1259 + $0x1d0] sm:$0xff]
    %v1319 = vld [vmem:[%s1259 + $0x1d8] sm:$0xff]
    %v1322 = vunpack.c.l.b16 %v1196
    %v1323 = vunpack.c.h.b16 %v1196
    %v1324 = vunpack.c.l.b16 %v1258
    %v1325 = vunpack.c.h.b16 %v1258
    %v1326 = vpack.c.b16 %v1324, %v1322
    %v1327 = vpack.c.b16 %v1325, %v1323
    %v1329 = vshrl.u32 %v1326, 16
    %v1331 = vshll.u32 %v1326, 16
    %v1333 = vrot.slane %v1331, 1
    %v1334 = vor.u32 %v1329, %v1333
    %v1336 = vshrl.u32 %v1327, 16
    %v1338 = vshll.u32 %v1327, 16
    %v1340 = vrot.slane %v1338, 1
    %v1341 = vor.u32 %v1336, %v1340
    %v1403 = vunpack.c.l.b16 %v1260
    %v1404 = vunpack.c.h.b16 %v1260
    %v1405 = vunpack.c.l.b16 %v1261
    %v1406 = vunpack.c.h.b16 %v1261
    %v1407 = vunpack.c.l.b16 %v1262
    %v1408 = vunpack.c.h.b16 %v1262
    %v1409 = vunpack.c.l.b16 %v1263
    %v1410 = vunpack.c.h.b16 %v1263
    %v1411 = vunpack.c.l.b16 %v1264
    %v1412 = vunpack.c.h.b16 %v1264
    %v1413 = vunpack.c.l.b16 %v1265
    %v1414 = vunpack.c.h.b16 %v1265
    %v1415 = vunpack.c.l.b16 %v1266
    %v1416 = vunpack.c.h.b16 %v1266
    %v1417 = vunpack.c.l.b16 %v1267
    %v1418 = vunpack.c.h.b16 %v1267
    %v1419 = vunpack.c.l.b16 %v1268
    %v1420 = vunpack.c.h.b16 %v1268
    %v1421 = vunpack.c.l.b16 %v1269
    %v1422 = vunpack.c.h.b16 %v1269
    %v1423 = vunpack.c.l.b16 %v1270
    %v1424 = vunpack.c.h.b16 %v1270
    %v1425 = vunpack.c.l.b16 %v1271
    %v1426 = vunpack.c.h.b16 %v1271
    %v1427 = vunpack.c.l.b16 %v1272
    %v1428 = vunpack.c.h.b16 %v1272
    %v1429 = vunpack.c.l.b16 %v1273
    %v1430 = vunpack.c.h.b16 %v1273
    %v1431 = vunpack.c.l.b16 %v1274
    %v1432 = vunpack.c.h.b16 %v1274
    %v1433 = vunpack.c.l.b16 %v1275
    %v1434 = vunpack.c.h.b16 %v1275
    %v1435 = vunpack.c.l.b16 %v1276
    %v1436 = vunpack.c.h.b16 %v1276
    %v1437 = vunpack.c.l.b16 %v1277
    %v1438 = vunpack.c.h.b16 %v1277
    %v1439 = vunpack.c.l.b16 %v1278
    %v1440 = vunpack.c.h.b16 %v1278
    %v1441 = vunpack.c.l.b16 %v1279
    %v1442 = vunpack.c.h.b16 %v1279
    %v1443 = vunpack.c.l.b16 %v1280
    %v1444 = vunpack.c.h.b16 %v1280
    %v1445 = vunpack.c.l.b16 %v1281
    %v1446 = vunpack.c.h.b16 %v1281
    %v1447 = vunpack.c.l.b16 %v1282
    %v1448 = vunpack.c.h.b16 %v1282
    %v1449 = vunpack.c.l.b16 %v1283
    %v1450 = vunpack.c.h.b16 %v1283
    %v1451 = vunpack.c.l.b16 %v1284
    %v1452 = vunpack.c.h.b16 %v1284
    %v1453 = vunpack.c.l.b16 %v1285
    %v1454 = vunpack.c.h.b16 %v1285
    %v1455 = vunpack.c.l.b16 %v1286
    %v1456 = vunpack.c.h.b16 %v1286
    %v1457 = vunpack.c.l.b16 %v1287
    %v1458 = vunpack.c.h.b16 %v1287
    %v1459 = vunpack.c.l.b16 %v1288
    %v1460 = vunpack.c.h.b16 %v1288
    %v1461 = vunpack.c.l.b16 %v1289
    %v1462 = vunpack.c.h.b16 %v1289
    %v1463 = vunpack.c.l.b16 %v1290
    %v1464 = vunpack.c.h.b16 %v1290
    %v1465 = vunpack.c.l.b16 %v1291
    %v1466 = vunpack.c.h.b16 %v1291
    %v1467 = vunpack.c.l.b16 %v1292
    %v1468 = vunpack.c.h.b16 %v1292
    %v1469 = vunpack.c.l.b16 %v1293
    %v1470 = vunpack.c.h.b16 %v1293
    %v1471 = vunpack.c.l.b16 %v1294
    %v1472 = vunpack.c.h.b16 %v1294
    %v1473 = vunpack.c.l.b16 %v1295
    %v1474 = vunpack.c.h.b16 %v1295
    %v1475 = vunpack.c.l.b16 %v1296
    %v1476 = vunpack.c.h.b16 %v1296
    %v1477 = vunpack.c.l.b16 %v1297
    %v1478 = vunpack.c.h.b16 %v1297
    %v1479 = vunpack.c.l.b16 %v1298
    %v1480 = vunpack.c.h.b16 %v1298
    %v1481 = vunpack.c.l.b16 %v1299
    %v1482 = vunpack.c.h.b16 %v1299
    %v1483 = vunpack.c.l.b16 %v1300
    %v1484 = vunpack.c.h.b16 %v1300
    %v1485 = vunpack.c.l.b16 %v1301
    %v1486 = vunpack.c.h.b16 %v1301
    %v1487 = vunpack.c.l.b16 %v1302
    %v1488 = vunpack.c.h.b16 %v1302
    %v1489 = vunpack.c.l.b16 %v1303
    %v1490 = vunpack.c.h.b16 %v1303
    %v1491 = vunpack.c.l.b16 %v1304
    %v1492 = vunpack.c.h.b16 %v1304
    %v1493 = vunpack.c.l.b16 %v1305
    %v1494 = vunpack.c.h.b16 %v1305
    %v1495 = vunpack.c.l.b16 %v1306
    %v1496 = vunpack.c.h.b16 %v1306
    %v1497 = vunpack.c.l.b16 %v1307
    %v1498 = vunpack.c.h.b16 %v1307
    %v1499 = vunpack.c.l.b16 %v1308
    %v1500 = vunpack.c.h.b16 %v1308
    %v1501 = vunpack.c.l.b16 %v1309
    %v1502 = vunpack.c.h.b16 %v1309
    %v1503 = vunpack.c.l.b16 %v1310
    %v1504 = vunpack.c.h.b16 %v1310
    %v1505 = vunpack.c.l.b16 %v1311
    %v1506 = vunpack.c.h.b16 %v1311
    %v1507 = vunpack.c.l.b16 %v1312
    %v1508 = vunpack.c.h.b16 %v1312
    %v1509 = vunpack.c.l.b16 %v1313
    %v1510 = vunpack.c.h.b16 %v1313
    %v1511 = vunpack.c.l.b16 %v1314
    %v1512 = vunpack.c.h.b16 %v1314
    %v1513 = vunpack.c.l.b16 %v1315
    %v1514 = vunpack.c.h.b16 %v1315
    %v1515 = vunpack.c.l.b16 %v1316
    %v1516 = vunpack.c.h.b16 %v1316
    %v1517 = vunpack.c.l.b16 %v1317
    %v1518 = vunpack.c.h.b16 %v1317
    %v1519 = vunpack.c.l.b16 %v1318
    %v1520 = vunpack.c.h.b16 %v1318
    %v1521 = vunpack.c.l.b16 %v1319
    %v1522 = vunpack.c.h.b16 %v1319
    %v1523 = vpack.c.b16 %v1407, %v1403
    %v1524 = vpack.c.b16 %v1408, %v1404
    %v1525 = vpack.c.b16 %v1409, %v1405
    %v1526 = vpack.c.b16 %v1410, %v1406
    %v1527 = vpack.c.b16 %v1415, %v1411
    %v1528 = vpack.c.b16 %v1416, %v1412
    %v1529 = vpack.c.b16 %v1417, %v1413
    %v1530 = vpack.c.b16 %v1418, %v1414
    %v1531 = vpack.c.b16 %v1423, %v1419
    %v1532 = vpack.c.b16 %v1424, %v1420
    %v1533 = vpack.c.b16 %v1425, %v1421
    %v1534 = vpack.c.b16 %v1426, %v1422
    %v1535 = vpack.c.b16 %v1431, %v1427
    %v1536 = vpack.c.b16 %v1432, %v1428
    %v1537 = vpack.c.b16 %v1433, %v1429
    %v1538 = vpack.c.b16 %v1434, %v1430
    %v1539 = vpack.c.b16 %v1439, %v1435
    %v1540 = vpack.c.b16 %v1440, %v1436
    %v1541 = vpack.c.b16 %v1441, %v1437
    %v1542 = vpack.c.b16 %v1442, %v1438
    %v1543 = vpack.c.b16 %v1447, %v1443
    %v1544 = vpack.c.b16 %v1448, %v1444
    %v1545 = vpack.c.b16 %v1449, %v1445
    %v1546 = vpack.c.b16 %v1450, %v1446
    %v1547 = vpack.c.b16 %v1455, %v1451
    %v1548 = vpack.c.b16 %v1456, %v1452
    %v1549 = vpack.c.b16 %v1457, %v1453
    %v1550 = vpack.c.b16 %v1458, %v1454
    %v1551 = vpack.c.b16 %v1463, %v1459
    %v1552 = vpack.c.b16 %v1464, %v1460
    %v1553 = vpack.c.b16 %v1465, %v1461
    %v1554 = vpack.c.b16 %v1466, %v1462
    %v1555 = vpack.c.b16 %v1471, %v1467
    %v1556 = vpack.c.b16 %v1472, %v1468
    %v1557 = vpack.c.b16 %v1473, %v1469
    %v1558 = vpack.c.b16 %v1474, %v1470
    %v1559 = vpack.c.b16 %v1479, %v1475
    %v1560 = vpack.c.b16 %v1480, %v1476
    %v1561 = vpack.c.b16 %v1481, %v1477
    %v1562 = vpack.c.b16 %v1482, %v1478
    %v1563 = vpack.c.b16 %v1487, %v1483
    %v1564 = vpack.c.b16 %v1488, %v1484
    %v1565 = vpack.c.b16 %v1489, %v1485
    %v1566 = vpack.c.b16 %v1490, %v1486
    %v1567 = vpack.c.b16 %v1495, %v1491
    %v1568 = vpack.c.b16 %v1496, %v1492
    %v1569 = vpack.c.b16 %v1497, %v1493
    %v1570 = vpack.c.b16 %v1498, %v1494
    %v1571 = vpack.c.b16 %v1503, %v1499
    %v1572 = vpack.c.b16 %v1504, %v1500
    %v1573 = vpack.c.b16 %v1505, %v1501
    %v1574 = vpack.c.b16 %v1506, %v1502
    %v1575 = vpack.c.b16 %v1511, %v1507
    %v1576 = vpack.c.b16 %v1512, %v1508
    %v1577 = vpack.c.b16 %v1513, %v1509
    %v1578 = vpack.c.b16 %v1514, %v1510
    %v1579 = vpack.c.b16 %v1519, %v1515
    %v1580 = vpack.c.b16 %v1520, %v1516
    %v1581 = vpack.c.b16 %v1521, %v1517
    %v1582 = vpack.c.b16 %v1522, %v1518
    %vm1643 = vcmask 916480
    %v1645 = vsel %vm1643, %v1341, 0
    %1647 = vmatprep.subr.bf16.mxu0 %v1524
    %1648 = vmatpush1.bf16.msra.mxu0 %v1523
    %1649 = vmatprep.subr.bf16.mxu0 %v1528
    %1650 = vmatpush1.bf16.msra.mxu0 %v1527
    %1651 = vmatprep.subr.bf16.mxu0 %v1532
    %1652 = vmatpush1.bf16.msra.mxu0 %v1531
    %1653 = vmatprep.subr.bf16.mxu0 %v1536
    %1654 = vmatpush1.bf16.msra.mxu0 %v1535
    %1655 = vmatprep.subr.bf16.mxu0 %v1540
    %1656 = vmatpush1.bf16.msra.mxu0 %v1539
    %1657 = vmatprep.subr.bf16.mxu0 %v1544
    %1658 = vmatpush1.bf16.msra.mxu0 %v1543
    %1659 = vmatprep.subr.bf16.mxu0 %v1548
    %1660 = vmatpush1.bf16.msra.mxu0 %v1547
    %1661 = vmatprep.subr.bf16.mxu0 %v1552
    %1662 = vmatpush1.bf16.msra.mxu0 %v1551
    %1663 = vmatprep.subr.bf16.mxu0 %v1556
    %1664 = vmatpush1.bf16.msra.mxu0 %v1555
    %1665 = vmatprep.subr.bf16.mxu0 %v1560
    %1666 = vmatpush1.bf16.msra.mxu0 %v1559
    %1667 = vmatprep.subr.bf16.mxu0 %v1564
    %1668 = vmatpush1.bf16.msra.mxu0 %v1563
    %1669 = vmatprep.subr.bf16.mxu0 %v1568
    %1670 = vmatpush1.bf16.msra.mxu0 %v1567
    %1671 = vmatprep.subr.bf16.mxu0 %v1572
    %1672 = vmatpush1.bf16.msra.mxu0 %v1571
    %1673 = vmatprep.subr.bf16.mxu0 %v1576
    %1674 = vmatpush1.bf16.msra.mxu0 %v1575
    %1675 = vmatprep.subr.bf16.mxu0 %v1580
    %1676 = vmatpush1.bf16.msra.mxu0 %v1579
    %1677 = vmatprep.subr.bf16.mxu0 0
    %1678 = vmatpush1.bf16.msra.mxu0 0
    %1679 = vmatprep.mubr.bf16.mxu0 %v1645
    %1680 = vmatmul.mubr.bf16.gmra.mrb[0].mxu0 %v1334
    %v1681 = vpop.f32.mrb[0].mxu0
    %v1682 = vadd.f32 0.0, %v1681
    %v1683 = vpop.f32.mrb[0].mxu0
    %v1684 = vadd.f32 0.0, %v1683
    %v1685 = vpop.f32.mrb[0].mxu0
    %v1686 = vadd.f32 0.0, %v1685
    %v1687 = vpop.f32.mrb[0].mxu0
    %v1688 = vadd.f32 0.0, %v1687
    %1689 = vdwg.mxu0
    %1690 = vmatprep.subr.bf16.mxu0 %v1526
    %1691 = vmatpush1.bf16.msra.mxu0 %v1525
    %1692 = vmatprep.subr.bf16.mxu0 %v1530
    %1693 = vmatpush1.bf16.msra.mxu0 %v1529
    %1694 = vmatprep.subr.bf16.mxu0 %v1534
    %1695 = vmatpush1.bf16.msra.mxu0 %v1533
    %1696 = vmatprep.subr.bf16.mxu0 %v1538
    %1697 = vmatpush1.bf16.msra.mxu0 %v1537
    %1698 = vmatprep.subr.bf16.mxu0 %v1542
    %1699 = vmatpush1.bf16.msra.mxu0 %v1541
    %1700 = vmatprep.subr.bf16.mxu0 %v1546
    %1701 = vmatpush1.bf16.msra.mxu0 %v1545
    %1702 = vmatprep.subr.bf16.mxu0 %v1550
    %1703 = vmatpush1.bf16.msra.mxu0 %v1549
    %1704 = vmatprep.subr.bf16.mxu0 %v1554
    %1705 = vmatpush1.bf16.msra.mxu0 %v1553
    %1706 = vmatprep.subr.bf16.mxu0 %v1558
    %1707 = vmatpush1.bf16.msra.mxu0 %v1557
    %1708 = vmatprep.subr.bf16.mxu0 %v1562
    %1709 = vmatpush1.bf16.msra.mxu0 %v1561
    %1710 = vmatprep.subr.bf16.mxu0 %v1566
    %1711 = vmatpush1.bf16.msra.mxu0 %v1565
    %1712 = vmatprep.subr.bf16.mxu0 %v1570
    %1713 = vmatpush1.bf16.msra.mxu0 %v1569
    %1714 = vmatprep.subr.bf16.mxu0 %v1574
    %1715 = vmatpush1.bf16.msra.mxu0 %v1573
    %1716 = vmatprep.subr.bf16.mxu0 %v1578
    %1717 = vmatpush1.bf16.msra.mxu0 %v1577
    %1718 = vmatprep.subr.bf16.mxu0 %v1582
    %1719 = vmatpush1.bf16.msra.mxu0 %v1581
    %1720 = vmatprep.subr.bf16.mxu0 0
    %1721 = vmatpush1.bf16.msra.mxu0 0
    %1722 = vmatprep.mubr.bf16.mxu0 %v1645
    %1723 = vmatmul.mubr.bf16.gmra.mrb[0].mxu0 %v1334
    %v1724 = vpop.f32.mrb[0].mxu0
    %v1725 = vadd.f32 0.0, %v1724
    %v1726 = vpop.f32.mrb[0].mxu0
    %v1727 = vadd.f32 0.0, %v1726
    %v1728 = vpop.f32.mrb[0].mxu0
    %v1729 = vadd.f32 0.0, %v1728
    %v1730 = vpop.f32.mrb[0].mxu0
    %v1731 = vadd.f32 0.0, %v1730
    %1732 = vdwg.mxu0
    %v1734 = vunpack.c.l.b16 %v1197
    %v1735 = vunpack.c.h.b16 %v1197
    %v1736 = vpack.c.b16 %v1734, %v1322
    %v1737 = vpack.c.b16 %v1735, %v1323
    %v1799 = vunpack.c.l.b16 %v1198
    %v1800 = vunpack.c.h.b16 %v1198
    %v1801 = vunpack.c.l.b16 %v1199
    %v1802 = vunpack.c.h.b16 %v1199
    %v1803 = vunpack.c.l.b16 %v1200
    %v1804 = vunpack.c.h.b16 %v1200
    %v1805 = vunpack.c.l.b16 %v1201
    %v1806 = vunpack.c.h.b16 %v1201
    %v1807 = vunpack.c.l.b16 %v1202
    %v1808 = vunpack.c.h.b16 %v1202
    %v1809 = vunpack.c.l.b16 %v1203
    %v1810 = vunpack.c.h.b16 %v1203
    %v1811 = vunpack.c.l.b16 %v1204
    %v1812 = vunpack.c.h.b16 %v1204
    %v1813 = vunpack.c.l.b16 %v1205
    %v1814 = vunpack.c.h.b16 %v1205
    %v1815 = vunpack.c.l.b16 %v1206
    %v1816 = vunpack.c.h.b16 %v1206
    %v1817 = vunpack.c.l.b16 %v1207
    %v1818 = vunpack.c.h.b16 %v1207
    %v1819 = vunpack.c.l.b16 %v1208
    %v1820 = vunpack.c.h.b16 %v1208
    %v1821 = vunpack.c.l.b16 %v1209
    %v1822 = vunpack.c.h.b16 %v1209
    %v1823 = vunpack.c.l.b16 %v1210
    %v1824 = vunpack.c.h.b16 %v1210
    %v1825 = vunpack.c.l.b16 %v1211
    %v1826 = vunpack.c.h.b16 %v1211
    %v1827 = vunpack.c.l.b16 %v1212
    %v1828 = vunpack.c.h.b16 %v1212
    %v1829 = vunpack.c.l.b16 %v1213
    %v1830 = vunpack.c.h.b16 %v1213
    %v1831 = vunpack.c.l.b16 %v1214
    %v1832 = vunpack.c.h.b16 %v1214
    %v1833 = vunpack.c.l.b16 %v1215
    %v1834 = vunpack.c.h.b16 %v1215
    %v1835 = vunpack.c.l.b16 %v1216
    %v1836 = vunpack.c.h.b16 %v1216
    %v1837 = vunpack.c.l.b16 %v1217
    %v1838 = vunpack.c.h.b16 %v1217
    %v1839 = vunpack.c.l.b16 %v1218
    %v1840 = vunpack.c.h.b16 %v1218
    %v1841 = vunpack.c.l.b16 %v1219
    %v1842 = vunpack.c.h.b16 %v1219
    %v1843 = vunpack.c.l.b16 %v1220
    %v1844 = vunpack.c.h.b16 %v1220
    %v1845 = vunpack.c.l.b16 %v1221
    %v1846 = vunpack.c.h.b16 %v1221
    %v1847 = vunpack.c.l.b16 %v1222
    %v1848 = vunpack.c.h.b16 %v1222
    %v1849 = vunpack.c.l.b16 %v1223
    %v1850 = vunpack.c.h.b16 %v1223
    %v1851 = vunpack.c.l.b16 %v1224
    %v1852 = vunpack.c.h.b16 %v1224
    %v1853 = vunpack.c.l.b16 %v1225
    %v1854 = vunpack.c.h.b16 %v1225
    %v1855 = vunpack.c.l.b16 %v1226
    %v1856 = vunpack.c.h.b16 %v1226
    %v1857 = vunpack.c.l.b16 %v1227
    %v1858 = vunpack.c.h.b16 %v1227
    %v1859 = vunpack.c.l.b16 %v1228
    %v1860 = vunpack.c.h.b16 %v1228
    %v1861 = vunpack.c.l.b16 %v1229
    %v1862 = vunpack.c.h.b16 %v1229
    %v1863 = vunpack.c.l.b16 %v1230
    %v1864 = vunpack.c.h.b16 %v1230
    %v1865 = vunpack.c.l.b16 %v1231
    %v1866 = vunpack.c.h.b16 %v1231
    %v1867 = vunpack.c.l.b16 %v1232
    %v1868 = vunpack.c.h.b16 %v1232
    %v1869 = vunpack.c.l.b16 %v1233
    %v1870 = vunpack.c.h.b16 %v1233
    %v1871 = vunpack.c.l.b16 %v1234
    %v1872 = vunpack.c.h.b16 %v1234
    %v1873 = vunpack.c.l.b16 %v1235
    %v1874 = vunpack.c.h.b16 %v1235
    %v1875 = vunpack.c.l.b16 %v1236
    %v1876 = vunpack.c.h.b16 %v1236
    %v1877 = vunpack.c.l.b16 %v1237
    %v1878 = vunpack.c.h.b16 %v1237
    %v1879 = vunpack.c.l.b16 %v1238
    %v1880 = vunpack.c.h.b16 %v1238
    %v1881 = vunpack.c.l.b16 %v1239
    %v1882 = vunpack.c.h.b16 %v1239
    %v1883 = vunpack.c.l.b16 %v1240
    %v1884 = vunpack.c.h.b16 %v1240
    %v1885 = vunpack.c.l.b16 %v1241
    %v1886 = vunpack.c.h.b16 %v1241
    %v1887 = vunpack.c.l.b16 %v1242
    %v1888 = vunpack.c.h.b16 %v1242
    %v1889 = vunpack.c.l.b16 %v1243
    %v1890 = vunpack.c.h.b16 %v1243
    %v1891 = vunpack.c.l.b16 %v1244
    %v1892 = vunpack.c.h.b16 %v1244
    %v1893 = vunpack.c.l.b16 %v1245
    %v1894 = vunpack.c.h.b16 %v1245
    %v1895 = vunpack.c.l.b16 %v1246
    %v1896 = vunpack.c.h.b16 %v1246
    %v1897 = vunpack.c.l.b16 %v1247
    %v1898 = vunpack.c.h.b16 %v1247
    %v1899 = vunpack.c.l.b16 %v1248
    %v1900 = vunpack.c.h.b16 %v1248
    %v1901 = vunpack.c.l.b16 %v1249
    %v1902 = vunpack.c.h.b16 %v1249
    %v1903 = vunpack.c.l.b16 %v1250
    %v1904 = vunpack.c.h.b16 %v1250
    %v1905 = vunpack.c.l.b16 %v1251
    %v1906 = vunpack.c.h.b16 %v1251
    %v1907 = vunpack.c.l.b16 %v1252
    %v1908 = vunpack.c.h.b16 %v1252
    %v1909 = vunpack.c.l.b16 %v1253
    %v1910 = vunpack.c.h.b16 %v1253
    %v1911 = vunpack.c.l.b16 %v1254
    %v1912 = vunpack.c.h.b16 %v1254
    %v1913 = vunpack.c.l.b16 %v1255
    %v1914 = vunpack.c.h.b16 %v1255
    %v1915 = vunpack.c.l.b16 %v1256
    %v1916 = vunpack.c.h.b16 %v1256
    %v1917 = vunpack.c.l.b16 %v1257
    %v1918 = vunpack.c.h.b16 %v1257
    %v1919 = vpack.c.b16 %v1803, %v1799
    %v1920 = vpack.c.b16 %v1804, %v1800
    %v1921 = vpack.c.b16 %v1805, %v1801
    %v1922 = vpack.c.b16 %v1806, %v1802
    %v1923 = vpack.c.b16 %v1811, %v1807
    %v1924 = vpack.c.b16 %v1812, %v1808
    %v1925 = vpack.c.b16 %v1813, %v1809
    %v1926 = vpack.c.b16 %v1814, %v1810
    %v1927 = vpack.c.b16 %v1819, %v1815
    %v1928 = vpack.c.b16 %v1820, %v1816
    %v1929 = vpack.c.b16 %v1821, %v1817
    %v1930 = vpack.c.b16 %v1822, %v1818
    %v1931 = vpack.c.b16 %v1827, %v1823
    %v1932 = vpack.c.b16 %v1828, %v1824
    %v1933 = vpack.c.b16 %v1829, %v1825
    %v1934 = vpack.c.b16 %v1830, %v1826
    %v1935 = vpack.c.b16 %v1835, %v1831
    %v1936 = vpack.c.b16 %v1836, %v1832
    %v1937 = vpack.c.b16 %v1837, %v1833
    %v1938 = vpack.c.b16 %v1838, %v1834
    %v1939 = vpack.c.b16 %v1843, %v1839
    %v1940 = vpack.c.b16 %v1844, %v1840
    %v1941 = vpack.c.b16 %v1845, %v1841
    %v1942 = vpack.c.b16 %v1846, %v1842
    %v1943 = vpack.c.b16 %v1851, %v1847
    %v1944 = vpack.c.b16 %v1852, %v1848
    %v1945 = vpack.c.b16 %v1853, %v1849
    %v1946 = vpack.c.b16 %v1854, %v1850
    %v1947 = vpack.c.b16 %v1859, %v1855
    %v1948 = vpack.c.b16 %v1860, %v1856
    %v1949 = vpack.c.b16 %v1861, %v1857
    %v1950 = vpack.c.b16 %v1862, %v1858
    %v1951 = vpack.c.b16 %v1867, %v1863
    %v1952 = vpack.c.b16 %v1868, %v1864
    %v1953 = vpack.c.b16 %v1869, %v1865
    %v1954 = vpack.c.b16 %v1870, %v1866
    %v1955 = vpack.c.b16 %v1875, %v1871
    %v1956 = vpack.c.b16 %v1876, %v1872
    %v1957 = vpack.c.b16 %v1877, %v1873
    %v1958 = vpack.c.b16 %v1878, %v1874
    %v1959 = vpack.c.b16 %v1883, %v1879
    %v1960 = vpack.c.b16 %v1884, %v1880
    %v1961 = vpack.c.b16 %v1885, %v1881
    %v1962 = vpack.c.b16 %v1886, %v1882
    %v1963 = vpack.c.b16 %v1891, %v1887
    %v1964 = vpack.c.b16 %v1892, %v1888
    %v1965 = vpack.c.b16 %v1893, %v1889
    %v1966 = vpack.c.b16 %v1894, %v1890
    %v1967 = vpack.c.b16 %v1899, %v1895
    %v1968 = vpack.c.b16 %v1900, %v1896
    %v1969 = vpack.c.b16 %v1901, %v1897
    %v1970 = vpack.c.b16 %v1902, %v1898
    %v1971 = vpack.c.b16 %v1907, %v1903
    %v1972 = vpack.c.b16 %v1908, %v1904
    %v1973 = vpack.c.b16 %v1909, %v1905
    %v1974 = vpack.c.b16 %v1910, %v1906
    %v1975 = vpack.c.b16 %v1915, %v1911
    %v1976 = vpack.c.b16 %v1916, %v1912
    %v1977 = vpack.c.b16 %v1917, %v1913
    %v1978 = vpack.c.b16 %v1918, %v1914
    %v2040 = vsel %vm1643, %v1737, 0
    %2042 = vmatprep.subr.bf16.mxu0 %v1920
    %2043 = vmatpush1.bf16.msra.mxu0 %v1919
    %2044 = vmatprep.subr.bf16.mxu0 %v1924
    %2045 = vmatpush1.bf16.msra.mxu0 %v1923
    %2046 = vmatprep.subr.bf16.mxu0 %v1928
    %2047 = vmatpush1.bf16.msra.mxu0 %v1927
    %2048 = vmatprep.subr.bf16.mxu0 %v1932
    %2049 = vmatpush1.bf16.msra.mxu0 %v1931
    %2050 = vmatprep.subr.bf16.mxu0 %v1936
    %2051 = vmatpush1.bf16.msra.mxu0 %v1935
    %2052 = vmatprep.subr.bf16.mxu0 %v1940
    %2053 = vmatpush1.bf16.msra.mxu0 %v1939
    %2054 = vmatprep.subr.bf16.mxu0 %v1944
    %2055 = vmatpush1.bf16.msra.mxu0 %v1943
    %2056 = vmatprep.subr.bf16.mxu0 %v1948
    %2057 = vmatpush1.bf16.msra.mxu0 %v1947
    %2058 = vmatprep.subr.bf16.mxu0 %v1952
    %2059 = vmatpush1.bf16.msra.mxu0 %v1951
    %2060 = vmatprep.subr.bf16.mxu0 %v1956
    %2061 = vmatpush1.bf16.msra.mxu0 %v1955
    %2062 = vmatprep.subr.bf16.mxu0 %v1960
    %2063 = vmatpush1.bf16.msra.mxu0 %v1959
    %2064 = vmatprep.subr.bf16.mxu0 %v1964
    %2065 = vmatpush1.bf16.msra.mxu0 %v1963
    %2066 = vmatprep.subr.bf16.mxu0 %v1968
    %2067 = vmatpush1.bf16.msra.mxu0 %v1967
    %2068 = vmatprep.subr.bf16.mxu0 %v1972
    %2069 = vmatpush1.bf16.msra.mxu0 %v1971
    %2070 = vmatprep.subr.bf16.mxu0 %v1976
    %2071 = vmatpush1.bf16.msra.mxu0 %v1975
    %2072 = vmatprep.subr.bf16.mxu0 0
    %2073 = vmatpush1.bf16.msra.mxu0 0
    %2074 = vmatprep.mubr.bf16.mxu0 %v2040
    %2075 = vmatmul.mubr.bf16.gmra.mrb[0].mxu0 %v1736
    %v2076 = vpop.f32.mrb[0].mxu0
    %v2077 = vadd.f32 %v1682, %v2076
    %v2078 = vpop.f32.mrb[0].mxu0
    %v2079 = vadd.f32 %v1684, %v2078
    %v2080 = vpop.f32.mrb[0].mxu0
    %v2081 = vadd.f32 %v1686, %v2080
    %v2082 = vpop.f32.mrb[0].mxu0
    %v2083 = vadd.f32 %v1688, %v2082
    %2084 = vdwg.mxu0
    %2085 = vmatprep.subr.bf16.mxu0 %v1922
    %2086 = vmatpush1.bf16.msra.mxu0 %v1921
    %2087 = vmatprep.subr.bf16.mxu0 %v1926
    %2088 = vmatpush1.bf16.msra.mxu0 %v1925
    %2089 = vmatprep.subr.bf16.mxu0 %v1930
    %2090 = vmatpush1.bf16.msra.mxu0 %v1929
    %2091 = vmatprep.subr.bf16.mxu0 %v1934
    %2092 = vmatpush1.bf16.msra.mxu0 %v1933
    %2093 = vmatprep.subr.bf16.mxu0 %v1938
    %2094 = vmatpush1.bf16.msra.mxu0 %v1937
    %2095 = vmatprep.subr.bf16.mxu0 %v1942
    %2096 = vmatpush1.bf16.msra.mxu0 %v1941
    %2097 = vmatprep.subr.bf16.mxu0 %v1946
    %2098 = vmatpush1.bf16.msra.mxu0 %v1945
    %2099 = vmatprep.subr.bf16.mxu0 %v1950
    %2100 = vmatpush1.bf16.msra.mxu0 %v1949
    %2101 = vmatprep.subr.bf16.mxu0 %v1954
    %2102 = vmatpush1.bf16.msra.mxu0 %v1953
    %2103 = vmatprep.subr.bf16.mxu0 %v1958
    %2104 = vmatpush1.bf16.msra.mxu0 %v1957
    %2105 = vmatprep.subr.bf16.mxu0 %v1962
    %2106 = vmatpush1.bf16.msra.mxu0 %v1961
    %2107 = vmatprep.subr.bf16.mxu0 %v1966
    %2108 = vmatpush1.bf16.msra.mxu0 %v1965
    %2109 = vmatprep.subr.bf16.mxu0 %v1970
    %2110 = vmatpush1.bf16.msra.mxu0 %v1969
    %2111 = vmatprep.subr.bf16.mxu0 %v1974
    %2112 = vmatpush1.bf16.msra.mxu0 %v1973
    %2113 = vmatprep.subr.bf16.mxu0 %v1978
    %2114 = vmatpush1.bf16.msra.mxu0 %v1977
    %2115 = vmatprep.subr.bf16.mxu0 0
    %2116 = vmatpush1.bf16.msra.mxu0 0
    %2117 = vmatprep.mubr.bf16.mxu0 %v2040
    %2118 = vmatmul.mubr.bf16.gmra.mrb[0].mxu0 %v1736
    %v2119 = vpop.f32.mrb[0].mxu0
    %v2120 = vadd.f32 %v1725, %v2119
    %v2121 = vpop.f32.mrb[0].mxu0
    %v2122 = vadd.f32 %v1727, %v2121
    %v2123 = vpop.f32.mrb[0].mxu0
    %v2124 = vadd.f32 %v1729, %v2123
    %v2125 = vpop.f32.mrb[0].mxu0
    %v2126 = vadd.f32 %v1731, %v2125
    %2127 = vdwg.mxu0
    %v2128 = vld [vmem:[#allocation2] sm:$0xee]
    %s2129 = scalar_lea.vmem [#allocation5], 960
    %v2130 = vld [vmem:[%s2129] sm:$0xff]
    %v2131 = vld [vmem:[%s2129 + $0x8] sm:$0xff]
    %v2132 = vld [vmem:[%s2129 + $0x10] sm:$0xff]
    %v2133 = vld [vmem:[%s2129 + $0x18] sm:$0xff]
    %v2134 = vld [vmem:[%s2129 + $0x20] sm:$0xff]
    %v2135 = vld [vmem:[%s2129 + $0x28] sm:$0xff]
    %v2136 = vld [vmem:[%s2129 + $0x30] sm:$0xff]
    %v2137 = vld [vmem:[%s2129 + $0x38] sm:$0xff]
    %v2138 = vld [vmem:[%s2129 + $0x40] sm:$0xff]
    %v2139 = vld [vmem:[%s2129 + $0x48] sm:$0xff]
    %v2140 = vld [vmem:[%s2129 + $0x50] sm:$0xff]
    %v2141 = vld [vmem:[%s2129 + $0x58] sm:$0xff]
    %v2142 = vld [vmem:[%s2129 + $0x60] sm:$0xff]
    %v2143 = vld [vmem:[%s2129 + $0x68] sm:$0xff]
    %v2144 = vld [vmem:[%s2129 + $0x70] sm:$0xff]
    %v2145 = vld [vmem:[%s2129 + $0x78] sm:$0xff]
    %v2146 = vld [vmem:[%s2129 + $0x80] sm:$0xff]
    %v2147 = vld [vmem:[%s2129 + $0x88] sm:$0xff]
    %v2148 = vld [vmem:[%s2129 + $0x90] sm:$0xff]
    %v2149 = vld [vmem:[%s2129 + $0x98] sm:$0xff]
    %v2150 = vld [vmem:[%s2129 + $0xa0] sm:$0xff]
    %v2151 = vld [vmem:[%s2129 + $0xa8] sm:$0xff]
    %v2152 = vld [vmem:[%s2129 + $0xb0] sm:$0xff]
    %v2153 = vld [vmem:[%s2129 + $0xb8] sm:$0xff]
    %v2154 = vld [vmem:[%s2129 + $0xc0] sm:$0xff]
    %v2155 = vld [vmem:[%s2129 + $0xc8] sm:$0xff]
    %v2156 = vld [vmem:[%s2129 + $0xd0] sm:$0xff]
    %v2157 = vld [vmem:[%s2129 + $0xd8] sm:$0xff]
    %v2158 = vld [vmem:[%s2129 + $0xe0] sm:$0xff]
    %v2159 = vld [vmem:[%s2129 + $0xe8] sm:$0xff]
    %v2160 = vld [vmem:[%s2129 + $0xf0] sm:$0xff]
    %v2161 = vld [vmem:[%s2129 + $0xf8] sm:$0xff]
    %v2162 = vld [vmem:[%s2129 + $0x100] sm:$0xff]
    %v2163 = vld [vmem:[%s2129 + $0x108] sm:$0xff]
    %v2164 = vld [vmem:[%s2129 + $0x110] sm:$0xff]
    %v2165 = vld [vmem:[%s2129 + $0x118] sm:$0xff]
    %v2166 = vld [vmem:[%s2129 + $0x120] sm:$0xff]
    %v2167 = vld [vmem:[%s2129 + $0x128] sm:$0xff]
    %v2168 = vld [vmem:[%s2129 + $0x130] sm:$0xff]
    %v2169 = vld [vmem:[%s2129 + $0x138] sm:$0xff]
    %v2170 = vld [vmem:[%s2129 + $0x140] sm:$0xff]
    %v2171 = vld [vmem:[%s2129 + $0x148] sm:$0xff]
    %v2172 = vld [vmem:[%s2129 + $0x150] sm:$0xff]
    %v2173 = vld [vmem:[%s2129 + $0x158] sm:$0xff]
    %v2174 = vld [vmem:[%s2129 + $0x160] sm:$0xff]
    %v2175 = vld [vmem:[%s2129 + $0x168] sm:$0xff]
    %v2176 = vld [vmem:[%s2129 + $0x170] sm:$0xff]
    %v2177 = vld [vmem:[%s2129 + $0x178] sm:$0xff]
    %v2178 = vld [vmem:[%s2129 + $0x180] sm:$0xff]
    %v2179 = vld [vmem:[%s2129 + $0x188] sm:$0xff]
    %v2180 = vld [vmem:[%s2129 + $0x190] sm:$0xff]
    %v2181 = vld [vmem:[%s2129 + $0x198] sm:$0xff]
    %v2182 = vld [vmem:[%s2129 + $0x1a0] sm:$0xff]
    %v2183 = vld [vmem:[%s2129 + $0x1a8] sm:$0xff]
    %v2184 = vld [vmem:[%s2129 + $0x1b0] sm:$0xff]
    %v2185 = vld [vmem:[%s2129 + $0x1b8] sm:$0xff]
    %v2186 = vld [vmem:[%s2129 + $0x1c0] sm:$0xff]
    %v2187 = vld [vmem:[%s2129 + $0x1c8] sm:$0xff]
    %v2188 = vld [vmem:[%s2129 + $0x1d0] sm:$0xff]
    %v2189 = vld [vmem:[%s2129 + $0x1d8] sm:$0xff]
    %v2191 = vunpack.c.l.b16 %v2128
    %v2192 = vunpack.c.h.b16 %v2128
    %v2193 = vpack.c.b16 %v1324, %v2191
    %v2194 = vpack.c.b16 %v1325, %v2192
    %v2195 = vrot.slane %v2193, 1
    %v2196 = vrot.slane %v2194, 1
    %v2258 = vunpack.c.l.b16 %v2130
    %v2259 = vunpack.c.h.b16 %v2130
    %v2260 = vunpack.c.l.b16 %v2131
    %v2261 = vunpack.c.h.b16 %v2131
    %v2262 = vunpack.c.l.b16 %v2132
    %v2263 = vunpack.c.h.b16 %v2132
    %v2264 = vunpack.c.l.b16 %v2133
    %v2265 = vunpack.c.h.b16 %v2133
    %v2266 = vunpack.c.l.b16 %v2134
    %v2267 = vunpack.c.h.b16 %v2134
    %v2268 = vunpack.c.l.b16 %v2135
    %v2269 = vunpack.c.h.b16 %v2135
    %v2270 = vunpack.c.l.b16 %v2136
    %v2271 = vunpack.c.h.b16 %v2136
    %v2272 = vunpack.c.l.b16 %v2137
    %v2273 = vunpack.c.h.b16 %v2137
    %v2274 = vunpack.c.l.b16 %v2138
    %v2275 = vunpack.c.h.b16 %v2138
    %v2276 = vunpack.c.l.b16 %v2139
    %v2277 = vunpack.c.h.b16 %v2139
    %v2278 = vunpack.c.l.b16 %v2140
    %v2279 = vunpack.c.h.b16 %v2140
    %v2280 = vunpack.c.l.b16 %v2141
    %v2281 = vunpack.c.h.b16 %v2141
    %v2282 = vunpack.c.l.b16 %v2142
    %v2283 = vunpack.c.h.b16 %v2142
    %v2284 = vunpack.c.l.b16 %v2143
    %v2285 = vunpack.c.h.b16 %v2143
    %v2286 = vunpack.c.l.b16 %v2144
    %v2287 = vunpack.c.h.b16 %v2144
    %v2288 = vunpack.c.l.b16 %v2145
    %v2289 = vunpack.c.h.b16 %v2145
    %v2290 = vunpack.c.l.b16 %v2146
    %v2291 = vunpack.c.h.b16 %v2146
    %v2292 = vunpack.c.l.b16 %v2147
    %v2293 = vunpack.c.h.b16 %v2147
    %v2294 = vunpack.c.l.b16 %v2148
    %v2295 = vunpack.c.h.b16 %v2148
    %v2296 = vunpack.c.l.b16 %v2149
    %v2297 = vunpack.c.h.b16 %v2149
    %v2298 = vunpack.c.l.b16 %v2150
    %v2299 = vunpack.c.h.b16 %v2150
    %v2300 = vunpack.c.l.b16 %v2151
    %v2301 = vunpack.c.h.b16 %v2151
    %v2302 = vunpack.c.l.b16 %v2152
    %v2303 = vunpack.c.h.b16 %v2152
    %v2304 = vunpack.c.l.b16 %v2153
    %v2305 = vunpack.c.h.b16 %v2153
    %v2306 = vunpack.c.l.b16 %v2154
    %v2307 = vunpack.c.h.b16 %v2154
    %v2308 = vunpack.c.l.b16 %v2155
    %v2309 = vunpack.c.h.b16 %v2155
    %v2310 = vunpack.c.l.b16 %v2156
    %v2311 = vunpack.c.h.b16 %v2156
    %v2312 = vunpack.c.l.b16 %v2157
    %v2313 = vunpack.c.h.b16 %v2157
    %v2314 = vunpack.c.l.b16 %v2158
    %v2315 = vunpack.c.h.b16 %v2158
    %v2316 = vunpack.c.l.b16 %v2159
    %v2317 = vunpack.c.h.b16 %v2159
    %v2318 = vunpack.c.l.b16 %v2160
    %v2319 = vunpack.c.h.b16 %v2160
    %v2320 = vunpack.c.l.b16 %v2161
    %v2321 = vunpack.c.h.b16 %v2161
    %v2322 = vunpack.c.l.b16 %v2162
    %v2323 = vunpack.c.h.b16 %v2162
    %v2324 = vunpack.c.l.b16 %v2163
    %v2325 = vunpack.c.h.b16 %v2163
    %v2326 = vunpack.c.l.b16 %v2164
    %v2327 = vunpack.c.h.b16 %v2164
    %v2328 = vunpack.c.l.b16 %v2165
    %v2329 = vunpack.c.h.b16 %v2165
    %v2330 = vunpack.c.l.b16 %v2166
    %v2331 = vunpack.c.h.b16 %v2166
    %v2332 = vunpack.c.l.b16 %v2167
    %v2333 = vunpack.c.h.b16 %v2167
    %v2334 = vunpack.c.l.b16 %v2168
    %v2335 = vunpack.c.h.b16 %v2168
    %v2336 = vunpack.c.l.b16 %v2169
    %v2337 = vunpack.c.h.b16 %v2169
    %v2338 = vunpack.c.l.b16 %v2170
    %v2339 = vunpack.c.h.b16 %v2170
    %v2340 = vunpack.c.l.b16 %v2171
    %v2341 = vunpack.c.h.b16 %v2171
    %v2342 = vunpack.c.l.b16 %v2172
    %v2343 = vunpack.c.h.b16 %v2172
    %v2344 = vunpack.c.l.b16 %v2173
    %v2345 = vunpack.c.h.b16 %v2173
    %v2346 = vunpack.c.l.b16 %v2174
    %v2347 = vunpack.c.h.b16 %v2174
    %v2348 = vunpack.c.l.b16 %v2175
    %v2349 = vunpack.c.h.b16 %v2175
    %v2350 = vunpack.c.l.b16 %v2176
    %v2351 = vunpack.c.h.b16 %v2176
    %v2352 = vunpack.c.l.b16 %v2177
    %v2353 = vunpack.c.h.b16 %v2177
    %v2354 = vunpack.c.l.b16 %v2178
    %v2355 = vunpack.c.h.b16 %v2178
    %v2356 = vunpack.c.l.b16 %v2179
    %v2357 = vunpack.c.h.b16 %v2179
    %v2358 = vunpack.c.l.b16 %v2180
    %v2359 = vunpack.c.h.b16 %v2180
    %v2360 = vunpack.c.l.b16 %v2181
    %v2361 = vunpack.c.h.b16 %v2181
    %v2362 = vunpack.c.l.b16 %v2182
    %v2363 = vunpack.c.h.b16 %v2182
    %v2364 = vunpack.c.l.b16 %v2183
    %v2365 = vunpack.c.h.b16 %v2183
    %v2366 = vunpack.c.l.b16 %v2184
    %v2367 = vunpack.c.h.b16 %v2184
    %v2368 = vunpack.c.l.b16 %v2185
    %v2369 = vunpack.c.h.b16 %v2185
    %v2370 = vunpack.c.l.b16 %v2186
    %v2371 = vunpack.c.h.b16 %v2186
    %v2372 = vunpack.c.l.b16 %v2187
    %v2373 = vunpack.c.h.b16 %v2187
    %v2374 = vunpack.c.l.b16 %v2188
    %v2375 = vunpack.c.h.b16 %v2188
    %v2376 = vunpack.c.l.b16 %v2189
    %v2377 = vunpack.c.h.b16 %v2189
    %v2378 = vpack.c.b16 %v2262, %v2258
    %v2379 = vpack.c.b16 %v2263, %v2259
    %v2380 = vpack.c.b16 %v2264, %v2260
    %v2381 = vpack.c.b16 %v2265, %v2261
    %v2382 = vpack.c.b16 %v2270, %v2266
    %v2383 = vpack.c.b16 %v2271, %v2267
    %v2384 = vpack.c.b16 %v2272, %v2268
    %v2385 = vpack.c.b16 %v2273, %v2269
    %v2386 = vpack.c.b16 %v2278, %v2274
    %v2387 = vpack.c.b16 %v2279, %v2275
    %v2388 = vpack.c.b16 %v2280, %v2276
    %v2389 = vpack.c.b16 %v2281, %v2277
    %v2390 = vpack.c.b16 %v2286, %v2282
    %v2391 = vpack.c.b16 %v2287, %v2283
    %v2392 = vpack.c.b16 %v2288, %v2284
    %v2393 = vpack.c.b16 %v2289, %v2285
    %v2394 = vpack.c.b16 %v2294, %v2290
    %v2395 = vpack.c.b16 %v2295, %v2291
    %v2396 = vpack.c.b16 %v2296, %v2292
    %v2397 = vpack.c.b16 %v2297, %v2293
    %v2398 = vpack.c.b16 %v2302, %v2298
    %v2399 = vpack.c.b16 %v2303, %v2299
    %v2400 = vpack.c.b16 %v2304, %v2300
    %v2401 = vpack.c.b16 %v2305, %v2301
    %v2402 = vpack.c.b16 %v2310, %v2306
    %v2403 = vpack.c.b16 %v2311, %v2307
    %v2404 = vpack.c.b16 %v2312, %v2308
    %v2405 = vpack.c.b16 %v2313, %v2309
    %v2406 = vpack.c.b16 %v2318, %v2314
    %v2407 = vpack.c.b16 %v2319, %v2315
    %v2408 = vpack.c.b16 %v2320, %v2316
    %v2409 = vpack.c.b16 %v2321, %v2317
    %v2410 = vpack.c.b16 %v2326, %v2322
    %v2411 = vpack.c.b16 %v2327, %v2323
    %v2412 = vpack.c.b16 %v2328, %v2324
    %v2413 = vpack.c.b16 %v2329, %v2325
    %v2414 = vpack.c.b16 %v2334, %v2330
    %v2415 = vpack.c.b16 %v2335, %v2331
    %v2416 = vpack.c.b16 %v2336, %v2332
    %v2417 = vpack.c.b16 %v2337, %v2333
    %v2418 = vpack.c.b16 %v2342, %v2338
    %v2419 = vpack.c.b16 %v2343, %v2339
    %v2420 = vpack.c.b16 %v2344, %v2340
    %v2421 = vpack.c.b16 %v2345, %v2341
    %v2422 = vpack.c.b16 %v2350, %v2346
    %v2423 = vpack.c.b16 %v2351, %v2347
    %v2424 = vpack.c.b16 %v2352, %v2348
    %v2425 = vpack.c.b16 %v2353, %v2349
    %v2426 = vpack.c.b16 %v2358, %v2354
    %v2427 = vpack.c.b16 %v2359, %v2355
    %v2428 = vpack.c.b16 %v2360, %v2356
    %v2429 = vpack.c.b16 %v2361, %v2357
    %v2430 = vpack.c.b16 %v2366, %v2362
    %v2431 = vpack.c.b16 %v2367, %v2363
    %v2432 = vpack.c.b16 %v2368, %v2364
    %v2433 = vpack.c.b16 %v2369, %v2365
    %v2434 = vpack.c.b16 %v2374, %v2370
    %v2435 = vpack.c.b16 %v2375, %v2371
    %v2436 = vpack.c.b16 %v2376, %v2372
    %v2437 = vpack.c.b16 %v2377, %v2373
    %v2499 = vsel %vm1643, %v2196, 0
    %2501 = vmatprep.subr.bf16.mxu0 %v2379
    %2502 = vmatpush1.bf16.msra.mxu0 %v2378
    %2503 = vmatprep.subr.bf16.mxu0 %v2383
    %2504 = vmatpush1.bf16.msra.mxu0 %v2382
    %2505 = vmatprep.subr.bf16.mxu0 %v2387
    %2506 = vmatpush1.bf16.msra.mxu0 %v2386
    %2507 = vmatprep.subr.bf16.mxu0 %v2391
    %2508 = vmatpush1.bf16.msra.mxu0 %v2390
    %2509 = vmatprep.subr.bf16.mxu0 %v2395
    %2510 = vmatpush1.bf16.msra.mxu0 %v2394
    %2511 = vmatprep.subr.bf16.mxu0 %v2399
    %2512 = vmatpush1.bf16.msra.mxu0 %v2398
    %2513 = vmatprep.subr.bf16.mxu0 %v2403
    %2514 = vmatpush1.bf16.msra.mxu0 %v2402
    %2515 = vmatprep.subr.bf16.mxu0 %v2407
    %2516 = vmatpush1.bf16.msra.mxu0 %v2406
    %2517 = vmatprep.subr.bf16.mxu0 %v2411
    %2518 = vmatpush1.bf16.msra.mxu0 %v2410
    %2519 = vmatprep.subr.bf16.mxu0 %v2415
    %2520 = vmatpush1.bf16.msra.mxu0 %v2414
    %2521 = vmatprep.subr.bf16.mxu0 %v2419
    %2522 = vmatpush1.bf16.msra.mxu0 %v2418
    %2523 = vmatprep.subr.bf16.mxu0 %v2423
    %2524 = vmatpush1.bf16.msra.mxu0 %v2422
    %2525 = vmatprep.subr.bf16.mxu0 %v2427
    %2526 = vmatpush1.bf16.msra.mxu0 %v2426
    %2527 = vmatprep.subr.bf16.mxu0 %v2431
    %2528 = vmatpush1.bf16.msra.mxu0 %v2430
    %2529 = vmatprep.subr.bf16.mxu0 %v2435
    %2530 = vmatpush1.bf16.msra.mxu0 %v2434
    %2531 = vmatprep.subr.bf16.mxu0 0
    %2532 = vmatpush1.bf16.msra.mxu0 0
    %2533 = vmatprep.mubr.bf16.mxu0 %v2499
    %2534 = vmatmul.mubr.bf16.gmra.mrb[0].mxu0 %v2195
    %v2535 = vpop.f32.mrb[0].mxu0
    %v2536 = vadd.f32 0.0, %v2535
    %v2537 = vpop.f32.mrb[0].mxu0
    %v2538 = vadd.f32 0.0, %v2537
    %v2539 = vpop.f32.mrb[0].mxu0
    %v2540 = vadd.f32 0.0, %v2539
    %v2541 = vpop.f32.mrb[0].mxu0
    %v2542 = vadd.f32 0.0, %v2541
    %2543 = vdwg.mxu0
    %2544 = vmatprep.subr.bf16.mxu0 %v2381
    %2545 = vmatpush1.bf16.msra.mxu0 %v2380
    %2546 = vmatprep.subr.bf16.mxu0 %v2385
    %2547 = vmatpush1.bf16.msra.mxu0 %v2384
    %2548 = vmatprep.subr.bf16.mxu0 %v2389
    %2549 = vmatpush1.bf16.msra.mxu0 %v2388
    %2550 = vmatprep.subr.bf16.mxu0 %v2393
    %2551 = vmatpush1.bf16.msra.mxu0 %v2392
    %2552 = vmatprep.subr.bf16.mxu0 %v2397
    %2553 = vmatpush1.bf16.msra.mxu0 %v2396
    %2554 = vmatprep.subr.bf16.mxu0 %v2401
    %2555 = vmatpush1.bf16.msra.mxu0 %v2400
    %2556 = vmatprep.subr.bf16.mxu0 %v2405
    %2557 = vmatpush1.bf16.msra.mxu0 %v2404
    %2558 = vmatprep.subr.bf16.mxu0 %v2409
    %2559 = vmatpush1.bf16.msra.mxu0 %v2408
    %2560 = vmatprep.subr.bf16.mxu0 %v2413
    %2561 = vmatpush1.bf16.msra.mxu0 %v2412
    %2562 = vmatprep.subr.bf16.mxu0 %v2417
    %2563 = vmatpush1.bf16.msra.mxu0 %v2416
    %2564 = vmatprep.subr.bf16.mxu0 %v2421
    %2565 = vmatpush1.bf16.msra.mxu0 %v2420
    %2566 = vmatprep.subr.bf16.mxu0 %v2425
    %2567 = vmatpush1.bf16.msra.mxu0 %v2424
    %2568 = vmatprep.subr.bf16.mxu0 %v2429
    %2569 = vmatpush1.bf16.msra.mxu0 %v2428
    %2570 = vmatprep.subr.bf16.mxu0 %v2433
    %2571 = vmatpush1.bf16.msra.mxu0 %v2432
    %2572 = vmatprep.subr.bf16.mxu0 %v2437
    %2573 = vmatpush1.bf16.msra.mxu0 %v2436
    %2574 = vmatprep.subr.bf16.mxu0 0
    %2575 = vmatpush1.bf16.msra.mxu0 0
    %2576 = vmatprep.mubr.bf16.mxu0 %v2499
    %2577 = vmatmul.mubr.bf16.gmra.mrb[0].mxu0 %v2195
    %v2578 = vpop.f32.mrb[0].mxu0
    %v2579 = vadd.f32 0.0, %v2578
    %v2580 = vpop.f32.mrb[0].mxu0
    %v2581 = vadd.f32 0.0, %v2580
    %v2582 = vpop.f32.mrb[0].mxu0
    %v2583 = vadd.f32 0.0, %v2582
    %v2584 = vpop.f32.mrb[0].mxu0
    %v2585 = vadd.f32 0.0, %v2584
    %2586 = vdwg.mxu0
    %v2587 = vadd.f32 %v2077, %v2536
    %v2588 = vadd.f32 %v2079, %v2538
    %v2589 = vadd.f32 %v2120, %v2579
    %v2590 = vadd.f32 %v2122, %v2581
    %v2591 = vadd.f32 %v2081, %v2540
    %v2592 = vadd.f32 %v2083, %v2542
    %v2593 = vadd.f32 %v2124, %v2583
    %v2594 = vadd.f32 %v2126, %v2585
    %v2595 = vmax.f32 %v2587, %v2589
    %v2596 = vmax.f32 %v2588, %v2590
    %v2597 = vmax.f32 %v2591, %v2593
    %v2598 = vmax.f32 %v2592, %v2594
    %v2601 = vrot.slane %v2595, 1
    %v2602 = vrot.slane %v2596, 1
    %v2605 = vmax.f32 %v2595, %v2601
    %v2606 = vmax.f32 %v2596, %v2602
    %v2609 = vrot.slane %v2597, 1
    %v2610 = vrot.slane %v2598, 1
    %v2613 = vmax.f32 %v2597, %v2609
    %v2614 = vmax.f32 %v2598, %v2610
    %v2617 = vrot.slane %v2605, 1
    %v2618 = vrot.slane %v2606, 1
    %v2621 = vrot.slane %v2605, 2
    %v2622 = vrot.slane %v2606, 2
    %v2625 = vrot.slane %v2605, 3
    %v2626 = vrot.slane %v2606, 3
    %v2631 = vrot.slane %v2613, 4
    %v2632 = vrot.slane %v2614, 4
    %v2635 = vrot.slane %v2613, 5
    %v2636 = vrot.slane %v2614, 5
    %v2639 = vrot.slane %v2613, 6
    %v2640 = vrot.slane %v2614, 6
    %v2643 = vsel %vm1085, %v2605, %v2617
    %v2644 = vsel %vm1085, %v2606, %v2618
    %v2645 = vsel %vm1088, %v2643, %v2621
    %v2646 = vsel %vm1088, %v2644, %v2622
    %v2647 = vsel %vm1091, %v2645, %v2625
    %v2648 = vsel %vm1091, %v2646, %v2626
    %v2649 = vsel %vm95, %v2647, %v2631
    %v2650 = vsel %vm95, %v2648, %v2632
    %v2651 = vsel %vm1096, %v2649, %v2635
    %v2652 = vsel %vm1096, %v2650, %v2636
    %v2653 = vsel %vm332, %v2651, %v2639
    %v2654 = vsel %vm332, %v2652, %v2640
    %v2655 = vld [vmem:[%s4] sm:$0x3]
    %v2657 = vlaneseq
    %v2658 = vshrl.u32 %v2657, 7
    %v2659 = vsub.s32 0, %v2658
    %v2660 = vrot.slane %v2655, %v2659
    %v2661 = vlaneseq
    %v2662 = vshrl.u32 %v2661, 7
    %v2663 = vsub.s32 1, %v2662
    %v2664 = vrot.slane %v2655, %v2663
    %v2667 = vadd.f32 %v2653, %v2660
    %v2668 = vadd.f32 %v2654, %v2664
    %vm2669 = vcmp.gt.f32.partialorder %v2667, 0.0
    %vm2670 = vcmp.gt.f32.partialorder %v2668, 0.0
    %v2671 = vmin.f32 %v2667, 0.0
    %v2672 = vmin.f32 %v2668, 0.0
    %v2673 = vmul.f32 %v2671, 1.442695
    %v2674 = vpow.pop %v2673
    %v2675 = vmul.f32 %v2672, 1.442695
    %v2676 = vpow.pop %v2675
    %v2677 = vsub.f32 %v2674, 1.0
    %v2678 = vsub.f32 %v2676, 1.0
    %v2679 = vsel %vm2669, %v2667, %v2677
    %v2680 = vsel %vm2670, %v2668, %v2678
    %v2681 = vpack.c.bf16 %v2679, %v2679
    %v2682 = vpack.c.bf16 %v2680, %v2680
    %v2685 = vunpack.c.l.b16 %v2681
    %v2686 = vunpack.c.l.b16 %v2682
    %v2687 = vpack.c.b16 %v2686, %v2685
    %v2689 = vshrl.u32 %v2687, 16
    %v2691 = vrot.slane %v2689, 7
    %v2692 = vshll.u32 %v2687, 16
    %v2694 = vor.u32 %v2691, %v2692
    %vm2696 = vcmask 785412
    %vm2697 = vmand %vm2696, %vm1189
    %vm2698 = vmor %vm2697, %vm1187
    %v2699 = vld [vmem:[#allocation3] sm:$0xff]
    %v2700 = vsel %vm2698, %v2694, %v2699
    %2701 = vst [vmem:[#allocation3] sm:$0xff] %v2700
    %v2702 = vld [vmem:[#allocation3] sm:$0x77]
    %v2703 = vld [vmem:[#allocation8] sm:$0xff]
    %v2704 = vld [vmem:[#allocation8 + $0x8] sm:$0xff]
    %v2705 = vld [vmem:[#allocation8 + $0x10] sm:$0xff]
    %v2706 = vld [vmem:[#allocation8 + $0x18] sm:$0xff]
    %v2707 = vld [vmem:[#allocation8 + $0x20] sm:$0xff]
    %v2708 = vld [vmem:[#allocation8 + $0x28] sm:$0xff]
    %v2709 = vld [vmem:[#allocation8 + $0x30] sm:$0xff]
    %v2710 = vld [vmem:[#allocation8 + $0x38] sm:$0xff]
    %v2711 = vld [vmem:[#allocation8 + $0x40] sm:$0xff]
    %v2712 = vld [vmem:[#allocation8 + $0x48] sm:$0xff]
    %v2713 = vld [vmem:[#allocation8 + $0x50] sm:$0xff]
    %v2714 = vld [vmem:[#allocation8 + $0x58] sm:$0xff]
    %v2715 = vld [vmem:[#allocation8 + $0x60] sm:$0xff]
    %v2716 = vld [vmem:[#allocation8 + $0x68] sm:$0xff]
    %v2717 = vld [vmem:[#allocation8 + $0x70] sm:$0xff]
    %v2718 = vld [vmem:[#allocation8 + $0x78] sm:$0xff]
    %v2719 = vld [vmem:[#allocation8 + $0x80] sm:$0xff]
    %v2720 = vld [vmem:[#allocation8 + $0x88] sm:$0xff]
    %v2721 = vld [vmem:[#allocation8 + $0x90] sm:$0xff]
    %v2722 = vld [vmem:[#allocation8 + $0x98] sm:$0xff]
    %v2723 = vld [vmem:[#allocation8 + $0xa0] sm:$0xff]
    %v2724 = vld [vmem:[#allocation8 + $0xa8] sm:$0xff]
    %v2725 = vld [vmem:[#allocation8 + $0xb0] sm:$0xff]
    %v2726 = vld [vmem:[#allocation8 + $0xb8] sm:$0xff]
    %v2727 = vld [vmem:[#allocation8 + $0xc0] sm:$0xff]
    %v2728 = vld [vmem:[#allocation8 + $0xc8] sm:$0xff]
    %v2729 = vld [vmem:[#allocation8 + $0xd0] sm:$0xff]
    %v2730 = vld [vmem:[#allocation8 + $0xd8] sm:$0xff]
    %v2731 = vld [vmem:[#allocation8 + $0xe0] sm:$0xff]
    %v2732 = vld [vmem:[#allocation8 + $0xe8] sm:$0xff]
    %v2733 = vld [vmem:[#allocation8 + $0xf0] sm:$0xff]
    %v2734 = vld [vmem:[#allocation8 + $0xf8] sm:$0xff]
    %v2735 = vld [vmem:[#allocation8 + $0x100] sm:$0xff]
    %v2736 = vld [vmem:[#allocation8 + $0x108] sm:$0xff]
    %v2737 = vld [vmem:[#allocation8 + $0x110] sm:$0xff]
    %v2738 = vld [vmem:[#allocation8 + $0x118] sm:$0xff]
    %v2739 = vld [vmem:[#allocation8 + $0x120] sm:$0xff]
    %v2740 = vld [vmem:[#allocation8 + $0x128] sm:$0xff]
    %v2741 = vld [vmem:[#allocation8 + $0x130] sm:$0xff]
    %v2742 = vld [vmem:[#allocation8 + $0x138] sm:$0xff]
    %v2743 = vld [vmem:[#allocation8 + $0x140] sm:$0xff]
    %v2744 = vld [vmem:[#allocation8 + $0x148] sm:$0xff]
    %v2745 = vld [vmem:[#allocation8 + $0x150] sm:$0xff]
    %v2746 = vld [vmem:[#allocation8 + $0x158] sm:$0xff]
    %v2747 = vld [vmem:[#allocation8 + $0x160] sm:$0xff]
    %v2748 = vld [vmem:[#allocation8 + $0x168] sm:$0xff]
    %v2749 = vld [vmem:[#allocation8 + $0x170] sm:$0xff]
    %v2750 = vld [vmem:[#allocation8 + $0x178] sm:$0xff]
    %v2751 = vld [vmem:[#allocation8 + $0x180] sm:$0xff]
    %v2752 = vld [vmem:[#allocation8 + $0x188] sm:$0xff]
    %v2753 = vld [vmem:[#allocation8 + $0x190] sm:$0xff]
    %v2754 = vld [vmem:[#allocation8 + $0x198] sm:$0xff]
    %v2755 = vld [vmem:[#allocation8 + $0x1a0] sm:$0xff]
    %v2756 = vld [vmem:[#allocation8 + $0x1a8] sm:$0xff]
    %v2757 = vld [vmem:[#allocation8 + $0x1b0] sm:$0xff]
    %v2758 = vld [vmem:[#allocation8 + $0x1b8] sm:$0xff]
    %v2759 = vld [vmem:[#allocation3] sm:$0xff]
    %s2760 = scalar_lea.vmem [#allocation8], 448
    %v2761 = vld [vmem:[%s2760] sm:$0xff]
    %v2762 = vld [vmem:[%s2760 + $0x8] sm:$0xff]
    %v2763 = vld [vmem:[%s2760 + $0x10] sm:$0xff]
    %v2764 = vld [vmem:[%s2760 + $0x18] sm:$0xff]
    %v2765 = vld [vmem:[%s2760 + $0x20] sm:$0xff]
    %v2766 = vld [vmem:[%s2760 + $0x28] sm:$0xff]
    %v2767 = vld [vmem:[%s2760 + $0x30] sm:$0xff]
    %v2768 = vld [vmem:[%s2760 + $0x38] sm:$0xff]
    %v2769 = vld [vmem:[%s2760 + $0x40] sm:$0xff]
    %v2770 = vld [vmem:[%s2760 + $0x48] sm:$0xff]
    %v2771 = vld [vmem:[%s2760 + $0x50] sm:$0xff]
    %v2772 = vld [vmem:[%s2760 + $0x58] sm:$0xff]
    %v2773 = vld [vmem:[%s2760 + $0x60] sm:$0xff]
    %v2774 = vld [vmem:[%s2760 + $0x68] sm:$0xff]
    %v2775 = vld [vmem:[%s2760 + $0x70] sm:$0xff]
    %v2776 = vld [vmem:[%s2760 + $0x78] sm:$0xff]
    %v2777 = vld [vmem:[%s2760 + $0x80] sm:$0xff]
    %v2778 = vld [vmem:[%s2760 + $0x88] sm:$0xff]
    %v2779 = vld [vmem:[%s2760 + $0x90] sm:$0xff]
    %v2780 = vld [vmem:[%s2760 + $0x98] sm:$0xff]
    %v2781 = vld [vmem:[%s2760 + $0xa0] sm:$0xff]
    %v2782 = vld [vmem:[%s2760 + $0xa8] sm:$0xff]
    %v2783 = vld [vmem:[%s2760 + $0xb0] sm:$0xff]
    %v2784 = vld [vmem:[%s2760 + $0xb8] sm:$0xff]
    %v2785 = vld [vmem:[%s2760 + $0xc0] sm:$0xff]
    %v2786 = vld [vmem:[%s2760 + $0xc8] sm:$0xff]
    %v2787 = vld [vmem:[%s2760 + $0xd0] sm:$0xff]
    %v2788 = vld [vmem:[%s2760 + $0xd8] sm:$0xff]
    %v2789 = vld [vmem:[%s2760 + $0xe0] sm:$0xff]
    %v2790 = vld [vmem:[%s2760 + $0xe8] sm:$0xff]
    %v2791 = vld [vmem:[%s2760 + $0xf0] sm:$0xff]
    %v2792 = vld [vmem:[%s2760 + $0xf8] sm:$0xff]
    %v2793 = vld [vmem:[%s2760 + $0x100] sm:$0xff]
    %v2794 = vld [vmem:[%s2760 + $0x108] sm:$0xff]
    %v2795 = vld [vmem:[%s2760 + $0x110] sm:$0xff]
    %v2796 = vld [vmem:[%s2760 + $0x118] sm:$0xff]
    %v2797 = vld [vmem:[%s2760 + $0x120] sm:$0xff]
    %v2798 = vld [vmem:[%s2760 + $0x128] sm:$0xff]
    %v2799 = vld [vmem:[%s2760 + $0x130] sm:$0xff]
    %v2800 = vld [vmem:[%s2760 + $0x138] sm:$0xff]
    %v2801 = vld [vmem:[%s2760 + $0x140] sm:$0xff]
    %v2802 = vld [vmem:[%s2760 + $0x148] sm:$0xff]
    %v2803 = vld [vmem:[%s2760 + $0x150] sm:$0xff]
    %v2804 = vld [vmem:[%s2760 + $0x158] sm:$0xff]
    %v2805 = vld [vmem:[%s2760 + $0x160] sm:$0xff]
    %v2806 = vld [vmem:[%s2760 + $0x168] sm:$0xff]
    %v2807 = vld [vmem:[%s2760 + $0x170] sm:$0xff]
    %v2808 = vld [vmem:[%s2760 + $0x178] sm:$0xff]
    %v2809 = vld [vmem:[%s2760 + $0x180] sm:$0xff]
    %v2810 = vld [vmem:[%s2760 + $0x188] sm:$0xff]
    %v2811 = vld [vmem:[%s2760 + $0x190] sm:$0xff]
    %v2812 = vld [vmem:[%s2760 + $0x198] sm:$0xff]
    %v2813 = vld [vmem:[%s2760 + $0x1a0] sm:$0xff]
    %v2814 = vld [vmem:[%s2760 + $0x1a8] sm:$0xff]
    %v2815 = vld [vmem:[%s2760 + $0x1b0] sm:$0xff]
    %v2816 = vld [vmem:[%s2760 + $0x1b8] sm:$0xff]
    %v2818 = vunpack.c.l.b16 %v2759
    %v2819 = vunpack.c.h.b16 %v2759
    %v2820 = vpack.c.b16 %v2818, %v2818
    %v2821 = vpack.c.b16 %v2819, %v2819
    %v2823 = vshrl.u32 %v2820, 16
    %v2825 = vshll.u32 %v2820, 16
    %v2827 = vrot.slane %v2825, 1
    %v2828 = vor.u32 %v2823, %v2827
    %v2830 = vshrl.u32 %v2821, 16
    %v2832 = vshll.u32 %v2821, 16
    %v2834 = vrot.slane %v2832, 1
    %v2835 = vor.u32 %v2830, %v2834
    %v2893 = vunpack.c.l.b16 %v2761
    %v2894 = vunpack.c.h.b16 %v2761
    %v2895 = vunpack.c.l.b16 %v2762
    %v2896 = vunpack.c.h.b16 %v2762
    %v2897 = vunpack.c.l.b16 %v2763
    %v2898 = vunpack.c.h.b16 %v2763
    %v2899 = vunpack.c.l.b16 %v2764
    %v2900 = vunpack.c.h.b16 %v2764
    %v2901 = vunpack.c.l.b16 %v2765
    %v2902 = vunpack.c.h.b16 %v2765
    %v2903 = vunpack.c.l.b16 %v2766
    %v2904 = vunpack.c.h.b16 %v2766
    %v2905 = vunpack.c.l.b16 %v2767
    %v2906 = vunpack.c.h.b16 %v2767
    %v2907 = vunpack.c.l.b16 %v2768
    %v2908 = vunpack.c.h.b16 %v2768
    %v2909 = vunpack.c.l.b16 %v2769
    %v2910 = vunpack.c.h.b16 %v2769
    %v2911 = vunpack.c.l.b16 %v2770
    %v2912 = vunpack.c.h.b16 %v2770
    %v2913 = vunpack.c.l.b16 %v2771
    %v2914 = vunpack.c.h.b16 %v2771
    %v2915 = vunpack.c.l.b16 %v2772
    %v2916 = vunpack.c.h.b16 %v2772
    %v2917 = vunpack.c.l.b16 %v2773
    %v2918 = vunpack.c.h.b16 %v2773
    %v2919 = vunpack.c.l.b16 %v2774
    %v2920 = vunpack.c.h.b16 %v2774
    %v2921 = vunpack.c.l.b16 %v2775
    %v2922 = vunpack.c.h.b16 %v2775
    %v2923 = vunpack.c.l.b16 %v2776
    %v2924 = vunpack.c.h.b16 %v2776
    %v2925 = vunpack.c.l.b16 %v2777
    %v2926 = vunpack.c.h.b16 %v2777
    %v2927 = vunpack.c.l.b16 %v2778
    %v2928 = vunpack.c.h.b16 %v2778
    %v2929 = vunpack.c.l.b16 %v2779
    %v2930 = vunpack.c.h.b16 %v2779
    %v2931 = vunpack.c.l.b16 %v2780
    %v2932 = vunpack.c.h.b16 %v2780
    %v2933 = vunpack.c.l.b16 %v2781
    %v2934 = vunpack.c.h.b16 %v2781
    %v2935 = vunpack.c.l.b16 %v2782
    %v2936 = vunpack.c.h.b16 %v2782
    %v2937 = vunpack.c.l.b16 %v2783
    %v2938 = vunpack.c.h.b16 %v2783
    %v2939 = vunpack.c.l.b16 %v2784
    %v2940 = vunpack.c.h.b16 %v2784
    %v2941 = vunpack.c.l.b16 %v2785
    %v2942 = vunpack.c.h.b16 %v2785
    %v2943 = vunpack.c.l.b16 %v2786
    %v2944 = vunpack.c.h.b16 %v2786
    %v2945 = vunpack.c.l.b16 %v2787
    %v2946 = vunpack.c.h.b16 %v2787
    %v2947 = vunpack.c.l.b16 %v2788
    %v2948 = vunpack.c.h.b16 %v2788
    %v2949 = vunpack.c.l.b16 %v2789
    %v2950 = vunpack.c.h.b16 %v2789
    %v2951 = vunpack.c.l.b16 %v2790
    %v2952 = vunpack.c.h.b16 %v2790
    %v2953 = vunpack.c.l.b16 %v2791
    %v2954 = vunpack.c.h.b16 %v2791
    %v2955 = vunpack.c.l.b16 %v2792
    %v2956 = vunpack.c.h.b16 %v2792
    %v2957 = vunpack.c.l.b16 %v2793
    %v2958 = vunpack.c.h.b16 %v2793
    %v2959 = vunpack.c.l.b16 %v2794
    %v2960 = vunpack.c.h.b16 %v2794
    %v2961 = vunpack.c.l.b16 %v2795
    %v2962 = vunpack.c.h.b16 %v2795
    %v2963 = vunpack.c.l.b16 %v2796
    %v2964 = vunpack.c.h.b16 %v2796
    %v2965 = vunpack.c.l.b16 %v2797
    %v2966 = vunpack.c.h.b16 %v2797
    %v2967 = vunpack.c.l.b16 %v2798
    %v2968 = vunpack.c.h.b16 %v2798
    %v2969 = vunpack.c.l.b16 %v2799
    %v2970 = vunpack.c.h.b16 %v2799
    %v2971 = vunpack.c.l.b16 %v2800
    %v2972 = vunpack.c.h.b16 %v2800
    %v2973 = vunpack.c.l.b16 %v2801
    %v2974 = vunpack.c.h.b16 %v2801
    %v2975 = vunpack.c.l.b16 %v2802
    %v2976 = vunpack.c.h.b16 %v2802
    %v2977 = vunpack.c.l.b16 %v2803
    %v2978 = vunpack.c.h.b16 %v2803
    %v2979 = vunpack.c.l.b16 %v2804
    %v2980 = vunpack.c.h.b16 %v2804
    %v2981 = vunpack.c.l.b16 %v2805
    %v2982 = vunpack.c.h.b16 %v2805
    %v2983 = vunpack.c.l.b16 %v2806
    %v2984 = vunpack.c.h.b16 %v2806
    %v2985 = vunpack.c.l.b16 %v2807
    %v2986 = vunpack.c.h.b16 %v2807
    %v2987 = vunpack.c.l.b16 %v2808
    %v2988 = vunpack.c.h.b16 %v2808
    %v2989 = vunpack.c.l.b16 %v2809
    %v2990 = vunpack.c.h.b16 %v2809
    %v2991 = vunpack.c.l.b16 %v2810
    %v2992 = vunpack.c.h.b16 %v2810
    %v2993 = vunpack.c.l.b16 %v2811
    %v2994 = vunpack.c.h.b16 %v2811
    %v2995 = vunpack.c.l.b16 %v2812
    %v2996 = vunpack.c.h.b16 %v2812
    %v2997 = vunpack.c.l.b16 %v2813
    %v2998 = vunpack.c.h.b16 %v2813
    %v2999 = vunpack.c.l.b16 %v2814
    %v3000 = vunpack.c.h.b16 %v2814
    %v3001 = vunpack.c.l.b16 %v2815
    %v3002 = vunpack.c.h.b16 %v2815
    %v3003 = vunpack.c.l.b16 %v2816
    %v3004 = vunpack.c.h.b16 %v2816
    %v3005 = vpack.c.b16 %v2897, %v2893
    %v3006 = vpack.c.b16 %v2898, %v2894
    %v3007 = vpack.c.b16 %v2899, %v2895
    %v3008 = vpack.c.b16 %v2900, %v2896
    %v3009 = vpack.c.b16 %v2905, %v2901
    %v3010 = vpack.c.b16 %v2906, %v2902
    %v3011 = vpack.c.b16 %v2907, %v2903
    %v3012 = vpack.c.b16 %v2908, %v2904
    %v3013 = vpack.c.b16 %v2913, %v2909
    %v3014 = vpack.c.b16 %v2914, %v2910
    %v3015 = vpack.c.b16 %v2915, %v2911
    %v3016 = vpack.c.b16 %v2916, %v2912
    %v3017 = vpack.c.b16 %v2921, %v2917
    %v3018 = vpack.c.b16 %v2922, %v2918
    %v3019 = vpack.c.b16 %v2923, %v2919
    %v3020 = vpack.c.b16 %v2924, %v2920
    %v3021 = vpack.c.b16 %v2929, %v2925
    %v3022 = vpack.c.b16 %v2930, %v2926
    %v3023 = vpack.c.b16 %v2931, %v2927
    %v3024 = vpack.c.b16 %v2932, %v2928
    %v3025 = vpack.c.b16 %v2937, %v2933
    %v3026 = vpack.c.b16 %v2938, %v2934
    %v3027 = vpack.c.b16 %v2939, %v2935
    %v3028 = vpack.c.b16 %v2940, %v2936
    %v3029 = vpack.c.b16 %v2945, %v2941
    %v3030 = vpack.c.b16 %v2946, %v2942
    %v3031 = vpack.c.b16 %v2947, %v2943
    %v3032 = vpack.c.b16 %v2948, %v2944
    %v3033 = vpack.c.b16 %v2953, %v2949
    %v3034 = vpack.c.b16 %v2954, %v2950
    %v3035 = vpack.c.b16 %v2955, %v2951
    %v3036 = vpack.c.b16 %v2956, %v2952
    %v3037 = vpack.c.b16 %v2961, %v2957
    %v3038 = vpack.c.b16 %v2962, %v2958
    %v3039 = vpack.c.b16 %v2963, %v2959
    %v3040 = vpack.c.b16 %v2964, %v2960
    %v3041 = vpack.c.b16 %v2969, %v2965
    %v3042 = vpack.c.b16 %v2970, %v2966
    %v3043 = vpack.c.b16 %v2971, %v2967
    %v3044 = vpack.c.b16 %v2972, %v2968
    %v3045 = vpack.c.b16 %v2977, %v2973
    %v3046 = vpack.c.b16 %v2978, %v2974
    %v3047 = vpack.c.b16 %v2979, %v2975
    %v3048 = vpack.c.b16 %v2980, %v2976
    %v3049 = vpack.c.b16 %v2985, %v2981
    %v3050 = vpack.c.b16 %v2986, %v2982
    %v3051 = vpack.c.b16 %v2987, %v2983
    %v3052 = vpack.c.b16 %v2988, %v2984
    %v3053 = vpack.c.b16 %v2993, %v2989
    %v3054 = vpack.c.b16 %v2994, %v2990
    %v3055 = vpack.c.b16 %v2995, %v2991
    %v3056 = vpack.c.b16 %v2996, %v2992
    %v3057 = vpack.c.b16 %v3001, %v2997
    %v3058 = vpack.c.b16 %v3002, %v2998
    %v3059 = vpack.c.b16 %v3003, %v2999
    %v3060 = vpack.c.b16 %v3004, %v3000
    %vm3117 = vcmask 785408
    %v3119 = vsel %vm3117, %v2835, 0
    %3121 = vmatprep.subr.bf16.mxu0 %v3006
    %3122 = vmatpush1.bf16.msra.mxu0 %v3005
    %3123 = vmatprep.subr.bf16.mxu0 %v3010
    %3124 = vmatpush1.bf16.msra.mxu0 %v3009
    %3125 = vmatprep.subr.bf16.mxu0 %v3014
    %3126 = vmatpush1.bf16.msra.mxu0 %v3013
    %3127 = vmatprep.subr.bf16.mxu0 %v3018
    %3128 = vmatpush1.bf16.msra.mxu0 %v3017
    %3129 = vmatprep.subr.bf16.mxu0 %v3022
    %3130 = vmatpush1.bf16.msra.mxu0 %v3021
    %3131 = vmatprep.subr.bf16.mxu0 %v3026
    %3132 = vmatpush1.bf16.msra.mxu0 %v3025
    %3133 = vmatprep.subr.bf16.mxu0 %v3030
    %3134 = vmatpush1.bf16.msra.mxu0 %v3029
    %3135 = vmatprep.subr.bf16.mxu0 %v3034
    %3136 = vmatpush1.bf16.msra.mxu0 %v3033
    %3137 = vmatprep.subr.bf16.mxu0 %v3038
    %3138 = vmatpush1.bf16.msra.mxu0 %v3037
    %3139 = vmatprep.subr.bf16.mxu0 %v3042
    %3140 = vmatpush1.bf16.msra.mxu0 %v3041
    %3141 = vmatprep.subr.bf16.mxu0 %v3046
    %3142 = vmatpush1.bf16.msra.mxu0 %v3045
    %3143 = vmatprep.subr.bf16.mxu0 %v3050
    %3144 = vmatpush1.bf16.msra.mxu0 %v3049
    %3145 = vmatprep.subr.bf16.mxu0 %v3054
    %3146 = vmatpush1.bf16.msra.mxu0 %v3053
    %3147 = vmatprep.subr.bf16.mxu0 %v3058
    %3148 = vmatpush1.bf16.msra.mxu0 %v3057
    %3149 = vmatprep.subr.bf16.mxu0 0
    %3150 = vmatpush1.bf16.msra.mxu0 0
    %3151 = vmatprep.subr.bf16.mxu0 0
    %3152 = vmatpush1.bf16.msra.mxu0 0
    %3153 = vmatprep.mubr.bf16.mxu0 %v3119
    %3154 = vmatmul.mubr.bf16.gmra.mrb[0].mxu0 %v2828
    %v3155 = vpop.f32.mrb[0].mxu0
    %v3156 = vadd.f32 0.0, %v3155
    %v3157 = vpop.f32.mrb[0].mxu0
    %v3158 = vadd.f32 0.0, %v3157
    %v3159 = vpop.f32.mrb[0].mxu0
    %v3160 = vpop.f32.mrb[0].mxu0
    %3161 = vdwg.mxu0
    %3162 = vmatprep.subr.bf16.mxu0 %v3008
    %3163 = vmatpush1.bf16.msra.mxu0 %v3007
    %3164 = vmatprep.subr.bf16.mxu0 %v3012
    %3165 = vmatpush1.bf16.msra.mxu0 %v3011
    %3166 = vmatprep.subr.bf16.mxu0 %v3016
    %3167 = vmatpush1.bf16.msra.mxu0 %v3015
    %3168 = vmatprep.subr.bf16.mxu0 %v3020
    %3169 = vmatpush1.bf16.msra.mxu0 %v3019
    %3170 = vmatprep.subr.bf16.mxu0 %v3024
    %3171 = vmatpush1.bf16.msra.mxu0 %v3023
    %3172 = vmatprep.subr.bf16.mxu0 %v3028
    %3173 = vmatpush1.bf16.msra.mxu0 %v3027
    %3174 = vmatprep.subr.bf16.mxu0 %v3032
    %3175 = vmatpush1.bf16.msra.mxu0 %v3031
    %3176 = vmatprep.subr.bf16.mxu0 %v3036
    %3177 = vmatpush1.bf16.msra.mxu0 %v3035
    %3178 = vmatprep.subr.bf16.mxu0 %v3040
    %3179 = vmatpush1.bf16.msra.mxu0 %v3039
    %3180 = vmatprep.subr.bf16.mxu0 %v3044
    %3181 = vmatpush1.bf16.msra.mxu0 %v3043
    %3182 = vmatprep.subr.bf16.mxu0 %v3048
    %3183 = vmatpush1.bf16.msra.mxu0 %v3047
    %3184 = vmatprep.subr.bf16.mxu0 %v3052
    %3185 = vmatpush1.bf16.msra.mxu0 %v3051
    %3186 = vmatprep.subr.bf16.mxu0 %v3056
    %3187 = vmatpush1.bf16.msra.mxu0 %v3055
    %3188 = vmatprep.subr.bf16.mxu0 %v3060
    %3189 = vmatpush1.bf16.msra.mxu0 %v3059
    %3190 = vmatprep.subr.bf16.mxu0 0
    %3191 = vmatpush1.bf16.msra.mxu0 0
    %3192 = vmatprep.subr.bf16.mxu0 0
    %3193 = vmatpush1.bf16.msra.mxu0 0
    %3194 = vmatprep.mubr.bf16.mxu0 %v3119
    %3195 = vmatmul.mubr.bf16.gmra.mrb[0].mxu0 %v2828
    %v3196 = vpop.f32.mrb[0].mxu0
    %v3197 = vadd.f32 0.0, %v3196
    %v3198 = vpop.f32.mrb[0].mxu0
    %v3199 = vadd.f32 0.0, %v3198
    %v3200 = vpop.f32.mrb[0].mxu0
    %v3201 = vpop.f32.mrb[0].mxu0
    %3202 = vdwg.mxu0
    %v3204 = vunpack.c.l.b16 %v2702
    %v3205 = vunpack.c.h.b16 %v2702
    %v3206 = vpack.c.b16 %v3204, %v3204
    %v3207 = vpack.c.b16 %v3205, %v3205
    %v3265 = vunpack.c.l.b16 %v2703
    %v3266 = vunpack.c.h.b16 %v2703
    %v3267 = vunpack.c.l.b16 %v2704
    %v3268 = vunpack.c.h.b16 %v2704
    %v3269 = vunpack.c.l.b16 %v2705
    %v3270 = vunpack.c.h.b16 %v2705
    %v3271 = vunpack.c.l.b16 %v2706
    %v3272 = vunpack.c.h.b16 %v2706
    %v3273 = vunpack.c.l.b16 %v2707
    %v3274 = vunpack.c.h.b16 %v2707
    %v3275 = vunpack.c.l.b16 %v2708
    %v3276 = vunpack.c.h.b16 %v2708
    %v3277 = vunpack.c.l.b16 %v2709
    %v3278 = vunpack.c.h.b16 %v2709
    %v3279 = vunpack.c.l.b16 %v2710
    %v3280 = vunpack.c.h.b16 %v2710
    %v3281 = vunpack.c.l.b16 %v2711
    %v3282 = vunpack.c.h.b16 %v2711
    %v3283 = vunpack.c.l.b16 %v2712
    %v3284 = vunpack.c.h.b16 %v2712
    %v3285 = vunpack.c.l.b16 %v2713
    %v3286 = vunpack.c.h.b16 %v2713
    %v3287 = vunpack.c.l.b16 %v2714
    %v3288 = vunpack.c.h.b16 %v2714
    %v3289 = vunpack.c.l.b16 %v2715
    %v3290 = vunpack.c.h.b16 %v2715
    %v3291 = vunpack.c.l.b16 %v2716
    %v3292 = vunpack.c.h.b16 %v2716
    %v3293 = vunpack.c.l.b16 %v2717
    %v3294 = vunpack.c.h.b16 %v2717
    %v3295 = vunpack.c.l.b16 %v2718
    %v3296 = vunpack.c.h.b16 %v2718
    %v3297 = vunpack.c.l.b16 %v2719
    %v3298 = vunpack.c.h.b16 %v2719
    %v3299 = vunpack.c.l.b16 %v2720
    %v3300 = vunpack.c.h.b16 %v2720
    %v3301 = vunpack.c.l.b16 %v2721
    %v3302 = vunpack.c.h.b16 %v2721
    %v3303 = vunpack.c.l.b16 %v2722
    %v3304 = vunpack.c.h.b16 %v2722
    %v3305 = vunpack.c.l.b16 %v2723
    %v3306 = vunpack.c.h.b16 %v2723
    %v3307 = vunpack.c.l.b16 %v2724
    %v3308 = vunpack.c.h.b16 %v2724
    %v3309 = vunpack.c.l.b16 %v2725
    %v3310 = vunpack.c.h.b16 %v2725
    %v3311 = vunpack.c.l.b16 %v2726
    %v3312 = vunpack.c.h.b16 %v2726
    %v3313 = vunpack.c.l.b16 %v2727
    %v3314 = vunpack.c.h.b16 %v2727
    %v3315 = vunpack.c.l.b16 %v2728
    %v3316 = vunpack.c.h.b16 %v2728
    %v3317 = vunpack.c.l.b16 %v2729
    %v3318 = vunpack.c.h.b16 %v2729
    %v3319 = vunpack.c.l.b16 %v2730
    %v3320 = vunpack.c.h.b16 %v2730
    %v3321 = vunpack.c.l.b16 %v2731
    %v3322 = vunpack.c.h.b16 %v2731
    %v3323 = vunpack.c.l.b16 %v2732
    %v3324 = vunpack.c.h.b16 %v2732
    %v3325 = vunpack.c.l.b16 %v2733
    %v3326 = vunpack.c.h.b16 %v2733
    %v3327 = vunpack.c.l.b16 %v2734
    %v3328 = vunpack.c.h.b16 %v2734
    %v3329 = vunpack.c.l.b16 %v2735
    %v3330 = vunpack.c.h.b16 %v2735
    %v3331 = vunpack.c.l.b16 %v2736
    %v3332 = vunpack.c.h.b16 %v2736
    %v3333 = vunpack.c.l.b16 %v2737
    %v3334 = vunpack.c.h.b16 %v2737
    %v3335 = vunpack.c.l.b16 %v2738
    %v3336 = vunpack.c.h.b16 %v2738
    %v3337 = vunpack.c.l.b16 %v2739
    %v3338 = vunpack.c.h.b16 %v2739
    %v3339 = vunpack.c.l.b16 %v2740
    %v3340 = vunpack.c.h.b16 %v2740
    %v3341 = vunpack.c.l.b16 %v2741
    %v3342 = vunpack.c.h.b16 %v2741
    %v3343 = vunpack.c.l.b16 %v2742
    %v3344 = vunpack.c.h.b16 %v2742
    %v3345 = vunpack.c.l.b16 %v2743
    %v3346 = vunpack.c.h.b16 %v2743
    %v3347 = vunpack.c.l.b16 %v2744
    %v3348 = vunpack.c.h.b16 %v2744
    %v3349 = vunpack.c.l.b16 %v2745
    %v3350 = vunpack.c.h.b16 %v2745
    %v3351 = vunpack.c.l.b16 %v2746
    %v3352 = vunpack.c.h.b16 %v2746
    %v3353 = vunpack.c.l.b16 %v2747
    %v3354 = vunpack.c.h.b16 %v2747
    %v3355 = vunpack.c.l.b16 %v2748
    %v3356 = vunpack.c.h.b16 %v2748
    %v3357 = vunpack.c.l.b16 %v2749
    %v3358 = vunpack.c.h.b16 %v2749
    %v3359 = vunpack.c.l.b16 %v2750
    %v3360 = vunpack.c.h.b16 %v2750
    %v3361 = vunpack.c.l.b16 %v2751
    %v3362 = vunpack.c.h.b16 %v2751
    %v3363 = vunpack.c.l.b16 %v2752
    %v3364 = vunpack.c.h.b16 %v2752
    %v3365 = vunpack.c.l.b16 %v2753
    %v3366 = vunpack.c.h.b16 %v2753
    %v3367 = vunpack.c.l.b16 %v2754
    %v3368 = vunpack.c.h.b16 %v2754
    %v3369 = vunpack.c.l.b16 %v2755
    %v3370 = vunpack.c.h.b16 %v2755
    %v3371 = vunpack.c.l.b16 %v2756
    %v3372 = vunpack.c.h.b16 %v2756
    %v3373 = vunpack.c.l.b16 %v2757
    %v3374 = vunpack.c.h.b16 %v2757
    %v3375 = vunpack.c.l.b16 %v2758
    %v3376 = vunpack.c.h.b16 %v2758
    %v3377 = vpack.c.b16 %v3269, %v3265
    %v3378 = vpack.c.b16 %v3270, %v3266
    %v3379 = vpack.c.b16 %v3271, %v3267
    %v3380 = vpack.c.b16 %v3272, %v3268
    %v3381 = vpack.c.b16 %v3277, %v3273
    %v3382 = vpack.c.b16 %v3278, %v3274
    %v3383 = vpack.c.b16 %v3279, %v3275
    %v3384 = vpack.c.b16 %v3280, %v3276
    %v3385 = vpack.c.b16 %v3285, %v3281
    %v3386 = vpack.c.b16 %v3286, %v3282
    %v3387 = vpack.c.b16 %v3287, %v3283
    %v3388 = vpack.c.b16 %v3288, %v3284
    %v3389 = vpack.c.b16 %v3293, %v3289
    %v3390 = vpack.c.b16 %v3294, %v3290
    %v3391 = vpack.c.b16 %v3295, %v3291
    %v3392 = vpack.c.b16 %v3296, %v3292
    %v3393 = vpack.c.b16 %v3301, %v3297
    %v3394 = vpack.c.b16 %v3302, %v3298
    %v3395 = vpack.c.b16 %v3303, %v3299
    %v3396 = vpack.c.b16 %v3304, %v3300
    %v3397 = vpack.c.b16 %v3309, %v3305
    %v3398 = vpack.c.b16 %v3310, %v3306
    %v3399 = vpack.c.b16 %v3311, %v3307
    %v3400 = vpack.c.b16 %v3312, %v3308
    %v3401 = vpack.c.b16 %v3317, %v3313
    %v3402 = vpack.c.b16 %v3318, %v3314
    %v3403 = vpack.c.b16 %v3319, %v3315
    %v3404 = vpack.c.b16 %v3320, %v3316
    %v3405 = vpack.c.b16 %v3325, %v3321
    %v3406 = vpack.c.b16 %v3326, %v3322
    %v3407 = vpack.c.b16 %v3327, %v3323
    %v3408 = vpack.c.b16 %v3328, %v3324
    %v3409 = vpack.c.b16 %v3333, %v3329
    %v3410 = vpack.c.b16 %v3334, %v3330
    %v3411 = vpack.c.b16 %v3335, %v3331
    %v3412 = vpack.c.b16 %v3336, %v3332
    %v3413 = vpack.c.b16 %v3341, %v3337
    %v3414 = vpack.c.b16 %v3342, %v3338
    %v3415 = vpack.c.b16 %v3343, %v3339
    %v3416 = vpack.c.b16 %v3344, %v3340
    %v3417 = vpack.c.b16 %v3349, %v3345
    %v3418 = vpack.c.b16 %v3350, %v3346
    %v3419 = vpack.c.b16 %v3351, %v3347
    %v3420 = vpack.c.b16 %v3352, %v3348
    %v3421 = vpack.c.b16 %v3357, %v3353
    %v3422 = vpack.c.b16 %v3358, %v3354
    %v3423 = vpack.c.b16 %v3359, %v3355
    %v3424 = vpack.c.b16 %v3360, %v3356
    %v3425 = vpack.c.b16 %v3365, %v3361
    %v3426 = vpack.c.b16 %v3366, %v3362
    %v3427 = vpack.c.b16 %v3367, %v3363
    %v3428 = vpack.c.b16 %v3368, %v3364
    %v3429 = vpack.c.b16 %v3373, %v3369
    %v3430 = vpack.c.b16 %v3374, %v3370
    %v3431 = vpack.c.b16 %v3375, %v3371
    %v3432 = vpack.c.b16 %v3376, %v3372
    %v3490 = vsel %vm3117, %v3207, 0
    %3492 = vmatprep.subr.bf16.mxu0 %v3378
    %3493 = vmatpush1.bf16.msra.mxu0 %v3377
    %3494 = vmatprep.subr.bf16.mxu0 %v3382
    %3495 = vmatpush1.bf16.msra.mxu0 %v3381
    %3496 = vmatprep.subr.bf16.mxu0 %v3386
    %3497 = vmatpush1.bf16.msra.mxu0 %v3385
    %3498 = vmatprep.subr.bf16.mxu0 %v3390
    %3499 = vmatpush1.bf16.msra.mxu0 %v3389
    %3500 = vmatprep.subr.bf16.mxu0 %v3394
    %3501 = vmatpush1.bf16.msra.mxu0 %v3393
    %3502 = vmatprep.subr.bf16.mxu0 %v3398
    %3503 = vmatpush1.bf16.msra.mxu0 %v3397
    %3504 = vmatprep.subr.bf16.mxu0 %v3402
    %3505 = vmatpush1.bf16.msra.mxu0 %v3401
    %3506 = vmatprep.subr.bf16.mxu0 %v3406
    %3507 = vmatpush1.bf16.msra.mxu0 %v3405
    %3508 = vmatprep.subr.bf16.mxu0 %v3410
    %3509 = vmatpush1.bf16.msra.mxu0 %v3409
    %3510 = vmatprep.subr.bf16.mxu0 %v3414
    %3511 = vmatpush1.bf16.msra.mxu0 %v3413
    %3512 = vmatprep.subr.bf16.mxu0 %v3418
    %3513 = vmatpush1.bf16.msra.mxu0 %v3417
    %3514 = vmatprep.subr.bf16.mxu0 %v3422
    %3515 = vmatpush1.bf16.msra.mxu0 %v3421
    %3516 = vmatprep.subr.bf16.mxu0 %v3426
    %3517 = vmatpush1.bf16.msra.mxu0 %v3425
    %3518 = vmatprep.subr.bf16.mxu0 %v3430
    %3519 = vmatpush1.bf16.msra.mxu0 %v3429
    %3520 = vmatprep.subr.bf16.mxu0 0
    %3521 = vmatpush1.bf16.msra.mxu0 0
    %3522 = vmatprep.subr.bf16.mxu0 0
    %3523 = vmatpush1.bf16.msra.mxu0 0
    %3524 = vmatprep.mubr.bf16.mxu0 %v3490
    %3525 = vmatmul.mubr.bf16.gmra.mrb[0].mxu0 %v3206
    %v3526 = vpop.f32.mrb[0].mxu0
    %v3527 = vadd.f32 %v3156, %v3526
    %v3528 = vpop.f32.mrb[0].mxu0
    %v3529 = vadd.f32 %v3158, %v3528
    %v3530 = vpop.f32.mrb[0].mxu0
    %v3531 = vpop.f32.mrb[0].mxu0
    %3532 = vdwg.mxu0
    %3533 = vmatprep.subr.bf16.mxu0 %v3380
    %3534 = vmatpush1.bf16.msra.mxu0 %v3379
    %3535 = vmatprep.subr.bf16.mxu0 %v3384
    %3536 = vmatpush1.bf16.msra.mxu0 %v3383
    %3537 = vmatprep.subr.bf16.mxu0 %v3388
    %3538 = vmatpush1.bf16.msra.mxu0 %v3387
    %3539 = vmatprep.subr.bf16.mxu0 %v3392
    %3540 = vmatpush1.bf16.msra.mxu0 %v3391
    %3541 = vmatprep.subr.bf16.mxu0 %v3396
    %3542 = vmatpush1.bf16.msra.mxu0 %v3395
    %3543 = vmatprep.subr.bf16.mxu0 %v3400
    %3544 = vmatpush1.bf16.msra.mxu0 %v3399
    %3545 = vmatprep.subr.bf16.mxu0 %v3404
    %3546 = vmatpush1.bf16.msra.mxu0 %v3403
    %3547 = vmatprep.subr.bf16.mxu0 %v3408
    %3548 = vmatpush1.bf16.msra.mxu0 %v3407
    %3549 = vmatprep.subr.bf16.mxu0 %v3412
    %3550 = vmatpush1.bf16.msra.mxu0 %v3411
    %3551 = vmatprep.subr.bf16.mxu0 %v3416
    %3552 = vmatpush1.bf16.msra.mxu0 %v3415
    %3553 = vmatprep.subr.bf16.mxu0 %v3420
    %3554 = vmatpush1.bf16.msra.mxu0 %v3419
    %3555 = vmatprep.subr.bf16.mxu0 %v3424
    %3556 = vmatpush1.bf16.msra.mxu0 %v3423
    %3557 = vmatprep.subr.bf16.mxu0 %v3428
    %3558 = vmatpush1.bf16.msra.mxu0 %v3427
    %3559 = vmatprep.subr.bf16.mxu0 %v3432
    %3560 = vmatpush1.bf16.msra.mxu0 %v3431
    %3561 = vmatprep.subr.bf16.mxu0 0
    %3562 = vmatpush1.bf16.msra.mxu0 0
    %3563 = vmatprep.subr.bf16.mxu0 0
    %3564 = vmatpush1.bf16.msra.mxu0 0
    %3565 = vmatprep.mubr.bf16.mxu0 %v3490
    %3566 = vmatmul.mubr.bf16.gmra.mrb[0].mxu0 %v3206
    %v3567 = vpop.f32.mrb[0].mxu0
    %v3568 = vadd.f32 %v3197, %v3567
    %v3569 = vpop.f32.mrb[0].mxu0
    %v3570 = vadd.f32 %v3199, %v3569
    %v3571 = vpop.f32.mrb[0].mxu0
    %v3572 = vpop.f32.mrb[0].mxu0
    %3573 = vdwg.mxu0
    %v3574 = vld [vmem:[#allocation3] sm:$0xee]
    %s3575 = scalar_lea.vmem [#allocation8], 896
    %v3576 = vld [vmem:[%s3575] sm:$0xff]
    %v3577 = vld [vmem:[%s3575 + $0x8] sm:$0xff]
    %v3578 = vld [vmem:[%s3575 + $0x10] sm:$0xff]
    %v3579 = vld [vmem:[%s3575 + $0x18] sm:$0xff]
    %v3580 = vld [vmem:[%s3575 + $0x20] sm:$0xff]
    %v3581 = vld [vmem:[%s3575 + $0x28] sm:$0xff]
    %v3582 = vld [vmem:[%s3575 + $0x30] sm:$0xff]
    %v3583 = vld [vmem:[%s3575 + $0x38] sm:$0xff]
    %v3584 = vld [vmem:[%s3575 + $0x40] sm:$0xff]
    %v3585 = vld [vmem:[%s3575 + $0x48] sm:$0xff]
    %v3586 = vld [vmem:[%s3575 + $0x50] sm:$0xff]
    %v3587 = vld [vmem:[%s3575 + $0x58] sm:$0xff]
    %v3588 = vld [vmem:[%s3575 + $0x60] sm:$0xff]
    %v3589 = vld [vmem:[%s3575 + $0x68] sm:$0xff]
    %v3590 = vld [vmem:[%s3575 + $0x70] sm:$0xff]
    %v3591 = vld [vmem:[%s3575 + $0x78] sm:$0xff]
    %v3592 = vld [vmem:[%s3575 + $0x80] sm:$0xff]
    %v3593 = vld [vmem:[%s3575 + $0x88] sm:$0xff]
    %v3594 = vld [vmem:[%s3575 + $0x90] sm:$0xff]
    %v3595 = vld [vmem:[%s3575 + $0x98] sm:$0xff]
    %v3596 = vld [vmem:[%s3575 + $0xa0] sm:$0xff]
    %v3597 = vld [vmem:[%s3575 + $0xa8] sm:$0xff]
    %v3598 = vld [vmem:[%s3575 + $0xb0] sm:$0xff]
    %v3599 = vld [vmem:[%s3575 + $0xb8] sm:$0xff]
    %v3600 = vld [vmem:[%s3575 + $0xc0] sm:$0xff]
    %v3601 = vld [vmem:[%s3575 + $0xc8] sm:$0xff]
    %v3602 = vld [vmem:[%s3575 + $0xd0] sm:$0xff]
    %v3603 = vld [vmem:[%s3575 + $0xd8] sm:$0xff]
    %v3604 = vld [vmem:[%s3575 + $0xe0] sm:$0xff]
    %v3605 = vld [vmem:[%s3575 + $0xe8] sm:$0xff]
    %v3606 = vld [vmem:[%s3575 + $0xf0] sm:$0xff]
    %v3607 = vld [vmem:[%s3575 + $0xf8] sm:$0xff]
    %v3608 = vld [vmem:[%s3575 + $0x100] sm:$0xff]
    %v3609 = vld [vmem:[%s3575 + $0x108] sm:$0xff]
    %v3610 = vld [vmem:[%s3575 + $0x110] sm:$0xff]
    %v3611 = vld [vmem:[%s3575 + $0x118] sm:$0xff]
    %v3612 = vld [vmem:[%s3575 + $0x120] sm:$0xff]
    %v3613 = vld [vmem:[%s3575 + $0x128] sm:$0xff]
    %v3614 = vld [vmem:[%s3575 + $0x130] sm:$0xff]
    %v3615 = vld [vmem:[%s3575 + $0x138] sm:$0xff]
    %v3616 = vld [vmem:[%s3575 + $0x140] sm:$0xff]
    %v3617 = vld [vmem:[%s3575 + $0x148] sm:$0xff]
    %v3618 = vld [vmem:[%s3575 + $0x150] sm:$0xff]
    %v3619 = vld [vmem:[%s3575 + $0x158] sm:$0xff]
    %v3620 = vld [vmem:[%s3575 + $0x160] sm:$0xff]
    %v3621 = vld [vmem:[%s3575 + $0x168] sm:$0xff]
    %v3622 = vld [vmem:[%s3575 + $0x170] sm:$0xff]
    %v3623 = vld [vmem:[%s3575 + $0x178] sm:$0xff]
    %v3624 = vld [vmem:[%s3575 + $0x180] sm:$0xff]
    %v3625 = vld [vmem:[%s3575 + $0x188] sm:$0xff]
    %v3626 = vld [vmem:[%s3575 + $0x190] sm:$0xff]
    %v3627 = vld [vmem:[%s3575 + $0x198] sm:$0xff]
    %v3628 = vld [vmem:[%s3575 + $0x1a0] sm:$0xff]
    %v3629 = vld [vmem:[%s3575 + $0x1a8] sm:$0xff]
    %v3630 = vld [vmem:[%s3575 + $0x1b0] sm:$0xff]
    %v3631 = vld [vmem:[%s3575 + $0x1b8] sm:$0xff]
    %v3633 = vunpack.c.l.b16 %v3574
    %v3634 = vunpack.c.h.b16 %v3574
    %v3635 = vpack.c.b16 %v3633, %v3633
    %v3636 = vpack.c.b16 %v3634, %v3634
    %v3637 = vrot.slane %v3635, 1
    %v3638 = vrot.slane %v3636, 1
    %v3696 = vunpack.c.l.b16 %v3576
    %v3697 = vunpack.c.h.b16 %v3576
    %v3698 = vunpack.c.l.b16 %v3577
    %v3699 = vunpack.c.h.b16 %v3577
    %v3700 = vunpack.c.l.b16 %v3578
    %v3701 = vunpack.c.h.b16 %v3578
    %v3702 = vunpack.c.l.b16 %v3579
    %v3703 = vunpack.c.h.b16 %v3579
    %v3704 = vunpack.c.l.b16 %v3580
    %v3705 = vunpack.c.h.b16 %v3580
    %v3706 = vunpack.c.l.b16 %v3581
    %v3707 = vunpack.c.h.b16 %v3581
    %v3708 = vunpack.c.l.b16 %v3582
    %v3709 = vunpack.c.h.b16 %v3582
    %v3710 = vunpack.c.l.b16 %v3583
    %v3711 = vunpack.c.h.b16 %v3583
    %v3712 = vunpack.c.l.b16 %v3584
    %v3713 = vunpack.c.h.b16 %v3584
    %v3714 = vunpack.c.l.b16 %v3585
    %v3715 = vunpack.c.h.b16 %v3585
    %v3716 = vunpack.c.l.b16 %v3586
    %v3717 = vunpack.c.h.b16 %v3586
    %v3718 = vunpack.c.l.b16 %v3587
    %v3719 = vunpack.c.h.b16 %v3587
    %v3720 = vunpack.c.l.b16 %v3588
    %v3721 = vunpack.c.h.b16 %v3588
    %v3722 = vunpack.c.l.b16 %v3589
    %v3723 = vunpack.c.h.b16 %v3589
    %v3724 = vunpack.c.l.b16 %v3590
    %v3725 = vunpack.c.h.b16 %v3590
    %v3726 = vunpack.c.l.b16 %v3591
    %v3727 = vunpack.c.h.b16 %v3591
    %v3728 = vunpack.c.l.b16 %v3592
    %v3729 = vunpack.c.h.b16 %v3592
    %v3730 = vunpack.c.l.b16 %v3593
    %v3731 = vunpack.c.h.b16 %v3593
    %v3732 = vunpack.c.l.b16 %v3594
    %v3733 = vunpack.c.h.b16 %v3594
    %v3734 = vunpack.c.l.b16 %v3595
    %v3735 = vunpack.c.h.b16 %v3595
    %v3736 = vunpack.c.l.b16 %v3596
    %v3737 = vunpack.c.h.b16 %v3596
    %v3738 = vunpack.c.l.b16 %v3597
    %v3739 = vunpack.c.h.b16 %v3597
    %v3740 = vunpack.c.l.b16 %v3598
    %v3741 = vunpack.c.h.b16 %v3598
    %v3742 = vunpack.c.l.b16 %v3599
    %v3743 = vunpack.c.h.b16 %v3599
    %v3744 = vunpack.c.l.b16 %v3600
    %v3745 = vunpack.c.h.b16 %v3600
    %v3746 = vunpack.c.l.b16 %v3601
    %v3747 = vunpack.c.h.b16 %v3601
    %v3748 = vunpack.c.l.b16 %v3602
    %v3749 = vunpack.c.h.b16 %v3602
    %v3750 = vunpack.c.l.b16 %v3603
    %v3751 = vunpack.c.h.b16 %v3603
    %v3752 = vunpack.c.l.b16 %v3604
    %v3753 = vunpack.c.h.b16 %v3604
    %v3754 = vunpack.c.l.b16 %v3605
    %v3755 = vunpack.c.h.b16 %v3605
    %v3756 = vunpack.c.l.b16 %v3606
    %v3757 = vunpack.c.h.b16 %v3606
    %v3758 = vunpack.c.l.b16 %v3607
    %v3759 = vunpack.c.h.b16 %v3607
    %v3760 = vunpack.c.l.b16 %v3608
    %v3761 = vunpack.c.h.b16 %v3608
    %v3762 = vunpack.c.l.b16 %v3609
    %v3763 = vunpack.c.h.b16 %v3609
    %v3764 = vunpack.c.l.b16 %v3610
    %v3765 = vunpack.c.h.b16 %v3610
    %v3766 = vunpack.c.l.b16 %v3611
    %v3767 = vunpack.c.h.b16 %v3611
    %v3768 = vunpack.c.l.b16 %v3612
    %v3769 = vunpack.c.h.b16 %v3612
    %v3770 = vunpack.c.l.b16 %v3613
    %v3771 = vunpack.c.h.b16 %v3613
    %v3772 = vunpack.c.l.b16 %v3614
    %v3773 = vunpack.c.h.b16 %v3614
    %v3774 = vunpack.c.l.b16 %v3615
    %v3775 = vunpack.c.h.b16 %v3615
    %v3776 = vunpack.c.l.b16 %v3616
    %v3777 = vunpack.c.h.b16 %v3616
    %v3778 = vunpack.c.l.b16 %v3617
    %v3779 = vunpack.c.h.b16 %v3617
    %v3780 = vunpack.c.l.b16 %v3618
    %v3781 = vunpack.c.h.b16 %v3618
    %v3782 = vunpack.c.l.b16 %v3619
    %v3783 = vunpack.c.h.b16 %v3619
    %v3784 = vunpack.c.l.b16 %v3620
    %v3785 = vunpack.c.h.b16 %v3620
    %v3786 = vunpack.c.l.b16 %v3621
    %v3787 = vunpack.c.h.b16 %v3621
    %v3788 = vunpack.c.l.b16 %v3622
    %v3789 = vunpack.c.h.b16 %v3622
    %v3790 = vunpack.c.l.b16 %v3623
    %v3791 = vunpack.c.h.b16 %v3623
    %v3792 = vunpack.c.l.b16 %v3624
    %v3793 = vunpack.c.h.b16 %v3624
    %v3794 = vunpack.c.l.b16 %v3625
    %v3795 = vunpack.c.h.b16 %v3625
    %v3796 = vunpack.c.l.b16 %v3626
    %v3797 = vunpack.c.h.b16 %v3626
    %v3798 = vunpack.c.l.b16 %v3627
    %v3799 = vunpack.c.h.b16 %v3627
    %v3800 = vunpack.c.l.b16 %v3628
    %v3801 = vunpack.c.h.b16 %v3628
    %v3802 = vunpack.c.l.b16 %v3629
    %v3803 = vunpack.c.h.b16 %v3629
    %v3804 = vunpack.c.l.b16 %v3630
    %v3805 = vunpack.c.h.b16 %v3630
    %v3806 = vunpack.c.l.b16 %v3631
    %v3807 = vunpack.c.h.b16 %v3631
    %v3808 = vpack.c.b16 %v3700, %v3696
    %v3809 = vpack.c.b16 %v3701, %v3697
    %v3810 = vpack.c.b16 %v3702, %v3698
    %v3811 = vpack.c.b16 %v3703, %v3699
    %v3812 = vpack.c.b16 %v3708, %v3704
    %v3813 = vpack.c.b16 %v3709, %v3705
    %v3814 = vpack.c.b16 %v3710, %v3706
    %v3815 = vpack.c.b16 %v3711, %v3707
    %v3816 = vpack.c.b16 %v3716, %v3712
    %v3817 = vpack.c.b16 %v3717, %v3713
    %v3818 = vpack.c.b16 %v3718, %v3714
    %v3819 = vpack.c.b16 %v3719, %v3715
    %v3820 = vpack.c.b16 %v3724, %v3720
    %v3821 = vpack.c.b16 %v3725, %v3721
    %v3822 = vpack.c.b16 %v3726, %v3722
    %v3823 = vpack.c.b16 %v3727, %v3723
    %v3824 = vpack.c.b16 %v3732, %v3728
    %v3825 = vpack.c.b16 %v3733, %v3729
    %v3826 = vpack.c.b16 %v3734, %v3730
    %v3827 = vpack.c.b16 %v3735, %v3731
    %v3828 = vpack.c.b16 %v3740, %v3736
    %v3829 = vpack.c.b16 %v3741, %v3737
    %v3830 = vpack.c.b16 %v3742, %v3738
    %v3831 = vpack.c.b16 %v3743, %v3739
    %v3832 = vpack.c.b16 %v3748, %v3744
    %v3833 = vpack.c.b16 %v3749, %v3745
    %v3834 = vpack.c.b16 %v3750, %v3746
    %v3835 = vpack.c.b16 %v3751, %v3747
    %v3836 = vpack.c.b16 %v3756, %v3752
    %v3837 = vpack.c.b16 %v3757, %v3753
    %v3838 = vpack.c.b16 %v3758, %v3754
    %v3839 = vpack.c.b16 %v3759, %v3755
    %v3840 = vpack.c.b16 %v3764, %v3760
    %v3841 = vpack.c.b16 %v3765, %v3761
    %v3842 = vpack.c.b16 %v3766, %v3762
    %v3843 = vpack.c.b16 %v3767, %v3763
    %v3844 = vpack.c.b16 %v3772, %v3768
    %v3845 = vpack.c.b16 %v3773, %v3769
    %v3846 = vpack.c.b16 %v3774, %v3770
    %v3847 = vpack.c.b16 %v3775, %v3771
    %v3848 = vpack.c.b16 %v3780, %v3776
    %v3849 = vpack.c.b16 %v3781, %v3777
    %v3850 = vpack.c.b16 %v3782, %v3778
    %v3851 = vpack.c.b16 %v3783, %v3779
    %v3852 = vpack.c.b16 %v3788, %v3784
    %v3853 = vpack.c.b16 %v3789, %v3785
    %v3854 = vpack.c.b16 %v3790, %v3786
    %v3855 = vpack.c.b16 %v3791, %v3787
    %v3856 = vpack.c.b16 %v3796, %v3792
    %v3857 = vpack.c.b16 %v3797, %v3793
    %v3858 = vpack.c.b16 %v3798, %v3794
    %v3859 = vpack.c.b16 %v3799, %v3795
    %v3860 = vpack.c.b16 %v3804, %v3800
    %v3861 = vpack.c.b16 %v3805, %v3801
    %v3862 = vpack.c.b16 %v3806, %v3802
    %v3863 = vpack.c.b16 %v3807, %v3803
    %v3921 = vsel %vm3117, %v3638, 0
    %3923 = vmatprep.subr.bf16.mxu0 %v3809
    %3924 = vmatpush1.bf16.msra.mxu0 %v3808
    %3925 = vmatprep.subr.bf16.mxu0 %v3813
    %3926 = vmatpush1.bf16.msra.mxu0 %v3812
    %3927 = vmatprep.subr.bf16.mxu0 %v3817
    %3928 = vmatpush1.bf16.msra.mxu0 %v3816
    %3929 = vmatprep.subr.bf16.mxu0 %v3821
    %3930 = vmatpush1.bf16.msra.mxu0 %v3820
    %3931 = vmatprep.subr.bf16.mxu0 %v3825
    %3932 = vmatpush1.bf16.msra.mxu0 %v3824
    %3933 = vmatprep.subr.bf16.mxu0 %v3829
    %3934 = vmatpush1.bf16.msra.mxu0 %v3828
    %3935 = vmatprep.subr.bf16.mxu0 %v3833
    %3936 = vmatpush1.bf16.msra.mxu0 %v3832
    %3937 = vmatprep.subr.bf16.mxu0 %v3837
    %3938 = vmatpush1.bf16.msra.mxu0 %v3836
    %3939 = vmatprep.subr.bf16.mxu0 %v3841
    %3940 = vmatpush1.bf16.msra.mxu0 %v3840
    %3941 = vmatprep.subr.bf16.mxu0 %v3845
    %3942 = vmatpush1.bf16.msra.mxu0 %v3844
    %3943 = vmatprep.subr.bf16.mxu0 %v3849
    %3944 = vmatpush1.bf16.msra.mxu0 %v3848
    %3945 = vmatprep.subr.bf16.mxu0 %v3853
    %3946 = vmatpush1.bf16.msra.mxu0 %v3852
    %3947 = vmatprep.subr.bf16.mxu0 %v3857
    %3948 = vmatpush1.bf16.msra.mxu0 %v3856
    %3949 = vmatprep.subr.bf16.mxu0 %v3861
    %3950 = vmatpush1.bf16.msra.mxu0 %v3860
    %3951 = vmatprep.subr.bf16.mxu0 0
    %3952 = vmatpush1.bf16.msra.mxu0 0
    %3953 = vmatprep.subr.bf16.mxu0 0
    %3954 = vmatpush1.bf16.msra.mxu0 0
    %3955 = vmatprep.mubr.bf16.mxu0 %v3921
    %3956 = vmatmul.mubr.bf16.gmra.mrb[0].mxu0 %v3637
    %v3957 = vpop.f32.mrb[0].mxu0
    %v3958 = vadd.f32 0.0, %v3957
    %v3959 = vpop.f32.mrb[0].mxu0
    %v3960 = vadd.f32 0.0, %v3959
    %v3961 = vpop.f32.mrb[0].mxu0
    %v3962 = vpop.f32.mrb[0].mxu0
    %3963 = vdwg.mxu0
    %3964 = vmatprep.subr.bf16.mxu0 %v3811
    %3965 = vmatpush1.bf16.msra.mxu0 %v3810
    %3966 = vmatprep.subr.bf16.mxu0 %v3815
    %3967 = vmatpush1.bf16.msra.mxu0 %v3814
    %3968 = vmatprep.subr.bf16.mxu0 %v3819
    %3969 = vmatpush1.bf16.msra.mxu0 %v3818
    %3970 = vmatprep.subr.bf16.mxu0 %v3823
    %3971 = vmatpush1.bf16.msra.mxu0 %v3822
    %3972 = vmatprep.subr.bf16.mxu0 %v3827
    %3973 = vmatpush1.bf16.msra.mxu0 %v3826
    %3974 = vmatprep.subr.bf16.mxu0 %v3831
    %3975 = vmatpush1.bf16.msra.mxu0 %v3830
    %3976 = vmatprep.subr.bf16.mxu0 %v3835
    %3977 = vmatpush1.bf16.msra.mxu0 %v3834
    %3978 = vmatprep.subr.bf16.mxu0 %v3839
    %3979 = vmatpush1.bf16.msra.mxu0 %v3838
    %3980 = vmatprep.subr.bf16.mxu0 %v3843
    %3981 = vmatpush1.bf16.msra.mxu0 %v3842
    %3982 = vmatprep.subr.bf16.mxu0 %v3847
    %3983 = vmatpush1.bf16.msra.mxu0 %v3846
    %3984 = vmatprep.subr.bf16.mxu0 %v3851
    %3985 = vmatpush1.bf16.msra.mxu0 %v3850
    %3986 = vmatprep.subr.bf16.mxu0 %v3855
    %3987 = vmatpush1.bf16.msra.mxu0 %v3854
    %3988 = vmatprep.subr.bf16.mxu0 %v3859
    %3989 = vmatpush1.bf16.msra.mxu0 %v3858
    %3990 = vmatprep.subr.bf16.mxu0 %v3863
    %3991 = vmatpush1.bf16.msra.mxu0 %v3862
    %3992 = vmatprep.subr.bf16.mxu0 0
    %3993 = vmatpush1.bf16.msra.mxu0 0
    %3994 = vmatprep.subr.bf16.mxu0 0
    %3995 = vmatpush1.bf16.msra.mxu0 0
    %3996 = vmatprep.mubr.bf16.mxu0 %v3921
    %3997 = vmatmul.mubr.bf16.gmra.mrb[0].mxu0 %v3637
    %v3998 = vpop.f32.mrb[0].mxu0
    %v3999 = vadd.f32 0.0, %v3998
    %v4000 = vpop.f32.mrb[0].mxu0
    %v4001 = vadd.f32 0.0, %v4000
    %v4002 = vpop.f32.mrb[0].mxu0
    %v4003 = vpop.f32.mrb[0].mxu0
    %4004 = vdwg.mxu0
    %v4005 = vadd.f32 %v3527, %v3958
    %v4006 = vadd.f32 %v3529, %v3960
    %v4007 = vadd.f32 %v3568, %v3999
    %v4008 = vadd.f32 %v3570, %v4001
    %v4009 = vmax.f32 %v4005, %v4007
    %v4010 = vmax.f32 %v4006, %v4008
    %v4013 = vrot.slane %v4009, 1
    %v4014 = vrot.slane %v4010, 1
    %v4017 = vmax.f32 %v4009, %v4013
    %v4018 = vmax.f32 %v4010, %v4014
    %v4021 = vrot.slane %v4017, 1
    %v4022 = vrot.slane %v4018, 1
    %v4025 = vrot.slane %v4017, 2
    %v4026 = vrot.slane %v4018, 2
    %v4029 = vsel %vm1085, %v4017, %v4021
    %v4030 = vsel %vm1085, %v4018, %v4022
    %v4031 = vsel %vm1088, %v4029, %v4025
    %v4032 = vsel %vm1088, %v4030, %v4026
    %v4033 = vld [vmem:[%s6] sm:$0x3]
    %v4035 = vlaneseq
    %v4036 = vshrl.u32 %v4035, 7
    %v4037 = vsub.s32 0, %v4036
    %v4038 = vrot.slane %v4033, %v4037
    %v4039 = vlaneseq
    %v4040 = vshrl.u32 %v4039, 7
    %v4041 = vsub.s32 1, %v4040
    %v4042 = vrot.slane %v4033, %v4041
    %v4045 = vadd.f32 %v4031, %v4038
    %v4046 = vadd.f32 %v4032, %v4042
    %vm4047 = vcmp.gt.f32.partialorder %v4045, 0.0
    %vm4048 = vcmp.gt.f32.partialorder %v4046, 0.0
    %v4049 = vmin.f32 %v4045, 0.0
    %v4050 = vmin.f32 %v4046, 0.0
    %v4051 = vmul.f32 %v4049, 1.442695
    %v4052 = vpow.pop %v4051
    %v4053 = vmul.f32 %v4050, 1.442695
    %v4054 = vpow.pop %v4053
    %v4055 = vsub.f32 %v4052, 1.0
    %v4056 = vsub.f32 %v4054, 1.0
    %v4057 = vsel %vm4047, %v4045, %v4055
    %v4058 = vsel %vm4048, %v4046, %v4056
    %v4059 = vpack.c.bf16 %v4057, %v4057
    %v4060 = vpack.c.bf16 %v4058, %v4058
    %v4063 = vcombine.low %v4059, %v4060
    %v4065 = vunpack.c.l.s4 1966171168
    %v4066 = vunpack.c.0.s8 %v4065
    %v4067 = vlaneseq
    %v4068 = vshrl.u32 %v4067, 7
    %v4069 = vsub.s32 %v4066, %v4068
    %v4070 = vrot.slane %v4063, %v4069
    %v4072 = vunpack.c.l.s4 1966171168
    %v4073 = vunpack.c.0.s8 %v4072
    %v4074 = vlaneseq
    %v4075 = vshrl.u32 %v4074, 7
    %v4076 = vsub.s32 %v4073, %v4075
    %v4077 = vrot.slane %v4070, %v4076
    %vm4079 = vcmask 517121
    %vm4080 = vsmask.f32 1280
    %vm4081 = vmand %vm4079, %vm4080
    %vm4082 = vmor %vm4081, %vm102
    %v4083 = vld [vmem:[#allocation4] sm:$0x3]
    %v4084 = vsel %vm4082, %v4077, %v4083
    %4085 = vst [vmem:[#allocation4] sm:$0x3] %v4084
    %v4087 = vshrl.u32 %v4077, 16
    %v4089 = vrot.slane %v4087, 7
    %v4090 = vrot.slane %v4089, 1
    %v4092 = vld [vmem:[#allocation4 + $0x2] sm:$0x3]
    %v4093 = vsel %vm4082, %v4090, %v4092
    %4094 = vst [vmem:[#allocation4 + $0x2] sm:$0x3] %v4093
    %v4095 = vcombine.high %v4070, %v4070
    %v4097 = vunpack.c.l.s4 1966171168
    %v4098 = vunpack.c.0.s8 %v4097
    %v4099 = vlaneseq
    %v4100 = vshrl.u32 %v4099, 7
    %v4101 = vsub.s32 %v4098, %v4100
    %v4102 = vrot.slane %v4095, %v4101
    %v4104 = vld [vmem:[#allocation4 + $0x4] sm:$0x3]
    %v4105 = vsel %vm4082, %v4102, %v4104
    %4106 = vst [vmem:[#allocation4 + $0x4] sm:$0x3] %v4105
    %s4107 = scalar_lea.vmem %s0, 20
    %v4108 = vld [vmem:[%s4107] sm:$0xf]
    %v4109 = vld [vmem:[%s4107 + $0x4] sm:$0xf]
    %v4110 = vld [vmem:[%s4107 + $0x8] sm:$0xf]
    %v4111 = vld [vmem:[%s4107 + $0xc] sm:$0x7]
    %v4112 = vld [vmem:[%s1] sm:$0xff]
    %v4113 = vld [vmem:[%s1 + $0x8] sm:$0xff]
    %v4114 = vld [vmem:[%s1 + $0x10] sm:$0xff]
    %v4115 = vld [vmem:[%s1 + $0x18] sm:$0xff]
    %v4116 = vld [vmem:[%s1 + $0x20] sm:$0xff]
    %v4117 = vld [vmem:[%s1 + $0x28] sm:$0xff]
    %v4118 = vld [vmem:[%s1 + $0x30] sm:$0xff]
    %v4119 = vld [vmem:[%s1 + $0x38] sm:$0xff]
    %v4120 = vld [vmem:[%s1 + $0x40] sm:$0xff]
    %v4121 = vld [vmem:[%s1 + $0x48] sm:$0xff]
    %v4122 = vld [vmem:[%s1 + $0x50] sm:$0xff]
    %v4123 = vld [vmem:[%s1 + $0x58] sm:$0xff]
    %v4124 = vld [vmem:[%s1 + $0x60] sm:$0xff]
    %v4125 = vld [vmem:[%s1 + $0x68] sm:$0xff]
    %v4126 = vld [vmem:[%s1 + $0x70] sm:$0xff]
    %v4127 = vld [vmem:[%s1 + $0x78] sm:$0xff]
    %v4128 = vld [vmem:[%s1 + $0x80] sm:$0xff]
    %v4129 = vld [vmem:[%s1 + $0x88] sm:$0xff]
    %v4130 = vld [vmem:[%s1 + $0x90] sm:$0xff]
    %v4131 = vld [vmem:[%s1 + $0x98] sm:$0xff]
    %v4132 = vld [vmem:[%s1 + $0xa0] sm:$0xff]
    %v4133 = vld [vmem:[%s1 + $0xa8] sm:$0xff]
    %v4134 = vld [vmem:[%s1 + $0xb0] sm:$0x77]
    %v4135 = vld [vmem:[%s1 + $0xb8] sm:$0x77]
    %v4136 = vld [vmem:[%s4107 + $0xc] sm:$0xf]
    %v4137 = vld [vmem:[%s158] sm:$0xff]
    %v4138 = vld [vmem:[%s158 + $0x8] sm:$0xff]
    %v4139 = vld [vmem:[%s158 + $0x10] sm:$0xff]
    %v4140 = vld [vmem:[%s158 + $0x18] sm:$0xff]
    %v4141 = vld [vmem:[%s158 + $0x20] sm:$0xff]
    %v4142 = vld [vmem:[%s158 + $0x28] sm:$0xff]
    %v4143 = vld [vmem:[%s158 + $0x30] sm:$0xff]
    %v4144 = vld [vmem:[%s158 + $0x38] sm:$0xff]
    %v4145 = vld [vmem:[%s158 + $0x40] sm:$0xff]
    %v4146 = vld [vmem:[%s158 + $0x48] sm:$0xff]
    %v4147 = vld [vmem:[%s158 + $0x50] sm:$0xff]
    %v4148 = vld [vmem:[%s158 + $0x58] sm:$0xff]
    %v4149 = vld [vmem:[%s158 + $0x60] sm:$0xff]
    %v4150 = vld [vmem:[%s158 + $0x68] sm:$0xff]
    %v4151 = vld [vmem:[%s158 + $0x70] sm:$0xff]
    %v4152 = vld [vmem:[%s158 + $0x78] sm:$0xff]
    %v4153 = vld [vmem:[%s158 + $0x80] sm:$0xff]
    %v4154 = vld [vmem:[%s158 + $0x88] sm:$0xff]
    %v4155 = vld [vmem:[%s158 + $0x90] sm:$0xff]
    %v4156 = vld [vmem:[%s158 + $0x98] sm:$0xff]
    %v4157 = vld [vmem:[%s158 + $0xa0] sm:$0xff]
    %v4158 = vld [vmem:[%s158 + $0xa8] sm:$0xff]
    %v4159 = vld [vmem:[%s158 + $0xb0] sm:$0x77]
    %v4160 = vld [vmem:[%s158 + $0xb8] sm:$0x77]
    %v4165 = vunpack.c.l.b16 %v4108
    %v4166 = vunpack.c.l.b16 %v4109
    %v4167 = vunpack.c.l.b16 %v4110
    %v4168 = vunpack.c.l.b16 %v4136
    %v4169 = vpack.c.b16 %v4166, %v4165
    %v4170 = vpack.c.b16 %v4168, %v4167
    %v4172 = vshrl.u32 %v4169, 16
    %v4174 = vshll.u32 %v4169, 16
    %v4176 = vrot.slane %v4174, 1
    %v4177 = vor.u32 %v4172, %v4176
    %v4179 = vshll.u32 %v4170, 16
    %v4181 = vrot.slane %v4179, 1
    %v4182 = vsel %vm193, %v4177, %v4181
    %v4183 = vshrl.u32 %v4170, 16
    %v4185 = vor.u32 %v4183, %v4181
    %v4210 = vunpack.c.l.b16 %v4137
    %v4211 = vunpack.c.h.b16 %v4137
    %v4212 = vunpack.c.l.b16 %v4138
    %v4213 = vunpack.c.h.b16 %v4138
    %v4214 = vunpack.c.l.b16 %v4139
    %v4215 = vunpack.c.h.b16 %v4139
    %v4216 = vunpack.c.l.b16 %v4140
    %v4217 = vunpack.c.h.b16 %v4140
    %v4218 = vunpack.c.l.b16 %v4141
    %v4219 = vunpack.c.h.b16 %v4141
    %v4220 = vunpack.c.l.b16 %v4142
    %v4221 = vunpack.c.h.b16 %v4142
    %v4222 = vunpack.c.l.b16 %v4143
    %v4223 = vunpack.c.h.b16 %v4143
    %v4224 = vunpack.c.l.b16 %v4144
    %v4225 = vunpack.c.h.b16 %v4144
    %v4226 = vunpack.c.l.b16 %v4145
    %v4227 = vunpack.c.h.b16 %v4145
    %v4228 = vunpack.c.l.b16 %v4146
    %v4229 = vunpack.c.h.b16 %v4146
    %v4230 = vunpack.c.l.b16 %v4147
    %v4231 = vunpack.c.h.b16 %v4147
    %v4232 = vunpack.c.l.b16 %v4148
    %v4233 = vunpack.c.h.b16 %v4148
    %v4234 = vunpack.c.l.b16 %v4149
    %v4235 = vunpack.c.h.b16 %v4149
    %v4236 = vunpack.c.l.b16 %v4150
    %v4237 = vunpack.c.h.b16 %v4150
    %v4238 = vunpack.c.l.b16 %v4151
    %v4239 = vunpack.c.h.b16 %v4151
    %v4240 = vunpack.c.l.b16 %v4152
    %v4241 = vunpack.c.h.b16 %v4152
    %v4242 = vunpack.c.l.b16 %v4153
    %v4243 = vunpack.c.h.b16 %v4153
    %v4244 = vunpack.c.l.b16 %v4154
    %v4245 = vunpack.c.h.b16 %v4154
    %v4246 = vunpack.c.l.b16 %v4155
    %v4247 = vunpack.c.h.b16 %v4155
    %v4248 = vunpack.c.l.b16 %v4156
    %v4249 = vunpack.c.h.b16 %v4156
    %v4250 = vunpack.c.l.b16 %v4157
    %v4251 = vunpack.c.h.b16 %v4157
    %v4252 = vunpack.c.l.b16 %v4158
    %v4253 = vunpack.c.h.b16 %v4158
    %v4254 = vunpack.c.l.b16 %v4159
    %v4255 = vunpack.c.h.b16 %v4159
    %v4256 = vunpack.c.l.b16 %v4160
    %v4257 = vunpack.c.h.b16 %v4160
    %v4258 = vpack.c.b16 %v4214, %v4210
    %v4259 = vpack.c.b16 %v4215, %v4211
    %v4260 = vpack.c.b16 %v4216, %v4212
    %v4261 = vpack.c.b16 %v4217, %v4213
    %v4262 = vpack.c.b16 %v4222, %v4218
    %v4263 = vpack.c.b16 %v4223, %v4219
    %v4264 = vpack.c.b16 %v4224, %v4220
    %v4265 = vpack.c.b16 %v4225, %v4221
    %v4266 = vpack.c.b16 %v4230, %v4226
    %v4267 = vpack.c.b16 %v4231, %v4227
    %v4268 = vpack.c.b16 %v4232, %v4228
    %v4269 = vpack.c.b16 %v4233, %v4229
    %v4270 = vpack.c.b16 %v4238, %v4234
    %v4271 = vpack.c.b16 %v4239, %v4235
    %v4272 = vpack.c.b16 %v4240, %v4236
    %v4273 = vpack.c.b16 %v4241, %v4237
    %v4274 = vpack.c.b16 %v4246, %v4242
    %v4275 = vpack.c.b16 %v4247, %v4243
    %v4276 = vpack.c.b16 %v4248, %v4244
    %v4277 = vpack.c.b16 %v4249, %v4245
    %v4278 = vpack.c.b16 %v4254, %v4250
    %v4279 = vpack.c.b16 %v4255, %v4251
    %v4280 = vpack.c.b16 %v4256, %v4252
    %v4281 = vpack.c.b16 %v4257, %v4253
    %v4303 = vsel %vm325, %v4182, 0
    %v4306 = vsel %vm325, %v4185, 0
    %v4309 = vand.u32 %v4278, %v335
    %v4312 = vand.u32 %v4279, %v335
    %v4315 = vand.u32 %v4280, %v335
    %v4318 = vand.u32 %v4281, %v335
    %4320 = vmatprep.subr.bf16.mxu0 %v4259
    %4321 = vmatpush1.bf16.msra.mxu0 %v4258
    %4322 = vmatprep.subr.bf16.mxu0 %v4263
    %4323 = vmatpush1.bf16.msra.mxu0 %v4262
    %4324 = vmatprep.subr.bf16.mxu0 %v4267
    %4325 = vmatpush1.bf16.msra.mxu0 %v4266
    %4326 = vmatprep.subr.bf16.mxu0 %v4271
    %4327 = vmatpush1.bf16.msra.mxu0 %v4270
    %4328 = vmatprep.subr.bf16.mxu0 %v4275
    %4329 = vmatpush1.bf16.msra.mxu0 %v4274
    %4330 = vmatprep.subr.bf16.mxu0 %v4312
    %4331 = vmatpush1.bf16.msra.mxu0 %v4309
    %4332 = vmatprep.subr.bf16.mxu0 0
    %4333 = vmatpush1.bf16.msra.mxu0 0
    %4334 = vmatprep.subr.bf16.mxu0 0
    %4335 = vmatpush1.bf16.msra.mxu0 0
    %4336 = vmatprep.subr.bf16.mxu0 0
    %4337 = vmatpush1.bf16.msra.mxu0 0
    %4338 = vmatprep.subr.bf16.mxu0 0
    %4339 = vmatpush1.bf16.msra.mxu0 0
    %4340 = vmatprep.subr.bf16.mxu0 0
    %4341 = vmatpush1.bf16.msra.mxu0 0
    %4342 = vmatprep.subr.bf16.mxu0 0
    %4343 = vmatpush1.bf16.msra.mxu0 0
    %4344 = vmatprep.subr.bf16.mxu0 0
    %4345 = vmatpush1.bf16.msra.mxu0 0
    %4346 = vmatprep.subr.bf16.mxu0 0
    %4347 = vmatpush1.bf16.msra.mxu0 0
    %4348 = vmatprep.subr.bf16.mxu0 0
    %4349 = vmatpush1.bf16.msra.mxu0 0
    %4350 = vmatprep.subr.bf16.mxu0 0
    %4351 = vmatpush1.bf16.msra.mxu0 0
    %4352 = vmatprep.mubr.bf16.mxu0 0
    %4353 = vmatmul.mubr.bf16.gmra.mrb[0].mxu0 %v4303
    %v4354 = vpop.f32.mrb[0].mxu0
    %v4355 = vadd.f32 0.0, %v4354
    %v4356 = vpop.f32.mrb[0].mxu0
    %v4357 = vadd.f32 0.0, %v4356
    %v4358 = vpop.f32.mrb[0].mxu0
    %v4359 = vadd.f32 0.0, %v4358
    %v4360 = vpop.f32.mrb[0].mxu0
    %v4361 = vadd.f32 0.0, %v4360
    %4362 = vmatprep.mubr.bf16.mxu0 0
    %4363 = vmatmul.mubr.bf16.gmra.mrb[0].mxu0 %v4306
    %v4364 = vpop.f32.mrb[0].mxu0
    %v4365 = vadd.f32 0.0, %v4364
    %v4366 = vpop.f32.mrb[0].mxu0
    %v4367 = vadd.f32 0.0, %v4366
    %v4368 = vpop.f32.mrb[0].mxu0
    %v4369 = vadd.f32 0.0, %v4368
    %v4370 = vpop.f32.mrb[0].mxu0
    %v4371 = vadd.f32 0.0, %v4370
    %4372 = vdwg.mxu0
    %4373 = vmatprep.subr.bf16.mxu0 %v4261
    %4374 = vmatpush1.bf16.msra.mxu0 %v4260
    %4375 = vmatprep.subr.bf16.mxu0 %v4265
    %4376 = vmatpush1.bf16.msra.mxu0 %v4264
    %4377 = vmatprep.subr.bf16.mxu0 %v4269
    %4378 = vmatpush1.bf16.msra.mxu0 %v4268
    %4379 = vmatprep.subr.bf16.mxu0 %v4273
    %4380 = vmatpush1.bf16.msra.mxu0 %v4272
    %4381 = vmatprep.subr.bf16.mxu0 %v4277
    %4382 = vmatpush1.bf16.msra.mxu0 %v4276
    %4383 = vmatprep.subr.bf16.mxu0 %v4318
    %4384 = vmatpush1.bf16.msra.mxu0 %v4315
    %4385 = vmatprep.subr.bf16.mxu0 0
    %4386 = vmatpush1.bf16.msra.mxu0 0
    %4387 = vmatprep.subr.bf16.mxu0 0
    %4388 = vmatpush1.bf16.msra.mxu0 0
    %4389 = vmatprep.subr.bf16.mxu0 0
    %4390 = vmatpush1.bf16.msra.mxu0 0
    %4391 = vmatprep.subr.bf16.mxu0 0
    %4392 = vmatpush1.bf16.msra.mxu0 0
    %4393 = vmatprep.subr.bf16.mxu0 0
    %4394 = vmatpush1.bf16.msra.mxu0 0
    %4395 = vmatprep.subr.bf16.mxu0 0
    %4396 = vmatpush1.bf16.msra.mxu0 0
    %4397 = vmatprep.subr.bf16.mxu0 0
    %4398 = vmatpush1.bf16.msra.mxu0 0
    %4399 = vmatprep.subr.bf16.mxu0 0
    %4400 = vmatpush1.bf16.msra.mxu0 0
    %4401 = vmatprep.subr.bf16.mxu0 0
    %4402 = vmatpush1.bf16.msra.mxu0 0
    %4403 = vmatprep.subr.bf16.mxu0 0
    %4404 = vmatpush1.bf16.msra.mxu0 0
    %4405 = vmatprep.mubr.bf16.mxu0 0
    %4406 = vmatmul.mubr.bf16.gmra.mrb[0].mxu0 %v4303
    %v4407 = vpop.f32.mrb[0].mxu0
    %v4408 = vadd.f32 0.0, %v4407
    %v4409 = vpop.f32.mrb[0].mxu0
    %v4410 = vadd.f32 0.0, %v4409
    %v4411 = vpop.f32.mrb[0].mxu0
    %v4412 = vadd.f32 0.0, %v4411
    %v4413 = vpop.f32.mrb[0].mxu0
    %v4414 = vadd.f32 0.0, %v4413
    %4415 = vmatprep.mubr.bf16.mxu0 0
    %4416 = vmatmul.mubr.bf16.gmra.mrb[0].mxu0 %v4306
    %v4417 = vpop.f32.mrb[0].mxu0
    %v4418 = vadd.f32 0.0, %v4417
    %v4419 = vpop.f32.mrb[0].mxu0
    %v4420 = vadd.f32 0.0, %v4419
    %v4421 = vpop.f32.mrb[0].mxu0
    %v4422 = vadd.f32 0.0, %v4421
    %v4423 = vpop.f32.mrb[0].mxu0
    %v4424 = vadd.f32 0.0, %v4423
    %4425 = vdwg.mxu0
    %v4427 = vunpack.c.l.b16 %v4111
    %v4428 = vpack.c.b16 %v4427, %v4167
    %v4453 = vunpack.c.l.b16 %v4112
    %v4454 = vunpack.c.h.b16 %v4112
    %v4455 = vunpack.c.l.b16 %v4113
    %v4456 = vunpack.c.h.b16 %v4113
    %v4457 = vunpack.c.l.b16 %v4114
    %v4458 = vunpack.c.h.b16 %v4114
    %v4459 = vunpack.c.l.b16 %v4115
    %v4460 = vunpack.c.h.b16 %v4115
    %v4461 = vunpack.c.l.b16 %v4116
    %v4462 = vunpack.c.h.b16 %v4116
    %v4463 = vunpack.c.l.b16 %v4117
    %v4464 = vunpack.c.h.b16 %v4117
    %v4465 = vunpack.c.l.b16 %v4118
    %v4466 = vunpack.c.h.b16 %v4118
    %v4467 = vunpack.c.l.b16 %v4119
    %v4468 = vunpack.c.h.b16 %v4119
    %v4469 = vunpack.c.l.b16 %v4120
    %v4470 = vunpack.c.h.b16 %v4120
    %v4471 = vunpack.c.l.b16 %v4121
    %v4472 = vunpack.c.h.b16 %v4121
    %v4473 = vunpack.c.l.b16 %v4122
    %v4474 = vunpack.c.h.b16 %v4122
    %v4475 = vunpack.c.l.b16 %v4123
    %v4476 = vunpack.c.h.b16 %v4123
    %v4477 = vunpack.c.l.b16 %v4124
    %v4478 = vunpack.c.h.b16 %v4124
    %v4479 = vunpack.c.l.b16 %v4125
    %v4480 = vunpack.c.h.b16 %v4125
    %v4481 = vunpack.c.l.b16 %v4126
    %v4482 = vunpack.c.h.b16 %v4126
    %v4483 = vunpack.c.l.b16 %v4127
    %v4484 = vunpack.c.h.b16 %v4127
    %v4485 = vunpack.c.l.b16 %v4128
    %v4486 = vunpack.c.h.b16 %v4128
    %v4487 = vunpack.c.l.b16 %v4129
    %v4488 = vunpack.c.h.b16 %v4129
    %v4489 = vunpack.c.l.b16 %v4130
    %v4490 = vunpack.c.h.b16 %v4130
    %v4491 = vunpack.c.l.b16 %v4131
    %v4492 = vunpack.c.h.b16 %v4131
    %v4493 = vunpack.c.l.b16 %v4132
    %v4494 = vunpack.c.h.b16 %v4132
    %v4495 = vunpack.c.l.b16 %v4133
    %v4496 = vunpack.c.h.b16 %v4133
    %v4497 = vunpack.c.l.b16 %v4134
    %v4498 = vunpack.c.h.b16 %v4134
    %v4499 = vunpack.c.l.b16 %v4135
    %v4500 = vunpack.c.h.b16 %v4135
    %v4501 = vpack.c.b16 %v4457, %v4453
    %v4502 = vpack.c.b16 %v4458, %v4454
    %v4503 = vpack.c.b16 %v4459, %v4455
    %v4504 = vpack.c.b16 %v4460, %v4456
    %v4505 = vpack.c.b16 %v4465, %v4461
    %v4506 = vpack.c.b16 %v4466, %v4462
    %v4507 = vpack.c.b16 %v4467, %v4463
    %v4508 = vpack.c.b16 %v4468, %v4464
    %v4509 = vpack.c.b16 %v4473, %v4469
    %v4510 = vpack.c.b16 %v4474, %v4470
    %v4511 = vpack.c.b16 %v4475, %v4471
    %v4512 = vpack.c.b16 %v4476, %v4472
    %v4513 = vpack.c.b16 %v4481, %v4477
    %v4514 = vpack.c.b16 %v4482, %v4478
    %v4515 = vpack.c.b16 %v4483, %v4479
    %v4516 = vpack.c.b16 %v4484, %v4480
    %v4517 = vpack.c.b16 %v4489, %v4485
    %v4518 = vpack.c.b16 %v4490, %v4486
    %v4519 = vpack.c.b16 %v4491, %v4487
    %v4520 = vpack.c.b16 %v4492, %v4488
    %v4521 = vpack.c.b16 %v4497, %v4493
    %v4522 = vpack.c.b16 %v4498, %v4494
    %v4523 = vpack.c.b16 %v4499, %v4495
    %v4524 = vpack.c.b16 %v4500, %v4496
    %v4545 = vsel %vm325, %v4169, 0
    %v4548 = vsel %vm325, %v4428, 0
    %v4551 = vand.u32 %v4521, %v335
    %v4554 = vand.u32 %v4522, %v335
    %v4557 = vand.u32 %v4523, %v335
    %v4560 = vand.u32 %v4524, %v335
    %4562 = vmatprep.subr.bf16.mxu0 %v4502
    %4563 = vmatpush1.bf16.msra.mxu0 %v4501
    %4564 = vmatprep.subr.bf16.mxu0 %v4506
    %4565 = vmatpush1.bf16.msra.mxu0 %v4505
    %4566 = vmatprep.subr.bf16.mxu0 %v4510
    %4567 = vmatpush1.bf16.msra.mxu0 %v4509
    %4568 = vmatprep.subr.bf16.mxu0 %v4514
    %4569 = vmatpush1.bf16.msra.mxu0 %v4513
    %4570 = vmatprep.subr.bf16.mxu0 %v4518
    %4571 = vmatpush1.bf16.msra.mxu0 %v4517
    %4572 = vmatprep.subr.bf16.mxu0 %v4554
    %4573 = vmatpush1.bf16.msra.mxu0 %v4551
    %4574 = vmatprep.subr.bf16.mxu0 0
    %4575 = vmatpush1.bf16.msra.mxu0 0
    %4576 = vmatprep.subr.bf16.mxu0 0
    %4577 = vmatpush1.bf16.msra.mxu0 0
    %4578 = vmatprep.subr.bf16.mxu0 0
    %4579 = vmatpush1.bf16.msra.mxu0 0
    %4580 = vmatprep.subr.bf16.mxu0 0
    %4581 = vmatpush1.bf16.msra.mxu0 0
    %4582 = vmatprep.subr.bf16.mxu0 0
    %4583 = vmatpush1.bf16.msra.mxu0 0
    %4584 = vmatprep.subr.bf16.mxu0 0
    %4585 = vmatpush1.bf16.msra.mxu0 0
    %4586 = vmatprep.subr.bf16.mxu0 0
    %4587 = vmatpush1.bf16.msra.mxu0 0
    %4588 = vmatprep.subr.bf16.mxu0 0
    %4589 = vmatpush1.bf16.msra.mxu0 0
    %4590 = vmatprep.subr.bf16.mxu0 0
    %4591 = vmatpush1.bf16.msra.mxu0 0
    %4592 = vmatprep.subr.bf16.mxu0 0
    %4593 = vmatpush1.bf16.msra.mxu0 0
    %4594 = vmatprep.mubr.bf16.mxu0 0
    %4595 = vmatmul.mubr.bf16.gmra.mrb[0].mxu0 %v4545
    %v4596 = vpop.f32.mrb[0].mxu0
    %v4597 = vadd.f32 %v4355, %v4596
    %v4598 = vpop.f32.mrb[0].mxu0
    %v4599 = vadd.f32 %v4357, %v4598
    %v4600 = vpop.f32.mrb[0].mxu0
    %v4601 = vadd.f32 %v4359, %v4600
    %v4602 = vpop.f32.mrb[0].mxu0
    %v4603 = vadd.f32 %v4361, %v4602
    %4604 = vmatprep.mubr.bf16.mxu0 0
    %4605 = vmatmul.mubr.bf16.gmra.mrb[0].mxu0 %v4548
    %v4606 = vpop.f32.mrb[0].mxu0
    %v4607 = vadd.f32 %v4365, %v4606
    %v4608 = vpop.f32.mrb[0].mxu0
    %v4609 = vadd.f32 %v4367, %v4608
    %v4610 = vpop.f32.mrb[0].mxu0
    %v4611 = vadd.f32 %v4369, %v4610
    %v4612 = vpop.f32.mrb[0].mxu0
    %v4613 = vadd.f32 %v4371, %v4612
    %4614 = vdwg.mxu0
    %4615 = vmatprep.subr.bf16.mxu0 %v4504
    %4616 = vmatpush1.bf16.msra.mxu0 %v4503
    %4617 = vmatprep.subr.bf16.mxu0 %v4508
    %4618 = vmatpush1.bf16.msra.mxu0 %v4507
    %4619 = vmatprep.subr.bf16.mxu0 %v4512
    %4620 = vmatpush1.bf16.msra.mxu0 %v4511
    %4621 = vmatprep.subr.bf16.mxu0 %v4516
    %4622 = vmatpush1.bf16.msra.mxu0 %v4515
    %4623 = vmatprep.subr.bf16.mxu0 %v4520
    %4624 = vmatpush1.bf16.msra.mxu0 %v4519
    %4625 = vmatprep.subr.bf16.mxu0 %v4560
    %4626 = vmatpush1.bf16.msra.mxu0 %v4557
    %4627 = vmatprep.subr.bf16.mxu0 0
    %4628 = vmatpush1.bf16.msra.mxu0 0
    %4629 = vmatprep.subr.bf16.mxu0 0
    %4630 = vmatpush1.bf16.msra.mxu0 0
    %4631 = vmatprep.subr.bf16.mxu0 0
    %4632 = vmatpush1.bf16.msra.mxu0 0
    %4633 = vmatprep.subr.bf16.mxu0 0
    %4634 = vmatpush1.bf16.msra.mxu0 0
    %4635 = vmatprep.subr.bf16.mxu0 0
    %4636 = vmatpush1.bf16.msra.mxu0 0
    %4637 = vmatprep.subr.bf16.mxu0 0
    %4638 = vmatpush1.bf16.msra.mxu0 0
    %4639 = vmatprep.subr.bf16.mxu0 0
    %4640 = vmatpush1.bf16.msra.mxu0 0
    %4641 = vmatprep.subr.bf16.mxu0 0
    %4642 = vmatpush1.bf16.msra.mxu0 0
    %4643 = vmatprep.subr.bf16.mxu0 0
    %4644 = vmatpush1.bf16.msra.mxu0 0
    %4645 = vmatprep.subr.bf16.mxu0 0
    %4646 = vmatpush1.bf16.msra.mxu0 0
    %4647 = vmatprep.mubr.bf16.mxu0 0
    %4648 = vmatmul.mubr.bf16.gmra.mrb[0].mxu0 %v4545
    %v4649 = vpop.f32.mrb[0].mxu0
    %v4650 = vadd.f32 %v4408, %v4649
    %v4651 = vpop.f32.mrb[0].mxu0
    %v4652 = vadd.f32 %v4410, %v4651
    %v4653 = vpop.f32.mrb[0].mxu0
    %v4654 = vadd.f32 %v4412, %v4653
    %v4655 = vpop.f32.mrb[0].mxu0
    %v4656 = vadd.f32 %v4414, %v4655
    %4657 = vmatprep.mubr.bf16.mxu0 0
    %4658 = vmatmul.mubr.bf16.gmra.mrb[0].mxu0 %v4548
    %v4659 = vpop.f32.mrb[0].mxu0
    %v4660 = vadd.f32 %v4418, %v4659
    %v4661 = vpop.f32.mrb[0].mxu0
    %v4662 = vadd.f32 %v4420, %v4661
    %v4663 = vpop.f32.mrb[0].mxu0
    %v4664 = vadd.f32 %v4422, %v4663
    %v4665 = vpop.f32.mrb[0].mxu0
    %v4666 = vadd.f32 %v4424, %v4665
    %4667 = vdwg.mxu0
    %v4668 = vld [vmem:[%s4107] sm:$0xe]
    %v4669 = vld [vmem:[%s697] sm:$0xff]
    %v4670 = vld [vmem:[%s697 + $0x8] sm:$0xff]
    %v4671 = vld [vmem:[%s697 + $0x10] sm:$0xff]
    %v4672 = vld [vmem:[%s697 + $0x18] sm:$0xff]
    %v4673 = vld [vmem:[%s697 + $0x20] sm:$0xff]
    %v4674 = vld [vmem:[%s697 + $0x28] sm:$0xff]
    %v4675 = vld [vmem:[%s697 + $0x30] sm:$0xff]
    %v4676 = vld [vmem:[%s697 + $0x38] sm:$0xff]
    %v4677 = vld [vmem:[%s697 + $0x40] sm:$0xff]
    %v4678 = vld [vmem:[%s697 + $0x48] sm:$0xff]
    %v4679 = vld [vmem:[%s697 + $0x50] sm:$0xff]
    %v4680 = vld [vmem:[%s697 + $0x58] sm:$0xff]
    %v4681 = vld [vmem:[%s697 + $0x60] sm:$0xff]
    %v4682 = vld [vmem:[%s697 + $0x68] sm:$0xff]
    %v4683 = vld [vmem:[%s697 + $0x70] sm:$0xff]
    %v4684 = vld [vmem:[%s697 + $0x78] sm:$0xff]
    %v4685 = vld [vmem:[%s697 + $0x80] sm:$0xff]
    %v4686 = vld [vmem:[%s697 + $0x88] sm:$0xff]
    %v4687 = vld [vmem:[%s697 + $0x90] sm:$0xff]
    %v4688 = vld [vmem:[%s697 + $0x98] sm:$0xff]
    %v4689 = vld [vmem:[%s697 + $0xa0] sm:$0xff]
    %v4690 = vld [vmem:[%s697 + $0xa8] sm:$0xff]
    %v4691 = vld [vmem:[%s697 + $0xb0] sm:$0x77]
    %v4692 = vld [vmem:[%s697 + $0xb8] sm:$0x77]
    %v4694 = vunpack.c.l.b16 %v4668
    %v4695 = vpack.c.b16 %v4166, %v4694
    %v4696 = vrot.slane %v4695, 1
    %v4697 = vrot.slane %v4170, 1
    %v4698 = vsel %vm725, %v4696, %v4697
    %v4723 = vunpack.c.l.b16 %v4669
    %v4724 = vunpack.c.h.b16 %v4669
    %v4725 = vunpack.c.l.b16 %v4670
    %v4726 = vunpack.c.h.b16 %v4670
    %v4727 = vunpack.c.l.b16 %v4671
    %v4728 = vunpack.c.h.b16 %v4671
    %v4729 = vunpack.c.l.b16 %v4672
    %v4730 = vunpack.c.h.b16 %v4672
    %v4731 = vunpack.c.l.b16 %v4673
    %v4732 = vunpack.c.h.b16 %v4673
    %v4733 = vunpack.c.l.b16 %v4674
    %v4734 = vunpack.c.h.b16 %v4674
    %v4735 = vunpack.c.l.b16 %v4675
    %v4736 = vunpack.c.h.b16 %v4675
    %v4737 = vunpack.c.l.b16 %v4676
    %v4738 = vunpack.c.h.b16 %v4676
    %v4739 = vunpack.c.l.b16 %v4677
    %v4740 = vunpack.c.h.b16 %v4677
    %v4741 = vunpack.c.l.b16 %v4678
    %v4742 = vunpack.c.h.b16 %v4678
    %v4743 = vunpack.c.l.b16 %v4679
    %v4744 = vunpack.c.h.b16 %v4679
    %v4745 = vunpack.c.l.b16 %v4680
    %v4746 = vunpack.c.h.b16 %v4680
    %v4747 = vunpack.c.l.b16 %v4681
    %v4748 = vunpack.c.h.b16 %v4681
    %v4749 = vunpack.c.l.b16 %v4682
    %v4750 = vunpack.c.h.b16 %v4682
    %v4751 = vunpack.c.l.b16 %v4683
    %v4752 = vunpack.c.h.b16 %v4683
    %v4753 = vunpack.c.l.b16 %v4684
    %v4754 = vunpack.c.h.b16 %v4684
    %v4755 = vunpack.c.l.b16 %v4685
    %v4756 = vunpack.c.h.b16 %v4685
    %v4757 = vunpack.c.l.b16 %v4686
    %v4758 = vunpack.c.h.b16 %v4686
    %v4759 = vunpack.c.l.b16 %v4687
    %v4760 = vunpack.c.h.b16 %v4687
    %v4761 = vunpack.c.l.b16 %v4688
    %v4762 = vunpack.c.h.b16 %v4688
    %v4763 = vunpack.c.l.b16 %v4689
    %v4764 = vunpack.c.h.b16 %v4689
    %v4765 = vunpack.c.l.b16 %v4690
    %v4766 = vunpack.c.h.b16 %v4690
    %v4767 = vunpack.c.l.b16 %v4691
    %v4768 = vunpack.c.h.b16 %v4691
    %v4769 = vunpack.c.l.b16 %v4692
    %v4770 = vunpack.c.h.b16 %v4692
    %v4771 = vpack.c.b16 %v4727, %v4723
    %v4772 = vpack.c.b16 %v4728, %v4724
    %v4773 = vpack.c.b16 %v4729, %v4725
    %v4774 = vpack.c.b16 %v4730, %v4726
    %v4775 = vpack.c.b16 %v4735, %v4731
    %v4776 = vpack.c.b16 %v4736, %v4732
    %v4777 = vpack.c.b16 %v4737, %v4733
    %v4778 = vpack.c.b16 %v4738, %v4734
    %v4779 = vpack.c.b16 %v4743, %v4739
    %v4780 = vpack.c.b16 %v4744, %v4740
    %v4781 = vpack.c.b16 %v4745, %v4741
    %v4782 = vpack.c.b16 %v4746, %v4742
    %v4783 = vpack.c.b16 %v4751, %v4747
    %v4784 = vpack.c.b16 %v4752, %v4748
    %v4785 = vpack.c.b16 %v4753, %v4749
    %v4786 = vpack.c.b16 %v4754, %v4750
    %v4787 = vpack.c.b16 %v4759, %v4755
    %v4788 = vpack.c.b16 %v4760, %v4756
    %v4789 = vpack.c.b16 %v4761, %v4757
    %v4790 = vpack.c.b16 %v4762, %v4758
    %v4791 = vpack.c.b16 %v4767, %v4763
    %v4792 = vpack.c.b16 %v4768, %v4764
    %v4793 = vpack.c.b16 %v4769, %v4765
    %v4794 = vpack.c.b16 %v4770, %v4766
    %v4816 = vsel %vm325, %v4698, 0
    %v4819 = vsel %vm325, %v4697, 0
    %v4822 = vand.u32 %v4791, %v335
    %v4825 = vand.u32 %v4792, %v335
    %v4828 = vand.u32 %v4793, %v335
    %v4831 = vand.u32 %v4794, %v335
    %4833 = vmatprep.subr.bf16.mxu0 %v4772
    %4834 = vmatpush1.bf16.msra.mxu0 %v4771
    %4835 = vmatprep.subr.bf16.mxu0 %v4776
    %4836 = vmatpush1.bf16.msra.mxu0 %v4775
    %4837 = vmatprep.subr.bf16.mxu0 %v4780
    %4838 = vmatpush1.bf16.msra.mxu0 %v4779
    %4839 = vmatprep.subr.bf16.mxu0 %v4784
    %4840 = vmatpush1.bf16.msra.mxu0 %v4783
    %4841 = vmatprep.subr.bf16.mxu0 %v4788
    %4842 = vmatpush1.bf16.msra.mxu0 %v4787
    %4843 = vmatprep.subr.bf16.mxu0 %v4825
    %4844 = vmatpush1.bf16.msra.mxu0 %v4822
    %4845 = vmatprep.subr.bf16.mxu0 0
    %4846 = vmatpush1.bf16.msra.mxu0 0
    %4847 = vmatprep.subr.bf16.mxu0 0
    %4848 = vmatpush1.bf16.msra.mxu0 0
    %4849 = vmatprep.subr.bf16.mxu0 0
    %4850 = vmatpush1.bf16.msra.mxu0 0
    %4851 = vmatprep.subr.bf16.mxu0 0
    %4852 = vmatpush1.bf16.msra.mxu0 0
    %4853 = vmatprep.subr.bf16.mxu0 0
    %4854 = vmatpush1.bf16.msra.mxu0 0
    %4855 = vmatprep.subr.bf16.mxu0 0
    %4856 = vmatpush1.bf16.msra.mxu0 0
    %4857 = vmatprep.subr.bf16.mxu0 0
    %4858 = vmatpush1.bf16.msra.mxu0 0
    %4859 = vmatprep.subr.bf16.mxu0 0
    %4860 = vmatpush1.bf16.msra.mxu0 0
    %4861 = vmatprep.subr.bf16.mxu0 0
    %4862 = vmatpush1.bf16.msra.mxu0 0
    %4863 = vmatprep.subr.bf16.mxu0 0
    %4864 = vmatpush1.bf16.msra.mxu0 0
    %4865 = vmatprep.mubr.bf16.mxu0 0
    %4866 = vmatmul.mubr.bf16.gmra.mrb[0].mxu0 %v4816
    %v4867 = vpop.f32.mrb[0].mxu0
    %v4868 = vadd.f32 0.0, %v4867
    %v4869 = vpop.f32.mrb[0].mxu0
    %v4870 = vadd.f32 0.0, %v4869
    %v4871 = vpop.f32.mrb[0].mxu0
    %v4872 = vadd.f32 0.0, %v4871
    %v4873 = vpop.f32.mrb[0].mxu0
    %v4874 = vadd.f32 0.0, %v4873
    %4875 = vmatprep.mubr.bf16.mxu0 0
    %4876 = vmatmul.mubr.bf16.gmra.mrb[0].mxu0 %v4819
    %v4877 = vpop.f32.mrb[0].mxu0
    %v4878 = vadd.f32 0.0, %v4877
    %v4879 = vpop.f32.mrb[0].mxu0
    %v4880 = vadd.f32 0.0, %v4879
    %v4881 = vpop.f32.mrb[0].mxu0
    %v4882 = vadd.f32 0.0, %v4881
    %v4883 = vpop.f32.mrb[0].mxu0
    %v4884 = vadd.f32 0.0, %v4883
    %4885 = vdwg.mxu0
    %4886 = vmatprep.subr.bf16.mxu0 %v4774
    %4887 = vmatpush1.bf16.msra.mxu0 %v4773
    %4888 = vmatprep.subr.bf16.mxu0 %v4778
    %4889 = vmatpush1.bf16.msra.mxu0 %v4777
    %4890 = vmatprep.subr.bf16.mxu0 %v4782
    %4891 = vmatpush1.bf16.msra.mxu0 %v4781
    %4892 = vmatprep.subr.bf16.mxu0 %v4786
    %4893 = vmatpush1.bf16.msra.mxu0 %v4785
    %4894 = vmatprep.subr.bf16.mxu0 %v4790
    %4895 = vmatpush1.bf16.msra.mxu0 %v4789
    %4896 = vmatprep.subr.bf16.mxu0 %v4831
    %4897 = vmatpush1.bf16.msra.mxu0 %v4828
    %4898 = vmatprep.subr.bf16.mxu0 0
    %4899 = vmatpush1.bf16.msra.mxu0 0
    %4900 = vmatprep.subr.bf16.mxu0 0
    %4901 = vmatpush1.bf16.msra.mxu0 0
    %4902 = vmatprep.subr.bf16.mxu0 0
    %4903 = vmatpush1.bf16.msra.mxu0 0
    %4904 = vmatprep.subr.bf16.mxu0 0
    %4905 = vmatpush1.bf16.msra.mxu0 0
    %4906 = vmatprep.subr.bf16.mxu0 0
    %4907 = vmatpush1.bf16.msra.mxu0 0
    %4908 = vmatprep.subr.bf16.mxu0 0
    %4909 = vmatpush1.bf16.msra.mxu0 0
    %4910 = vmatprep.subr.bf16.mxu0 0
    %4911 = vmatpush1.bf16.msra.mxu0 0
    %4912 = vmatprep.subr.bf16.mxu0 0
    %4913 = vmatpush1.bf16.msra.mxu0 0
    %4914 = vmatprep.subr.bf16.mxu0 0
    %4915 = vmatpush1.bf16.msra.mxu0 0
    %4916 = vmatprep.subr.bf16.mxu0 0
    %4917 = vmatpush1.bf16.msra.mxu0 0
    %4918 = vmatprep.mubr.bf16.mxu0 0
    %4919 = vmatmul.mubr.bf16.gmra.mrb[0].mxu0 %v4816
    %v4920 = vpop.f32.mrb[0].mxu0
    %v4921 = vadd.f32 0.0, %v4920
    %v4922 = vpop.f32.mrb[0].mxu0
    %v4923 = vadd.f32 0.0, %v4922
    %v4924 = vpop.f32.mrb[0].mxu0
    %v4925 = vadd.f32 0.0, %v4924
    %v4926 = vpop.f32.mrb[0].mxu0
    %v4927 = vadd.f32 0.0, %v4926
    %4928 = vmatprep.mubr.bf16.mxu0 0
    %4929 = vmatmul.mubr.bf16.gmra.mrb[0].mxu0 %v4819
    %v4930 = vpop.f32.mrb[0].mxu0
    %v4931 = vadd.f32 0.0, %v4930
    %v4932 = vpop.f32.mrb[0].mxu0
    %v4933 = vadd.f32 0.0, %v4932
    %v4934 = vpop.f32.mrb[0].mxu0
    %v4935 = vadd.f32 0.0, %v4934
    %v4936 = vpop.f32.mrb[0].mxu0
    %v4937 = vadd.f32 0.0, %v4936
    %4938 = vdwg.mxu0
    %v4939 = vadd.f32 %v4597, %v4868
    %v4940 = vadd.f32 %v4599, %v4870
    %v4941 = vadd.f32 %v4650, %v4921
    %v4942 = vadd.f32 %v4652, %v4923
    %v4943 = vadd.f32 %v4601, %v4872
    %v4944 = vadd.f32 %v4603, %v4874
    %v4945 = vadd.f32 %v4654, %v4925
    %v4946 = vadd.f32 %v4656, %v4927
    %v4947 = vadd.f32 %v4607, %v4878
    %v4948 = vadd.f32 %v4609, %v4880
    %v4949 = vadd.f32 %v4660, %v4931
    %v4950 = vadd.f32 %v4662, %v4933
    %v4951 = vadd.f32 %v4611, %v4882
    %v4952 = vadd.f32 %v4613, %v4884
    %v4953 = vadd.f32 %v4664, %v4935
    %v4954 = vadd.f32 %v4666, %v4937
    %v4955 = vmax.f32 %v4939, %v4941
    %v4956 = vmax.f32 %v4940, %v4942
    %v4957 = vmax.f32 %v4943, %v4945
    %v4958 = vmax.f32 %v4944, %v4946
    %v4959 = vmax.f32 %v4947, %v4949
    %v4960 = vmax.f32 %v4948, %v4950
    %v4961 = vmax.f32 %v4951, %v4953
    %v4962 = vmax.f32 %v4952, %v4954
    %v4965 = vrot.slane %v4955, 1
    %v4966 = vrot.slane %v4956, 1
    %v4969 = vmax.f32 %v4955, %v4965
    %v4970 = vmax.f32 %v4956, %v4966
    %v4973 = vrot.slane %v4957, 1
    %v4974 = vrot.slane %v4958, 1
    %v4977 = vmax.f32 %v4957, %v4973
    %v4978 = vmax.f32 %v4958, %v4974
    %v4981 = vrot.slane %v4959, 1
    %v4982 = vrot.slane %v4960, 1
    %v4985 = vmax.f32 %v4959, %v4981
    %v4986 = vmax.f32 %v4960, %v4982
    %v4989 = vrot.slane %v4961, 1
    %v4990 = vrot.slane %v4962, 1
    %v4993 = vmax.f32 %v4961, %v4989
    %v4994 = vmax.f32 %v4962, %v4990
    %v4997 = vrot.slane %v4969, 1
    %v4998 = vrot.slane %v4970, 1
    %v5001 = vrot.slane %v4969, 2
    %v5002 = vrot.slane %v4970, 2
    %v5005 = vrot.slane %v4969, 3
    %v5006 = vrot.slane %v4970, 3
    %v5011 = vrot.slane %v4977, 4
    %v5012 = vrot.slane %v4978, 4
    %v5015 = vrot.slane %v4977, 5
    %v5016 = vrot.slane %v4978, 5
    %v5019 = vrot.slane %v4977, 6
    %v5020 = vrot.slane %v4978, 6
    %v5023 = vrot.slane %v4977, 7
    %v5024 = vrot.slane %v4978, 7
    %v5029 = vrot.slane %v4985, 1
    %v5030 = vrot.slane %v4986, 1
    %v5033 = vrot.slane %v4985, 2
    %v5034 = vrot.slane %v4986, 2
    %v5037 = vrot.slane %v4985, 3
    %v5038 = vrot.slane %v4986, 3
    %v5043 = vrot.slane %v4993, 4
    %v5044 = vrot.slane %v4994, 4
    %v5047 = vrot.slane %v4993, 5
    %v5048 = vrot.slane %v4994, 5
    %v5051 = vrot.slane %v4993, 6
    %v5052 = vrot.slane %v4994, 6
    %v5055 = vsel %vm1085, %v4969, %v4997
    %v5056 = vsel %vm1085, %v4970, %v4998
    %v5057 = vsel %vm1088, %v5055, %v5001
    %v5058 = vsel %vm1088, %v5056, %v5002
    %v5059 = vsel %vm1091, %v5057, %v5005
    %v5060 = vsel %vm1091, %v5058, %v5006
    %v5061 = vsel %vm95, %v5059, %v5011
    %v5062 = vsel %vm95, %v5060, %v5012
    %v5063 = vsel %vm1096, %v5061, %v5015
    %v5064 = vsel %vm1096, %v5062, %v5016
    %v5065 = vsel %vm332, %v5063, %v5019
    %v5066 = vsel %vm332, %v5064, %v5020
    %v5067 = vsel %vm333, %v5065, %v5023
    %v5068 = vsel %vm333, %v5066, %v5024
    %v5069 = vsel %vm1085, %v4985, %v5029
    %v5070 = vsel %vm1085, %v4986, %v5030
    %v5071 = vsel %vm1088, %v5069, %v5033
    %v5072 = vsel %vm1088, %v5070, %v5034
    %v5073 = vsel %vm1091, %v5071, %v5037
    %v5074 = vsel %vm1091, %v5072, %v5038
    %v5075 = vsel %vm95, %v5073, %v5043
    %v5076 = vsel %vm95, %v5074, %v5044
    %v5077 = vsel %vm1096, %v5075, %v5047
    %v5078 = vsel %vm1096, %v5076, %v5048
    %v5079 = vsel %vm332, %v5077, %v5051
    %v5080 = vsel %vm332, %v5078, %v5052
    %v5081 = vld [vmem:[%s2] sm:$0x3]
    %v5083 = vlaneseq
    %v5084 = vshrl.u32 %v5083, 7
    %v5085 = vsub.s32 0, %v5084
    %v5086 = vrot.slane %v5081, %v5085
    %v5087 = vlaneseq
    %v5088 = vshrl.u32 %v5087, 7
    %v5089 = vsub.s32 1, %v5088
    %v5090 = vrot.slane %v5081, %v5089
    %v5093 = vadd.f32 %v5067, %v5086
    %v5094 = vadd.f32 %v5068, %v5090
    %v5095 = vadd.f32 %v5079, %v5086
    %v5096 = vadd.f32 %v5080, %v5090
    %vm5097 = vcmp.gt.f32.partialorder %v5093, 0.0
    %vm5098 = vcmp.gt.f32.partialorder %v5094, 0.0
    %vm5099 = vcmp.gt.f32.partialorder %v5095, 0.0
    %vm5100 = vcmp.gt.f32.partialorder %v5096, 0.0
    %v5101 = vmin.f32 %v5093, 0.0
    %v5102 = vmin.f32 %v5094, 0.0
    %v5103 = vmin.f32 %v5095, 0.0
    %v5104 = vmin.f32 %v5096, 0.0
    %v5105 = vmul.f32 %v5101, 1.442695
    %v5106 = vpow.pop %v5105
    %v5107 = vmul.f32 %v5102, 1.442695
    %v5108 = vpow.pop %v5107
    %v5109 = vmul.f32 %v5103, 1.442695
    %v5110 = vpow.pop %v5109
    %v5111 = vmul.f32 %v5104, 1.442695
    %v5112 = vpow.pop %v5111
    %v5113 = vsub.f32 %v5106, 1.0
    %v5114 = vsub.f32 %v5108, 1.0
    %v5115 = vsub.f32 %v5110, 1.0
    %v5116 = vsub.f32 %v5112, 1.0
    %v5117 = vsel %vm5097, %v5093, %v5113
    %v5118 = vsel %vm5098, %v5094, %v5114
    %v5119 = vsel %vm5099, %v5095, %v5115
    %v5120 = vsel %vm5100, %v5096, %v5116
    %v5121 = vpack.c.bf16 %v5119, %v5117
    %v5122 = vpack.c.bf16 %v5120, %v5118
    %v5125 = vunpack.c.l.b16 %v5121
    %v5126 = vunpack.c.l.b16 %v5122
    %v5127 = vunpack.c.h.b16 %v5121
    %v5128 = vunpack.c.h.b16 %v5122
    %v5129 = vpack.c.b16 %v5126, %v5125
    %v5130 = vpack.c.b16 %v5128, %v5127
    %v5132 = vshrl.u32 %v5129, 16
    %v5134 = vrot.slane %v5132, 7
    %v5135 = vshll.u32 %v5129, 16
    %v5137 = vor.u32 %v5134, %v5135
    %v5138 = vrot.slane %v5134, 4
    %v5140 = vshrl.u32 %v5130, 16
    %v5142 = vrot.slane %v5140, 7
    %v5143 = vshll.u32 %v5130, 16
    %v5145 = vor.u32 %v5142, %v5143
    %v5146 = vsel %vm1166, %v5138, %v5145
    %s5149 = scalar_lea.vmem [#allocation2], 24
    %v5150 = vld [vmem:[%s5149] sm:$0xff]
    %v5151 = vsel %vm1191, %v5137, %v5150
    %5152 = vst [vmem:[%s5149] sm:$0xff] %v5151
    %5153 = vst.msk [vmem:[%s5149 + $0x8] sm:$0xff] %vm97, %v5146
    %v5154 = vld [vmem:[%s5149] sm:$0xff]
    %v5155 = vld [vmem:[%s5149 + $0x8] sm:$0x77]
    %v5156 = vld [vmem:[#allocation5] sm:$0xff]
    %v5157 = vld [vmem:[#allocation5 + $0x8] sm:$0xff]
    %v5158 = vld [vmem:[#allocation5 + $0x10] sm:$0xff]
    %v5159 = vld [vmem:[#allocation5 + $0x18] sm:$0xff]
    %v5160 = vld [vmem:[#allocation5 + $0x20] sm:$0xff]
    %v5161 = vld [vmem:[#allocation5 + $0x28] sm:$0xff]
    %v5162 = vld [vmem:[#allocation5 + $0x30] sm:$0xff]
    %v5163 = vld [vmem:[#allocation5 + $0x38] sm:$0xff]
    %v5164 = vld [vmem:[#allocation5 + $0x40] sm:$0xff]
    %v5165 = vld [vmem:[#allocation5 + $0x48] sm:$0xff]
    %v5166 = vld [vmem:[#allocation5 + $0x50] sm:$0xff]
    %v5167 = vld [vmem:[#allocation5 + $0x58] sm:$0xff]
    %v5168 = vld [vmem:[#allocation5 + $0x60] sm:$0xff]
    %v5169 = vld [vmem:[#allocation5 + $0x68] sm:$0xff]
    %v5170 = vld [vmem:[#allocation5 + $0x70] sm:$0xff]
    %v5171 = vld [vmem:[#allocation5 + $0x78] sm:$0xff]
    %v5172 = vld [vmem:[#allocation5 + $0x80] sm:$0xff]
    %v5173 = vld [vmem:[#allocation5 + $0x88] sm:$0xff]
    %v5174 = vld [vmem:[#allocation5 + $0x90] sm:$0xff]
    %v5175 = vld [vmem:[#allocation5 + $0x98] sm:$0xff]
    %v5176 = vld [vmem:[#allocation5 + $0xa0] sm:$0xff]
    %v5177 = vld [vmem:[#allocation5 + $0xa8] sm:$0xff]
    %v5178 = vld [vmem:[#allocation5 + $0xb0] sm:$0xff]
    %v5179 = vld [vmem:[#allocation5 + $0xb8] sm:$0xff]
    %v5180 = vld [vmem:[#allocation5 + $0xc0] sm:$0xff]
    %v5181 = vld [vmem:[#allocation5 + $0xc8] sm:$0xff]
    %v5182 = vld [vmem:[#allocation5 + $0xd0] sm:$0xff]
    %v5183 = vld [vmem:[#allocation5 + $0xd8] sm:$0xff]
    %v5184 = vld [vmem:[#allocation5 + $0xe0] sm:$0xff]
    %v5185 = vld [vmem:[#allocation5 + $0xe8] sm:$0xff]
    %v5186 = vld [vmem:[#allocation5 + $0xf0] sm:$0xff]
    %v5187 = vld [vmem:[#allocation5 + $0xf8] sm:$0xff]
    %v5188 = vld [vmem:[#allocation5 + $0x100] sm:$0xff]
    %v5189 = vld [vmem:[#allocation5 + $0x108] sm:$0xff]
    %v5190 = vld [vmem:[#allocation5 + $0x110] sm:$0xff]
    %v5191 = vld [vmem:[#allocation5 + $0x118] sm:$0xff]
    %v5192 = vld [vmem:[#allocation5 + $0x120] sm:$0xff]
    %v5193 = vld [vmem:[#allocation5 + $0x128] sm:$0xff]
    %v5194 = vld [vmem:[#allocation5 + $0x130] sm:$0xff]
    %v5195 = vld [vmem:[#allocation5 + $0x138] sm:$0xff]
    %v5196 = vld [vmem:[#allocation5 + $0x140] sm:$0xff]
    %v5197 = vld [vmem:[#allocation5 + $0x148] sm:$0xff]
    %v5198 = vld [vmem:[#allocation5 + $0x150] sm:$0xff]
    %v5199 = vld [vmem:[#allocation5 + $0x158] sm:$0xff]
    %v5200 = vld [vmem:[#allocation5 + $0x160] sm:$0xff]
    %v5201 = vld [vmem:[#allocation5 + $0x168] sm:$0xff]
    %v5202 = vld [vmem:[#allocation5 + $0x170] sm:$0xff]
    %v5203 = vld [vmem:[#allocation5 + $0x178] sm:$0xff]
    %v5204 = vld [vmem:[#allocation5 + $0x180] sm:$0xff]
    %v5205 = vld [vmem:[#allocation5 + $0x188] sm:$0xff]
    %v5206 = vld [vmem:[#allocation5 + $0x190] sm:$0xff]
    %v5207 = vld [vmem:[#allocation5 + $0x198] sm:$0xff]
    %v5208 = vld [vmem:[#allocation5 + $0x1a0] sm:$0xff]
    %v5209 = vld [vmem:[#allocation5 + $0x1a8] sm:$0xff]
    %v5210 = vld [vmem:[#allocation5 + $0x1b0] sm:$0xff]
    %v5211 = vld [vmem:[#allocation5 + $0x1b8] sm:$0xff]
    %v5212 = vld [vmem:[#allocation5 + $0x1c0] sm:$0xff]
    %v5213 = vld [vmem:[#allocation5 + $0x1c8] sm:$0xff]
    %v5214 = vld [vmem:[#allocation5 + $0x1d0] sm:$0xff]
    %v5215 = vld [vmem:[#allocation5 + $0x1d8] sm:$0xff]
    %v5216 = vld [vmem:[%s5149 + $0x8] sm:$0xff]
    %v5217 = vld [vmem:[%s1259] sm:$0xff]
    %v5218 = vld [vmem:[%s1259 + $0x8] sm:$0xff]
    %v5219 = vld [vmem:[%s1259 + $0x10] sm:$0xff]
    %v5220 = vld [vmem:[%s1259 + $0x18] sm:$0xff]
    %v5221 = vld [vmem:[%s1259 + $0x20] sm:$0xff]
    %v5222 = vld [vmem:[%s1259 + $0x28] sm:$0xff]
    %v5223 = vld [vmem:[%s1259 + $0x30] sm:$0xff]
    %v5224 = vld [vmem:[%s1259 + $0x38] sm:$0xff]
    %v5225 = vld [vmem:[%s1259 + $0x40] sm:$0xff]
    %v5226 = vld [vmem:[%s1259 + $0x48] sm:$0xff]
    %v5227 = vld [vmem:[%s1259 + $0x50] sm:$0xff]
    %v5228 = vld [vmem:[%s1259 + $0x58] sm:$0xff]
    %v5229 = vld [vmem:[%s1259 + $0x60] sm:$0xff]
    %v5230 = vld [vmem:[%s1259 + $0x68] sm:$0xff]
    %v5231 = vld [vmem:[%s1259 + $0x70] sm:$0xff]
    %v5232 = vld [vmem:[%s1259 + $0x78] sm:$0xff]
    %v5233 = vld [vmem:[%s1259 + $0x80] sm:$0xff]
    %v5234 = vld [vmem:[%s1259 + $0x88] sm:$0xff]
    %v5235 = vld [vmem:[%s1259 + $0x90] sm:$0xff]
    %v5236 = vld [vmem:[%s1259 + $0x98] sm:$0xff]
    %v5237 = vld [vmem:[%s1259 + $0xa0] sm:$0xff]
    %v5238 = vld [vmem:[%s1259 + $0xa8] sm:$0xff]
    %v5239 = vld [vmem:[%s1259 + $0xb0] sm:$0xff]
    %v5240 = vld [vmem:[%s1259 + $0xb8] sm:$0xff]
    %v5241 = vld [vmem:[%s1259 + $0xc0] sm:$0xff]
    %v5242 = vld [vmem:[%s1259 + $0xc8] sm:$0xff]
    %v5243 = vld [vmem:[%s1259 + $0xd0] sm:$0xff]
    %v5244 = vld [vmem:[%s1259 + $0xd8] sm:$0xff]
    %v5245 = vld [vmem:[%s1259 + $0xe0] sm:$0xff]
    %v5246 = vld [vmem:[%s1259 + $0xe8] sm:$0xff]
    %v5247 = vld [vmem:[%s1259 + $0xf0] sm:$0xff]
    %v5248 = vld [vmem:[%s1259 + $0xf8] sm:$0xff]
    %v5249 = vld [vmem:[%s1259 + $0x100] sm:$0xff]
    %v5250 = vld [vmem:[%s1259 + $0x108] sm:$0xff]
    %v5251 = vld [vmem:[%s1259 + $0x110] sm:$0xff]
    %v5252 = vld [vmem:[%s1259 + $0x118] sm:$0xff]
    %v5253 = vld [vmem:[%s1259 + $0x120] sm:$0xff]
    %v5254 = vld [vmem:[%s1259 + $0x128] sm:$0xff]
    %v5255 = vld [vmem:[%s1259 + $0x130] sm:$0xff]
    %v5256 = vld [vmem:[%s1259 + $0x138] sm:$0xff]
    %v5257 = vld [vmem:[%s1259 + $0x140] sm:$0xff]
    %v5258 = vld [vmem:[%s1259 + $0x148] sm:$0xff]
    %v5259 = vld [vmem:[%s1259 + $0x150] sm:$0xff]
    %v5260 = vld [vmem:[%s1259 + $0x158] sm:$0xff]
    %v5261 = vld [vmem:[%s1259 + $0x160] sm:$0xff]
    %v5262 = vld [vmem:[%s1259 + $0x168] sm:$0xff]
    %v5263 = vld [vmem:[%s1259 + $0x170] sm:$0xff]
    %v5264 = vld [vmem:[%s1259 + $0x178] sm:$0xff]
    %v5265 = vld [vmem:[%s1259 + $0x180] sm:$0xff]
    %v5266 = vld [vmem:[%s1259 + $0x188] sm:$0xff]
    %v5267 = vld [vmem:[%s1259 + $0x190] sm:$0xff]
    %v5268 = vld [vmem:[%s1259 + $0x198] sm:$0xff]
    %v5269 = vld [vmem:[%s1259 + $0x1a0] sm:$0xff]
    %v5270 = vld [vmem:[%s1259 + $0x1a8] sm:$0xff]
    %v5271 = vld [vmem:[%s1259 + $0x1b0] sm:$0xff]
    %v5272 = vld [vmem:[%s1259 + $0x1b8] sm:$0xff]
    %v5273 = vld [vmem:[%s1259 + $0x1c0] sm:$0xff]
    %v5274 = vld [vmem:[%s1259 + $0x1c8] sm:$0xff]
    %v5275 = vld [vmem:[%s1259 + $0x1d0] sm:$0xff]
    %v5276 = vld [vmem:[%s1259 + $0x1d8] sm:$0xff]
    %v5279 = vunpack.c.l.b16 %v5154
    %v5280 = vunpack.c.h.b16 %v5154
    %v5281 = vunpack.c.l.b16 %v5216
    %v5282 = vunpack.c.h.b16 %v5216
    %v5283 = vpack.c.b16 %v5281, %v5279
    %v5284 = vpack.c.b16 %v5282, %v5280
    %v5286 = vshrl.u32 %v5283, 16
    %v5288 = vshll.u32 %v5283, 16
    %v5290 = vrot.slane %v5288, 1
    %v5291 = vor.u32 %v5286, %v5290
    %v5293 = vshrl.u32 %v5284, 16
    %v5295 = vshll.u32 %v5284, 16
    %v5297 = vrot.slane %v5295, 1
    %v5298 = vor.u32 %v5293, %v5297
    %v5360 = vunpack.c.l.b16 %v5217
    %v5361 = vunpack.c.h.b16 %v5217
    %v5362 = vunpack.c.l.b16 %v5218
    %v5363 = vunpack.c.h.b16 %v5218
    %v5364 = vunpack.c.l.b16 %v5219
    %v5365 = vunpack.c.h.b16 %v5219
    %v5366 = vunpack.c.l.b16 %v5220
    %v5367 = vunpack.c.h.b16 %v5220
    %v5368 = vunpack.c.l.b16 %v5221
    %v5369 = vunpack.c.h.b16 %v5221
    %v5370 = vunpack.c.l.b16 %v5222
    %v5371 = vunpack.c.h.b16 %v5222
    %v5372 = vunpack.c.l.b16 %v5223
    %v5373 = vunpack.c.h.b16 %v5223
    %v5374 = vunpack.c.l.b16 %v5224
    %v5375 = vunpack.c.h.b16 %v5224
    %v5376 = vunpack.c.l.b16 %v5225
    %v5377 = vunpack.c.h.b16 %v5225
    %v5378 = vunpack.c.l.b16 %v5226
    %v5379 = vunpack.c.h.b16 %v5226
    %v5380 = vunpack.c.l.b16 %v5227
    %v5381 = vunpack.c.h.b16 %v5227
    %v5382 = vunpack.c.l.b16 %v5228
    %v5383 = vunpack.c.h.b16 %v5228
    %v5384 = vunpack.c.l.b16 %v5229
    %v5385 = vunpack.c.h.b16 %v5229
    %v5386 = vunpack.c.l.b16 %v5230
    %v5387 = vunpack.c.h.b16 %v5230
    %v5388 = vunpack.c.l.b16 %v5231
    %v5389 = vunpack.c.h.b16 %v5231
    %v5390 = vunpack.c.l.b16 %v5232
    %v5391 = vunpack.c.h.b16 %v5232
    %v5392 = vunpack.c.l.b16 %v5233
    %v5393 = vunpack.c.h.b16 %v5233
    %v5394 = vunpack.c.l.b16 %v5234
    %v5395 = vunpack.c.h.b16 %v5234
    %v5396 = vunpack.c.l.b16 %v5235
    %v5397 = vunpack.c.h.b16 %v5235
    %v5398 = vunpack.c.l.b16 %v5236
    %v5399 = vunpack.c.h.b16 %v5236
    %v5400 = vunpack.c.l.b16 %v5237
    %v5401 = vunpack.c.h.b16 %v5237
    %v5402 = vunpack.c.l.b16 %v5238
    %v5403 = vunpack.c.h.b16 %v5238
    %v5404 = vunpack.c.l.b16 %v5239
    %v5405 = vunpack.c.h.b16 %v5239
    %v5406 = vunpack.c.l.b16 %v5240
    %v5407 = vunpack.c.h.b16 %v5240
    %v5408 = vunpack.c.l.b16 %v5241
    %v5409 = vunpack.c.h.b16 %v5241
    %v5410 = vunpack.c.l.b16 %v5242
    %v5411 = vunpack.c.h.b16 %v5242
    %v5412 = vunpack.c.l.b16 %v5243
    %v5413 = vunpack.c.h.b16 %v5243
    %v5414 = vunpack.c.l.b16 %v5244
    %v5415 = vunpack.c.h.b16 %v5244
    %v5416 = vunpack.c.l.b16 %v5245
    %v5417 = vunpack.c.h.b16 %v5245
    %v5418 = vunpack.c.l.b16 %v5246
    %v5419 = vunpack.c.h.b16 %v5246
    %v5420 = vunpack.c.l.b16 %v5247
    %v5421 = vunpack.c.h.b16 %v5247
    %v5422 = vunpack.c.l.b16 %v5248
    %v5423 = vunpack.c.h.b16 %v5248
    %v5424 = vunpack.c.l.b16 %v5249
    %v5425 = vunpack.c.h.b16 %v5249
    %v5426 = vunpack.c.l.b16 %v5250
    %v5427 = vunpack.c.h.b16 %v5250
    %v5428 = vunpack.c.l.b16 %v5251
    %v5429 = vunpack.c.h.b16 %v5251
    %v5430 = vunpack.c.l.b16 %v5252
    %v5431 = vunpack.c.h.b16 %v5252
    %v5432 = vunpack.c.l.b16 %v5253
    %v5433 = vunpack.c.h.b16 %v5253
    %v5434 = vunpack.c.l.b16 %v5254
    %v5435 = vunpack.c.h.b16 %v5254
    %v5436 = vunpack.c.l.b16 %v5255
    %v5437 = vunpack.c.h.b16 %v5255
    %v5438 = vunpack.c.l.b16 %v5256
    %v5439 = vunpack.c.h.b16 %v5256
    %v5440 = vunpack.c.l.b16 %v5257
    %v5441 = vunpack.c.h.b16 %v5257
    %v5442 = vunpack.c.l.b16 %v5258
    %v5443 = vunpack.c.h.b16 %v5258
    %v5444 = vunpack.c.l.b16 %v5259
    %v5445 = vunpack.c.h.b16 %v5259
    %v5446 = vunpack.c.l.b16 %v5260
    %v5447 = vunpack.c.h.b16 %v5260
    %v5448 = vunpack.c.l.b16 %v5261
    %v5449 = vunpack.c.h.b16 %v5261
    %v5450 = vunpack.c.l.b16 %v5262
    %v5451 = vunpack.c.h.b16 %v5262
    %v5452 = vunpack.c.l.b16 %v5263
    %v5453 = vunpack.c.h.b16 %v5263
    %v5454 = vunpack.c.l.b16 %v5264
    %v5455 = vunpack.c.h.b16 %v5264
    %v5456 = vunpack.c.l.b16 %v5265
    %v5457 = vunpack.c.h.b16 %v5265
    %v5458 = vunpack.c.l.b16 %v5266
    %v5459 = vunpack.c.h.b16 %v5266
    %v5460 = vunpack.c.l.b16 %v5267
    %v5461 = vunpack.c.h.b16 %v5267
    %v5462 = vunpack.c.l.b16 %v5268
    %v5463 = vunpack.c.h.b16 %v5268
    %v5464 = vunpack.c.l.b16 %v5269
    %v5465 = vunpack.c.h.b16 %v5269
    %v5466 = vunpack.c.l.b16 %v5270
    %v5467 = vunpack.c.h.b16 %v5270
    %v5468 = vunpack.c.l.b16 %v5271
    %v5469 = vunpack.c.h.b16 %v5271
    %v5470 = vunpack.c.l.b16 %v5272
    %v5471 = vunpack.c.h.b16 %v5272
    %v5472 = vunpack.c.l.b16 %v5273
    %v5473 = vunpack.c.h.b16 %v5273
    %v5474 = vunpack.c.l.b16 %v5274
    %v5475 = vunpack.c.h.b16 %v5274
    %v5476 = vunpack.c.l.b16 %v5275
    %v5477 = vunpack.c.h.b16 %v5275
    %v5478 = vunpack.c.l.b16 %v5276
    %v5479 = vunpack.c.h.b16 %v5276
    %v5480 = vpack.c.b16 %v5364, %v5360
    %v5481 = vpack.c.b16 %v5365, %v5361
    %v5482 = vpack.c.b16 %v5366, %v5362
    %v5483 = vpack.c.b16 %v5367, %v5363
    %v5484 = vpack.c.b16 %v5372, %v5368
    %v5485 = vpack.c.b16 %v5373, %v5369
    %v5486 = vpack.c.b16 %v5374, %v5370
    %v5487 = vpack.c.b16 %v5375, %v5371
    %v5488 = vpack.c.b16 %v5380, %v5376
    %v5489 = vpack.c.b16 %v5381, %v5377
    %v5490 = vpack.c.b16 %v5382, %v5378
    %v5491 = vpack.c.b16 %v5383, %v5379
    %v5492 = vpack.c.b16 %v5388, %v5384
    %v5493 = vpack.c.b16 %v5389, %v5385
    %v5494 = vpack.c.b16 %v5390, %v5386
    %v5495 = vpack.c.b16 %v5391, %v5387
    %v5496 = vpack.c.b16 %v5396, %v5392
    %v5497 = vpack.c.b16 %v5397, %v5393
    %v5498 = vpack.c.b16 %v5398, %v5394
    %v5499 = vpack.c.b16 %v5399, %v5395
    %v5500 = vpack.c.b16 %v5404, %v5400
    %v5501 = vpack.c.b16 %v5405, %v5401
    %v5502 = vpack.c.b16 %v5406, %v5402
    %v5503 = vpack.c.b16 %v5407, %v5403
    %v5504 = vpack.c.b16 %v5412, %v5408
    %v5505 = vpack.c.b16 %v5413, %v5409
    %v5506 = vpack.c.b16 %v5414, %v5410
    %v5507 = vpack.c.b16 %v5415, %v5411
    %v5508 = vpack.c.b16 %v5420, %v5416
    %v5509 = vpack.c.b16 %v5421, %v5417
    %v5510 = vpack.c.b16 %v5422, %v5418
    %v5511 = vpack.c.b16 %v5423, %v5419
    %v5512 = vpack.c.b16 %v5428, %v5424
    %v5513 = vpack.c.b16 %v5429, %v5425
    %v5514 = vpack.c.b16 %v5430, %v5426
    %v5515 = vpack.c.b16 %v5431, %v5427
    %v5516 = vpack.c.b16 %v5436, %v5432
    %v5517 = vpack.c.b16 %v5437, %v5433
    %v5518 = vpack.c.b16 %v5438, %v5434
    %v5519 = vpack.c.b16 %v5439, %v5435
    %v5520 = vpack.c.b16 %v5444, %v5440
    %v5521 = vpack.c.b16 %v5445, %v5441
    %v5522 = vpack.c.b16 %v5446, %v5442
    %v5523 = vpack.c.b16 %v5447, %v5443
    %v5524 = vpack.c.b16 %v5452, %v5448
    %v5525 = vpack.c.b16 %v5453, %v5449
    %v5526 = vpack.c.b16 %v5454, %v5450
    %v5527 = vpack.c.b16 %v5455, %v5451
    %v5528 = vpack.c.b16 %v5460, %v5456
    %v5529 = vpack.c.b16 %v5461, %v5457
    %v5530 = vpack.c.b16 %v5462, %v5458
    %v5531 = vpack.c.b16 %v5463, %v5459
    %v5532 = vpack.c.b16 %v5468, %v5464
    %v5533 = vpack.c.b16 %v5469, %v5465
    %v5534 = vpack.c.b16 %v5470, %v5466
    %v5535 = vpack.c.b16 %v5471, %v5467
    %v5536 = vpack.c.b16 %v5476, %v5472
    %v5537 = vpack.c.b16 %v5477, %v5473
    %v5538 = vpack.c.b16 %v5478, %v5474
    %v5539 = vpack.c.b16 %v5479, %v5475
    %v5601 = vsel %vm1643, %v5298, 0
    %5603 = vmatprep.subr.bf16.mxu0 %v5481
    %5604 = vmatpush1.bf16.msra.mxu0 %v5480
    %5605 = vmatprep.subr.bf16.mxu0 %v5485
    %5606 = vmatpush1.bf16.msra.mxu0 %v5484
    %5607 = vmatprep.subr.bf16.mxu0 %v5489
    %5608 = vmatpush1.bf16.msra.mxu0 %v5488
    %5609 = vmatprep.subr.bf16.mxu0 %v5493
    %5610 = vmatpush1.bf16.msra.mxu0 %v5492
    %5611 = vmatprep.subr.bf16.mxu0 %v5497
    %5612 = vmatpush1.bf16.msra.mxu0 %v5496
    %5613 = vmatprep.subr.bf16.mxu0 %v5501
    %5614 = vmatpush1.bf16.msra.mxu0 %v5500
    %5615 = vmatprep.subr.bf16.mxu0 %v5505
    %5616 = vmatpush1.bf16.msra.mxu0 %v5504
    %5617 = vmatprep.subr.bf16.mxu0 %v5509
    %5618 = vmatpush1.bf16.msra.mxu0 %v5508
    %5619 = vmatprep.subr.bf16.mxu0 %v5513
    %5620 = vmatpush1.bf16.msra.mxu0 %v5512
    %5621 = vmatprep.subr.bf16.mxu0 %v5517
    %5622 = vmatpush1.bf16.msra.mxu0 %v5516
    %5623 = vmatprep.subr.bf16.mxu0 %v5521
    %5624 = vmatpush1.bf16.msra.mxu0 %v5520
    %5625 = vmatprep.subr.bf16.mxu0 %v5525
    %5626 = vmatpush1.bf16.msra.mxu0 %v5524
    %5627 = vmatprep.subr.bf16.mxu0 %v5529
    %5628 = vmatpush1.bf16.msra.mxu0 %v5528
    %5629 = vmatprep.subr.bf16.mxu0 %v5533
    %5630 = vmatpush1.bf16.msra.mxu0 %v5532
    %5631 = vmatprep.subr.bf16.mxu0 %v5537
    %5632 = vmatpush1.bf16.msra.mxu0 %v5536
    %5633 = vmatprep.subr.bf16.mxu0 0
    %5634 = vmatpush1.bf16.msra.mxu0 0
    %5635 = vmatprep.mubr.bf16.mxu0 %v5601
    %5636 = vmatmul.mubr.bf16.gmra.mrb[0].mxu0 %v5291
    %v5637 = vpop.f32.mrb[0].mxu0
    %v5638 = vadd.f32 0.0, %v5637
    %v5639 = vpop.f32.mrb[0].mxu0
    %v5640 = vadd.f32 0.0, %v5639
    %v5641 = vpop.f32.mrb[0].mxu0
    %v5642 = vadd.f32 0.0, %v5641
    %v5643 = vpop.f32.mrb[0].mxu0
    %v5644 = vadd.f32 0.0, %v5643
    %5645 = vdwg.mxu0
    %5646 = vmatprep.subr.bf16.mxu0 %v5483
    %5647 = vmatpush1.bf16.msra.mxu0 %v5482
    %5648 = vmatprep.subr.bf16.mxu0 %v5487
    %5649 = vmatpush1.bf16.msra.mxu0 %v5486
    %5650 = vmatprep.subr.bf16.mxu0 %v5491
    %5651 = vmatpush1.bf16.msra.mxu0 %v5490
    %5652 = vmatprep.subr.bf16.mxu0 %v5495
    %5653 = vmatpush1.bf16.msra.mxu0 %v5494
    %5654 = vmatprep.subr.bf16.mxu0 %v5499
    %5655 = vmatpush1.bf16.msra.mxu0 %v5498
    %5656 = vmatprep.subr.bf16.mxu0 %v5503
    %5657 = vmatpush1.bf16.msra.mxu0 %v5502
    %5658 = vmatprep.subr.bf16.mxu0 %v5507
    %5659 = vmatpush1.bf16.msra.mxu0 %v5506
    %5660 = vmatprep.subr.bf16.mxu0 %v5511
    %5661 = vmatpush1.bf16.msra.mxu0 %v5510
    %5662 = vmatprep.subr.bf16.mxu0 %v5515
    %5663 = vmatpush1.bf16.msra.mxu0 %v5514
    %5664 = vmatprep.subr.bf16.mxu0 %v5519
    %5665 = vmatpush1.bf16.msra.mxu0 %v5518
    %5666 = vmatprep.subr.bf16.mxu0 %v5523
    %5667 = vmatpush1.bf16.msra.mxu0 %v5522
    %5668 = vmatprep.subr.bf16.mxu0 %v5527
    %5669 = vmatpush1.bf16.msra.mxu0 %v5526
    %5670 = vmatprep.subr.bf16.mxu0 %v5531
    %5671 = vmatpush1.bf16.msra.mxu0 %v5530
    %5672 = vmatprep.subr.bf16.mxu0 %v5535
    %5673 = vmatpush1.bf16.msra.mxu0 %v5534
    %5674 = vmatprep.subr.bf16.mxu0 %v5539
    %5675 = vmatpush1.bf16.msra.mxu0 %v5538
    %5676 = vmatprep.subr.bf16.mxu0 0
    %5677 = vmatpush1.bf16.msra.mxu0 0
    %5678 = vmatprep.mubr.bf16.mxu0 %v5601
    %5679 = vmatmul.mubr.bf16.gmra.mrb[0].mxu0 %v5291
    %v5680 = vpop.f32.mrb[0].mxu0
    %v5681 = vadd.f32 0.0, %v5680
    %v5682 = vpop.f32.mrb[0].mxu0
    %v5683 = vadd.f32 0.0, %v5682
    %v5684 = vpop.f32.mrb[0].mxu0
    %v5685 = vadd.f32 0.0, %v5684
    %v5686 = vpop.f32.mrb[0].mxu0
    %v5687 = vadd.f32 0.0, %v5686
    %5688 = vdwg.mxu0
    %v5690 = vunpack.c.l.b16 %v5155
    %v5691 = vunpack.c.h.b16 %v5155
    %v5692 = vpack.c.b16 %v5690, %v5279
    %v5693 = vpack.c.b16 %v5691, %v5280
    %v5755 = vunpack.c.l.b16 %v5156
    %v5756 = vunpack.c.h.b16 %v5156
    %v5757 = vunpack.c.l.b16 %v5157
    %v5758 = vunpack.c.h.b16 %v5157
    %v5759 = vunpack.c.l.b16 %v5158
    %v5760 = vunpack.c.h.b16 %v5158
    %v5761 = vunpack.c.l.b16 %v5159
    %v5762 = vunpack.c.h.b16 %v5159
    %v5763 = vunpack.c.l.b16 %v5160
    %v5764 = vunpack.c.h.b16 %v5160
    %v5765 = vunpack.c.l.b16 %v5161
    %v5766 = vunpack.c.h.b16 %v5161
    %v5767 = vunpack.c.l.b16 %v5162
    %v5768 = vunpack.c.h.b16 %v5162
    %v5769 = vunpack.c.l.b16 %v5163
    %v5770 = vunpack.c.h.b16 %v5163
    %v5771 = vunpack.c.l.b16 %v5164
    %v5772 = vunpack.c.h.b16 %v5164
    %v5773 = vunpack.c.l.b16 %v5165
    %v5774 = vunpack.c.h.b16 %v5165
    %v5775 = vunpack.c.l.b16 %v5166
    %v5776 = vunpack.c.h.b16 %v5166
    %v5777 = vunpack.c.l.b16 %v5167
    %v5778 = vunpack.c.h.b16 %v5167
    %v5779 = vunpack.c.l.b16 %v5168
    %v5780 = vunpack.c.h.b16 %v5168
    %v5781 = vunpack.c.l.b16 %v5169
    %v5782 = vunpack.c.h.b16 %v5169
    %v5783 = vunpack.c.l.b16 %v5170
    %v5784 = vunpack.c.h.b16 %v5170
    %v5785 = vunpack.c.l.b16 %v5171
    %v5786 = vunpack.c.h.b16 %v5171
    %v5787 = vunpack.c.l.b16 %v5172
    %v5788 = vunpack.c.h.b16 %v5172
    %v5789 = vunpack.c.l.b16 %v5173
    %v5790 = vunpack.c.h.b16 %v5173
    %v5791 = vunpack.c.l.b16 %v5174
    %v5792 = vunpack.c.h.b16 %v5174
    %v5793 = vunpack.c.l.b16 %v5175
    %v5794 = vunpack.c.h.b16 %v5175
    %v5795 = vunpack.c.l.b16 %v5176
    %v5796 = vunpack.c.h.b16 %v5176
    %v5797 = vunpack.c.l.b16 %v5177
    %v5798 = vunpack.c.h.b16 %v5177
    %v5799 = vunpack.c.l.b16 %v5178
    %v5800 = vunpack.c.h.b16 %v5178
    %v5801 = vunpack.c.l.b16 %v5179
    %v5802 = vunpack.c.h.b16 %v5179
    %v5803 = vunpack.c.l.b16 %v5180
    %v5804 = vunpack.c.h.b16 %v5180
    %v5805 = vunpack.c.l.b16 %v5181
    %v5806 = vunpack.c.h.b16 %v5181
    %v5807 = vunpack.c.l.b16 %v5182
    %v5808 = vunpack.c.h.b16 %v5182
    %v5809 = vunpack.c.l.b16 %v5183
    %v5810 = vunpack.c.h.b16 %v5183
    %v5811 = vunpack.c.l.b16 %v5184
    %v5812 = vunpack.c.h.b16 %v5184
    %v5813 = vunpack.c.l.b16 %v5185
    %v5814 = vunpack.c.h.b16 %v5185
    %v5815 = vunpack.c.l.b16 %v5186
    %v5816 = vunpack.c.h.b16 %v5186
    %v5817 = vunpack.c.l.b16 %v5187
    %v5818 = vunpack.c.h.b16 %v5187
    %v5819 = vunpack.c.l.b16 %v5188
    %v5820 = vunpack.c.h.b16 %v5188
    %v5821 = vunpack.c.l.b16 %v5189
    %v5822 = vunpack.c.h.b16 %v5189
    %v5823 = vunpack.c.l.b16 %v5190
    %v5824 = vunpack.c.h.b16 %v5190
    %v5825 = vunpack.c.l.b16 %v5191
    %v5826 = vunpack.c.h.b16 %v5191
    %v5827 = vunpack.c.l.b16 %v5192
    %v5828 = vunpack.c.h.b16 %v5192
    %v5829 = vunpack.c.l.b16 %v5193
    %v5830 = vunpack.c.h.b16 %v5193
    %v5831 = vunpack.c.l.b16 %v5194
    %v5832 = vunpack.c.h.b16 %v5194
    %v5833 = vunpack.c.l.b16 %v5195
    %v5834 = vunpack.c.h.b16 %v5195
    %v5835 = vunpack.c.l.b16 %v5196
    %v5836 = vunpack.c.h.b16 %v5196
    %v5837 = vunpack.c.l.b16 %v5197
    %v5838 = vunpack.c.h.b16 %v5197
    %v5839 = vunpack.c.l.b16 %v5198
    %v5840 = vunpack.c.h.b16 %v5198
    %v5841 = vunpack.c.l.b16 %v5199
    %v5842 = vunpack.c.h.b16 %v5199
    %v5843 = vunpack.c.l.b16 %v5200
    %v5844 = vunpack.c.h.b16 %v5200
    %v5845 = vunpack.c.l.b16 %v5201
    %v5846 = vunpack.c.h.b16 %v5201
    %v5847 = vunpack.c.l.b16 %v5202
    %v5848 = vunpack.c.h.b16 %v5202
    %v5849 = vunpack.c.l.b16 %v5203
    %v5850 = vunpack.c.h.b16 %v5203
    %v5851 = vunpack.c.l.b16 %v5204
    %v5852 = vunpack.c.h.b16 %v5204
    %v5853 = vunpack.c.l.b16 %v5205
    %v5854 = vunpack.c.h.b16 %v5205
    %v5855 = vunpack.c.l.b16 %v5206
    %v5856 = vunpack.c.h.b16 %v5206
    %v5857 = vunpack.c.l.b16 %v5207
    %v5858 = vunpack.c.h.b16 %v5207
    %v5859 = vunpack.c.l.b16 %v5208
    %v5860 = vunpack.c.h.b16 %v5208
    %v5861 = vunpack.c.l.b16 %v5209
    %v5862 = vunpack.c.h.b16 %v5209
    %v5863 = vunpack.c.l.b16 %v5210
    %v5864 = vunpack.c.h.b16 %v5210
    %v5865 = vunpack.c.l.b16 %v5211
    %v5866 = vunpack.c.h.b16 %v5211
    %v5867 = vunpack.c.l.b16 %v5212
    %v5868 = vunpack.c.h.b16 %v5212
    %v5869 = vunpack.c.l.b16 %v5213
    %v5870 = vunpack.c.h.b16 %v5213
    %v5871 = vunpack.c.l.b16 %v5214
    %v5872 = vunpack.c.h.b16 %v5214
    %v5873 = vunpack.c.l.b16 %v5215
    %v5874 = vunpack.c.h.b16 %v5215
    %v5875 = vpack.c.b16 %v5759, %v5755
    %v5876 = vpack.c.b16 %v5760, %v5756
    %v5877 = vpack.c.b16 %v5761, %v5757
    %v5878 = vpack.c.b16 %v5762, %v5758
    %v5879 = vpack.c.b16 %v5767, %v5763
    %v5880 = vpack.c.b16 %v5768, %v5764
    %v5881 = vpack.c.b16 %v5769, %v5765
    %v5882 = vpack.c.b16 %v5770, %v5766
    %v5883 = vpack.c.b16 %v5775, %v5771
    %v5884 = vpack.c.b16 %v5776, %v5772
    %v5885 = vpack.c.b16 %v5777, %v5773
    %v5886 = vpack.c.b16 %v5778, %v5774
    %v5887 = vpack.c.b16 %v5783, %v5779
    %v5888 = vpack.c.b16 %v5784, %v5780
    %v5889 = vpack.c.b16 %v5785, %v5781
    %v5890 = vpack.c.b16 %v5786, %v5782
    %v5891 = vpack.c.b16 %v5791, %v5787
    %v5892 = vpack.c.b16 %v5792, %v5788
    %v5893 = vpack.c.b16 %v5793, %v5789
    %v5894 = vpack.c.b16 %v5794, %v5790
    %v5895 = vpack.c.b16 %v5799, %v5795
    %v5896 = vpack.c.b16 %v5800, %v5796
    %v5897 = vpack.c.b16 %v5801, %v5797
    %v5898 = vpack.c.b16 %v5802, %v5798
    %v5899 = vpack.c.b16 %v5807, %v5803
    %v5900 = vpack.c.b16 %v5808, %v5804
    %v5901 = vpack.c.b16 %v5809, %v5805
    %v5902 = vpack.c.b16 %v5810, %v5806
    %v5903 = vpack.c.b16 %v5815, %v5811
    %v5904 = vpack.c.b16 %v5816, %v5812
    %v5905 = vpack.c.b16 %v5817, %v5813
    %v5906 = vpack.c.b16 %v5818, %v5814
    %v5907 = vpack.c.b16 %v5823, %v5819
    %v5908 = vpack.c.b16 %v5824, %v5820
    %v5909 = vpack.c.b16 %v5825, %v5821
    %v5910 = vpack.c.b16 %v5826, %v5822
    %v5911 = vpack.c.b16 %v5831, %v5827
    %v5912 = vpack.c.b16 %v5832, %v5828
    %v5913 = vpack.c.b16 %v5833, %v5829
    %v5914 = vpack.c.b16 %v5834, %v5830
    %v5915 = vpack.c.b16 %v5839, %v5835
    %v5916 = vpack.c.b16 %v5840, %v5836
    %v5917 = vpack.c.b16 %v5841, %v5837
    %v5918 = vpack.c.b16 %v5842, %v5838
    %v5919 = vpack.c.b16 %v5847, %v5843
    %v5920 = vpack.c.b16 %v5848, %v5844
    %v5921 = vpack.c.b16 %v5849, %v5845
    %v5922 = vpack.c.b16 %v5850, %v5846
    %v5923 = vpack.c.b16 %v5855, %v5851
    %v5924 = vpack.c.b16 %v5856, %v5852
    %v5925 = vpack.c.b16 %v5857, %v5853
    %v5926 = vpack.c.b16 %v5858, %v5854
    %v5927 = vpack.c.b16 %v5863, %v5859
    %v5928 = vpack.c.b16 %v5864, %v5860
    %v5929 = vpack.c.b16 %v5865, %v5861
    %v5930 = vpack.c.b16 %v5866, %v5862
    %v5931 = vpack.c.b16 %v5871, %v5867
    %v5932 = vpack.c.b16 %v5872, %v5868
    %v5933 = vpack.c.b16 %v5873, %v5869
    %v5934 = vpack.c.b16 %v5874, %v5870
    %v5996 = vsel %vm1643, %v5693, 0
    %5998 = vmatprep.subr.bf16.mxu0 %v5876
    %5999 = vmatpush1.bf16.msra.mxu0 %v5875
    %6000 = vmatprep.subr.bf16.mxu0 %v5880
    %6001 = vmatpush1.bf16.msra.mxu0 %v5879
    %6002 = vmatprep.subr.bf16.mxu0 %v5884
    %6003 = vmatpush1.bf16.msra.mxu0 %v5883
    %6004 = vmatprep.subr.bf16.mxu0 %v5888
    %6005 = vmatpush1.bf16.msra.mxu0 %v5887
    %6006 = vmatprep.subr.bf16.mxu0 %v5892
    %6007 = vmatpush1.bf16.msra.mxu0 %v5891
    %6008 = vmatprep.subr.bf16.mxu0 %v5896
    %6009 = vmatpush1.bf16.msra.mxu0 %v5895
    %6010 = vmatprep.subr.bf16.mxu0 %v5900
    %6011 = vmatpush1.bf16.msra.mxu0 %v5899
    %6012 = vmatprep.subr.bf16.mxu0 %v5904
    %6013 = vmatpush1.bf16.msra.mxu0 %v5903
    %6014 = vmatprep.subr.bf16.mxu0 %v5908
    %6015 = vmatpush1.bf16.msra.mxu0 %v5907
    %6016 = vmatprep.subr.bf16.mxu0 %v5912
    %6017 = vmatpush1.bf16.msra.mxu0 %v5911
    %6018 = vmatprep.subr.bf16.mxu0 %v5916
    %6019 = vmatpush1.bf16.msra.mxu0 %v5915
    %6020 = vmatprep.subr.bf16.mxu0 %v5920
    %6021 = vmatpush1.bf16.msra.mxu0 %v5919
    %6022 = vmatprep.subr.bf16.mxu0 %v5924
    %6023 = vmatpush1.bf16.msra.mxu0 %v5923
    %6024 = vmatprep.subr.bf16.mxu0 %v5928
    %6025 = vmatpush1.bf16.msra.mxu0 %v5927
    %6026 = vmatprep.subr.bf16.mxu0 %v5932
    %6027 = vmatpush1.bf16.msra.mxu0 %v5931
    %6028 = vmatprep.subr.bf16.mxu0 0
    %6029 = vmatpush1.bf16.msra.mxu0 0
    %6030 = vmatprep.mubr.bf16.mxu0 %v5996
    %6031 = vmatmul.mubr.bf16.gmra.mrb[0].mxu0 %v5692
    %v6032 = vpop.f32.mrb[0].mxu0
    %v6033 = vadd.f32 %v5638, %v6032
    %v6034 = vpop.f32.mrb[0].mxu0
    %v6035 = vadd.f32 %v5640, %v6034
    %v6036 = vpop.f32.mrb[0].mxu0
    %v6037 = vadd.f32 %v5642, %v6036
    %v6038 = vpop.f32.mrb[0].mxu0
    %v6039 = vadd.f32 %v5644, %v6038
    %6040 = vdwg.mxu0
    %6041 = vmatprep.subr.bf16.mxu0 %v5878
    %6042 = vmatpush1.bf16.msra.mxu0 %v5877
    %6043 = vmatprep.subr.bf16.mxu0 %v5882
    %6044 = vmatpush1.bf16.msra.mxu0 %v5881
    %6045 = vmatprep.subr.bf16.mxu0 %v5886
    %6046 = vmatpush1.bf16.msra.mxu0 %v5885
    %6047 = vmatprep.subr.bf16.mxu0 %v5890
    %6048 = vmatpush1.bf16.msra.mxu0 %v5889
    %6049 = vmatprep.subr.bf16.mxu0 %v5894
    %6050 = vmatpush1.bf16.msra.mxu0 %v5893
    %6051 = vmatprep.subr.bf16.mxu0 %v5898
    %6052 = vmatpush1.bf16.msra.mxu0 %v5897
    %6053 = vmatprep.subr.bf16.mxu0 %v5902
    %6054 = vmatpush1.bf16.msra.mxu0 %v5901
    %6055 = vmatprep.subr.bf16.mxu0 %v5906
    %6056 = vmatpush1.bf16.msra.mxu0 %v5905
    %6057 = vmatprep.subr.bf16.mxu0 %v5910
    %6058 = vmatpush1.bf16.msra.mxu0 %v5909
    %6059 = vmatprep.subr.bf16.mxu0 %v5914
    %6060 = vmatpush1.bf16.msra.mxu0 %v5913
    %6061 = vmatprep.subr.bf16.mxu0 %v5918
    %6062 = vmatpush1.bf16.msra.mxu0 %v5917
    %6063 = vmatprep.subr.bf16.mxu0 %v5922
    %6064 = vmatpush1.bf16.msra.mxu0 %v5921
    %6065 = vmatprep.subr.bf16.mxu0 %v5926
    %6066 = vmatpush1.bf16.msra.mxu0 %v5925
    %6067 = vmatprep.subr.bf16.mxu0 %v5930
    %6068 = vmatpush1.bf16.msra.mxu0 %v5929
    %6069 = vmatprep.subr.bf16.mxu0 %v5934
    %6070 = vmatpush1.bf16.msra.mxu0 %v5933
    %6071 = vmatprep.subr.bf16.mxu0 0
    %6072 = vmatpush1.bf16.msra.mxu0 0
    %6073 = vmatprep.mubr.bf16.mxu0 %v5996
    %6074 = vmatmul.mubr.bf16.gmra.mrb[0].mxu0 %v5692
    %v6075 = vpop.f32.mrb[0].mxu0
    %v6076 = vadd.f32 %v5681, %v6075
    %v6077 = vpop.f32.mrb[0].mxu0
    %v6078 = vadd.f32 %v5683, %v6077
    %v6079 = vpop.f32.mrb[0].mxu0
    %v6080 = vadd.f32 %v5685, %v6079
    %v6081 = vpop.f32.mrb[0].mxu0
    %v6082 = vadd.f32 %v5687, %v6081
    %6083 = vdwg.mxu0
    %v6084 = vld [vmem:[%s5149] sm:$0xee]
    %v6085 = vld [vmem:[%s2129] sm:$0xff]
    %v6086 = vld [vmem:[%s2129 + $0x8] sm:$0xff]
    %v6087 = vld [vmem:[%s2129 + $0x10] sm:$0xff]
    %v6088 = vld [vmem:[%s2129 + $0x18] sm:$0xff]
    %v6089 = vld [vmem:[%s2129 + $0x20] sm:$0xff]
    %v6090 = vld [vmem:[%s2129 + $0x28] sm:$0xff]
    %v6091 = vld [vmem:[%s2129 + $0x30] sm:$0xff]
    %v6092 = vld [vmem:[%s2129 + $0x38] sm:$0xff]
    %v6093 = vld [vmem:[%s2129 + $0x40] sm:$0xff]
    %v6094 = vld [vmem:[%s2129 + $0x48] sm:$0xff]
    %v6095 = vld [vmem:[%s2129 + $0x50] sm:$0xff]
    %v6096 = vld [vmem:[%s2129 + $0x58] sm:$0xff]
    %v6097 = vld [vmem:[%s2129 + $0x60] sm:$0xff]
    %v6098 = vld [vmem:[%s2129 + $0x68] sm:$0xff]
    %v6099 = vld [vmem:[%s2129 + $0x70] sm:$0xff]
    %v6100 = vld [vmem:[%s2129 + $0x78] sm:$0xff]
    %v6101 = vld [vmem:[%s2129 + $0x80] sm:$0xff]
    %v6102 = vld [vmem:[%s2129 + $0x88] sm:$0xff]
    %v6103 = vld [vmem:[%s2129 + $0x90] sm:$0xff]
    %v6104 = vld [vmem:[%s2129 + $0x98] sm:$0xff]
    %v6105 = vld [vmem:[%s2129 + $0xa0] sm:$0xff]
    %v6106 = vld [vmem:[%s2129 + $0xa8] sm:$0xff]
    %v6107 = vld [vmem:[%s2129 + $0xb0] sm:$0xff]
    %v6108 = vld [vmem:[%s2129 + $0xb8] sm:$0xff]
    %v6109 = vld [vmem:[%s2129 + $0xc0] sm:$0xff]
    %v6110 = vld [vmem:[%s2129 + $0xc8] sm:$0xff]
    %v6111 = vld [vmem:[%s2129 + $0xd0] sm:$0xff]
    %v6112 = vld [vmem:[%s2129 + $0xd8] sm:$0xff]
    %v6113 = vld [vmem:[%s2129 + $0xe0] sm:$0xff]
    %v6114 = vld [vmem:[%s2129 + $0xe8] sm:$0xff]
    %v6115 = vld [vmem:[%s2129 + $0xf0] sm:$0xff]
    %v6116 = vld [vmem:[%s2129 + $0xf8] sm:$0xff]
    %v6117 = vld [vmem:[%s2129 + $0x100] sm:$0xff]
    %v6118 = vld [vmem:[%s2129 + $0x108] sm:$0xff]
    %v6119 = vld [vmem:[%s2129 + $0x110] sm:$0xff]
    %v6120 = vld [vmem:[%s2129 + $0x118] sm:$0xff]
    %v6121 = vld [vmem:[%s2129 + $0x120] sm:$0xff]
    %v6122 = vld [vmem:[%s2129 + $0x128] sm:$0xff]
    %v6123 = vld [vmem:[%s2129 + $0x130] sm:$0xff]
    %v6124 = vld [vmem:[%s2129 + $0x138] sm:$0xff]
    %v6125 = vld [vmem:[%s2129 + $0x140] sm:$0xff]
    %v6126 = vld [vmem:[%s2129 + $0x148] sm:$0xff]
    %v6127 = vld [vmem:[%s2129 + $0x150] sm:$0xff]
    %v6128 = vld [vmem:[%s2129 + $0x158] sm:$0xff]
    %v6129 = vld [vmem:[%s2129 + $0x160] sm:$0xff]
    %v6130 = vld [vmem:[%s2129 + $0x168] sm:$0xff]
    %v6131 = vld [vmem:[%s2129 + $0x170] sm:$0xff]
    %v6132 = vld [vmem:[%s2129 + $0x178] sm:$0xff]
    %v6133 = vld [vmem:[%s2129 + $0x180] sm:$0xff]
    %v6134 = vld [vmem:[%s2129 + $0x188] sm:$0xff]
    %v6135 = vld [vmem:[%s2129 + $0x190] sm:$0xff]
    %v6136 = vld [vmem:[%s2129 + $0x198] sm:$0xff]
    %v6137 = vld [vmem:[%s2129 + $0x1a0] sm:$0xff]
    %v6138 = vld [vmem:[%s2129 + $0x1a8] sm:$0xff]
    %v6139 = vld [vmem:[%s2129 + $0x1b0] sm:$0xff]
    %v6140 = vld [vmem:[%s2129 + $0x1b8] sm:$0xff]
    %v6141 = vld [vmem:[%s2129 + $0x1c0] sm:$0xff]
    %v6142 = vld [vmem:[%s2129 + $0x1c8] sm:$0xff]
    %v6143 = vld [vmem:[%s2129 + $0x1d0] sm:$0xff]
    %v6144 = vld [vmem:[%s2129 + $0x1d8] sm:$0xff]
    %v6146 = vunpack.c.l.b16 %v6084
    %v6147 = vunpack.c.h.b16 %v6084
    %v6148 = vpack.c.b16 %v5281, %v6146
    %v6149 = vpack.c.b16 %v5282, %v6147
    %v6150 = vrot.slane %v6148, 1
    %v6151 = vrot.slane %v6149, 1
    %v6213 = vunpack.c.l.b16 %v6085
    %v6214 = vunpack.c.h.b16 %v6085
    %v6215 = vunpack.c.l.b16 %v6086
    %v6216 = vunpack.c.h.b16 %v6086
    %v6217 = vunpack.c.l.b16 %v6087
    %v6218 = vunpack.c.h.b16 %v6087
    %v6219 = vunpack.c.l.b16 %v6088
    %v6220 = vunpack.c.h.b16 %v6088
    %v6221 = vunpack.c.l.b16 %v6089
    %v6222 = vunpack.c.h.b16 %v6089
    %v6223 = vunpack.c.l.b16 %v6090
    %v6224 = vunpack.c.h.b16 %v6090
    %v6225 = vunpack.c.l.b16 %v6091
    %v6226 = vunpack.c.h.b16 %v6091
    %v6227 = vunpack.c.l.b16 %v6092
    %v6228 = vunpack.c.h.b16 %v6092
    %v6229 = vunpack.c.l.b16 %v6093
    %v6230 = vunpack.c.h.b16 %v6093
    %v6231 = vunpack.c.l.b16 %v6094
    %v6232 = vunpack.c.h.b16 %v6094
    %v6233 = vunpack.c.l.b16 %v6095
    %v6234 = vunpack.c.h.b16 %v6095
    %v6235 = vunpack.c.l.b16 %v6096
    %v6236 = vunpack.c.h.b16 %v6096
    %v6237 = vunpack.c.l.b16 %v6097
    %v6238 = vunpack.c.h.b16 %v6097
    %v6239 = vunpack.c.l.b16 %v6098
    %v6240 = vunpack.c.h.b16 %v6098
    %v6241 = vunpack.c.l.b16 %v6099
    %v6242 = vunpack.c.h.b16 %v6099
    %v6243 = vunpack.c.l.b16 %v6100
    %v6244 = vunpack.c.h.b16 %v6100
    %v6245 = vunpack.c.l.b16 %v6101
    %v6246 = vunpack.c.h.b16 %v6101
    %v6247 = vunpack.c.l.b16 %v6102
    %v6248 = vunpack.c.h.b16 %v6102
    %v6249 = vunpack.c.l.b16 %v6103
    %v6250 = vunpack.c.h.b16 %v6103
    %v6251 = vunpack.c.l.b16 %v6104
    %v6252 = vunpack.c.h.b16 %v6104
    %v6253 = vunpack.c.l.b16 %v6105
    %v6254 = vunpack.c.h.b16 %v6105
    %v6255 = vunpack.c.l.b16 %v6106
    %v6256 = vunpack.c.h.b16 %v6106
    %v6257 = vunpack.c.l.b16 %v6107
    %v6258 = vunpack.c.h.b16 %v6107
    %v6259 = vunpack.c.l.b16 %v6108
    %v6260 = vunpack.c.h.b16 %v6108
    %v6261 = vunpack.c.l.b16 %v6109
    %v6262 = vunpack.c.h.b16 %v6109
    %v6263 = vunpack.c.l.b16 %v6110
    %v6264 = vunpack.c.h.b16 %v6110
    %v6265 = vunpack.c.l.b16 %v6111
    %v6266 = vunpack.c.h.b16 %v6111
    %v6267 = vunpack.c.l.b16 %v6112
    %v6268 = vunpack.c.h.b16 %v6112
    %v6269 = vunpack.c.l.b16 %v6113
    %v6270 = vunpack.c.h.b16 %v6113
    %v6271 = vunpack.c.l.b16 %v6114
    %v6272 = vunpack.c.h.b16 %v6114
    %v6273 = vunpack.c.l.b16 %v6115
    %v6274 = vunpack.c.h.b16 %v6115
    %v6275 = vunpack.c.l.b16 %v6116
    %v6276 = vunpack.c.h.b16 %v6116
    %v6277 = vunpack.c.l.b16 %v6117
    %v6278 = vunpack.c.h.b16 %v6117
    %v6279 = vunpack.c.l.b16 %v6118
    %v6280 = vunpack.c.h.b16 %v6118
    %v6281 = vunpack.c.l.b16 %v6119
    %v6282 = vunpack.c.h.b16 %v6119
    %v6283 = vunpack.c.l.b16 %v6120
    %v6284 = vunpack.c.h.b16 %v6120
    %v6285 = vunpack.c.l.b16 %v6121
    %v6286 = vunpack.c.h.b16 %v6121
    %v6287 = vunpack.c.l.b16 %v6122
    %v6288 = vunpack.c.h.b16 %v6122
    %v6289 = vunpack.c.l.b16 %v6123
    %v6290 = vunpack.c.h.b16 %v6123
    %v6291 = vunpack.c.l.b16 %v6124
    %v6292 = vunpack.c.h.b16 %v6124
    %v6293 = vunpack.c.l.b16 %v6125
    %v6294 = vunpack.c.h.b16 %v6125
    %v6295 = vunpack.c.l.b16 %v6126
    %v6296 = vunpack.c.h.b16 %v6126
    %v6297 = vunpack.c.l.b16 %v6127
    %v6298 = vunpack.c.h.b16 %v6127
    %v6299 = vunpack.c.l.b16 %v6128
    %v6300 = vunpack.c.h.b16 %v6128
    %v6301 = vunpack.c.l.b16 %v6129
    %v6302 = vunpack.c.h.b16 %v6129
    %v6303 = vunpack.c.l.b16 %v6130
    %v6304 = vunpack.c.h.b16 %v6130
    %v6305 = vunpack.c.l.b16 %v6131
    %v6306 = vunpack.c.h.b16 %v6131
    %v6307 = vunpack.c.l.b16 %v6132
    %v6308 = vunpack.c.h.b16 %v6132
    %v6309 = vunpack.c.l.b16 %v6133
    %v6310 = vunpack.c.h.b16 %v6133
    %v6311 = vunpack.c.l.b16 %v6134
    %v6312 = vunpack.c.h.b16 %v6134
    %v6313 = vunpack.c.l.b16 %v6135
    %v6314 = vunpack.c.h.b16 %v6135
    %v6315 = vunpack.c.l.b16 %v6136
    %v6316 = vunpack.c.h.b16 %v6136
    %v6317 = vunpack.c.l.b16 %v6137
    %v6318 = vunpack.c.h.b16 %v6137
    %v6319 = vunpack.c.l.b16 %v6138
    %v6320 = vunpack.c.h.b16 %v6138
    %v6321 = vunpack.c.l.b16 %v6139
    %v6322 = vunpack.c.h.b16 %v6139
    %v6323 = vunpack.c.l.b16 %v6140
    %v6324 = vunpack.c.h.b16 %v6140
    %v6325 = vunpack.c.l.b16 %v6141
    %v6326 = vunpack.c.h.b16 %v6141
    %v6327 = vunpack.c.l.b16 %v6142
    %v6328 = vunpack.c.h.b16 %v6142
    %v6329 = vunpack.c.l.b16 %v6143
    %v6330 = vunpack.c.h.b16 %v6143
    %v6331 = vunpack.c.l.b16 %v6144
    %v6332 = vunpack.c.h.b16 %v6144
    %v6333 = vpack.c.b16 %v6217, %v6213
    %v6334 = vpack.c.b16 %v6218, %v6214
    %v6335 = vpack.c.b16 %v6219, %v6215
    %v6336 = vpack.c.b16 %v6220, %v6216
    %v6337 = vpack.c.b16 %v6225, %v6221
    %v6338 = vpack.c.b16 %v6226, %v6222
    %v6339 = vpack.c.b16 %v6227, %v6223
    %v6340 = vpack.c.b16 %v6228, %v6224
    %v6341 = vpack.c.b16 %v6233, %v6229
    %v6342 = vpack.c.b16 %v6234, %v6230
    %v6343 = vpack.c.b16 %v6235, %v6231
    %v6344 = vpack.c.b16 %v6236, %v6232
    %v6345 = vpack.c.b16 %v6241, %v6237
    %v6346 = vpack.c.b16 %v6242, %v6238
    %v6347 = vpack.c.b16 %v6243, %v6239
    %v6348 = vpack.c.b16 %v6244, %v6240
    %v6349 = vpack.c.b16 %v6249, %v6245
    %v6350 = vpack.c.b16 %v6250, %v6246
    %v6351 = vpack.c.b16 %v6251, %v6247
    %v6352 = vpack.c.b16 %v6252, %v6248
    %v6353 = vpack.c.b16 %v6257, %v6253
    %v6354 = vpack.c.b16 %v6258, %v6254
    %v6355 = vpack.c.b16 %v6259, %v6255
    %v6356 = vpack.c.b16 %v6260, %v6256
    %v6357 = vpack.c.b16 %v6265, %v6261
    %v6358 = vpack.c.b16 %v6266, %v6262
    %v6359 = vpack.c.b16 %v6267, %v6263
    %v6360 = vpack.c.b16 %v6268, %v6264
    %v6361 = vpack.c.b16 %v6273, %v6269
    %v6362 = vpack.c.b16 %v6274, %v6270
    %v6363 = vpack.c.b16 %v6275, %v6271
    %v6364 = vpack.c.b16 %v6276, %v6272
    %v6365 = vpack.c.b16 %v6281, %v6277
    %v6366 = vpack.c.b16 %v6282, %v6278
    %v6367 = vpack.c.b16 %v6283, %v6279
    %v6368 = vpack.c.b16 %v6284, %v6280
    %v6369 = vpack.c.b16 %v6289, %v6285
    %v6370 = vpack.c.b16 %v6290, %v6286
    %v6371 = vpack.c.b16 %v6291, %v6287
    %v6372 = vpack.c.b16 %v6292, %v6288
    %v6373 = vpack.c.b16 %v6297, %v6293
    %v6374 = vpack.c.b16 %v6298, %v6294
    %v6375 = vpack.c.b16 %v6299, %v6295
    %v6376 = vpack.c.b16 %v6300, %v6296
    %v6377 = vpack.c.b16 %v6305, %v6301
    %v6378 = vpack.c.b16 %v6306, %v6302
    %v6379 = vpack.c.b16 %v6307, %v6303
    %v6380 = vpack.c.b16 %v6308, %v6304
    %v6381 = vpack.c.b16 %v6313, %v6309
    %v6382 = vpack.c.b16 %v6314, %v6310
    %v6383 = vpack.c.b16 %v6315, %v6311
    %v6384 = vpack.c.b16 %v6316, %v6312
    %v6385 = vpack.c.b16 %v6321, %v6317
    %v6386 = vpack.c.b16 %v6322, %v6318
    %v6387 = vpack.c.b16 %v6323, %v6319
    %v6388 = vpack.c.b16 %v6324, %v6320
    %v6389 = vpack.c.b16 %v6329, %v6325
    %v6390 = vpack.c.b16 %v6330, %v6326
    %v6391 = vpack.c.b16 %v6331, %v6327
    %v6392 = vpack.c.b16 %v6332, %v6328
    %v6454 = vsel %vm1643, %v6151, 0
    %6456 = vmatprep.subr.bf16.mxu0 %v6334
    %6457 = vmatpush1.bf16.msra.mxu0 %v6333
    %6458 = vmatprep.subr.bf16.mxu0 %v6338
    %6459 = vmatpush1.bf16.msra.mxu0 %v6337
    %6460 = vmatprep.subr.bf16.mxu0 %v6342
    %6461 = vmatpush1.bf16.msra.mxu0 %v6341
    %6462 = vmatprep.subr.bf16.mxu0 %v6346
    %6463 = vmatpush1.bf16.msra.mxu0 %v6345
    %6464 = vmatprep.subr.bf16.mxu0 %v6350
    %6465 = vmatpush1.bf16.msra.mxu0 %v6349
    %6466 = vmatprep.subr.bf16.mxu0 %v6354
    %6467 = vmatpush1.bf16.msra.mxu0 %v6353
    %6468 = vmatprep.subr.bf16.mxu0 %v6358
    %6469 = vmatpush1.bf16.msra.mxu0 %v6357
    %6470 = vmatprep.subr.bf16.mxu0 %v6362
    %6471 = vmatpush1.bf16.msra.mxu0 %v6361
    %6472 = vmatprep.subr.bf16.mxu0 %v6366
    %6473 = vmatpush1.bf16.msra.mxu0 %v6365
    %6474 = vmatprep.subr.bf16.mxu0 %v6370
    %6475 = vmatpush1.bf16.msra.mxu0 %v6369
    %6476 = vmatprep.subr.bf16.mxu0 %v6374
    %6477 = vmatpush1.bf16.msra.mxu0 %v6373
    %6478 = vmatprep.subr.bf16.mxu0 %v6378
    %6479 = vmatpush1.bf16.msra.mxu0 %v6377
    %6480 = vmatprep.subr.bf16.mxu0 %v6382
    %6481 = vmatpush1.bf16.msra.mxu0 %v6381
    %6482 = vmatprep.subr.bf16.mxu0 %v6386
    %6483 = vmatpush1.bf16.msra.mxu0 %v6385
    %6484 = vmatprep.subr.bf16.mxu0 %v6390
    %6485 = vmatpush1.bf16.msra.mxu0 %v6389
    %6486 = vmatprep.subr.bf16.mxu0 0
    %6487 = vmatpush1.bf16.msra.mxu0 0
    %6488 = vmatprep.mubr.bf16.mxu0 %v6454
    %6489 = vmatmul.mubr.bf16.gmra.mrb[0].mxu0 %v6150
    %v6490 = vpop.f32.mrb[0].mxu0
    %v6491 = vadd.f32 0.0, %v6490
    %v6492 = vpop.f32.mrb[0].mxu0
    %v6493 = vadd.f32 0.0, %v6492
    %v6494 = vpop.f32.mrb[0].mxu0
    %v6495 = vadd.f32 0.0, %v6494
    %v6496 = vpop.f32.mrb[0].mxu0
    %v6497 = vadd.f32 0.0, %v6496
    %6498 = vdwg.mxu0
    %6499 = vmatprep.subr.bf16.mxu0 %v6336
    %6500 = vmatpush1.bf16.msra.mxu0 %v6335
    %6501 = vmatprep.subr.bf16.mxu0 %v6340
    %6502 = vmatpush1.bf16.msra.mxu0 %v6339
    %6503 = vmatprep.subr.bf16.mxu0 %v6344
    %6504 = vmatpush1.bf16.msra.mxu0 %v6343
    %6505 = vmatprep.subr.bf16.mxu0 %v6348
    %6506 = vmatpush1.bf16.msra.mxu0 %v6347
    %6507 = vmatprep.subr.bf16.mxu0 %v6352
    %6508 = vmatpush1.bf16.msra.mxu0 %v6351
    %6509 = vmatprep.subr.bf16.mxu0 %v6356
    %6510 = vmatpush1.bf16.msra.mxu0 %v6355
    %6511 = vmatprep.subr.bf16.mxu0 %v6360
    %6512 = vmatpush1.bf16.msra.mxu0 %v6359
    %6513 = vmatprep.subr.bf16.mxu0 %v6364
    %6514 = vmatpush1.bf16.msra.mxu0 %v6363
    %6515 = vmatprep.subr.bf16.mxu0 %v6368
    %6516 = vmatpush1.bf16.msra.mxu0 %v6367
    %6517 = vmatprep.subr.bf16.mxu0 %v6372
    %6518 = vmatpush1.bf16.msra.mxu0 %v6371
    %6519 = vmatprep.subr.bf16.mxu0 %v6376
    %6520 = vmatpush1.bf16.msra.mxu0 %v6375
    %6521 = vmatprep.subr.bf16.mxu0 %v6380
    %6522 = vmatpush1.bf16.msra.mxu0 %v6379
    %6523 = vmatprep.subr.bf16.mxu0 %v6384
    %6524 = vmatpush1.bf16.msra.mxu0 %v6383
    %6525 = vmatprep.subr.bf16.mxu0 %v6388
    %6526 = vmatpush1.bf16.msra.mxu0 %v6387
    %6527 = vmatprep.subr.bf16.mxu0 %v6392
    %6528 = vmatpush1.bf16.msra.mxu0 %v6391
    %6529 = vmatprep.subr.bf16.mxu0 0
    %6530 = vmatpush1.bf16.msra.mxu0 0
    %6531 = vmatprep.mubr.bf16.mxu0 %v6454
    %6532 = vmatmul.mubr.bf16.gmra.mrb[0].mxu0 %v6150
    %v6533 = vpop.f32.mrb[0].mxu0
    %v6534 = vadd.f32 0.0, %v6533
    %v6535 = vpop.f32.mrb[0].mxu0
    %v6536 = vadd.f32 0.0, %v6535
    %v6537 = vpop.f32.mrb[0].mxu0
    %v6538 = vadd.f32 0.0, %v6537
    %v6539 = vpop.f32.mrb[0].mxu0
    %v6540 = vadd.f32 0.0, %v6539
    %6541 = vdwg.mxu0
    %v6542 = vadd.f32 %v6033, %v6491
    %v6543 = vadd.f32 %v6035, %v6493
    %v6544 = vadd.f32 %v6076, %v6534
    %v6545 = vadd.f32 %v6078, %v6536
    %v6546 = vadd.f32 %v6037, %v6495
    %v6547 = vadd.f32 %v6039, %v6497
    %v6548 = vadd.f32 %v6080, %v6538
    %v6549 = vadd.f32 %v6082, %v6540
    %v6550 = vmax.f32 %v6542, %v6544
    %v6551 = vmax.f32 %v6543, %v6545
    %v6552 = vmax.f32 %v6546, %v6548
    %v6553 = vmax.f32 %v6547, %v6549
    %v6556 = vrot.slane %v6550, 1
    %v6557 = vrot.slane %v6551, 1
    %v6560 = vmax.f32 %v6550, %v6556
    %v6561 = vmax.f32 %v6551, %v6557
    %v6564 = vrot.slane %v6552, 1
    %v6565 = vrot.slane %v6553, 1
    %v6568 = vmax.f32 %v6552, %v6564
    %v6569 = vmax.f32 %v6553, %v6565
    %v6572 = vrot.slane %v6560, 1
    %v6573 = vrot.slane %v6561, 1
    %v6576 = vrot.slane %v6560, 2
    %v6577 = vrot.slane %v6561, 2
    %v6580 = vrot.slane %v6560, 3
    %v6581 = vrot.slane %v6561, 3
    %v6586 = vrot.slane %v6568, 4
    %v6587 = vrot.slane %v6569, 4
    %v6590 = vrot.slane %v6568, 5
    %v6591 = vrot.slane %v6569, 5
    %v6594 = vrot.slane %v6568, 6
    %v6595 = vrot.slane %v6569, 6
    %v6598 = vsel %vm1085, %v6560, %v6572
    %v6599 = vsel %vm1085, %v6561, %v6573
    %v6600 = vsel %vm1088, %v6598, %v6576
    %v6601 = vsel %vm1088, %v6599, %v6577
    %v6602 = vsel %vm1091, %v6600, %v6580
    %v6603 = vsel %vm1091, %v6601, %v6581
    %v6604 = vsel %vm95, %v6602, %v6586
    %v6605 = vsel %vm95, %v6603, %v6587
    %v6606 = vsel %vm1096, %v6604, %v6590
    %v6607 = vsel %vm1096, %v6605, %v6591
    %v6608 = vsel %vm332, %v6606, %v6594
    %v6609 = vsel %vm332, %v6607, %v6595
    %v6610 = vld [vmem:[%s4] sm:$0x3]
    %v6612 = vlaneseq
    %v6613 = vshrl.u32 %v6612, 7
    %v6614 = vsub.s32 0, %v6613
    %v6615 = vrot.slane %v6610, %v6614
    %v6616 = vlaneseq
    %v6617 = vshrl.u32 %v6616, 7
    %v6618 = vsub.s32 1, %v6617
    %v6619 = vrot.slane %v6610, %v6618
    %v6622 = vadd.f32 %v6608, %v6615
    %v6623 = vadd.f32 %v6609, %v6619
    %vm6624 = vcmp.gt.f32.partialorder %v6622, 0.0
    %vm6625 = vcmp.gt.f32.partialorder %v6623, 0.0
    %v6626 = vmin.f32 %v6622, 0.0
    %v6627 = vmin.f32 %v6623, 0.0
    %v6628 = vmul.f32 %v6626, 1.442695
    %v6629 = vpow.pop %v6628
    %v6630 = vmul.f32 %v6627, 1.442695
    %v6631 = vpow.pop %v6630
    %v6632 = vsub.f32 %v6629, 1.0
    %v6633 = vsub.f32 %v6631, 1.0
    %v6634 = vsel %vm6624, %v6622, %v6632
    %v6635 = vsel %vm6625, %v6623, %v6633
    %v6636 = vpack.c.bf16 %v6634, %v6634
    %v6637 = vpack.c.bf16 %v6635, %v6635
    %v6640 = vunpack.c.l.b16 %v6636
    %v6641 = vunpack.c.l.b16 %v6637
    %v6642 = vpack.c.b16 %v6641, %v6640
    %v6644 = vshrl.u32 %v6642, 16
    %v6646 = vrot.slane %v6644, 7
    %v6647 = vshll.u32 %v6642, 16
    %v6649 = vor.u32 %v6646, %v6647
    %s6651 = scalar_lea.vmem [#allocation3], 16
    %v6652 = vld [vmem:[%s6651] sm:$0xff]
    %v6653 = vsel %vm2698, %v6649, %v6652
    %6654 = vst [vmem:[%s6651] sm:$0xff] %v6653
    %v6655 = vld [vmem:[%s6651] sm:$0x77]
    %v6656 = vld [vmem:[#allocation8] sm:$0xff]
    %v6657 = vld [vmem:[#allocation8 + $0x8] sm:$0xff]
    %v6658 = vld [vmem:[#allocation8 + $0x10] sm:$0xff]
    %v6659 = vld [vmem:[#allocation8 + $0x18] sm:$0xff]
    %v6660 = vld [vmem:[#allocation8 + $0x20] sm:$0xff]
    %v6661 = vld [vmem:[#allocation8 + $0x28] sm:$0xff]
    %v6662 = vld [vmem:[#allocation8 + $0x30] sm:$0xff]
    %v6663 = vld [vmem:[#allocation8 + $0x38] sm:$0xff]
    %v6664 = vld [vmem:[#allocation8 + $0x40] sm:$0xff]
    %v6665 = vld [vmem:[#allocation8 + $0x48] sm:$0xff]
    %v6666 = vld [vmem:[#allocation8 + $0x50] sm:$0xff]
    %v6667 = vld [vmem:[#allocation8 + $0x58] sm:$0xff]
    %v6668 = vld [vmem:[#allocation8 + $0x60] sm:$0xff]
    %v6669 = vld [vmem:[#allocation8 + $0x68] sm:$0xff]
    %v6670 = vld [vmem:[#allocation8 + $0x70] sm:$0xff]
    %v6671 = vld [vmem:[#allocation8 + $0x78] sm:$0xff]
    %v6672 = vld [vmem:[#allocation8 + $0x80] sm:$0xff]
    %v6673 = vld [vmem:[#allocation8 + $0x88] sm:$0xff]
    %v6674 = vld [vmem:[#allocation8 + $0x90] sm:$0xff]
    %v6675 = vld [vmem:[#allocation8 + $0x98] sm:$0xff]
    %v6676 = vld [vmem:[#allocation8 + $0xa0] sm:$0xff]
    %v6677 = vld [vmem:[#allocation8 + $0xa8] sm:$0xff]
    %v6678 = vld [vmem:[#allocation8 + $0xb0] sm:$0xff]
    %v6679 = vld [vmem:[#allocation8 + $0xb8] sm:$0xff]
    %v6680 = vld [vmem:[#allocation8 + $0xc0] sm:$0xff]
    %v6681 = vld [vmem:[#allocation8 + $0xc8] sm:$0xff]
    %v6682 = vld [vmem:[#allocation8 + $0xd0] sm:$0xff]
    %v6683 = vld [vmem:[#allocation8 + $0xd8] sm:$0xff]
    %v6684 = vld [vmem:[#allocation8 + $0xe0] sm:$0xff]
    %v6685 = vld [vmem:[#allocation8 + $0xe8] sm:$0xff]
    %v6686 = vld [vmem:[#allocation8 + $0xf0] sm:$0xff]
    %v6687 = vld [vmem:[#allocation8 + $0xf8] sm:$0xff]
    %v6688 = vld [vmem:[#allocation8 + $0x100] sm:$0xff]
    %v6689 = vld [vmem:[#allocation8 + $0x108] sm:$0xff]
    %v6690 = vld [vmem:[#allocation8 + $0x110] sm:$0xff]
    %v6691 = vld [vmem:[#allocation8 + $0x118] sm:$0xff]
    %v6692 = vld [vmem:[#allocation8 + $0x120] sm:$0xff]
    %v6693 = vld [vmem:[#allocation8 + $0x128] sm:$0xff]
    %v6694 = vld [vmem:[#allocation8 + $0x130] sm:$0xff]
    %v6695 = vld [vmem:[#allocation8 + $0x138] sm:$0xff]
    %v6696 = vld [vmem:[#allocation8 + $0x140] sm:$0xff]
    %v6697 = vld [vmem:[#allocation8 + $0x148] sm:$0xff]
    %v6698 = vld [vmem:[#allocation8 + $0x150] sm:$0xff]
    %v6699 = vld [vmem:[#allocation8 + $0x158] sm:$0xff]
    %v6700 = vld [vmem:[#allocation8 + $0x160] sm:$0xff]
    %v6701 = vld [vmem:[#allocation8 + $0x168] sm:$0xff]
    %v6702 = vld [vmem:[#allocation8 + $0x170] sm:$0xff]
    %v6703 = vld [vmem:[#allocation8 + $0x178] sm:$0xff]
    %v6704 = vld [vmem:[#allocation8 + $0x180] sm:$0xff]
    %v6705 = vld [vmem:[#allocation8 + $0x188] sm:$0xff]
    %v6706 = vld [vmem:[#allocation8 + $0x190] sm:$0xff]
    %v6707 = vld [vmem:[#allocation8 + $0x198] sm:$0xff]
    %v6708 = vld [vmem:[#allocation8 + $0x1a0] sm:$0xff]
    %v6709 = vld [vmem:[#allocation8 + $0x1a8] sm:$0xff]
    %v6710 = vld [vmem:[#allocation8 + $0x1b0] sm:$0xff]
    %v6711 = vld [vmem:[#allocation8 + $0x1b8] sm:$0xff]
    %v6712 = vld [vmem:[%s6651] sm:$0xff]
    %v6713 = vld [vmem:[%s2760] sm:$0xff]
    %v6714 = vld [vmem:[%s2760 + $0x8] sm:$0xff]
    %v6715 = vld [vmem:[%s2760 + $0x10] sm:$0xff]
    %v6716 = vld [vmem:[%s2760 + $0x18] sm:$0xff]
    %v6717 = vld [vmem:[%s2760 + $0x20] sm:$0xff]
    %v6718 = vld [vmem:[%s2760 + $0x28] sm:$0xff]
    %v6719 = vld [vmem:[%s2760 + $0x30] sm:$0xff]
    %v6720 = vld [vmem:[%s2760 + $0x38] sm:$0xff]
    %v6721 = vld [vmem:[%s2760 + $0x40] sm:$0xff]
    %v6722 = vld [vmem:[%s2760 + $0x48] sm:$0xff]
    %v6723 = vld [vmem:[%s2760 + $0x50] sm:$0xff]
    %v6724 = vld [vmem:[%s2760 + $0x58] sm:$0xff]
    %v6725 = vld [vmem:[%s2760 + $0x60] sm:$0xff]
    %v6726 = vld [vmem:[%s2760 + $0x68] sm:$0xff]
    %v6727 = vld [vmem:[%s2760 + $0x70] sm:$0xff]
    %v6728 = vld [vmem:[%s2760 + $0x78] sm:$0xff]
    %v6729 = vld [vmem:[%s2760 + $0x80] sm:$0xff]
    %v6730 = vld [vmem:[%s2760 + $0x88] sm:$0xff]
    %v6731 = vld [vmem:[%s2760 + $0x90] sm:$0xff]
    %v6732 = vld [vmem:[%s2760 + $0x98] sm:$0xff]
    %v6733 = vld [vmem:[%s2760 + $0xa0] sm:$0xff]
    %v6734 = vld [vmem:[%s2760 + $0xa8] sm:$0xff]
    %v6735 = vld [vmem:[%s2760 + $0xb0] sm:$0xff]
    %v6736 = vld [vmem:[%s2760 + $0xb8] sm:$0xff]
    %v6737 = vld [vmem:[%s2760 + $0xc0] sm:$0xff]
    %v6738 = vld [vmem:[%s2760 + $0xc8] sm:$0xff]
    %v6739 = vld [vmem:[%s2760 + $0xd0] sm:$0xff]
    %v6740 = vld [vmem:[%s2760 + $0xd8] sm:$0xff]
    %v6741 = vld [vmem:[%s2760 + $0xe0] sm:$0xff]
    %v6742 = vld [vmem:[%s2760 + $0xe8] sm:$0xff]
    %v6743 = vld [vmem:[%s2760 + $0xf0] sm:$0xff]
    %v6744 = vld [vmem:[%s2760 + $0xf8] sm:$0xff]
    %v6745 = vld [vmem:[%s2760 + $0x100] sm:$0xff]
    %v6746 = vld [vmem:[%s2760 + $0x108] sm:$0xff]
    %v6747 = vld [vmem:[%s2760 + $0x110] sm:$0xff]
    %v6748 = vld [vmem:[%s2760 + $0x118] sm:$0xff]
    %v6749 = vld [vmem:[%s2760 + $0x120] sm:$0xff]
    %v6750 = vld [vmem:[%s2760 + $0x128] sm:$0xff]
    %v6751 = vld [vmem:[%s2760 + $0x130] sm:$0xff]
    %v6752 = vld [vmem:[%s2760 + $0x138] sm:$0xff]
    %v6753 = vld [vmem:[%s2760 + $0x140] sm:$0xff]
    %v6754 = vld [vmem:[%s2760 + $0x148] sm:$0xff]
    %v6755 = vld [vmem:[%s2760 + $0x150] sm:$0xff]
    %v6756 = vld [vmem:[%s2760 + $0x158] sm:$0xff]
    %v6757 = vld [vmem:[%s2760 + $0x160] sm:$0xff]
    %v6758 = vld [vmem:[%s2760 + $0x168] sm:$0xff]
    %v6759 = vld [vmem:[%s2760 + $0x170] sm:$0xff]
    %v6760 = vld [vmem:[%s2760 + $0x178] sm:$0xff]
    %v6761 = vld [vmem:[%s2760 + $0x180] sm:$0xff]
    %v6762 = vld [vmem:[%s2760 + $0x188] sm:$0xff]
    %v6763 = vld [vmem:[%s2760 + $0x190] sm:$0xff]
    %v6764 = vld [vmem:[%s2760 + $0x198] sm:$0xff]
    %v6765 = vld [vmem:[%s2760 + $0x1a0] sm:$0xff]
    %v6766 = vld [vmem:[%s2760 + $0x1a8] sm:$0xff]
    %v6767 = vld [vmem:[%s2760 + $0x1b0] sm:$0xff]
    %v6768 = vld [vmem:[%s2760 + $0x1b8] sm:$0xff]
    %v6770 = vunpack.c.l.b16 %v6712
    %v6771 = vunpack.c.h.b16 %v6712
    %v6772 = vpack.c.b16 %v6770, %v6770
    %v6773 = vpack.c.b16 %v6771, %v6771
    %v6775 = vshrl.u32 %v6772, 16
    %v6777 = vshll.u32 %v6772, 16
    %v6779 = vrot.slane %v6777, 1
    %v6780 = vor.u32 %v6775, %v6779
    %v6782 = vshrl.u32 %v6773, 16
    %v6784 = vshll.u32 %v6773, 16
    %v6786 = vrot.slane %v6784, 1
    %v6787 = vor.u32 %v6782, %v6786
    %v6845 = vunpack.c.l.b16 %v6713
    %v6846 = vunpack.c.h.b16 %v6713
    %v6847 = vunpack.c.l.b16 %v6714
    %v6848 = vunpack.c.h.b16 %v6714
    %v6849 = vunpack.c.l.b16 %v6715
    %v6850 = vunpack.c.h.b16 %v6715
    %v6851 = vunpack.c.l.b16 %v6716
    %v6852 = vunpack.c.h.b16 %v6716
    %v6853 = vunpack.c.l.b16 %v6717
    %v6854 = vunpack.c.h.b16 %v6717
    %v6855 = vunpack.c.l.b16 %v6718
    %v6856 = vunpack.c.h.b16 %v6718
    %v6857 = vunpack.c.l.b16 %v6719
    %v6858 = vunpack.c.h.b16 %v6719
    %v6859 = vunpack.c.l.b16 %v6720
    %v6860 = vunpack.c.h.b16 %v6720
    %v6861 = vunpack.c.l.b16 %v6721
    %v6862 = vunpack.c.h.b16 %v6721
    %v6863 = vunpack.c.l.b16 %v6722
    %v6864 = vunpack.c.h.b16 %v6722
    %v6865 = vunpack.c.l.b16 %v6723
    %v6866 = vunpack.c.h.b16 %v6723
    %v6867 = vunpack.c.l.b16 %v6724
    %v6868 = vunpack.c.h.b16 %v6724
    %v6869 = vunpack.c.l.b16 %v6725
    %v6870 = vunpack.c.h.b16 %v6725
    %v6871 = vunpack.c.l.b16 %v6726
    %v6872 = vunpack.c.h.b16 %v6726
    %v6873 = vunpack.c.l.b16 %v6727
    %v6874 = vunpack.c.h.b16 %v6727
    %v6875 = vunpack.c.l.b16 %v6728
    %v6876 = vunpack.c.h.b16 %v6728
    %v6877 = vunpack.c.l.b16 %v6729
    %v6878 = vunpack.c.h.b16 %v6729
    %v6879 = vunpack.c.l.b16 %v6730
    %v6880 = vunpack.c.h.b16 %v6730
    %v6881 = vunpack.c.l.b16 %v6731
    %v6882 = vunpack.c.h.b16 %v6731
    %v6883 = vunpack.c.l.b16 %v6732
    %v6884 = vunpack.c.h.b16 %v6732
    %v6885 = vunpack.c.l.b16 %v6733
    %v6886 = vunpack.c.h.b16 %v6733
    %v6887 = vunpack.c.l.b16 %v6734
    %v6888 = vunpack.c.h.b16 %v6734
    %v6889 = vunpack.c.l.b16 %v6735
    %v6890 = vunpack.c.h.b16 %v6735
    %v6891 = vunpack.c.l.b16 %v6736
    %v6892 = vunpack.c.h.b16 %v6736
    %v6893 = vunpack.c.l.b16 %v6737
    %v6894 = vunpack.c.h.b16 %v6737
    %v6895 = vunpack.c.l.b16 %v6738
    %v6896 = vunpack.c.h.b16 %v6738
    %v6897 = vunpack.c.l.b16 %v6739
    %v6898 = vunpack.c.h.b16 %v6739
    %v6899 = vunpack.c.l.b16 %v6740
    %v6900 = vunpack.c.h.b16 %v6740
    %v6901 = vunpack.c.l.b16 %v6741
    %v6902 = vunpack.c.h.b16 %v6741
    %v6903 = vunpack.c.l.b16 %v6742
    %v6904 = vunpack.c.h.b16 %v6742
    %v6905 = vunpack.c.l.b16 %v6743
    %v6906 = vunpack.c.h.b16 %v6743
    %v6907 = vunpack.c.l.b16 %v6744
    %v6908 = vunpack.c.h.b16 %v6744
    %v6909 = vunpack.c.l.b16 %v6745
    %v6910 = vunpack.c.h.b16 %v6745
    %v6911 = vunpack.c.l.b16 %v6746
    %v6912 = vunpack.c.h.b16 %v6746
    %v6913 = vunpack.c.l.b16 %v6747
    %v6914 = vunpack.c.h.b16 %v6747
    %v6915 = vunpack.c.l.b16 %v6748
    %v6916 = vunpack.c.h.b16 %v6748
    %v6917 = vunpack.c.l.b16 %v6749
    %v6918 = vunpack.c.h.b16 %v6749
    %v6919 = vunpack.c.l.b16 %v6750
    %v6920 = vunpack.c.h.b16 %v6750
    %v6921 = vunpack.c.l.b16 %v6751
    %v6922 = vunpack.c.h.b16 %v6751
    %v6923 = vunpack.c.l.b16 %v6752
    %v6924 = vunpack.c.h.b16 %v6752
    %v6925 = vunpack.c.l.b16 %v6753
    %v6926 = vunpack.c.h.b16 %v6753
    %v6927 = vunpack.c.l.b16 %v6754
    %v6928 = vunpack.c.h.b16 %v6754
    %v6929 = vunpack.c.l.b16 %v6755
    %v6930 = vunpack.c.h.b16 %v6755
    %v6931 = vunpack.c.l.b16 %v6756
    %v6932 = vunpack.c.h.b16 %v6756
    %v6933 = vunpack.c.l.b16 %v6757
    %v6934 = vunpack.c.h.b16 %v6757
    %v6935 = vunpack.c.l.b16 %v6758
    %v6936 = vunpack.c.h.b16 %v6758
    %v6937 = vunpack.c.l.b16 %v6759
    %v6938 = vunpack.c.h.b16 %v6759
    %v6939 = vunpack.c.l.b16 %v6760
    %v6940 = vunpack.c.h.b16 %v6760
    %v6941 = vunpack.c.l.b16 %v6761
    %v6942 = vunpack.c.h.b16 %v6761
    %v6943 = vunpack.c.l.b16 %v6762
    %v6944 = vunpack.c.h.b16 %v6762
    %v6945 = vunpack.c.l.b16 %v6763
    %v6946 = vunpack.c.h.b16 %v6763
    %v6947 = vunpack.c.l.b16 %v6764
    %v6948 = vunpack.c.h.b16 %v6764
    %v6949 = vunpack.c.l.b16 %v6765
    %v6950 = vunpack.c.h.b16 %v6765
    %v6951 = vunpack.c.l.b16 %v6766
    %v6952 = vunpack.c.h.b16 %v6766
    %v6953 = vunpack.c.l.b16 %v6767
    %v6954 = vunpack.c.h.b16 %v6767
    %v6955 = vunpack.c.l.b16 %v6768
    %v6956 = vunpack.c.h.b16 %v6768
    %v6957 = vpack.c.b16 %v6849, %v6845
    %v6958 = vpack.c.b16 %v6850, %v6846
    %v6959 = vpack.c.b16 %v6851, %v6847
    %v6960 = vpack.c.b16 %v6852, %v6848
    %v6961 = vpack.c.b16 %v6857, %v6853
    %v6962 = vpack.c.b16 %v6858, %v6854
    %v6963 = vpack.c.b16 %v6859, %v6855
    %v6964 = vpack.c.b16 %v6860, %v6856
    %v6965 = vpack.c.b16 %v6865, %v6861
    %v6966 = vpack.c.b16 %v6866, %v6862
    %v6967 = vpack.c.b16 %v6867, %v6863
    %v6968 = vpack.c.b16 %v6868, %v6864
    %v6969 = vpack.c.b16 %v6873, %v6869
    %v6970 = vpack.c.b16 %v6874, %v6870
    %v6971 = vpack.c.b16 %v6875, %v6871
    %v6972 = vpack.c.b16 %v6876, %v6872
    %v6973 = vpack.c.b16 %v6881, %v6877
    %v6974 = vpack.c.b16 %v6882, %v6878
    %v6975 = vpack.c.b16 %v6883, %v6879
    %v6976 = vpack.c.b16 %v6884, %v6880
    %v6977 = vpack.c.b16 %v6889, %v6885
    %v6978 = vpack.c.b16 %v6890, %v6886
    %v6979 = vpack.c.b16 %v6891, %v6887
    %v6980 = vpack.c.b16 %v6892, %v6888
    %v6981 = vpack.c.b16 %v6897, %v6893
    %v6982 = vpack.c.b16 %v6898, %v6894
    %v6983 = vpack.c.b16 %v6899, %v6895
    %v6984 = vpack.c.b16 %v6900, %v6896
    %v6985 = vpack.c.b16 %v6905, %v6901
    %v6986 = vpack.c.b16 %v6906, %v6902
    %v6987 = vpack.c.b16 %v6907, %v6903
    %v6988 = vpack.c.b16 %v6908, %v6904
    %v6989 = vpack.c.b16 %v6913, %v6909
    %v6990 = vpack.c.b16 %v6914, %v6910
    %v6991 = vpack.c.b16 %v6915, %v6911
    %v6992 = vpack.c.b16 %v6916, %v6912
    %v6993 = vpack.c.b16 %v6921, %v6917
    %v6994 = vpack.c.b16 %v6922, %v6918
    %v6995 = vpack.c.b16 %v6923, %v6919
    %v6996 = vpack.c.b16 %v6924, %v6920
    %v6997 = vpack.c.b16 %v6929, %v6925
    %v6998 = vpack.c.b16 %v6930, %v6926
    %v6999 = vpack.c.b16 %v6931, %v6927
    %v7000 = vpack.c.b16 %v6932, %v6928
    %v7001 = vpack.c.b16 %v6937, %v6933
    %v7002 = vpack.c.b16 %v6938, %v6934
    %v7003 = vpack.c.b16 %v6939, %v6935
    %v7004 = vpack.c.b16 %v6940, %v6936
    %v7005 = vpack.c.b16 %v6945, %v6941
    %v7006 = vpack.c.b16 %v6946, %v6942
    %v7007 = vpack.c.b16 %v6947, %v6943
    %v7008 = vpack.c.b16 %v6948, %v6944
    %v7009 = vpack.c.b16 %v6953, %v6949
    %v7010 = vpack.c.b16 %v6954, %v6950
    %v7011 = vpack.c.b16 %v6955, %v6951
    %v7012 = vpack.c.b16 %v6956, %v6952
    %v7070 = vsel %vm3117, %v6787, 0
    %7072 = vmatprep.subr.bf16.mxu0 %v6958
    %7073 = vmatpush1.bf16.msra.mxu0 %v6957
    %7074 = vmatprep.subr.bf16.mxu0 %v6962
    %7075 = vmatpush1.bf16.msra.mxu0 %v6961
    %7076 = vmatprep.subr.bf16.mxu0 %v6966
    %7077 = vmatpush1.bf16.msra.mxu0 %v6965
    %7078 = vmatprep.subr.bf16.mxu0 %v6970
    %7079 = vmatpush1.bf16.msra.mxu0 %v6969
    %7080 = vmatprep.subr.bf16.mxu0 %v6974
    %7081 = vmatpush1.bf16.msra.mxu0 %v6973
    %7082 = vmatprep.subr.bf16.mxu0 %v6978
    %7083 = vmatpush1.bf16.msra.mxu0 %v6977
    %7084 = vmatprep.subr.bf16.mxu0 %v6982
    %7085 = vmatpush1.bf16.msra.mxu0 %v6981
    %7086 = vmatprep.subr.bf16.mxu0 %v6986
    %7087 = vmatpush1.bf16.msra.mxu0 %v6985
    %7088 = vmatprep.subr.bf16.mxu0 %v6990
    %7089 = vmatpush1.bf16.msra.mxu0 %v6989
    %7090 = vmatprep.subr.bf16.mxu0 %v6994
    %7091 = vmatpush1.bf16.msra.mxu0 %v6993
    %7092 = vmatprep.subr.bf16.mxu0 %v6998
    %7093 = vmatpush1.bf16.msra.mxu0 %v6997
    %7094 = vmatprep.subr.bf16.mxu0 %v7002
    %7095 = vmatpush1.bf16.msra.mxu0 %v7001
    %7096 = vmatprep.subr.bf16.mxu0 %v7006
    %7097 = vmatpush1.bf16.msra.mxu0 %v7005
    %7098 = vmatprep.subr.bf16.mxu0 %v7010
    %7099 = vmatpush1.bf16.msra.mxu0 %v7009
    %7100 = vmatprep.subr.bf16.mxu0 0
    %7101 = vmatpush1.bf16.msra.mxu0 0
    %7102 = vmatprep.subr.bf16.mxu0 0
    %7103 = vmatpush1.bf16.msra.mxu0 0
    %7104 = vmatprep.mubr.bf16.mxu0 %v7070
    %7105 = vmatmul.mubr.bf16.gmra.mrb[0].mxu0 %v6780
    %v7106 = vpop.f32.mrb[0].mxu0
    %v7107 = vadd.f32 0.0, %v7106
    %v7108 = vpop.f32.mrb[0].mxu0
    %v7109 = vadd.f32 0.0, %v7108
    %v7110 = vpop.f32.mrb[0].mxu0
    %v7111 = vpop.f32.mrb[0].mxu0
    %7112 = vdwg.mxu0
    %7113 = vmatprep.subr.bf16.mxu0 %v6960
    %7114 = vmatpush1.bf16.msra.mxu0 %v6959
    %7115 = vmatprep.subr.bf16.mxu0 %v6964
    %7116 = vmatpush1.bf16.msra.mxu0 %v6963
    %7117 = vmatprep.subr.bf16.mxu0 %v6968
    %7118 = vmatpush1.bf16.msra.mxu0 %v6967
    %7119 = vmatprep.subr.bf16.mxu0 %v6972
    %7120 = vmatpush1.bf16.msra.mxu0 %v6971
    %7121 = vmatprep.subr.bf16.mxu0 %v6976
    %7122 = vmatpush1.bf16.msra.mxu0 %v6975
    %7123 = vmatprep.subr.bf16.mxu0 %v6980
    %7124 = vmatpush1.bf16.msra.mxu0 %v6979
    %7125 = vmatprep.subr.bf16.mxu0 %v6984
    %7126 = vmatpush1.bf16.msra.mxu0 %v6983
    %7127 = vmatprep.subr.bf16.mxu0 %v6988
    %7128 = vmatpush1.bf16.msra.mxu0 %v6987
    %7129 = vmatprep.subr.bf16.mxu0 %v6992
    %7130 = vmatpush1.bf16.msra.mxu0 %v6991
    %7131 = vmatprep.subr.bf16.mxu0 %v6996
    %7132 = vmatpush1.bf16.msra.mxu0 %v6995
    %7133 = vmatprep.subr.bf16.mxu0 %v7000
    %7134 = vmatpush1.bf16.msra.mxu0 %v6999
    %7135 = vmatprep.subr.bf16.mxu0 %v7004
    %7136 = vmatpush1.bf16.msra.mxu0 %v7003
    %7137 = vmatprep.subr.bf16.mxu0 %v7008
    %7138 = vmatpush1.bf16.msra.mxu0 %v7007
    %7139 = vmatprep.subr.bf16.mxu0 %v7012
    %7140 = vmatpush1.bf16.msra.mxu0 %v7011
    %7141 = vmatprep.subr.bf16.mxu0 0
    %7142 = vmatpush1.bf16.msra.mxu0 0
    %7143 = vmatprep.subr.bf16.mxu0 0
    %7144 = vmatpush1.bf16.msra.mxu0 0
    %7145 = vmatprep.mubr.bf16.mxu0 %v7070
    %7146 = vmatmul.mubr.bf16.gmra.mrb[0].mxu0 %v6780
    %v7147 = vpop.f32.mrb[0].mxu0
    %v7148 = vadd.f32 0.0, %v7147
    %v7149 = vpop.f32.mrb[0].mxu0
    %v7150 = vadd.f32 0.0, %v7149
    %v7151 = vpop.f32.mrb[0].mxu0
    %v7152 = vpop.f32.mrb[0].mxu0
    %7153 = vdwg.mxu0
    %v7155 = vunpack.c.l.b16 %v6655
    %v7156 = vunpack.c.h.b16 %v6655
    %v7157 = vpack.c.b16 %v7155, %v7155
    %v7158 = vpack.c.b16 %v7156, %v7156
    %v7216 = vunpack.c.l.b16 %v6656
    %v7217 = vunpack.c.h.b16 %v6656
    %v7218 = vunpack.c.l.b16 %v6657
    %v7219 = vunpack.c.h.b16 %v6657
    %v7220 = vunpack.c.l.b16 %v6658
    %v7221 = vunpack.c.h.b16 %v6658
    %v7222 = vunpack.c.l.b16 %v6659
    %v7223 = vunpack.c.h.b16 %v6659
    %v7224 = vunpack.c.l.b16 %v6660
    %v7225 = vunpack.c.h.b16 %v6660
    %v7226 = vunpack.c.l.b16 %v6661
    %v7227 = vunpack.c.h.b16 %v6661
    %v7228 = vunpack.c.l.b16 %v6662
    %v7229 = vunpack.c.h.b16 %v6662
    %v7230 = vunpack.c.l.b16 %v6663
    %v7231 = vunpack.c.h.b16 %v6663
    %v7232 = vunpack.c.l.b16 %v6664
    %v7233 = vunpack.c.h.b16 %v6664
    %v7234 = vunpack.c.l.b16 %v6665
    %v7235 = vunpack.c.h.b16 %v6665
    %v7236 = vunpack.c.l.b16 %v6666
    %v7237 = vunpack.c.h.b16 %v6666
    %v7238 = vunpack.c.l.b16 %v6667
    %v7239 = vunpack.c.h.b16 %v6667
    %v7240 = vunpack.c.l.b16 %v6668
    %v7241 = vunpack.c.h.b16 %v6668
    %v7242 = vunpack.c.l.b16 %v6669
    %v7243 = vunpack.c.h.b16 %v6669
    %v7244 = vunpack.c.l.b16 %v6670
    %v7245 = vunpack.c.h.b16 %v6670
    %v7246 = vunpack.c.l.b16 %v6671
    %v7247 = vunpack.c.h.b16 %v6671
    %v7248 = vunpack.c.l.b16 %v6672
    %v7249 = vunpack.c.h.b16 %v6672
    %v7250 = vunpack.c.l.b16 %v6673
    %v7251 = vunpack.c.h.b16 %v6673
    %v7252 = vunpack.c.l.b16 %v6674
    %v7253 = vunpack.c.h.b16 %v6674
    %v7254 = vunpack.c.l.b16 %v6675
    %v7255 = vunpack.c.h.b16 %v6675
    %v7256 = vunpack.c.l.b16 %v6676
    %v7257 = vunpack.c.h.b16 %v6676
    %v7258 = vunpack.c.l.b16 %v6677
    %v7259 = vunpack.c.h.b16 %v6677
    %v7260 = vunpack.c.l.b16 %v6678
    %v7261 = vunpack.c.h.b16 %v6678
    %v7262 = vunpack.c.l.b16 %v6679
    %v7263 = vunpack.c.h.b16 %v6679
    %v7264 = vunpack.c.l.b16 %v6680
    %v7265 = vunpack.c.h.b16 %v6680
    %v7266 = vunpack.c.l.b16 %v6681
    %v7267 = vunpack.c.h.b16 %v6681
    %v7268 = vunpack.c.l.b16 %v6682
    %v7269 = vunpack.c.h.b16 %v6682
    %v7270 = vunpack.c.l.b16 %v6683
    %v7271 = vunpack.c.h.b16 %v6683
    %v7272 = vunpack.c.l.b16 %v6684
    %v7273 = vunpack.c.h.b16 %v6684
    %v7274 = vunpack.c.l.b16 %v6685
    %v7275 = vunpack.c.h.b16 %v6685
    %v7276 = vunpack.c.l.b16 %v6686
    %v7277 = vunpack.c.h.b16 %v6686
    %v7278 = vunpack.c.l.b16 %v6687
    %v7279 = vunpack.c.h.b16 %v6687
    %v7280 = vunpack.c.l.b16 %v6688
    %v7281 = vunpack.c.h.b16 %v6688
    %v7282 = vunpack.c.l.b16 %v6689
    %v7283 = vunpack.c.h.b16 %v6689
    %v7284 = vunpack.c.l.b16 %v6690
    %v7285 = vunpack.c.h.b16 %v6690
    %v7286 = vunpack.c.l.b16 %v6691
    %v7287 = vunpack.c.h.b16 %v6691
    %v7288 = vunpack.c.l.b16 %v6692
    %v7289 = vunpack.c.h.b16 %v6692
    %v7290 = vunpack.c.l.b16 %v6693
    %v7291 = vunpack.c.h.b16 %v6693
    %v7292 = vunpack.c.l.b16 %v6694
    %v7293 = vunpack.c.h.b16 %v6694
    %v7294 = vunpack.c.l.b16 %v6695
    %v7295 = vunpack.c.h.b16 %v6695
    %v7296 = vunpack.c.l.b16 %v6696
    %v7297 = vunpack.c.h.b16 %v6696
    %v7298 = vunpack.c.l.b16 %v6697
    %v7299 = vunpack.c.h.b16 %v6697
    %v7300 = vunpack.c.l.b16 %v6698
    %v7301 = vunpack.c.h.b16 %v6698
    %v7302 = vunpack.c.l.b16 %v6699
    %v7303 = vunpack.c.h.b16 %v6699
    %v7304 = vunpack.c.l.b16 %v6700
    %v7305 = vunpack.c.h.b16 %v6700
    %v7306 = vunpack.c.l.b16 %v6701
    %v7307 = vunpack.c.h.b16 %v6701
    %v7308 = vunpack.c.l.b16 %v6702
    %v7309 = vunpack.c.h.b16 %v6702
    %v7310 = vunpack.c.l.b16 %v6703
    %v7311 = vunpack.c.h.b16 %v6703
    %v7312 = vunpack.c.l.b16 %v6704
    %v7313 = vunpack.c.h.b16 %v6704
    %v7314 = vunpack.c.l.b16 %v6705
    %v7315 = vunpack.c.h.b16 %v6705
    %v7316 = vunpack.c.l.b16 %v6706
    %v7317 = vunpack.c.h.b16 %v6706
    %v7318 = vunpack.c.l.b16 %v6707
    %v7319 = vunpack.c.h.b16 %v6707
    %v7320 = vunpack.c.l.b16 %v6708
    %v7321 = vunpack.c.h.b16 %v6708
    %v7322 = vunpack.c.l.b16 %v6709
    %v7323 = vunpack.c.h.b16 %v6709
    %v7324 = vunpack.c.l.b16 %v6710
    %v7325 = vunpack.c.h.b16 %v6710
    %v7326 = vunpack.c.l.b16 %v6711
    %v7327 = vunpack.c.h.b16 %v6711
    %v7328 = vpack.c.b16 %v7220, %v7216
    %v7329 = vpack.c.b16 %v7221, %v7217
    %v7330 = vpack.c.b16 %v7222, %v7218
    %v7331 = vpack.c.b16 %v7223, %v7219
    %v7332 = vpack.c.b16 %v7228, %v7224
    %v7333 = vpack.c.b16 %v7229, %v7225
    %v7334 = vpack.c.b16 %v7230, %v7226
    %v7335 = vpack.c.b16 %v7231, %v7227
    %v7336 = vpack.c.b16 %v7236, %v7232
    %v7337 = vpack.c.b16 %v7237, %v7233
    %v7338 = vpack.c.b16 %v7238, %v7234
    %v7339 = vpack.c.b16 %v7239, %v7235
    %v7340 = vpack.c.b16 %v7244, %v7240
    %v7341 = vpack.c.b16 %v7245, %v7241
    %v7342 = vpack.c.b16 %v7246, %v7242
    %v7343 = vpack.c.b16 %v7247, %v7243
    %v7344 = vpack.c.b16 %v7252, %v7248
    %v7345 = vpack.c.b16 %v7253, %v7249
    %v7346 = vpack.c.b16 %v7254, %v7250
    %v7347 = vpack.c.b16 %v7255, %v7251
    %v7348 = vpack.c.b16 %v7260, %v7256
    %v7349 = vpack.c.b16 %v7261, %v7257
    %v7350 = vpack.c.b16 %v7262, %v7258
    %v7351 = vpack.c.b16 %v7263, %v7259
    %v7352 = vpack.c.b16 %v7268, %v7264
    %v7353 = vpack.c.b16 %v7269, %v7265
    %v7354 = vpack.c.b16 %v7270, %v7266
    %v7355 = vpack.c.b16 %v7271, %v7267
    %v7356 = vpack.c.b16 %v7276, %v7272
    %v7357 = vpack.c.b16 %v7277, %v7273
    %v7358 = vpack.c.b16 %v7278, %v7274
    %v7359 = vpack.c.b16 %v7279, %v7275
    %v7360 = vpack.c.b16 %v7284, %v7280
    %v7361 = vpack.c.b16 %v7285, %v7281
    %v7362 = vpack.c.b16 %v7286, %v7282
    %v7363 = vpack.c.b16 %v7287, %v7283
    %v7364 = vpack.c.b16 %v7292, %v7288
    %v7365 = vpack.c.b16 %v7293, %v7289
    %v7366 = vpack.c.b16 %v7294, %v7290
    %v7367 = vpack.c.b16 %v7295, %v7291
    %v7368 = vpack.c.b16 %v7300, %v7296
    %v7369 = vpack.c.b16 %v7301, %v7297
    %v7370 = vpack.c.b16 %v7302, %v7298
    %v7371 = vpack.c.b16 %v7303, %v7299
    %v7372 = vpack.c.b16 %v7308, %v7304
    %v7373 = vpack.c.b16 %v7309, %v7305
    %v7374 = vpack.c.b16 %v7310, %v7306
    %v7375 = vpack.c.b16 %v7311, %v7307
    %v7376 = vpack.c.b16 %v7316, %v7312
    %v7377 = vpack.c.b16 %v7317, %v7313
    %v7378 = vpack.c.b16 %v7318, %v7314
    %v7379 = vpack.c.b16 %v7319, %v7315
    %v7380 = vpack.c.b16 %v7324, %v7320
    %v7381 = vpack.c.b16 %v7325, %v7321
    %v7382 = vpack.c.b16 %v7326, %v7322
    %v7383 = vpack.c.b16 %v7327, %v7323
    %v7441 = vsel %vm3117, %v7158, 0
    %7443 = vmatprep.subr.bf16.mxu0 %v7329
    %7444 = vmatpush1.bf16.msra.mxu0 %v7328
    %7445 = vmatprep.subr.bf16.mxu0 %v7333
    %7446 = vmatpush1.bf16.msra.mxu0 %v7332
    %7447 = vmatprep.subr.bf16.mxu0 %v7337
    %7448 = vmatpush1.bf16.msra.mxu0 %v7336
    %7449 = vmatprep.subr.bf16.mxu0 %v7341
    %7450 = vmatpush1.bf16.msra.mxu0 %v7340
    %7451 = vmatprep.subr.bf16.mxu0 %v7345
    %7452 = vmatpush1.bf16.msra.mxu0 %v7344
    %7453 = vmatprep.subr.bf16.mxu0 %v7349
    %7454 = vmatpush1.bf16.msra.mxu0 %v7348
    %7455 = vmatprep.subr.bf16.mxu0 %v7353
    %7456 = vmatpush1.bf16.msra.mxu0 %v7352
    %7457 = vmatprep.subr.bf16.mxu0 %v7357
    %7458 = vmatpush1.bf16.msra.mxu0 %v7356
    %7459 = vmatprep.subr.bf16.mxu0 %v7361
    %7460 = vmatpush1.bf16.msra.mxu0 %v7360
    %7461 = vmatprep.subr.bf16.mxu0 %v7365
    %7462 = vmatpush1.bf16.msra.mxu0 %v7364
    %7463 = vmatprep.subr.bf16.mxu0 %v7369
    %7464 = vmatpush1.bf16.msra.mxu0 %v7368
    %7465 = vmatprep.subr.bf16.mxu0 %v7373
    %7466 = vmatpush1.bf16.msra.mxu0 %v7372
    %7467 = vmatprep.subr.bf16.mxu0 %v7377
    %7468 = vmatpush1.bf16.msra.mxu0 %v7376
    %7469 = vmatprep.subr.bf16.mxu0 %v7381
    %7470 = vmatpush1.bf16.msra.mxu0 %v7380
    %7471 = vmatprep.subr.bf16.mxu0 0
    %7472 = vmatpush1.bf16.msra.mxu0 0
    %7473 = vmatprep.subr.bf16.mxu0 0
    %7474 = vmatpush1.bf16.msra.mxu0 0
    %7475 = vmatprep.mubr.bf16.mxu0 %v7441
    %7476 = vmatmul.mubr.bf16.gmra.mrb[0].mxu0 %v7157
    %v7477 = vpop.f32.mrb[0].mxu0
    %v7478 = vadd.f32 %v7107, %v7477
    %v7479 = vpop.f32.mrb[0].mxu0
    %v7480 = vadd.f32 %v7109, %v7479
    %v7481 = vpop.f32.mrb[0].mxu0
    %v7482 = vpop.f32.mrb[0].mxu0
    %7483 = vdwg.mxu0
    %7484 = vmatprep.subr.bf16.mxu0 %v7331
    %7485 = vmatpush1.bf16.msra.mxu0 %v7330
    %7486 = vmatprep.subr.bf16.mxu0 %v7335
    %7487 = vmatpush1.bf16.msra.mxu0 %v7334
    %7488 = vmatprep.subr.bf16.mxu0 %v7339
    %7489 = vmatpush1.bf16.msra.mxu0 %v7338
    %7490 = vmatprep.subr.bf16.mxu0 %v7343
    %7491 = vmatpush1.bf16.msra.mxu0 %v7342
    %7492 = vmatprep.subr.bf16.mxu0 %v7347
    %7493 = vmatpush1.bf16.msra.mxu0 %v7346
    %7494 = vmatprep.subr.bf16.mxu0 %v7351
    %7495 = vmatpush1.bf16.msra.mxu0 %v7350
    %7496 = vmatprep.subr.bf16.mxu0 %v7355
    %7497 = vmatpush1.bf16.msra.mxu0 %v7354
    %7498 = vmatprep.subr.bf16.mxu0 %v7359
    %7499 = vmatpush1.bf16.msra.mxu0 %v7358
    %7500 = vmatprep.subr.bf16.mxu0 %v7363
    %7501 = vmatpush1.bf16.msra.mxu0 %v7362
    %7502 = vmatprep.subr.bf16.mxu0 %v7367
    %7503 = vmatpush1.bf16.msra.mxu0 %v7366
    %7504 = vmatprep.subr.bf16.mxu0 %v7371
    %7505 = vmatpush1.bf16.msra.mxu0 %v7370
    %7506 = vmatprep.subr.bf16.mxu0 %v7375
    %7507 = vmatpush1.bf16.msra.mxu0 %v7374
    %7508 = vmatprep.subr.bf16.mxu0 %v7379
    %7509 = vmatpush1.bf16.msra.mxu0 %v7378
    %7510 = vmatprep.subr.bf16.mxu0 %v7383
    %7511 = vmatpush1.bf16.msra.mxu0 %v7382
    %7512 = vmatprep.subr.bf16.mxu0 0
    %7513 = vmatpush1.bf16.msra.mxu0 0
    %7514 = vmatprep.subr.bf16.mxu0 0
    %7515 = vmatpush1.bf16.msra.mxu0 0
    %7516 = vmatprep.mubr.bf16.mxu0 %v7441
    %7517 = vmatmul.mubr.bf16.gmra.mrb[0].mxu0 %v7157
    %v7518 = vpop.f32.mrb[0].mxu0
    %v7519 = vadd.f32 %v7148, %v7518
    %v7520 = vpop.f32.mrb[0].mxu0
    %v7521 = vadd.f32 %v7150, %v7520
    %v7522 = vpop.f32.mrb[0].mxu0
    %v7523 = vpop.f32.mrb[0].mxu0
    %7524 = vdwg.mxu0
    %v7525 = vld [vmem:[%s6651] sm:$0xee]
    %v7526 = vld [vmem:[%s3575] sm:$0xff]
    %v7527 = vld [vmem:[%s3575 + $0x8] sm:$0xff]
    %v7528 = vld [vmem:[%s3575 + $0x10] sm:$0xff]
    %v7529 = vld [vmem:[%s3575 + $0x18] sm:$0xff]
    %v7530 = vld [vmem:[%s3575 + $0x20] sm:$0xff]
    %v7531 = vld [vmem:[%s3575 + $0x28] sm:$0xff]
    %v7532 = vld [vmem:[%s3575 + $0x30] sm:$0xff]
    %v7533 = vld [vmem:[%s3575 + $0x38] sm:$0xff]
    %v7534 = vld [vmem:[%s3575 + $0x40] sm:$0xff]
    %v7535 = vld [vmem:[%s3575 + $0x48] sm:$0xff]
    %v7536 = vld [vmem:[%s3575 + $0x50] sm:$0xff]
    %v7537 = vld [vmem:[%s3575 + $0x58] sm:$0xff]
    %v7538 = vld [vmem:[%s3575 + $0x60] sm:$0xff]
    %v7539 = vld [vmem:[%s3575 + $0x68] sm:$0xff]
    %v7540 = vld [vmem:[%s3575 + $0x70] sm:$0xff]
    %v7541 = vld [vmem:[%s3575 + $0x78] sm:$0xff]
    %v7542 = vld [vmem:[%s3575 + $0x80] sm:$0xff]
    %v7543 = vld [vmem:[%s3575 + $0x88] sm:$0xff]
    %v7544 = vld [vmem:[%s3575 + $0x90] sm:$0xff]
    %v7545 = vld [vmem:[%s3575 + $0x98] sm:$0xff]
    %v7546 = vld [vmem:[%s3575 + $0xa0] sm:$0xff]
    %v7547 = vld [vmem:[%s3575 + $0xa8] sm:$0xff]
    %v7548 = vld [vmem:[%s3575 + $0xb0] sm:$0xff]
    %v7549 = vld [vmem:[%s3575 + $0xb8] sm:$0xff]
    %v7550 = vld [vmem:[%s3575 + $0xc0] sm:$0xff]
    %v7551 = vld [vmem:[%s3575 + $0xc8] sm:$0xff]
    %v7552 = vld [vmem:[%s3575 + $0xd0] sm:$0xff]
    %v7553 = vld [vmem:[%s3575 + $0xd8] sm:$0xff]
    %v7554 = vld [vmem:[%s3575 + $0xe0] sm:$0xff]
    %v7555 = vld [vmem:[%s3575 + $0xe8] sm:$0xff]
    %v7556 = vld [vmem:[%s3575 + $0xf0] sm:$0xff]
    %v7557 = vld [vmem:[%s3575 + $0xf8] sm:$0xff]
    %v7558 = vld [vmem:[%s3575 + $0x100] sm:$0xff]
    %v7559 = vld [vmem:[%s3575 + $0x108] sm:$0xff]
    %v7560 = vld [vmem:[%s3575 + $0x110] sm:$0xff]
    %v7561 = vld [vmem:[%s3575 + $0x118] sm:$0xff]
    %v7562 = vld [vmem:[%s3575 + $0x120] sm:$0xff]
    %v7563 = vld [vmem:[%s3575 + $0x128] sm:$0xff]
    %v7564 = vld [vmem:[%s3575 + $0x130] sm:$0xff]
    %v7565 = vld [vmem:[%s3575 + $0x138] sm:$0xff]
    %v7566 = vld [vmem:[%s3575 + $0x140] sm:$0xff]
    %v7567 = vld [vmem:[%s3575 + $0x148] sm:$0xff]
    %v7568 = vld [vmem:[%s3575 + $0x150] sm:$0xff]
    %v7569 = vld [vmem:[%s3575 + $0x158] sm:$0xff]
    %v7570 = vld [vmem:[%s3575 + $0x160] sm:$0xff]
    %v7571 = vld [vmem:[%s3575 + $0x168] sm:$0xff]
    %v7572 = vld [vmem:[%s3575 + $0x170] sm:$0xff]
    %v7573 = vld [vmem:[%s3575 + $0x178] sm:$0xff]
    %v7574 = vld [vmem:[%s3575 + $0x180] sm:$0xff]
    %v7575 = vld [vmem:[%s3575 + $0x188] sm:$0xff]
    %v7576 = vld [vmem:[%s3575 + $0x190] sm:$0xff]
    %v7577 = vld [vmem:[%s3575 + $0x198] sm:$0xff]
    %v7578 = vld [vmem:[%s3575 + $0x1a0] sm:$0xff]
    %v7579 = vld [vmem:[%s3575 + $0x1a8] sm:$0xff]
    %v7580 = vld [vmem:[%s3575 + $0x1b0] sm:$0xff]
    %v7581 = vld [vmem:[%s3575 + $0x1b8] sm:$0xff]
    %v7583 = vunpack.c.l.b16 %v7525
    %v7584 = vunpack.c.h.b16 %v7525
    %v7585 = vpack.c.b16 %v7583, %v7583
    %v7586 = vpack.c.b16 %v7584, %v7584
    %v7587 = vrot.slane %v7585, 1
    %v7588 = vrot.slane %v7586, 1
    %v7646 = vunpack.c.l.b16 %v7526
    %v7647 = vunpack.c.h.b16 %v7526
    %v7648 = vunpack.c.l.b16 %v7527
    %v7649 = vunpack.c.h.b16 %v7527
    %v7650 = vunpack.c.l.b16 %v7528
    %v7651 = vunpack.c.h.b16 %v7528
    %v7652 = vunpack.c.l.b16 %v7529
    %v7653 = vunpack.c.h.b16 %v7529
    %v7654 = vunpack.c.l.b16 %v7530
    %v7655 = vunpack.c.h.b16 %v7530
    %v7656 = vunpack.c.l.b16 %v7531
    %v7657 = vunpack.c.h.b16 %v7531
    %v7658 = vunpack.c.l.b16 %v7532
    %v7659 = vunpack.c.h.b16 %v7532
    %v7660 = vunpack.c.l.b16 %v7533
    %v7661 = vunpack.c.h.b16 %v7533
    %v7662 = vunpack.c.l.b16 %v7534
    %v7663 = vunpack.c.h.b16 %v7534
    %v7664 = vunpack.c.l.b16 %v7535
    %v7665 = vunpack.c.h.b16 %v7535
    %v7666 = vunpack.c.l.b16 %v7536
    %v7667 = vunpack.c.h.b16 %v7536
    %v7668 = vunpack.c.l.b16 %v7537
    %v7669 = vunpack.c.h.b16 %v7537
    %v7670 = vunpack.c.l.b16 %v7538
    %v7671 = vunpack.c.h.b16 %v7538
    %v7672 = vunpack.c.l.b16 %v7539
    %v7673 = vunpack.c.h.b16 %v7539
    %v7674 = vunpack.c.l.b16 %v7540
    %v7675 = vunpack.c.h.b16 %v7540
    %v7676 = vunpack.c.l.b16 %v7541
    %v7677 = vunpack.c.h.b16 %v7541
    %v7678 = vunpack.c.l.b16 %v7542
    %v7679 = vunpack.c.h.b16 %v7542
    %v7680 = vunpack.c.l.b16 %v7543
    %v7681 = vunpack.c.h.b16 %v7543
    %v7682 = vunpack.c.l.b16 %v7544
    %v7683 = vunpack.c.h.b16 %v7544
    %v7684 = vunpack.c.l.b16 %v7545
    %v7685 = vunpack.c.h.b16 %v7545
    %v7686 = vunpack.c.l.b16 %v7546
    %v7687 = vunpack.c.h.b16 %v7546
    %v7688 = vunpack.c.l.b16 %v7547
    %v7689 = vunpack.c.h.b16 %v7547
    %v7690 = vunpack.c.l.b16 %v7548
    %v7691 = vunpack.c.h.b16 %v7548
    %v7692 = vunpack.c.l.b16 %v7549
    %v7693 = vunpack.c.h.b16 %v7549
    %v7694 = vunpack.c.l.b16 %v7550
    %v7695 = vunpack.c.h.b16 %v7550
    %v7696 = vunpack.c.l.b16 %v7551
    %v7697 = vunpack.c.h.b16 %v7551
    %v7698 = vunpack.c.l.b16 %v7552
    %v7699 = vunpack.c.h.b16 %v7552
    %v7700 = vunpack.c.l.b16 %v7553
    %v7701 = vunpack.c.h.b16 %v7553
    %v7702 = vunpack.c.l.b16 %v7554
    %v7703 = vunpack.c.h.b16 %v7554
    %v7704 = vunpack.c.l.b16 %v7555
    %v7705 = vunpack.c.h.b16 %v7555
    %v7706 = vunpack.c.l.b16 %v7556
    %v7707 = vunpack.c.h.b16 %v7556
    %v7708 = vunpack.c.l.b16 %v7557
    %v7709 = vunpack.c.h.b16 %v7557
    %v7710 = vunpack.c.l.b16 %v7558
    %v7711 = vunpack.c.h.b16 %v7558
    %v7712 = vunpack.c.l.b16 %v7559
    %v7713 = vunpack.c.h.b16 %v7559
    %v7714 = vunpack.c.l.b16 %v7560
    %v7715 = vunpack.c.h.b16 %v7560
    %v7716 = vunpack.c.l.b16 %v7561
    %v7717 = vunpack.c.h.b16 %v7561
    %v7718 = vunpack.c.l.b16 %v7562
    %v7719 = vunpack.c.h.b16 %v7562
    %v7720 = vunpack.c.l.b16 %v7563
    %v7721 = vunpack.c.h.b16 %v7563
    %v7722 = vunpack.c.l.b16 %v7564
    %v7723 = vunpack.c.h.b16 %v7564
    %v7724 = vunpack.c.l.b16 %v7565
    %v7725 = vunpack.c.h.b16 %v7565
    %v7726 = vunpack.c.l.b16 %v7566
    %v7727 = vunpack.c.h.b16 %v7566
    %v7728 = vunpack.c.l.b16 %v7567
    %v7729 = vunpack.c.h.b16 %v7567
    %v7730 = vunpack.c.l.b16 %v7568
    %v7731 = vunpack.c.h.b16 %v7568
    %v7732 = vunpack.c.l.b16 %v7569
    %v7733 = vunpack.c.h.b16 %v7569
    %v7734 = vunpack.c.l.b16 %v7570
    %v7735 = vunpack.c.h.b16 %v7570
    %v7736 = vunpack.c.l.b16 %v7571
    %v7737 = vunpack.c.h.b16 %v7571
    %v7738 = vunpack.c.l.b16 %v7572
    %v7739 = vunpack.c.h.b16 %v7572
    %v7740 = vunpack.c.l.b16 %v7573
    %v7741 = vunpack.c.h.b16 %v7573
    %v7742 = vunpack.c.l.b16 %v7574
    %v7743 = vunpack.c.h.b16 %v7574
    %v7744 = vunpack.c.l.b16 %v7575
    %v7745 = vunpack.c.h.b16 %v7575
    %v7746 = vunpack.c.l.b16 %v7576
    %v7747 = vunpack.c.h.b16 %v7576
    %v7748 = vunpack.c.l.b16 %v7577
    %v7749 = vunpack.c.h.b16 %v7577
    %v7750 = vunpack.c.l.b16 %v7578
    %v7751 = vunpack.c.h.b16 %v7578
    %v7752 = vunpack.c.l.b16 %v7579
    %v7753 = vunpack.c.h.b16 %v7579
    %v7754 = vunpack.c.l.b16 %v7580
    %v7755 = vunpack.c.h.b16 %v7580
    %v7756 = vunpack.c.l.b16 %v7581
    %v7757 = vunpack.c.h.b16 %v7581
    %v7758 = vpack.c.b16 %v7650, %v7646
    %v7759 = vpack.c.b16 %v7651, %v7647
    %v7760 = vpack.c.b16 %v7652, %v7648
    %v7761 = vpack.c.b16 %v7653, %v7649
    %v7762 = vpack.c.b16 %v7658, %v7654
    %v7763 = vpack.c.b16 %v7659, %v7655
    %v7764 = vpack.c.b16 %v7660, %v7656
    %v7765 = vpack.c.b16 %v7661, %v7657
    %v7766 = vpack.c.b16 %v7666, %v7662
    %v7767 = vpack.c.b16 %v7667, %v7663
    %v7768 = vpack.c.b16 %v7668, %v7664
    %v7769 = vpack.c.b16 %v7669, %v7665
    %v7770 = vpack.c.b16 %v7674, %v7670
    %v7771 = vpack.c.b16 %v7675, %v7671
    %v7772 = vpack.c.b16 %v7676, %v7672
    %v7773 = vpack.c.b16 %v7677, %v7673
    %v7774 = vpack.c.b16 %v7682, %v7678
    %v7775 = vpack.c.b16 %v7683, %v7679
    %v7776 = vpack.c.b16 %v7684, %v7680
    %v7777 = vpack.c.b16 %v7685, %v7681
    %v7778 = vpack.c.b16 %v7690, %v7686
    %v7779 = vpack.c.b16 %v7691, %v7687
    %v7780 = vpack.c.b16 %v7692, %v7688
    %v7781 = vpack.c.b16 %v7693, %v7689
    %v7782 = vpack.c.b16 %v7698, %v7694
    %v7783 = vpack.c.b16 %v7699, %v7695
    %v7784 = vpack.c.b16 %v7700, %v7696
    %v7785 = vpack.c.b16 %v7701, %v7697
    %v7786 = vpack.c.b16 %v7706, %v7702
    %v7787 = vpack.c.b16 %v7707, %v7703
    %v7788 = vpack.c.b16 %v7708, %v7704
    %v7789 = vpack.c.b16 %v7709, %v7705
    %v7790 = vpack.c.b16 %v7714, %v7710
    %v7791 = vpack.c.b16 %v7715, %v7711
    %v7792 = vpack.c.b16 %v7716, %v7712
    %v7793 = vpack.c.b16 %v7717, %v7713
    %v7794 = vpack.c.b16 %v7722, %v7718
    %v7795 = vpack.c.b16 %v7723, %v7719
    %v7796 = vpack.c.b16 %v7724, %v7720
    %v7797 = vpack.c.b16 %v7725, %v7721
    %v7798 = vpack.c.b16 %v7730, %v7726
    %v7799 = vpack.c.b16 %v7731, %v7727
    %v7800 = vpack.c.b16 %v7732, %v7728
    %v7801 = vpack.c.b16 %v7733, %v7729
    %v7802 = vpack.c.b16 %v7738, %v7734
    %v7803 = vpack.c.b16 %v7739, %v7735
    %v7804 = vpack.c.b16 %v7740, %v7736
    %v7805 = vpack.c.b16 %v7741, %v7737
    %v7806 = vpack.c.b16 %v7746, %v7742
    %v7807 = vpack.c.b16 %v7747, %v7743
    %v7808 = vpack.c.b16 %v7748, %v7744
    %v7809 = vpack.c.b16 %v7749, %v7745
    %v7810 = vpack.c.b16 %v7754, %v7750
    %v7811 = vpack.c.b16 %v7755, %v7751
    %v7812 = vpack.c.b16 %v7756, %v7752
    %v7813 = vpack.c.b16 %v7757, %v7753
    %v7871 = vsel %vm3117, %v7588, 0
    %7873 = vmatprep.subr.bf16.mxu0 %v7759
    %7874 = vmatpush1.bf16.msra.mxu0 %v7758
    %7875 = vmatprep.subr.bf16.mxu0 %v7763
    %7876 = vmatpush1.bf16.msra.mxu0 %v7762
    %7877 = vmatprep.subr.bf16.mxu0 %v7767
    %7878 = vmatpush1.bf16.msra.mxu0 %v7766
    %7879 = vmatprep.subr.bf16.mxu0 %v7771
    %7880 = vmatpush1.bf16.msra.mxu0 %v7770
    %7881 = vmatprep.subr.bf16.mxu0 %v7775
    %7882 = vmatpush1.bf16.msra.mxu0 %v7774
    %7883 = vmatprep.subr.bf16.mxu0 %v7779
    %7884 = vmatpush1.bf16.msra.mxu0 %v7778
    %7885 = vmatprep.subr.bf16.mxu0 %v7783
    %7886 = vmatpush1.bf16.msra.mxu0 %v7782
    %7887 = vmatprep.subr.bf16.mxu0 %v7787
    %7888 = vmatpush1.bf16.msra.mxu0 %v7786
    %7889 = vmatprep.subr.bf16.mxu0 %v7791
    %7890 = vmatpush1.bf16.msra.mxu0 %v7790
    %7891 = vmatprep.subr.bf16.mxu0 %v7795
    %7892 = vmatpush1.bf16.msra.mxu0 %v7794
    %7893 = vmatprep.subr.bf16.mxu0 %v7799
    %7894 = vmatpush1.bf16.msra.mxu0 %v7798
    %7895 = vmatprep.subr.bf16.mxu0 %v7803
    %7896 = vmatpush1.bf16.msra.mxu0 %v7802
    %7897 = vmatprep.subr.bf16.mxu0 %v7807
    %7898 = vmatpush1.bf16.msra.mxu0 %v7806
    %7899 = vmatprep.subr.bf16.mxu0 %v7811
    %7900 = vmatpush1.bf16.msra.mxu0 %v7810
    %7901 = vmatprep.subr.bf16.mxu0 0
    %7902 = vmatpush1.bf16.msra.mxu0 0
    %7903 = vmatprep.subr.bf16.mxu0 0
    %7904 = vmatpush1.bf16.msra.mxu0 0
    %7905 = vmatprep.mubr.bf16.mxu0 %v7871
    %7906 = vmatmul.mubr.bf16.gmra.mrb[0].mxu0 %v7587
    %v7907 = vpop.f32.mrb[0].mxu0
    %v7908 = vadd.f32 0.0, %v7907
    %v7909 = vpop.f32.mrb[0].mxu0
    %v7910 = vadd.f32 0.0, %v7909
    %v7911 = vpop.f32.mrb[0].mxu0
    %v7912 = vpop.f32.mrb[0].mxu0
    %7913 = vdwg.mxu0
    %7914 = vmatprep.subr.bf16.mxu0 %v7761
    %7915 = vmatpush1.bf16.msra.mxu0 %v7760
    %7916 = vmatprep.subr.bf16.mxu0 %v7765
    %7917 = vmatpush1.bf16.msra.mxu0 %v7764
    %7918 = vmatprep.subr.bf16.mxu0 %v7769
    %7919 = vmatpush1.bf16.msra.mxu0 %v7768
    %7920 = vmatprep.subr.bf16.mxu0 %v7773
    %7921 = vmatpush1.bf16.msra.mxu0 %v7772
    %7922 = vmatprep.subr.bf16.mxu0 %v7777
    %7923 = vmatpush1.bf16.msra.mxu0 %v7776
    %7924 = vmatprep.subr.bf16.mxu0 %v7781
    %7925 = vmatpush1.bf16.msra.mxu0 %v7780
    %7926 = vmatprep.subr.bf16.mxu0 %v7785
    %7927 = vmatpush1.bf16.msra.mxu0 %v7784
    %7928 = vmatprep.subr.bf16.mxu0 %v7789
    %7929 = vmatpush1.bf16.msra.mxu0 %v7788
    %7930 = vmatprep.subr.bf16.mxu0 %v7793
    %7931 = vmatpush1.bf16.msra.mxu0 %v7792
    %7932 = vmatprep.subr.bf16.mxu0 %v7797
    %7933 = vmatpush1.bf16.msra.mxu0 %v7796
    %7934 = vmatprep.subr.bf16.mxu0 %v7801
    %7935 = vmatpush1.bf16.msra.mxu0 %v7800
    %7936 = vmatprep.subr.bf16.mxu0 %v7805
    %7937 = vmatpush1.bf16.msra.mxu0 %v7804
    %7938 = vmatprep.subr.bf16.mxu0 %v7809
    %7939 = vmatpush1.bf16.msra.mxu0 %v7808
    %7940 = vmatprep.subr.bf16.mxu0 %v7813
    %7941 = vmatpush1.bf16.msra.mxu0 %v7812
    %7942 = vmatprep.subr.bf16.mxu0 0
    %7943 = vmatpush1.bf16.msra.mxu0 0
    %7944 = vmatprep.subr.bf16.mxu0 0
    %7945 = vmatpush1.bf16.msra.mxu0 0
    %7946 = vmatprep.mubr.bf16.mxu0 %v7871
    %7947 = vmatmul.mubr.bf16.gmra.mrb[0].mxu0 %v7587
    %v7948 = vpop.f32.mrb[0].mxu0
    %v7949 = vadd.f32 0.0, %v7948
    %v7950 = vpop.f32.mrb[0].mxu0
    %v7951 = vadd.f32 0.0, %v7950
    %v7952 = vpop.f32.mrb[0].mxu0
    %v7953 = vpop.f32.mrb[0].mxu0
    %7954 = vdwg.mxu0
    %v7955 = vadd.f32 %v7478, %v7908
    %v7956 = vadd.f32 %v7480, %v7910
    %v7957 = vadd.f32 %v7519, %v7949
    %v7958 = vadd.f32 %v7521, %v7951
    %v7959 = vmax.f32 %v7955, %v7957
    %v7960 = vmax.f32 %v7956, %v7958
    %v7963 = vrot.slane %v7959, 1
    %v7964 = vrot.slane %v7960, 1
    %v7967 = vmax.f32 %v7959, %v7963
    %v7968 = vmax.f32 %v7960, %v7964
    %v7971 = vrot.slane %v7967, 1
    %v7972 = vrot.slane %v7968, 1
    %v7975 = vrot.slane %v7967, 2
    %v7976 = vrot.slane %v7968, 2
    %v7979 = vsel %vm1085, %v7967, %v7971
    %v7980 = vsel %vm1085, %v7968, %v7972
    %v7981 = vsel %vm1088, %v7979, %v7975
    %v7982 = vsel %vm1088, %v7980, %v7976
    %v7983 = vld [vmem:[%s6] sm:$0x3]
    %v7985 = vlaneseq
    %v7986 = vshrl.u32 %v7985, 7
    %v7987 = vsub.s32 0, %v7986
    %v7988 = vrot.slane %v7983, %v7987
    %v7989 = vlaneseq
    %v7990 = vshrl.u32 %v7989, 7
    %v7991 = vsub.s32 1, %v7990
    %v7992 = vrot.slane %v7983, %v7991
    %v7995 = vadd.f32 %v7981, %v7988
    %v7996 = vadd.f32 %v7982, %v7992
    %vm7997 = vcmp.gt.f32.partialorder %v7995, 0.0
    %vm7998 = vcmp.gt.f32.partialorder %v7996, 0.0
    %v7999 = vmin.f32 %v7995, 0.0
    %v8000 = vmin.f32 %v7996, 0.0
    %v8001 = vmul.f32 %v7999, 1.442695
    %v8002 = vpow.pop %v8001
    %v8003 = vmul.f32 %v8000, 1.442695
    %v8004 = vpow.pop %v8003
    %v8005 = vsub.f32 %v8002, 1.0
    %v8006 = vsub.f32 %v8004, 1.0
    %v8007 = vsel %vm7997, %v7995, %v8005
    %v8008 = vsel %vm7998, %v7996, %v8006
    %v8009 = vpack.c.bf16 %v8007, %v8007
    %v8010 = vpack.c.bf16 %v8008, %v8008
    %v8013 = vcombine.low %v8009, %v8010
    %v8015 = vunpack.c.l.s4 1966171168
    %v8016 = vunpack.c.0.s8 %v8015
    %v8017 = vlaneseq
    %v8018 = vshrl.u32 %v8017, 7
    %v8019 = vsub.s32 %v8016, %v8018
    %v8020 = vrot.slane %v8013, %v8019
    %v8022 = vunpack.c.l.s4 1966171168
    %v8023 = vunpack.c.0.s8 %v8022
    %v8024 = vlaneseq
    %v8025 = vshrl.u32 %v8024, 7
    %v8026 = vsub.s32 %v8023, %v8025
    %v8027 = vrot.slane %v8020, %v8026
    %v8029 = vshll.u32 %v8027, 16
    %vm8032 = vmand %vm100, %vm1186
    %vm8033 = vsmask.f32 7942
    %vm8034 = vmand %vm4079, %vm8033
    %vm8035 = vmor %vm8034, %vm8032
    %v8036 = vld [vmem:[#allocation4] sm:$0x3]
    %v8037 = vsel %vm8035, %v8029, %v8036
    %8038 = vst [vmem:[#allocation4] sm:$0x3] %v8037
    %v8040 = vld [vmem:[#allocation4 + $0x2] sm:$0x3]
    %v8041 = vsel %vm8035, %v8027, %v8040
    %8042 = vst [vmem:[#allocation4 + $0x2] sm:$0x3] %v8041
    %v8043 = vcombine.high %v8020, %v8020
    %v8045 = vunpack.c.l.s4 1966171168
    %v8046 = vunpack.c.0.s8 %v8045
    %v8047 = vlaneseq
    %v8048 = vshrl.u32 %v8047, 7
    %v8049 = vsub.s32 %v8046, %v8048
    %v8050 = vrot.slane %v8043, %v8049
    %v8052 = vshll.u32 %v8050, 16
    %v8055 = vld [vmem:[#allocation4 + $0x4] sm:$0x3]
    %v8056 = vsel %vm8035, %v8052, %v8055
    %8057 = vst [vmem:[#allocation4 + $0x4] sm:$0x3] %v8056
    %v8058 = vld [vmem:[#allocation4] sm:$0x3f]
    %v8059 = vld [vmem:[#allocation10] sm:$0xf]
    %v8060 = vld [vmem:[#allocation10 + $0x4] sm:$0xf]
    %v8061 = vld [vmem:[#allocation10 + $0x8] sm:$0xf]
    %v8062 = vld [vmem:[#allocation10 + $0xc] sm:$0xf]
    %v8063 = vld [vmem:[#allocation10 + $0x10] sm:$0xf]
    %v8064 = vld [vmem:[#allocation10 + $0x14] sm:$0xf]
    %v8065 = vld [vmem:[#allocation10 + $0x18] sm:$0xf]
    %v8066 = vld [vmem:[#allocation10 + $0x1c] sm:$0xf]
    %v8067 = vld [vmem:[#allocation10 + $0x20] sm:$0xf]
    %v8068 = vld [vmem:[#allocation10 + $0x24] sm:$0xf]
    %v8069 = vld [vmem:[#allocation10 + $0x28] sm:$0xf]
    %v8070 = vld [vmem:[#allocation10 + $0x2c] sm:$0xf]
    %v8071 = vld [vmem:[#allocation10 + $0x30] sm:$0xf]
    %v8072 = vld [vmem:[#allocation10 + $0x34] sm:$0xf]
    %v8073 = vld [vmem:[#allocation10 + $0x38] sm:$0xf]
    %v8074 = vld [vmem:[#allocation10 + $0x3c] sm:$0xf]
    %v8075 = vld [vmem:[#allocation10 + $0x40] sm:$0xf]
    %v8076 = vld [vmem:[#allocation10 + $0x44] sm:$0xf]
    %v8077 = vld [vmem:[#allocation10 + $0x48] sm:$0xf]
    %v8078 = vld [vmem:[#allocation10 + $0x4c] sm:$0xf]
    %v8079 = vld [vmem:[#allocation10 + $0x50] sm:$0xf]
    %v8080 = vld [vmem:[#allocation10 + $0x54] sm:$0xf]
    %v8081 = vld [vmem:[#allocation10 + $0x58] sm:$0xf]
    %v8082 = vld [vmem:[#allocation10 + $0x5c] sm:$0xf]
    %v8083 = vld [vmem:[#allocation10 + $0x60] sm:$0xf]
    %v8084 = vld [vmem:[#allocation10 + $0x64] sm:$0xf]
    %v8085 = vld [vmem:[#allocation10 + $0x68] sm:$0xf]
    %v8086 = vld [vmem:[#allocation10 + $0x6c] sm:$0xf]
    %v8087 = vld [vmem:[#allocation10 + $0x70] sm:$0xf]
    %v8088 = vld [vmem:[#allocation10 + $0x74] sm:$0xf]
    %v8089 = vld [vmem:[#allocation10 + $0x78] sm:$0xf]
    %v8090 = vld [vmem:[#allocation10 + $0x7c] sm:$0xf]
    %v8091 = vld [vmem:[#allocation10 + $0x80] sm:$0xf]
    %v8092 = vld [vmem:[#allocation10 + $0x84] sm:$0xf]
    %v8093 = vld [vmem:[#allocation10 + $0x88] sm:$0xf]
    %v8094 = vld [vmem:[#allocation10 + $0x8c] sm:$0xf]
    %v8095 = vld [vmem:[#allocation10 + $0x90] sm:$0xf]
    %v8096 = vld [vmem:[#allocation10 + $0x94] sm:$0xf]
    %v8097 = vld [vmem:[#allocation10 + $0x98] sm:$0xf]
    %v8098 = vld [vmem:[#allocation10 + $0x9c] sm:$0xf]
    %v8099 = vld [vmem:[#allocation10 + $0xa0] sm:$0xf]
    %v8100 = vld [vmem:[#allocation10 + $0xa4] sm:$0xf]
    %v8101 = vld [vmem:[#allocation10 + $0xa8] sm:$0xf]
    %v8102 = vld [vmem:[#allocation10 + $0xac] sm:$0xf]
    %v8103 = vld [vmem:[#allocation10 + $0xb0] sm:$0xf]
    %v8104 = vld [vmem:[#allocation10 + $0xb4] sm:$0xf]
    %v8105 = vld [vmem:[#allocation10 + $0xb8] sm:$0xf]
    %v8106 = vld [vmem:[#allocation10 + $0xbc] sm:$0xf]
    %v8107 = vld [vmem:[#allocation10 + $0xc0] sm:$0xf]
    %v8108 = vld [vmem:[#allocation10 + $0xc4] sm:$0xf]
    %v8109 = vld [vmem:[#allocation10 + $0xc8] sm:$0xf]
    %v8110 = vld [vmem:[#allocation10 + $0xcc] sm:$0xf]
    %v8111 = vld [vmem:[#allocation10 + $0xd0] sm:$0xf]
    %v8112 = vld [vmem:[#allocation10 + $0xd4] sm:$0xf]
    %v8113 = vld [vmem:[#allocation10 + $0xd8] sm:$0xf]
    %v8114 = vld [vmem:[#allocation10 + $0xdc] sm:$0xf]
    %v8115 = vld [vmem:[#allocation10 + $0xe0] sm:$0xf]
    %v8116 = vld [vmem:[#allocation10 + $0xe4] sm:$0xf]
    %v8117 = vld [vmem:[#allocation10 + $0xe8] sm:$0xf]
    %v8118 = vld [vmem:[#allocation10 + $0xec] sm:$0xf]
    %v8119 = vld [vmem:[#allocation10 + $0xf0] sm:$0xf]
    %v8120 = vld [vmem:[#allocation10 + $0xf4] sm:$0xf]
    %v8121 = vld [vmem:[#allocation10 + $0xf8] sm:$0xf]
    %v8122 = vld [vmem:[#allocation10 + $0xfc] sm:$0xf]
    %v8123 = vld [vmem:[#allocation10 + $0x100] sm:$0xf]
    %v8124 = vld [vmem:[#allocation10 + $0x104] sm:$0xf]
    %v8125 = vld [vmem:[#allocation10 + $0x108] sm:$0xf]
    %v8126 = vld [vmem:[#allocation10 + $0x10c] sm:$0xf]
    %v8127 = vld [vmem:[#allocation10 + $0x110] sm:$0xf]
    %v8128 = vld [vmem:[#allocation10 + $0x114] sm:$0xf]
    %v8129 = vld [vmem:[#allocation10 + $0x118] sm:$0xf]
    %v8130 = vld [vmem:[#allocation10 + $0x11c] sm:$0xf]
    %v8131 = vld [vmem:[#allocation10 + $0x120] sm:$0xf]
    %v8132 = vld [vmem:[#allocation10 + $0x124] sm:$0xf]
    %v8133 = vld [vmem:[#allocation10 + $0x128] sm:$0xf]
    %v8134 = vld [vmem:[#allocation10 + $0x12c] sm:$0xf]
    %v8135 = vld [vmem:[#allocation10 + $0x130] sm:$0xf]
    %v8136 = vld [vmem:[#allocation10 + $0x134] sm:$0xf]
    %v8137 = vld [vmem:[#allocation10 + $0x138] sm:$0xf]
    %v8138 = vld [vmem:[#allocation10 + $0x13c] sm:$0xf]
    %v8139 = vld [vmem:[#allocation10 + $0x140] sm:$0xf]
    %v8140 = vld [vmem:[#allocation10 + $0x144] sm:$0xf]
    %v8141 = vld [vmem:[#allocation10 + $0x148] sm:$0xf]
    %v8142 = vld [vmem:[#allocation10 + $0x14c] sm:$0xf]
    %v8143 = vld [vmem:[#allocation10 + $0x150] sm:$0xf]
    %v8144 = vld [vmem:[#allocation10 + $0x154] sm:$0xf]
    %v8145 = vld [vmem:[#allocation10 + $0x158] sm:$0xf]
    %v8146 = vld [vmem:[#allocation10 + $0x15c] sm:$0xf]
    %v8147 = vld [vmem:[#allocation10 + $0x160] sm:$0xf]
    %v8148 = vld [vmem:[#allocation10 + $0x164] sm:$0xf]
    %v8149 = vld [vmem:[#allocation10 + $0x168] sm:$0xf]
    %v8150 = vld [vmem:[#allocation10 + $0x16c] sm:$0xf]
    %v8151 = vld [vmem:[#allocation10 + $0x170] sm:$0xf]
    %v8152 = vld [vmem:[#allocation10 + $0x174] sm:$0xf]
    %v8153 = vld [vmem:[#allocation10 + $0x178] sm:$0xf]
    %v8154 = vld [vmem:[#allocation10 + $0x17c] sm:$0xf]
    %v8155 = vld [vmem:[%s8] sm:$0x1]
    %v8157 = vlaneseq
    %v8158 = vshrl.u32 %v8157, 7
    %v8159 = vsub.s32 0, %v8158
    %v8160 = vrot.slane %v8155, %v8159
    %v8163 = vcombine.high %v8058, %v8058
    %v8165 = vunpack.c.l.s4 1966171168
    %v8166 = vunpack.c.0.s8 %v8165
    %v8167 = vlaneseq
    %v8168 = vshrl.u32 %v8167, 7
    %v8169 = vsub.s32 %v8166, %v8168
    %v8170 = vrot.slane %v8058, %v8169
    %v8172 = vunpack.c.l.s4 1966171168
    %v8173 = vunpack.c.0.s8 %v8172
    %v8174 = vlaneseq
    %v8175 = vshrl.u32 %v8174, 7
    %v8176 = vsub.s32 %v8173, %v8175
    %v8177 = vrot.slane %v8163, %v8176
    %v8178 = vcombine.high %v8170, %v8170
    %v8179 = vcombine.high %v8177, %v8177
    %v8181 = vunpack.c.l.s4 1966171168
    %v8182 = vunpack.c.0.s8 %v8181
    %v8183 = vlaneseq
    %v8184 = vshrl.u32 %v8183, 7
    %v8185 = vsub.s32 %v8182, %v8184
    %v8186 = vrot.slane %v8170, %v8185
    %v8188 = vunpack.c.l.s4 1966171168
    %v8189 = vunpack.c.0.s8 %v8188
    %v8190 = vlaneseq
    %v8191 = vshrl.u32 %v8190, 7
    %v8192 = vsub.s32 %v8189, %v8191
    %v8193 = vrot.slane %v8177, %v8192
    %v8195 = vunpack.c.l.s4 1966171168
    %v8196 = vunpack.c.0.s8 %v8195
    %v8197 = vlaneseq
    %v8198 = vshrl.u32 %v8197, 7
    %v8199 = vsub.s32 %v8196, %v8198
    %v8200 = vrot.slane %v8178, %v8199
    %v8202 = vunpack.c.l.s4 1966171168
    %v8203 = vunpack.c.0.s8 %v8202
    %v8204 = vlaneseq
    %v8205 = vshrl.u32 %v8204, 7
    %v8206 = vsub.s32 %v8203, %v8205
    %v8207 = vrot.slane %v8179, %v8206
    %v8208 = vcombine.high %v8186, %v8186
    %v8209 = vcombine.high %v8200, %v8200
    %v8312 = vunpack.c.l.b16 %v8059
    %v8313 = vunpack.c.l.b16 %v8060
    %v8314 = vunpack.c.l.b16 %v8061
    %v8315 = vunpack.c.l.b16 %v8062
    %v8316 = vunpack.c.l.b16 %v8063
    %v8317 = vunpack.c.l.b16 %v8064
    %v8318 = vunpack.c.l.b16 %v8065
    %v8319 = vunpack.c.l.b16 %v8066
    %v8320 = vunpack.c.l.b16 %v8067
    %v8321 = vunpack.c.l.b16 %v8068
    %v8322 = vunpack.c.l.b16 %v8069
    %v8323 = vunpack.c.l.b16 %v8070
    %v8324 = vunpack.c.l.b16 %v8071
    %v8325 = vunpack.c.l.b16 %v8072
    %v8326 = vunpack.c.l.b16 %v8073
    %v8327 = vunpack.c.l.b16 %v8074
    %v8328 = vunpack.c.l.b16 %v8075
    %v8329 = vunpack.c.l.b16 %v8076
    %v8330 = vunpack.c.l.b16 %v8077
    %v8331 = vunpack.c.l.b16 %v8078
    %v8332 = vunpack.c.l.b16 %v8079
    %v8333 = vunpack.c.l.b16 %v8080
    %v8334 = vunpack.c.l.b16 %v8081
    %v8335 = vunpack.c.l.b16 %v8082
    %v8336 = vunpack.c.l.b16 %v8083
    %v8337 = vunpack.c.l.b16 %v8084
    %v8338 = vunpack.c.l.b16 %v8085
    %v8339 = vunpack.c.l.b16 %v8086
    %v8340 = vunpack.c.l.b16 %v8087
    %v8341 = vunpack.c.l.b16 %v8088
    %v8342 = vunpack.c.l.b16 %v8089
    %v8343 = vunpack.c.l.b16 %v8090
    %v8344 = vunpack.c.l.b16 %v8091
    %v8345 = vunpack.c.l.b16 %v8092
    %v8346 = vunpack.c.l.b16 %v8093
    %v8347 = vunpack.c.l.b16 %v8094
    %v8348 = vunpack.c.l.b16 %v8095
    %v8349 = vunpack.c.l.b16 %v8096
    %v8350 = vunpack.c.l.b16 %v8097
    %v8351 = vunpack.c.l.b16 %v8098
    %v8352 = vunpack.c.l.b16 %v8099
    %v8353 = vunpack.c.l.b16 %v8100
    %v8354 = vunpack.c.l.b16 %v8101
    %v8355 = vunpack.c.l.b16 %v8102
    %v8356 = vunpack.c.l.b16 %v8103
    %v8357 = vunpack.c.l.b16 %v8104
    %v8358 = vunpack.c.l.b16 %v8105
    %v8359 = vunpack.c.l.b16 %v8106
    %v8360 = vunpack.c.l.b16 %v8107
    %v8361 = vunpack.c.l.b16 %v8108
    %v8362 = vunpack.c.l.b16 %v8109
    %v8363 = vunpack.c.l.b16 %v8110
    %v8364 = vunpack.c.l.b16 %v8111
    %v8365 = vunpack.c.l.b16 %v8112
    %v8366 = vunpack.c.l.b16 %v8113
    %v8367 = vunpack.c.l.b16 %v8114
    %v8368 = vunpack.c.l.b16 %v8115
    %v8369 = vunpack.c.l.b16 %v8116
    %v8370 = vunpack.c.l.b16 %v8117
    %v8371 = vunpack.c.l.b16 %v8118
    %v8372 = vunpack.c.l.b16 %v8119
    %v8373 = vunpack.c.l.b16 %v8120
    %v8374 = vunpack.c.l.b16 %v8121
    %v8375 = vunpack.c.l.b16 %v8122
    %v8376 = vunpack.c.l.b16 %v8123
    %v8377 = vunpack.c.l.b16 %v8124
    %v8378 = vunpack.c.l.b16 %v8125
    %v8379 = vunpack.c.l.b16 %v8126
    %v8380 = vunpack.c.l.b16 %v8127
    %v8381 = vunpack.c.l.b16 %v8128
    %v8382 = vunpack.c.l.b16 %v8129
    %v8383 = vunpack.c.l.b16 %v8130
    %v8384 = vunpack.c.l.b16 %v8131
    %v8385 = vunpack.c.l.b16 %v8132
    %v8386 = vunpack.c.l.b16 %v8133
    %v8387 = vunpack.c.l.b16 %v8134
    %v8388 = vunpack.c.l.b16 %v8135
    %v8389 = vunpack.c.l.b16 %v8136
    %v8390 = vunpack.c.l.b16 %v8137
    %v8391 = vunpack.c.l.b16 %v8138
    %v8392 = vunpack.c.l.b16 %v8139
    %v8393 = vunpack.c.l.b16 %v8140
    %v8394 = vunpack.c.l.b16 %v8141
    %v8395 = vunpack.c.l.b16 %v8142
    %v8396 = vunpack.c.l.b16 %v8143
    %v8397 = vunpack.c.l.b16 %v8144
    %v8398 = vunpack.c.l.b16 %v8145
    %v8399 = vunpack.c.l.b16 %v8146
    %v8400 = vunpack.c.l.b16 %v8147
    %v8401 = vunpack.c.l.b16 %v8148
    %v8402 = vunpack.c.l.b16 %v8149
    %v8403 = vunpack.c.l.b16 %v8150
    %v8404 = vunpack.c.l.b16 %v8151
    %v8405 = vunpack.c.l.b16 %v8152
    %v8406 = vunpack.c.l.b16 %v8153
    %v8407 = vunpack.c.l.b16 %v8154
    %v8408 = vpack.c.b16 %v8313, %v8312
    %v8409 = vpack.c.b16 %v8315, %v8314
    %v8410 = vpack.c.b16 %v8317, %v8316
    %v8411 = vpack.c.b16 %v8319, %v8318
    %v8412 = vpack.c.b16 %v8321, %v8320
    %v8413 = vpack.c.b16 %v8323, %v8322
    %v8414 = vpack.c.b16 %v8325, %v8324
    %v8415 = vpack.c.b16 %v8327, %v8326
    %v8416 = vpack.c.b16 %v8329, %v8328
    %v8417 = vpack.c.b16 %v8331, %v8330
    %v8418 = vpack.c.b16 %v8333, %v8332
    %v8419 = vpack.c.b16 %v8335, %v8334
    %v8420 = vpack.c.b16 %v8337, %v8336
    %v8421 = vpack.c.b16 %v8339, %v8338
    %v8422 = vpack.c.b16 %v8341, %v8340
    %v8423 = vpack.c.b16 %v8343, %v8342
    %v8424 = vpack.c.b16 %v8345, %v8344
    %v8425 = vpack.c.b16 %v8347, %v8346
    %v8426 = vpack.c.b16 %v8349, %v8348
    %v8427 = vpack.c.b16 %v8351, %v8350
    %v8428 = vpack.c.b16 %v8353, %v8352
    %v8429 = vpack.c.b16 %v8355, %v8354
    %v8430 = vpack.c.b16 %v8357, %v8356
    %v8431 = vpack.c.b16 %v8359, %v8358
    %v8432 = vpack.c.b16 %v8361, %v8360
    %v8433 = vpack.c.b16 %v8363, %v8362
    %v8434 = vpack.c.b16 %v8365, %v8364
    %v8435 = vpack.c.b16 %v8367, %v8366
    %v8436 = vpack.c.b16 %v8369, %v8368
    %v8437 = vpack.c.b16 %v8371, %v8370
    %v8438 = vpack.c.b16 %v8373, %v8372
    %v8439 = vpack.c.b16 %v8375, %v8374
    %v8440 = vpack.c.b16 %v8377, %v8376
    %v8441 = vpack.c.b16 %v8379, %v8378
    %v8442 = vpack.c.b16 %v8381, %v8380
    %v8443 = vpack.c.b16 %v8383, %v8382
    %v8444 = vpack.c.b16 %v8385, %v8384
    %v8445 = vpack.c.b16 %v8387, %v8386
    %v8446 = vpack.c.b16 %v8389, %v8388
    %v8447 = vpack.c.b16 %v8391, %v8390
    %v8448 = vpack.c.b16 %v8393, %v8392
    %v8449 = vpack.c.b16 %v8395, %v8394
    %v8450 = vpack.c.b16 %v8397, %v8396
    %v8451 = vpack.c.b16 %v8399, %v8398
    %v8452 = vpack.c.b16 %v8401, %v8400
    %v8453 = vpack.c.b16 %v8403, %v8402
    %v8454 = vpack.c.b16 %v8405, %v8404
    %v8455 = vpack.c.b16 %v8407, %v8406
    %8504 = vmatprep.subr.bf16.mxu0 0
    %8505 = vmatpush1.bf16.msra.mxu0 %v8408
    %8506 = vmatprep.subr.bf16.mxu0 0
    %8507 = vmatpush1.bf16.msra.mxu0 %v8409
    %8508 = vmatprep.subr.bf16.mxu0 0
    %8509 = vmatpush1.bf16.msra.mxu0 %v8410
    %8510 = vmatprep.subr.bf16.mxu0 0
    %8511 = vmatpush1.bf16.msra.mxu0 %v8411
    %8512 = vmatprep.subr.bf16.mxu0 0
    %8513 = vmatpush1.bf16.msra.mxu0 %v8412
    %8514 = vmatprep.subr.bf16.mxu0 0
    %8515 = vmatpush1.bf16.msra.mxu0 %v8413
    %8516 = vmatprep.subr.bf16.mxu0 0
    %8517 = vmatpush1.bf16.msra.mxu0 %v8414
    %8518 = vmatprep.subr.bf16.mxu0 0
    %8519 = vmatpush1.bf16.msra.mxu0 %v8415
    %8520 = vmatprep.subr.bf16.mxu0 0
    %8521 = vmatpush1.bf16.msra.mxu0 %v8416
    %8522 = vmatprep.subr.bf16.mxu0 0
    %8523 = vmatpush1.bf16.msra.mxu0 %v8417
    %8524 = vmatprep.subr.bf16.mxu0 0
    %8525 = vmatpush1.bf16.msra.mxu0 %v8418
    %8526 = vmatprep.subr.bf16.mxu0 0
    %8527 = vmatpush1.bf16.msra.mxu0 %v8419
    %8528 = vmatprep.subr.bf16.mxu0 0
    %8529 = vmatpush1.bf16.msra.mxu0 %v8420
    %8530 = vmatprep.subr.bf16.mxu0 0
    %8531 = vmatpush1.bf16.msra.mxu0 %v8421
    %8532 = vmatprep.subr.bf16.mxu0 0
    %8533 = vmatpush1.bf16.msra.mxu0 %v8422
    %8534 = vmatprep.subr.bf16.mxu0 0
    %8535 = vmatpush1.bf16.msra.mxu0 %v8423
    %8536 = vmatprep.mubr.bf16.mxu0 %v8200
    %8537 = vmatmul.mubr.bf16.gmra.mrb[0].mxu0 %v8186
    %v8538 = vpop.f32.mrb[0].mxu0
    %v8539 = vadd.f32 %v8160, %v8538
    %v8540 = vpop.f32.mrb[0].mxu0
    %v8541 = vpop.f32.mrb[0].mxu0
    %v8542 = vpop.f32.mrb[0].mxu0
    %8543 = vdwg.mxu0
    %8544 = vmatprep.subr.bf16.mxu0 0
    %8545 = vmatpush1.bf16.msra.mxu0 %v8424
    %8546 = vmatprep.subr.bf16.mxu0 0
    %8547 = vmatpush1.bf16.msra.mxu0 %v8425
    %8548 = vmatprep.subr.bf16.mxu0 0
    %8549 = vmatpush1.bf16.msra.mxu0 %v8426
    %8550 = vmatprep.subr.bf16.mxu0 0
    %8551 = vmatpush1.bf16.msra.mxu0 %v8427
    %8552 = vmatprep.subr.bf16.mxu0 0
    %8553 = vmatpush1.bf16.msra.mxu0 %v8428
    %8554 = vmatprep.subr.bf16.mxu0 0
    %8555 = vmatpush1.bf16.msra.mxu0 %v8429
    %8556 = vmatprep.subr.bf16.mxu0 0
    %8557 = vmatpush1.bf16.msra.mxu0 %v8430
    %8558 = vmatprep.subr.bf16.mxu0 0
    %8559 = vmatpush1.bf16.msra.mxu0 %v8431
    %8560 = vmatprep.subr.bf16.mxu0 0
    %8561 = vmatpush1.bf16.msra.mxu0 %v8432
    %8562 = vmatprep.subr.bf16.mxu0 0
    %8563 = vmatpush1.bf16.msra.mxu0 %v8433
    %8564 = vmatprep.subr.bf16.mxu0 0
    %8565 = vmatpush1.bf16.msra.mxu0 %v8434
    %8566 = vmatprep.subr.bf16.mxu0 0
    %8567 = vmatpush1.bf16.msra.mxu0 %v8435
    %8568 = vmatprep.subr.bf16.mxu0 0
    %8569 = vmatpush1.bf16.msra.mxu0 %v8436
    %8570 = vmatprep.subr.bf16.mxu0 0
    %8571 = vmatpush1.bf16.msra.mxu0 %v8437
    %8572 = vmatprep.subr.bf16.mxu0 0
    %8573 = vmatpush1.bf16.msra.mxu0 %v8438
    %8574 = vmatprep.subr.bf16.mxu0 0
    %8575 = vmatpush1.bf16.msra.mxu0 %v8439
    %8576 = vmatprep.mubr.bf16.mxu0 %v8209
    %8577 = vmatmul.mubr.bf16.gmra.mrb[0].mxu0 %v8208
    %v8578 = vpop.f32.mrb[0].mxu0
    %v8579 = vadd.f32 %v8539, %v8578
    %v8580 = vpop.f32.mrb[0].mxu0
    %v8581 = vpop.f32.mrb[0].mxu0
    %v8582 = vpop.f32.mrb[0].mxu0
    %8583 = vdwg.mxu0
    %8584 = vmatprep.subr.bf16.mxu0 0
    %8585 = vmatpush1.bf16.msra.mxu0 %v8440
    %8586 = vmatprep.subr.bf16.mxu0 0
    %8587 = vmatpush1.bf16.msra.mxu0 %v8441
    %8588 = vmatprep.subr.bf16.mxu0 0
    %8589 = vmatpush1.bf16.msra.mxu0 %v8442
    %8590 = vmatprep.subr.bf16.mxu0 0
    %8591 = vmatpush1.bf16.msra.mxu0 %v8443
    %8592 = vmatprep.subr.bf16.mxu0 0
    %8593 = vmatpush1.bf16.msra.mxu0 %v8444
    %8594 = vmatprep.subr.bf16.mxu0 0
    %8595 = vmatpush1.bf16.msra.mxu0 %v8445
    %8596 = vmatprep.subr.bf16.mxu0 0
    %8597 = vmatpush1.bf16.msra.mxu0 %v8446
    %8598 = vmatprep.subr.bf16.mxu0 0
    %8599 = vmatpush1.bf16.msra.mxu0 %v8447
    %8600 = vmatprep.subr.bf16.mxu0 0
    %8601 = vmatpush1.bf16.msra.mxu0 %v8448
    %8602 = vmatprep.subr.bf16.mxu0 0
    %8603 = vmatpush1.bf16.msra.mxu0 %v8449
    %8604 = vmatprep.subr.bf16.mxu0 0
    %8605 = vmatpush1.bf16.msra.mxu0 %v8450
    %8606 = vmatprep.subr.bf16.mxu0 0
    %8607 = vmatpush1.bf16.msra.mxu0 %v8451
    %8608 = vmatprep.subr.bf16.mxu0 0
    %8609 = vmatpush1.bf16.msra.mxu0 %v8452
    %8610 = vmatprep.subr.bf16.mxu0 0
    %8611 = vmatpush1.bf16.msra.mxu0 %v8453
    %8612 = vmatprep.subr.bf16.mxu0 0
    %8613 = vmatpush1.bf16.msra.mxu0 %v8454
    %8614 = vmatprep.subr.bf16.mxu0 0
    %8615 = vmatpush1.bf16.msra.mxu0 %v8455
    %8616 = vmatprep.mubr.bf16.mxu0 %v8207
    %8617 = vmatmul.mubr.bf16.gmra.mrb[0].mxu0 %v8193
    %v8618 = vpop.f32.mrb[0].mxu0
    %v8619 = vadd.f32 %v8579, %v8618
    %v8620 = vpop.f32.mrb[0].mxu0
    %v8621 = vpop.f32.mrb[0].mxu0
    %v8622 = vpop.f32.mrb[0].mxu0
    %8623 = vdwg.mxu0
    %v8624 = vmax.f32 %v8619, 0.0
    %v8625 = vpack.c.bf16 %v8624, %v8624
    %v8626 = vld [vmem:[#allocation11] sm:$0xf]
    %v8627 = vld [vmem:[#allocation11 + $0x4] sm:$0xf]
    %v8628 = vld [vmem:[#allocation11 + $0x8] sm:$0xf]
    %v8629 = vld [vmem:[#allocation11 + $0xc] sm:$0xf]
    %v8630 = vld [vmem:[#allocation11 + $0x10] sm:$0xf]
    %v8631 = vld [vmem:[#allocation11 + $0x14] sm:$0xf]
    %v8632 = vld [vmem:[#allocation11 + $0x18] sm:$0xf]
    %v8633 = vld [vmem:[#allocation11 + $0x1c] sm:$0xf]
    %v8634 = vld [vmem:[#allocation11 + $0x20] sm:$0xf]
    %v8635 = vld [vmem:[#allocation11 + $0x24] sm:$0xf]
    %v8636 = vld [vmem:[#allocation11 + $0x28] sm:$0xf]
    %v8637 = vld [vmem:[#allocation11 + $0x2c] sm:$0xf]
    %v8638 = vld [vmem:[#allocation11 + $0x30] sm:$0xf]
    %v8639 = vld [vmem:[#allocation11 + $0x34] sm:$0xf]
    %v8640 = vld [vmem:[#allocation11 + $0x38] sm:$0xf]
    %v8641 = vld [vmem:[#allocation11 + $0x3c] sm:$0xf]
    %v8642 = vld [vmem:[%s10] sm:$0x1]
    %v8644 = vlaneseq
    %v8645 = vshrl.u32 %v8644, 7
    %v8646 = vsub.s32 0, %v8645
    %v8647 = vrot.slane %v8642, %v8646
    %v8665 = vunpack.c.l.b16 %v8626
    %v8666 = vunpack.c.l.b16 %v8627
    %v8667 = vunpack.c.l.b16 %v8628
    %v8668 = vunpack.c.l.b16 %v8629
    %v8669 = vunpack.c.l.b16 %v8630
    %v8670 = vunpack.c.l.b16 %v8631
    %v8671 = vunpack.c.l.b16 %v8632
    %v8672 = vunpack.c.l.b16 %v8633
    %v8673 = vunpack.c.l.b16 %v8634
    %v8674 = vunpack.c.l.b16 %v8635
    %v8675 = vunpack.c.l.b16 %v8636
    %v8676 = vunpack.c.l.b16 %v8637
    %v8677 = vunpack.c.l.b16 %v8638
    %v8678 = vunpack.c.l.b16 %v8639
    %v8679 = vunpack.c.l.b16 %v8640
    %v8680 = vunpack.c.l.b16 %v8641
    %v8681 = vpack.c.b16 %v8666, %v8665
    %v8682 = vpack.c.b16 %v8668, %v8667
    %v8683 = vpack.c.b16 %v8670, %v8669
    %v8684 = vpack.c.b16 %v8672, %v8671
    %v8685 = vpack.c.b16 %v8674, %v8673
    %v8686 = vpack.c.b16 %v8676, %v8675
    %v8687 = vpack.c.b16 %v8678, %v8677
    %v8688 = vpack.c.b16 %v8680, %v8679
    %8697 = vmatprep.subr.bf16.mxu0 0
    %8698 = vmatpush1.bf16.msra.mxu0 %v8681
    %8699 = vmatprep.subr.bf16.mxu0 0
    %8700 = vmatpush1.bf16.msra.mxu0 %v8682
    %8701 = vmatprep.subr.bf16.mxu0 0
    %8702 = vmatpush1.bf16.msra.mxu0 %v8683
    %8703 = vmatprep.subr.bf16.mxu0 0
    %8704 = vmatpush1.bf16.msra.mxu0 %v8684
    %8705 = vmatprep.subr.bf16.mxu0 0
    %8706 = vmatpush1.bf16.msra.mxu0 %v8685
    %8707 = vmatprep.subr.bf16.mxu0 0
    %8708 = vmatpush1.bf16.msra.mxu0 %v8686
    %8709 = vmatprep.subr.bf16.mxu0 0
    %8710 = vmatpush1.bf16.msra.mxu0 %v8687
    %8711 = vmatprep.subr.bf16.mxu0 0
    %8712 = vmatpush1.bf16.msra.mxu0 %v8688
    %8713 = vmatprep.subr.bf16.mxu0 0
    %8714 = vmatpush1.bf16.msra.mxu0 0
    %8715 = vmatprep.subr.bf16.mxu0 0
    %8716 = vmatpush1.bf16.msra.mxu0 0
    %8717 = vmatprep.subr.bf16.mxu0 0
    %8718 = vmatpush1.bf16.msra.mxu0 0
    %8719 = vmatprep.subr.bf16.mxu0 0
    %8720 = vmatpush1.bf16.msra.mxu0 0
    %8721 = vmatprep.subr.bf16.mxu0 0
    %8722 = vmatpush1.bf16.msra.mxu0 0
    %8723 = vmatprep.subr.bf16.mxu0 0
    %8724 = vmatpush1.bf16.msra.mxu0 0
    %8725 = vmatprep.subr.bf16.mxu0 0
    %8726 = vmatpush1.bf16.msra.mxu0 0
    %8727 = vmatprep.subr.bf16.mxu0 0
    %8728 = vmatpush1.bf16.msra.mxu0 0
    %8729 = vmatprep.mubr.bf16.mxu0 0
    %8730 = vmatmul.mubr.bf16.gmra.mrb[0].mxu0 %v8625
    %v8731 = vpop.f32.mrb[0].mxu0
    %v8732 = vadd.f32 %v8647, %v8731
    %v8733 = vpop.f32.mrb[0].mxu0
    %v8734 = vpop.f32.mrb[0].mxu0
    %v8735 = vpop.f32.mrb[0].mxu0
    %8736 = vdwg.mxu0
    %8737 = vst [vmem:[#allocation13] sm:$0x3] %v8732
    // Predicated region
    $region62: #{neuralnet_forward.1} parent=1 // pred_check
      _
    $region63: #{neuralnet_forward.1} parent=1 // pred_check_branch
      %8739 = sbr.rel (0) target = $region65
    $region64: #{neuralnet_forward.1} parent=1 // pred_region
      %s8741 = ssub.s32 32, 32
      %8742 = vsyncadd [#allocation7], %s8741
      %s8744 = sshll.u32 [#allocation13], 4
      %s8745 = int_to_ptr.vmem [resolvable:$true] %s8744
      %8747 = dma.vmem_to_hbm [thread:$0]  %s8745, 32, %s11, [#allocation7]
    $region65: #{neuralnet_forward.1} parent=1 // pred_fallthru
      _
    // Predicated region
    $region66: #{neuralnet_forward.1} parent=1 // pred_check
      _
    $region67: #{neuralnet_forward.1} parent=1 // pred_check_branch
      %8749 = sbr.rel (0) target = $region69
    $region68: #{neuralnet_forward.1} parent=1 // pred_region
      %8750 = dma.done [#allocation7], 32
    $region69: #{neuralnet_forward.1} parent=1 // pred_fallthru
      _
    %8751 = vsyncpa [#allocation6], 1
    %8752 = vsyncpa [#allocation9], 1
    %8753 = vsyncpa [#allocation12], 1
    %8754 = vsyncpa [#allocation7], 1

</llo_original>
